<compile_context>
chip_gen: v7x
topology: tpu7x:2x2x1
jax: 0.10.0
libtpu: 0.0.40
codegen_flags: <defaults>
</compile_context>

<pallas_src>
import functools
import math

import jax
import jax.numpy as jnp
from jax.experimental import pallas as pl
from jax.experimental.pallas import tpu as pltpu


# ----------------------------- fused forward kernel ---------------------------------


def _fused_bert_kernel(
    # inputs
    emb_ref, bias_ref, labels_ref,
    emb_ln_g_ref, emb_ln_b_ref,
    wqkv_ref, bqkv_ref, wo_ref, bo_ref, ln1_g_ref, ln1_b_ref,
    wi_ref, bi_ref, wo2_ref, bo2_ref, ln2_g_ref, ln2_b_ref,
    cls_w_ref, cls_b_ref,
    # outputs
    loss_ref, pred_ref,
    # scratch
    qh_sc, kh_sc, vh_sc, attn_sc,
    *, bt, seq, num_layers, num_heads, head_dim, scale, eps,
):
    """One grid step == one batch tile of `bt` elements (bt*seq tokens, hidden H)."""
    S = seq
    M, H = emb_ref.shape                       # M = bt * S

    def layernorm(t, g, b):
        mu = jnp.mean(t, axis=-1, keepdims=True)
        var = jnp.mean(jnp.square(t - mu), axis=-1, keepdims=True)
        return (t - mu) * jax.lax.rsqrt(var + eps) * g + b

    x = layernorm(emb_ref[...], emb_ln_g_ref[...], emb_ln_b_ref[...])   # (M, H)
    bias = bias_ref[...]                                                 # (bt, 1, S)

    # Static unroll over layers (L == 2).
    # TODO(synk): for L >= 12 move the layer loop onto the grid (or lax.fori_loop with
    #             dynamic ref indexing) and block weights per layer to bound VMEM.
    for l in range(num_layers):
        # ---- QKV projections over the whole (bt*S, H) slab; weights split on a
        #      leading axis -> no unaligned lane slicing of a fused (.., 3H) result ----
        q = jnp.dot(x, wqkv_ref[l, 0], preferred_element_type=jnp.float32) + bqkv_ref[l, 0]
        k = jnp.dot(x, wqkv_ref[l, 1], preferred_element_type=jnp.float32) + bqkv_ref[l, 1]
        v = jnp.dot(x, wqkv_ref[l, 2], preferred_element_type=jnp.float32) + bqkv_ref[l, 2]

        # ---- head split: static (S, d) tiles scattered into head-major scratch via
        #      leading-axis full-view stores (no masked narrow lane stores) ----
        for b in range(bt):
            rows = slice(b * S, (b + 1) * S)
            for h in range(num_heads):
                cols = slice(h * head_dim, (h + 1) * head_dim)
                qh_sc[b, h, :, :] = q[rows, cols]
                kh_sc[b, h, :, :] = k[rows, cols]
                vh_sc[b, h, :, :] = v[rows, cols]

        # ---- attention: scores / context as single head-batched einsums ----
        wo_l = wo_ref[l]                                     # (nH, d, H)
        for b in range(bt):
            qh = qh_sc[b]                                    # (nH, S, d)
            kh = kh_sc[b]
            vh = vh_sc[b]
            s = jnp.einsum('hqd,hkd->hqk', qh, kh,
                           preferred_element_type=jnp.float32) * scale + bias[b]
            m = jnp.max(s, axis=-1, keepdims=True)
            p = jnp.exp(s - m)
            p = p / jnp.sum(p, axis=-1, keepdims=True)       # exact softmax denom
            ctx = jnp.einsum('hqk,hkd->hqd', p, vh,
                             preferred_element_type=jnp.float32)          # (nH, S, d)
            # concat-heads + (H,H) matmul == sum_h ctx_h @ Wo_h: one batched matmul
            per_head = jnp.einsum('hqd,hdo->hqo', ctx, wo_l,
                                  preferred_element_type=jnp.float32)     # (nH, S, H)
            out_b = per_head[0]
            for h in range(1, num_heads):
                out_b = out_b + per_head[h]
            attn_sc[b * S:(b + 1) * S, :] = out_b

        # residual + LN fused as matmul epilogue
        x = layernorm(x + attn_sc[...] + bo_ref[l], ln1_g_ref[l], ln1_b_ref[l])

        # ---- feed-forward ----
        inter = jax.nn.gelu(
            jnp.dot(x, wi_ref[l], preferred_element_type=jnp.float32) + bi_ref[l],
            approximate=True)
        ffn = jnp.dot(inter, wo2_ref[l], preferred_element_type=jnp.float32) + bo2_ref[l]
        x = layernorm(x + ffn, ln2_g_ref[l], ln2_b_ref[l])

    # ---- classifier head + argmax + per-token cross-entropy ----
    logits = jnp.dot(x, cls_w_ref[...],
                     preferred_element_type=jnp.float32) + cls_b_ref[...]     # (M, C)
    C = logits.shape[-1]
    col = jax.lax.broadcasted_iota(jnp.int32, logits.shape, 1)
    m = jnp.max(logits, axis=-1, keepdims=True)                               # (M, 1)
    pred_col = jnp.min(jnp.where(logits == m, col, C), axis=-1, keepdims=True)
    lse = jnp.log(jnp.sum(jnp.exp(logits - m), axis=-1, keepdims=True)) + m
    onehot = col == labels_ref[...]                          # labels_ref: (M, 1) int32
    lab_logit = jnp.sum(jnp.where(onehot, logits, 0.0), axis=-1, keepdims=True)
    loss_col = lse - lab_logit                                                # (M, 1)

    # lane-dense outputs: tokens laid along the lane axis (single (1, M) rows)
    pred_ref[...] = pred_col.T.astype(jnp.int32)
    loss_ref[...] = loss_col.T


def fused_bert_forward(emb, mask_bias, label_ids, p, cfg):
    """emb: [B*S, H] f32, mask_bias: [B, 1, S] f32, label_ids: [B, S] int32
    -> (loss_tok [tiles, bt*S] f32, pred [tiles, bt*S] int32)."""
    B = mask_bias.shape[0]
    N, H = emb.shape
    S = N // B
    L = cfg["layers"]
    nH = cfg["heads"]
    d = H // nH
    I = cfg["intermediate"]
    C = cfg["relation_num"]

    # Fold the entire (small) batch into the matmul M dimension: one grid step works on
    # the whole (B*S, H) slab.  For large B, shrink bt so bt*S ~ 128 rows per tile and
    # the grid extent becomes >= 2 (keeps both v7x TensorCores busy).
    bt = B
    num_tiles = B // bt
    M = bt * S
    labels = label_ids.reshape(N, 1).astype(jnp.int32)

    kernel = functools.partial(
        _fused_bert_kernel,
        bt=bt, seq=S, num_layers=L, num_heads=nH, head_dim=d,
        scale=1.0 / math.sqrt(d), eps=1e-12)

    def full(shape):
        nd = len(shape)
        return pl.BlockSpec(shape, lambda t, _nd=nd: (0,) * _nd)

    # explicit VMEM budget: resident weights (x2 buffers) + activations + scratch
    weight_names = ["emb_ln_g", "emb_ln_b", "wqkv", "bqkv", "wo", "bo", "ln1_g", "ln1_b",
                    "wi", "bi", "wo2", "bo2", "ln2_g", "ln2_b", "cls_w", "cls_b"]
    weight_bytes = sum(int(p[n].size) * p[n].dtype.itemsize for n in weight_names)
    act_bytes = M * max(3 * H, I) * 4
    vmem_limit = int(min(100 * 2 ** 20, max(32 * 2 ** 20, 2 * weight_bytes + 16 * act_bytes)))

    return pl.pallas_call(
        kernel,
        grid=(num_tiles,),
        out_shape=(
            jax.ShapeDtypeStruct((num_tiles, M), jnp.float32),   # per-token CE loss
            jax.ShapeDtypeStruct((num_tiles, M), jnp.int32),     # per-token argmax
        ),
        in_specs=[
            pl.BlockSpec((M, H), lambda t: (t, 0)),              # embeddings of this tile
            pl.BlockSpec((bt, 1, S), lambda t: (t, 0, 0)),       # additive attention bias
            pl.BlockSpec((M, 1), lambda t: (t, 0)),              # labels of this tile
            full((1, H)), full((1, H)),                          # embedding LN
            full((L, 3, H, H)), full((L, 3, 1, H)),              # QKV (leading-axis split)
            full((L, nH, d, H)), full((L, 1, H)),                # attn output proj (per-head)
            full((L, 1, H)), full((L, 1, H)),                    # LN1
            full((L, H, I)), full((L, 1, I)),                    # FFN in
            full((L, I, H)), full((L, 1, H)),                    # FFN out
            full((L, 1, H)), full((L, 1, H)),                    # LN2
            full((H, C)), full((1, C)),                          # classifier
        ],
        out_specs=(
            pl.BlockSpec((1, M), lambda t: (t, 0)),
            pl.BlockSpec((1, M), lambda t: (t, 0)),
        ),
        scratch_shapes=[
            pltpu.VMEM((bt, nH, S, d), jnp.float32),             # head-major Q
            pltpu.VMEM((bt, nH, S, d), jnp.float32),             # head-major K
            pltpu.VMEM((bt, nH, S, d), jnp.float32),             # head-major V
            pltpu.VMEM((M, H), jnp.float32),                     # attention output slab
        ],
        compiler_params=pltpu.CompilerParams(
            dimension_semantics=("parallel",),
            vmem_limit_bytes=vmem_limit),
    )(
        emb, mask_bias, labels,
        p["emb_ln_g"], p["emb_ln_b"],
        p["wqkv"], p["bqkv"], p["wo"], p["bo"], p["ln1_g"], p["ln1_b"],
        p["wi"], p["bi"], p["wo2"], p["bo2"], p["ln2_g"], p["ln2_b"],
        p["cls_w"], p["cls_b"],
    )


# ----------------------------- params + wrapper --------------------------------------


def init_params(key, cfg):
    H, I, L = cfg["hidden"], cfg["intermediate"], cfg["layers"]
    nH = cfg["heads"]
    d = H // nH
    C = cfg["relation_num"]
    ks = jax.random.split(key, 8)

    def normal(k, shape, scale=0.02):
        return (scale * jax.random.normal(k, shape)).astype(jnp.float32)

    return {
        "word_emb": normal(ks[0], (cfg["vocab"], H)),
        "pos_emb": normal(ks[1], (cfg["max_pos"], H)),
        "type_emb": normal(ks[2], (cfg["type_vocab"], H)),
        "emb_ln_g": jnp.ones((1, H), jnp.float32),
        "emb_ln_b": jnp.zeros((1, H), jnp.float32),
        "wqkv": normal(ks[3], (L, 3, H, H)),
        "bqkv": jnp.zeros((L, 3, 1, H), jnp.float32),
        "wo": normal(ks[4], (L, nH, d, H)),        # per-head output projection
        "bo": jnp.zeros((L, 1, H), jnp.float32),
        "ln1_g": jnp.ones((L, 1, H), jnp.float32),
        "ln1_b": jnp.zeros((L, 1, H), jnp.float32),
        "wi": normal(ks[5], (L, H, I)),
        "bi": jnp.zeros((L, 1, I), jnp.float32),
        "wo2": normal(ks[6], (L, I, H)),
        "bo2": jnp.zeros((L, 1, H), jnp.float32),
        "ln2_g": jnp.ones((L, 1, H), jnp.float32),
        "ln2_b": jnp.zeros((L, 1, H), jnp.float32),
        "cls_w": normal(ks[7], (H, C)),
        "cls_b": jnp.zeros((1, C), jnp.float32),
    }


def model_forward(params, input_ids, input_mask, segment_ids, label_ids, cfg):
    B, S = input_ids.shape
    H = cfg["hidden"]
    # embedding table gathers stay in plain JAX (glue feeding the fused kernel)
    emb = (
        params["word_emb"][input_ids]
        + params["pos_emb"][:S][None, :, :]
        + params["type_emb"][segment_ids]
    ).reshape(B * S, H).astype(jnp.float32)
    mask_bias = ((1.0 - input_mask.astype(jnp.float32)) * -10000.0).reshape(B, 1, S)

    loss_tok, pred_tok = fused_bert_forward(emb, mask_bias, label_ids, params, cfg)

    # nn.CrossEntropyLoss default: mean over all B*S tokens
    loss = jnp.sum(loss_tok) / (B * S)
    predict = pred_tok.reshape(B, S)
    return loss, predict


# ----------------------------- main --------------------------------------------------

if __name__ == "__main__":
    cfg = dict(
        vocab=128,
        hidden=32,
        heads=4,
        layers=2,
        intermediate=64,
        max_pos=64,
        type_vocab=2,
        relation_num=8,
    )
    B, S = 2, 8

    key = jax.random.PRNGKey(0)
    kp, k_ids, k_lab = jax.random.split(key, 3)
    params = init_params(kp, cfg)

    input_ids_list = jax.random.randint(k_ids, (B, S), 0, cfg["vocab"], dtype=jnp.int32)
    input_mask_list = jnp.ones((B, S), dtype=jnp.int32)
    segment_ids_list = jnp.zeros((B, S), dtype=jnp.int32)
    label_ids_list = jax.random.randint(
        k_lab, (B, S), 0, cfg["relation_num"], dtype=jnp.int32
    )

    fwd = jax.jit(
        lambda p, ids, msk, seg, lab: model_forward(p, ids, msk, seg, lab, cfg)
    )
    loss, predict = fwd(
        params, input_ids_list, input_mask_list, segment_ids_list, label_ids_list
    )
    jax.block_until_ready((loss, predict))
    assert loss.shape == () and predict.shape == (B, S)
    print("KERNEL_OK")
</pallas_src>

<mosaic_0001>
module attributes {stable_mosaic.version = 11 : i64} {
  func.func @_fused_bert_kernel(%arg0: i32, %arg1: memref<16x32xf32, #tpu.memory_space<vmem>>, %arg2: memref<2x1x8xf32, #tpu.memory_space<vmem>>, %arg3: memref<16x1xi32, #tpu.memory_space<vmem>>, %arg4: memref<1x32xf32, #tpu.memory_space<vmem>>, %arg5: memref<1x32xf32, #tpu.memory_space<vmem>>, %arg6: memref<2x3x32x32xf32, #tpu.memory_space<vmem>>, %arg7: memref<2x3x1x32xf32, #tpu.memory_space<vmem>>, %arg8: memref<2x4x8x32xf32, #tpu.memory_space<vmem>>, %arg9: memref<2x1x32xf32, #tpu.memory_space<vmem>>, %arg10: memref<2x1x32xf32, #tpu.memory_space<vmem>>, %arg11: memref<2x1x32xf32, #tpu.memory_space<vmem>>, %arg12: memref<2x32x64xf32, #tpu.memory_space<vmem>>, %arg13: memref<2x1x64xf32, #tpu.memory_space<vmem>>, %arg14: memref<2x64x32xf32, #tpu.memory_space<vmem>>, %arg15: memref<2x1x32xf32, #tpu.memory_space<vmem>>, %arg16: memref<2x1x32xf32, #tpu.memory_space<vmem>>, %arg17: memref<2x1x32xf32, #tpu.memory_space<vmem>>, %arg18: memref<32x8xf32, #tpu.memory_space<vmem>>, %arg19: memref<1x8xf32, #tpu.memory_space<vmem>>, %arg20: memref<1x16xf32, #tpu.memory_space<vmem>>, %arg21: memref<1x16xi32, #tpu.memory_space<vmem>>, %arg22: memref<2x4x8x8xf32, #tpu.memory_space<vmem>>, %arg23: memref<2x4x8x8xf32, #tpu.memory_space<vmem>>, %arg24: memref<2x4x8x8xf32, #tpu.memory_space<vmem>>, %arg25: memref<16x32xf32, #tpu.memory_space<vmem>>) attributes {dimension_semantics = [#tpu.dimension_semantics<parallel>], iteration_bounds = array<i64: 1>, scalar_prefetch = 0 : i64, scratch_operands = 4 : i64, tpu.core_type = #tpu.core_type<tc>, window_params = [{transform_indices = @transform_0, window_bounds = array<i64: 16, 32>}, {transform_indices = @transform_1, window_bounds = array<i64: 2, 1, 8>}, {transform_indices = @transform_2, window_bounds = array<i64: 16, 1>}, {pipeline_mode = #tpu.pipeline_mode<synchronous>, transform_indices = @transform_3, window_bounds = array<i64: 1, 32>}, {pipeline_mode = #tpu.pipeline_mode<synchronous>, transform_indices = @transform_4, window_bounds = array<i64: 1, 32>}, {pipeline_mode = #tpu.pipeline_mode<synchronous>, transform_indices = @transform_5, window_bounds = array<i64: 2, 3, 32, 32>}, {pipeline_mode = #tpu.pipeline_mode<synchronous>, transform_indices = @transform_6, window_bounds = array<i64: 2, 3, 1, 32>}, {pipeline_mode = #tpu.pipeline_mode<synchronous>, transform_indices = @transform_7, window_bounds = array<i64: 2, 4, 8, 32>}, {pipeline_mode = #tpu.pipeline_mode<synchronous>, transform_indices = @transform_8, window_bounds = array<i64: 2, 1, 32>}, {pipeline_mode = #tpu.pipeline_mode<synchronous>, transform_indices = @transform_9, window_bounds = array<i64: 2, 1, 32>}, {pipeline_mode = #tpu.pipeline_mode<synchronous>, transform_indices = @transform_10, window_bounds = array<i64: 2, 1, 32>}, {pipeline_mode = #tpu.pipeline_mode<synchronous>, transform_indices = @transform_11, window_bounds = array<i64: 2, 32, 64>}, {pipeline_mode = #tpu.pipeline_mode<synchronous>, transform_indices = @transform_12, window_bounds = array<i64: 2, 1, 64>}, {pipeline_mode = #tpu.pipeline_mode<synchronous>, transform_indices = @transform_13, window_bounds = array<i64: 2, 64, 32>}, {pipeline_mode = #tpu.pipeline_mode<synchronous>, transform_indices = @transform_14, window_bounds = array<i64: 2, 1, 32>}, {pipeline_mode = #tpu.pipeline_mode<synchronous>, transform_indices = @transform_15, window_bounds = array<i64: 2, 1, 32>}, {pipeline_mode = #tpu.pipeline_mode<synchronous>, transform_indices = @transform_16, window_bounds = array<i64: 2, 1, 32>}, {pipeline_mode = #tpu.pipeline_mode<synchronous>, transform_indices = @transform_17, window_bounds = array<i64: 32, 8>}, {pipeline_mode = #tpu.pipeline_mode<synchronous>, transform_indices = @transform_18, window_bounds = array<i64: 1, 8>}, {transform_indices = @transform_19, window_bounds = array<i64: 1, 16>}, {transform_indices = @transform_20, window_bounds = array<i64: 1, 16>}]} {
    %c0 = arith.constant 0 : index
    %c0_0 = arith.constant 0 : index
    %0 = vector.load %arg1[%c0, %c0_0] : memref<16x32xf32, #tpu.memory_space<vmem>>, vector<16x32xf32>
    %c0_1 = arith.constant 0 : index
    %c0_2 = arith.constant 0 : index
    %1 = vector.load %arg4[%c0_1, %c0_2] : memref<1x32xf32, #tpu.memory_space<vmem>>, vector<1x32xf32>
    %c0_3 = arith.constant 0 : index
    %c0_4 = arith.constant 0 : index
    %2 = vector.load %arg5[%c0_3, %c0_4] : memref<1x32xf32, #tpu.memory_space<vmem>>, vector<1x32xf32>
    %cst = arith.constant dense<0.000000e+00> : vector<16xf32>
    %3 = vector.multi_reduction <add>, %0, %cst [1] : vector<16x32xf32> to vector<16xf32>
    %4 = vector.shape_cast %3 : vector<16xf32> to vector<16x1xf32>
    %cst_5 = arith.constant 3.200000e+01 : f32
    %5 = vector.broadcast %cst_5 : f32 to vector<16x1xf32>
    %6 = arith.divf %4, %5 : vector<16x1xf32>
    %7 = vector.broadcast %6 : vector<16x1xf32> to vector<16x32xf32>
    %8 = arith.subf %0, %7 : vector<16x32xf32>
    %9 = arith.mulf %8, %8 : vector<16x32xf32>
    %cst_6 = arith.constant dense<0.000000e+00> : vector<16xf32>
    %10 = vector.multi_reduction <add>, %9, %cst_6 [1] : vector<16x32xf32> to vector<16xf32>
    %11 = vector.shape_cast %10 : vector<16xf32> to vector<16x1xf32>
    %cst_7 = arith.constant 3.200000e+01 : f32
    %12 = vector.broadcast %cst_7 : f32 to vector<16x1xf32>
    %13 = arith.divf %11, %12 : vector<16x1xf32>
    %14 = vector.broadcast %6 : vector<16x1xf32> to vector<16x32xf32>
    %15 = arith.subf %0, %14 : vector<16x32xf32>
    %cst_8 = arith.constant 9.99999996E-13 : f32
    %16 = vector.broadcast %cst_8 : f32 to vector<16x1xf32>
    %17 = arith.addf %13, %16 : vector<16x1xf32>
    %18 = math.rsqrt %17 : vector<16x1xf32>
    %19 = vector.broadcast %18 : vector<16x1xf32> to vector<16x32xf32>
    %20 = arith.mulf %15, %19 : vector<16x32xf32>
    %21 = vector.broadcast %1 : vector<1x32xf32> to vector<16x32xf32>
    %22 = arith.mulf %20, %21 : vector<16x32xf32>
    %23 = vector.broadcast %2 : vector<1x32xf32> to vector<16x32xf32>
    %24 = arith.addf %22, %23 : vector<16x32xf32>
    %c0_9 = arith.constant 0 : index
    %c0_10 = arith.constant 0 : index
    %c0_11 = arith.constant 0 : index
    %25 = vector.load %arg2[%c0_9, %c0_10, %c0_11] : memref<2x1x8xf32, #tpu.memory_space<vmem>>, vector<2x1x8xf32>
    %c0_12 = arith.constant 0 : index
    %c0_13 = arith.constant 0 : index
    %c0_14 = arith.constant 0 : index
    %c0_15 = arith.constant 0 : index
    %26 = vector.load %arg6[%c0_12, %c0_13, %c0_14, %c0_15] : memref<2x3x32x32xf32, #tpu.memory_space<vmem>>, vector<1x1x32x32xf32>
    %27 = vector.shape_cast %26 : vector<1x1x32x32xf32> to vector<32x32xf32>
    %cst_16 = arith.constant dense<0.000000e+00> : vector<16x32xf32>
    %28 = tpu.matmul %24, %27, %cst_16 {dimension_numbers = #tpu.dot_dimension_numbers<[1], [0], [0], [1], [0, 0, 1, 1], [], []>} : vector<16x32xf32>, vector<32x32xf32>, vector<16x32xf32> -> vector<16x32xf32>
    %c0_17 = arith.constant 0 : index
    %c0_18 = arith.constant 0 : index
    %c0_19 = arith.constant 0 : index
    %c0_20 = arith.constant 0 : index
    %29 = vector.load %arg7[%c0_17, %c0_18, %c0_19, %c0_20] : memref<2x3x1x32xf32, #tpu.memory_space<vmem>>, vector<1x1x1x32xf32>
    %30 = vector.shape_cast %29 : vector<1x1x1x32xf32> to vector<1x32xf32>
    %31 = vector.broadcast %30 : vector<1x32xf32> to vector<16x32xf32>
    %32 = arith.addf %28, %31 : vector<16x32xf32>
    %c0_21 = arith.constant 0 : index
    %c1 = arith.constant 1 : index
    %c0_22 = arith.constant 0 : index
    %c0_23 = arith.constant 0 : index
    %33 = vector.load %arg6[%c0_21, %c1, %c0_22, %c0_23] : memref<2x3x32x32xf32, #tpu.memory_space<vmem>>, vector<1x1x32x32xf32>
    %34 = vector.shape_cast %33 : vector<1x1x32x32xf32> to vector<32x32xf32>
    %cst_24 = arith.constant dense<0.000000e+00> : vector<16x32xf32>
    %35 = tpu.matmul %24, %34, %cst_24 {dimension_numbers = #tpu.dot_dimension_numbers<[1], [0], [0], [1], [0, 0, 1, 1], [], []>} : vector<16x32xf32>, vector<32x32xf32>, vector<16x32xf32> -> vector<16x32xf32>
    %c0_25 = arith.constant 0 : index
    %c1_26 = arith.constant 1 : index
    %c0_27 = arith.constant 0 : index
    %c0_28 = arith.constant 0 : index
    %36 = vector.load %arg7[%c0_25, %c1_26, %c0_27, %c0_28] : memref<2x3x1x32xf32, #tpu.memory_space<vmem>>, vector<1x1x1x32xf32>
    %37 = vector.shape_cast %36 : vector<1x1x1x32xf32> to vector<1x32xf32>
    %38 = vector.broadcast %37 : vector<1x32xf32> to vector<16x32xf32>
    %39 = arith.addf %35, %38 : vector<16x32xf32>
    %c0_29 = arith.constant 0 : index
    %c2 = arith.constant 2 : index
    %c0_30 = arith.constant 0 : index
    %c0_31 = arith.constant 0 : index
    %40 = vector.load %arg6[%c0_29, %c2, %c0_30, %c0_31] : memref<2x3x32x32xf32, #tpu.memory_space<vmem>>, vector<1x1x32x32xf32>
    %41 = vector.shape_cast %40 : vector<1x1x32x32xf32> to vector<32x32xf32>
    %cst_32 = arith.constant dense<0.000000e+00> : vector<16x32xf32>
    %42 = tpu.matmul %24, %41, %cst_32 {dimension_numbers = #tpu.dot_dimension_numbers<[1], [0], [0], [1], [0, 0, 1, 1], [], []>} : vector<16x32xf32>, vector<32x32xf32>, vector<16x32xf32> -> vector<16x32xf32>
    %c0_33 = arith.constant 0 : index
    %c2_34 = arith.constant 2 : index
    %c0_35 = arith.constant 0 : index
    %c0_36 = arith.constant 0 : index
    %43 = vector.load %arg7[%c0_33, %c2_34, %c0_35, %c0_36] : memref<2x3x1x32xf32, #tpu.memory_space<vmem>>, vector<1x1x1x32xf32>
    %44 = vector.shape_cast %43 : vector<1x1x1x32xf32> to vector<1x32xf32>
    %45 = vector.broadcast %44 : vector<1x32xf32> to vector<16x32xf32>
    %46 = arith.addf %42, %45 : vector<16x32xf32>
    %47 = vector.extract_strided_slice %32 {offsets = [0, 0], sizes = [8, 8], strides = [1, 1]} : vector<16x32xf32> to vector<8x8xf32>
    %c0_37 = arith.constant 0 : index
    %c0_38 = arith.constant 0 : index
    %c0_39 = arith.constant 0 : index
    %c0_40 = arith.constant 0 : index
    %48 = vector.load %arg22[%c0_37, %c0_38, %c0_39, %c0_40] : memref<2x4x8x8xf32, #tpu.memory_space<vmem>>, vector<1x1x8x8xf32>
    %49 = vector.shape_cast %48 : vector<1x1x8x8xf32> to vector<8x8xf32>
    %50 = vector.shape_cast %47 : vector<8x8xf32> to vector<1x1x8x8xf32>
    tpu.vector_store %arg22[%c0_37, %c0_38, %c0_39, %c0_40], %50 {strides = array<i32>} : memref<2x4x8x8xf32, #tpu.memory_space<vmem>>, vector<1x1x8x8xf32>,
    %51 = vector.extract_strided_slice %39 {offsets = [0, 0], sizes = [8, 8], strides = [1, 1]} : vector<16x32xf32> to vector<8x8xf32>
    %c0_41 = arith.constant 0 : index
    %c0_42 = arith.constant 0 : index
    %c0_43 = arith.constant 0 : index
    %c0_44 = arith.constant 0 : index
    %52 = vector.load %arg23[%c0_41, %c0_42, %c0_43, %c0_44] : memref<2x4x8x8xf32, #tpu.memory_space<vmem>>, vector<1x1x8x8xf32>
    %53 = vector.shape_cast %52 : vector<1x1x8x8xf32> to vector<8x8xf32>
    %54 = vector.shape_cast %51 : vector<8x8xf32> to vector<1x1x8x8xf32>
    tpu.vector_store %arg23[%c0_41, %c0_42, %c0_43, %c0_44], %54 {strides = array<i32>} : memref<2x4x8x8xf32, #tpu.memory_space<vmem>>, vector<1x1x8x8xf32>,
    %55 = vector.extract_strided_slice %46 {offsets = [0, 0], sizes = [8, 8], strides = [1, 1]} : vector<16x32xf32> to vector<8x8xf32>
    %c0_45 = arith.constant 0 : index
    %c0_46 = arith.constant 0 : index
    %c0_47 = arith.constant 0 : index
    %c0_48 = arith.constant 0 : index
    %56 = vector.load %arg24[%c0_45, %c0_46, %c0_47, %c0_48] : memref<2x4x8x8xf32, #tpu.memory_space<vmem>>, vector<1x1x8x8xf32>
    %57 = vector.shape_cast %56 : vector<1x1x8x8xf32> to vector<8x8xf32>
    %58 = vector.shape_cast %55 : vector<8x8xf32> to vector<1x1x8x8xf32>
    tpu.vector_store %arg24[%c0_45, %c0_46, %c0_47, %c0_48], %58 {strides = array<i32>} : memref<2x4x8x8xf32, #tpu.memory_space<vmem>>, vector<1x1x8x8xf32>,
    %59 = vector.extract_strided_slice %32 {offsets = [0, 8], sizes = [8, 8], strides = [1, 1]} : vector<16x32xf32> to vector<8x8xf32>
    %c0_49 = arith.constant 0 : index
    %c1_50 = arith.constant 1 : index
    %c0_51 = arith.constant 0 : index
    %c0_52 = arith.constant 0 : index
    %60 = vector.load %arg22[%c0_49, %c1_50, %c0_51, %c0_52] : memref<2x4x8x8xf32, #tpu.memory_space<vmem>>, vector<1x1x8x8xf32>
    %61 = vector.shape_cast %60 : vector<1x1x8x8xf32> to vector<8x8xf32>
    %62 = vector.shape_cast %59 : vector<8x8xf32> to vector<1x1x8x8xf32>
    tpu.vector_store %arg22[%c0_49, %c1_50, %c0_51, %c0_52], %62 {strides = array<i32>} : memref<2x4x8x8xf32, #tpu.memory_space<vmem>>, vector<1x1x8x8xf32>,
    %63 = vector.extract_strided_slice %39 {offsets = [0, 8], sizes = [8, 8], strides = [1, 1]} : vector<16x32xf32> to vector<8x8xf32>
    %c0_53 = arith.constant 0 : index
    %c1_54 = arith.constant 1 : index
    %c0_55 = arith.constant 0 : index
    %c0_56 = arith.constant 0 : index
    %64 = vector.load %arg23[%c0_53, %c1_54, %c0_55, %c0_56] : memref<2x4x8x8xf32, #tpu.memory_space<vmem>>, vector<1x1x8x8xf32>
    %65 = vector.shape_cast %64 : vector<1x1x8x8xf32> to vector<8x8xf32>
    %66 = vector.shape_cast %63 : vector<8x8xf32> to vector<1x1x8x8xf32>
    tpu.vector_store %arg23[%c0_53, %c1_54, %c0_55, %c0_56], %66 {strides = array<i32>} : memref<2x4x8x8xf32, #tpu.memory_space<vmem>>, vector<1x1x8x8xf32>,
    %67 = vector.extract_strided_slice %46 {offsets = [0, 8], sizes = [8, 8], strides = [1, 1]} : vector<16x32xf32> to vector<8x8xf32>
    %c0_57 = arith.constant 0 : index
    %c1_58 = arith.constant 1 : index
    %c0_59 = arith.constant 0 : index
    %c0_60 = arith.constant 0 : index
    %68 = vector.load %arg24[%c0_57, %c1_58, %c0_59, %c0_60] : memref<2x4x8x8xf32, #tpu.memory_space<vmem>>, vector<1x1x8x8xf32>
    %69 = vector.shape_cast %68 : vector<1x1x8x8xf32> to vector<8x8xf32>
    %70 = vector.shape_cast %67 : vector<8x8xf32> to vector<1x1x8x8xf32>
    tpu.vector_store %arg24[%c0_57, %c1_58, %c0_59, %c0_60], %70 {strides = array<i32>} : memref<2x4x8x8xf32, #tpu.memory_space<vmem>>, vector<1x1x8x8xf32>,
    %71 = vector.extract_strided_slice %32 {offsets = [0, 16], sizes = [8, 8], strides = [1, 1]} : vector<16x32xf32> to vector<8x8xf32>
    %c0_61 = arith.constant 0 : index
    %c2_62 = arith.constant 2 : index
    %c0_63 = arith.constant 0 : index
    %c0_64 = arith.constant 0 : index
    %72 = vector.load %arg22[%c0_61, %c2_62, %c0_63, %c0_64] : memref<2x4x8x8xf32, #tpu.memory_space<vmem>>, vector<1x1x8x8xf32>
    %73 = vector.shape_cast %72 : vector<1x1x8x8xf32> to vector<8x8xf32>
    %74 = vector.shape_cast %71 : vector<8x8xf32> to vector<1x1x8x8xf32>
    tpu.vector_store %arg22[%c0_61, %c2_62, %c0_63, %c0_64], %74 {strides = array<i32>} : memref<2x4x8x8xf32, #tpu.memory_space<vmem>>, vector<1x1x8x8xf32>,
    %75 = vector.extract_strided_slice %39 {offsets = [0, 16], sizes = [8, 8], strides = [1, 1]} : vector<16x32xf32> to vector<8x8xf32>
    %c0_65 = arith.constant 0 : index
    %c2_66 = arith.constant 2 : index
    %c0_67 = arith.constant 0 : index
    %c0_68 = arith.constant 0 : index
    %76 = vector.load %arg23[%c0_65, %c2_66, %c0_67, %c0_68] : memref<2x4x8x8xf32, #tpu.memory_space<vmem>>, vector<1x1x8x8xf32>
    %77 = vector.shape_cast %76 : vector<1x1x8x8xf32> to vector<8x8xf32>
    %78 = vector.shape_cast %75 : vector<8x8xf32> to vector<1x1x8x8xf32>
    tpu.vector_store %arg23[%c0_65, %c2_66, %c0_67, %c0_68], %78 {strides = array<i32>} : memref<2x4x8x8xf32, #tpu.memory_space<vmem>>, vector<1x1x8x8xf32>,
    %79 = vector.extract_strided_slice %46 {offsets = [0, 16], sizes = [8, 8], strides = [1, 1]} : vector<16x32xf32> to vector<8x8xf32>
    %c0_69 = arith.constant 0 : index
    %c2_70 = arith.constant 2 : index
    %c0_71 = arith.constant 0 : index
    %c0_72 = arith.constant 0 : index
    %80 = vector.load %arg24[%c0_69, %c2_70, %c0_71, %c0_72] : memref<2x4x8x8xf32, #tpu.memory_space<vmem>>, vector<1x1x8x8xf32>
    %81 = vector.shape_cast %80 : vector<1x1x8x8xf32> to vector<8x8xf32>
    %82 = vector.shape_cast %79 : vector<8x8xf32> to vector<1x1x8x8xf32>
    tpu.vector_store %arg24[%c0_69, %c2_70, %c0_71, %c0_72], %82 {strides = array<i32>} : memref<2x4x8x8xf32, #tpu.memory_space<vmem>>, vector<1x1x8x8xf32>,
    %83 = vector.extract_strided_slice %32 {offsets = [0, 24], sizes = [8, 8], strides = [1, 1]} : vector<16x32xf32> to vector<8x8xf32>
    %c0_73 = arith.constant 0 : index
    %c3 = arith.constant 3 : index
    %c0_74 = arith.constant 0 : index
    %c0_75 = arith.constant 0 : index
    %84 = vector.load %arg22[%c0_73, %c3, %c0_74, %c0_75] : memref<2x4x8x8xf32, #tpu.memory_space<vmem>>, vector<1x1x8x8xf32>
    %85 = vector.shape_cast %84 : vector<1x1x8x8xf32> to vector<8x8xf32>
    %86 = vector.shape_cast %83 : vector<8x8xf32> to vector<1x1x8x8xf32>
    tpu.vector_store %arg22[%c0_73, %c3, %c0_74, %c0_75], %86 {strides = array<i32>} : memref<2x4x8x8xf32, #tpu.memory_space<vmem>>, vector<1x1x8x8xf32>,
    %87 = vector.extract_strided_slice %39 {offsets = [0, 24], sizes = [8, 8], strides = [1, 1]} : vector<16x32xf32> to vector<8x8xf32>
    %c0_76 = arith.constant 0 : index
    %c3_77 = arith.constant 3 : index
    %c0_78 = arith.constant 0 : index
    %c0_79 = arith.constant 0 : index
    %88 = vector.load %arg23[%c0_76, %c3_77, %c0_78, %c0_79] : memref<2x4x8x8xf32, #tpu.memory_space<vmem>>, vector<1x1x8x8xf32>
    %89 = vector.shape_cast %88 : vector<1x1x8x8xf32> to vector<8x8xf32>
    %90 = vector.shape_cast %87 : vector<8x8xf32> to vector<1x1x8x8xf32>
    tpu.vector_store %arg23[%c0_76, %c3_77, %c0_78, %c0_79], %90 {strides = array<i32>} : memref<2x4x8x8xf32, #tpu.memory_space<vmem>>, vector<1x1x8x8xf32>,
    %91 = vector.extract_strided_slice %46 {offsets = [0, 24], sizes = [8, 8], strides = [1, 1]} : vector<16x32xf32> to vector<8x8xf32>
    %c0_80 = arith.constant 0 : index
    %c3_81 = arith.constant 3 : index
    %c0_82 = arith.constant 0 : index
    %c0_83 = arith.constant 0 : index
    %92 = vector.load %arg24[%c0_80, %c3_81, %c0_82, %c0_83] : memref<2x4x8x8xf32, #tpu.memory_space<vmem>>, vector<1x1x8x8xf32>
    %93 = vector.shape_cast %92 : vector<1x1x8x8xf32> to vector<8x8xf32>
    %94 = vector.shape_cast %91 : vector<8x8xf32> to vector<1x1x8x8xf32>
    tpu.vector_store %arg24[%c0_80, %c3_81, %c0_82, %c0_83], %94 {strides = array<i32>} : memref<2x4x8x8xf32, #tpu.memory_space<vmem>>, vector<1x1x8x8xf32>,
    %95 = vector.extract_strided_slice %32 {offsets = [8, 0], sizes = [8, 8], strides = [1, 1]} : vector<16x32xf32> to vector<8x8xf32>
    %c1_84 = arith.constant 1 : index
    %c0_85 = arith.constant 0 : index
    %c0_86 = arith.constant 0 : index
    %c0_87 = arith.constant 0 : index
    %96 = vector.load %arg22[%c1_84, %c0_85, %c0_86, %c0_87] : memref<2x4x8x8xf32, #tpu.memory_space<vmem>>, vector<1x1x8x8xf32>
    %97 = vector.shape_cast %96 : vector<1x1x8x8xf32> to vector<8x8xf32>
    %98 = vector.shape_cast %95 : vector<8x8xf32> to vector<1x1x8x8xf32>
    tpu.vector_store %arg22[%c1_84, %c0_85, %c0_86, %c0_87], %98 {strides = array<i32>} : memref<2x4x8x8xf32, #tpu.memory_space<vmem>>, vector<1x1x8x8xf32>,
    %99 = vector.extract_strided_slice %39 {offsets = [8, 0], sizes = [8, 8], strides = [1, 1]} : vector<16x32xf32> to vector<8x8xf32>
    %c1_88 = arith.constant 1 : index
    %c0_89 = arith.constant 0 : index
    %c0_90 = arith.constant 0 : index
    %c0_91 = arith.constant 0 : index
    %100 = vector.load %arg23[%c1_88, %c0_89, %c0_90, %c0_91] : memref<2x4x8x8xf32, #tpu.memory_space<vmem>>, vector<1x1x8x8xf32>
    %101 = vector.shape_cast %100 : vector<1x1x8x8xf32> to vector<8x8xf32>
    %102 = vector.shape_cast %99 : vector<8x8xf32> to vector<1x1x8x8xf32>
    tpu.vector_store %arg23[%c1_88, %c0_89, %c0_90, %c0_91], %102 {strides = array<i32>} : memref<2x4x8x8xf32, #tpu.memory_space<vmem>>, vector<1x1x8x8xf32>,
    %103 = vector.extract_strided_slice %46 {offsets = [8, 0], sizes = [8, 8], strides = [1, 1]} : vector<16x32xf32> to vector<8x8xf32>
    %c1_92 = arith.constant 1 : index
    %c0_93 = arith.constant 0 : index
    %c0_94 = arith.constant 0 : index
    %c0_95 = arith.constant 0 : index
    %104 = vector.load %arg24[%c1_92, %c0_93, %c0_94, %c0_95] : memref<2x4x8x8xf32, #tpu.memory_space<vmem>>, vector<1x1x8x8xf32>
    %105 = vector.shape_cast %104 : vector<1x1x8x8xf32> to vector<8x8xf32>
    %106 = vector.shape_cast %103 : vector<8x8xf32> to vector<1x1x8x8xf32>
    tpu.vector_store %arg24[%c1_92, %c0_93, %c0_94, %c0_95], %106 {strides = array<i32>} : memref<2x4x8x8xf32, #tpu.memory_space<vmem>>, vector<1x1x8x8xf32>,
    %107 = vector.extract_strided_slice %32 {offsets = [8, 8], sizes = [8, 8], strides = [1, 1]} : vector<16x32xf32> to vector<8x8xf32>
    %c1_96 = arith.constant 1 : index
    %c1_97 = arith.constant 1 : index
    %c0_98 = arith.constant 0 : index
    %c0_99 = arith.constant 0 : index
    %108 = vector.load %arg22[%c1_96, %c1_97, %c0_98, %c0_99] : memref<2x4x8x8xf32, #tpu.memory_space<vmem>>, vector<1x1x8x8xf32>
    %109 = vector.shape_cast %108 : vector<1x1x8x8xf32> to vector<8x8xf32>
    %110 = vector.shape_cast %107 : vector<8x8xf32> to vector<1x1x8x8xf32>
    tpu.vector_store %arg22[%c1_96, %c1_97, %c0_98, %c0_99], %110 {strides = array<i32>} : memref<2x4x8x8xf32, #tpu.memory_space<vmem>>, vector<1x1x8x8xf32>,
    %111 = vector.extract_strided_slice %39 {offsets = [8, 8], sizes = [8, 8], strides = [1, 1]} : vector<16x32xf32> to vector<8x8xf32>
    %c1_100 = arith.constant 1 : index
    %c1_101 = arith.constant 1 : index
    %c0_102 = arith.constant 0 : index
    %c0_103 = arith.constant 0 : index
    %112 = vector.load %arg23[%c1_100, %c1_101, %c0_102, %c0_103] : memref<2x4x8x8xf32, #tpu.memory_space<vmem>>, vector<1x1x8x8xf32>
    %113 = vector.shape_cast %112 : vector<1x1x8x8xf32> to vector<8x8xf32>
    %114 = vector.shape_cast %111 : vector<8x8xf32> to vector<1x1x8x8xf32>
    tpu.vector_store %arg23[%c1_100, %c1_101, %c0_102, %c0_103], %114 {strides = array<i32>} : memref<2x4x8x8xf32, #tpu.memory_space<vmem>>, vector<1x1x8x8xf32>,
    %115 = vector.extract_strided_slice %46 {offsets = [8, 8], sizes = [8, 8], strides = [1, 1]} : vector<16x32xf32> to vector<8x8xf32>
    %c1_104 = arith.constant 1 : index
    %c1_105 = arith.constant 1 : index
    %c0_106 = arith.constant 0 : index
    %c0_107 = arith.constant 0 : index
    %116 = vector.load %arg24[%c1_104, %c1_105, %c0_106, %c0_107] : memref<2x4x8x8xf32, #tpu.memory_space<vmem>>, vector<1x1x8x8xf32>
    %117 = vector.shape_cast %116 : vector<1x1x8x8xf32> to vector<8x8xf32>
    %118 = vector.shape_cast %115 : vector<8x8xf32> to vector<1x1x8x8xf32>
    tpu.vector_store %arg24[%c1_104, %c1_105, %c0_106, %c0_107], %118 {strides = array<i32>} : memref<2x4x8x8xf32, #tpu.memory_space<vmem>>, vector<1x1x8x8xf32>,
    %119 = vector.extract_strided_slice %32 {offsets = [8, 16], sizes = [8, 8], strides = [1, 1]} : vector<16x32xf32> to vector<8x8xf32>
    %c1_108 = arith.constant 1 : index
    %c2_109 = arith.constant 2 : index
    %c0_110 = arith.constant 0 : index
    %c0_111 = arith.constant 0 : index
    %120 = vector.load %arg22[%c1_108, %c2_109, %c0_110, %c0_111] : memref<2x4x8x8xf32, #tpu.memory_space<vmem>>, vector<1x1x8x8xf32>
    %121 = vector.shape_cast %120 : vector<1x1x8x8xf32> to vector<8x8xf32>
    %122 = vector.shape_cast %119 : vector<8x8xf32> to vector<1x1x8x8xf32>
    tpu.vector_store %arg22[%c1_108, %c2_109, %c0_110, %c0_111], %122 {strides = array<i32>} : memref<2x4x8x8xf32, #tpu.memory_space<vmem>>, vector<1x1x8x8xf32>,
    %123 = vector.extract_strided_slice %39 {offsets = [8, 16], sizes = [8, 8], strides = [1, 1]} : vector<16x32xf32> to vector<8x8xf32>
    %c1_112 = arith.constant 1 : index
    %c2_113 = arith.constant 2 : index
    %c0_114 = arith.constant 0 : index
    %c0_115 = arith.constant 0 : index
    %124 = vector.load %arg23[%c1_112, %c2_113, %c0_114, %c0_115] : memref<2x4x8x8xf32, #tpu.memory_space<vmem>>, vector<1x1x8x8xf32>
    %125 = vector.shape_cast %124 : vector<1x1x8x8xf32> to vector<8x8xf32>
    %126 = vector.shape_cast %123 : vector<8x8xf32> to vector<1x1x8x8xf32>
    tpu.vector_store %arg23[%c1_112, %c2_113, %c0_114, %c0_115], %126 {strides = array<i32>} : memref<2x4x8x8xf32, #tpu.memory_space<vmem>>, vector<1x1x8x8xf32>,
    %127 = vector.extract_strided_slice %46 {offsets = [8, 16], sizes = [8, 8], strides = [1, 1]} : vector<16x32xf32> to vector<8x8xf32>
    %c1_116 = arith.constant 1 : index
    %c2_117 = arith.constant 2 : index
    %c0_118 = arith.constant 0 : index
    %c0_119 = arith.constant 0 : index
    %128 = vector.load %arg24[%c1_116, %c2_117, %c0_118, %c0_119] : memref<2x4x8x8xf32, #tpu.memory_space<vmem>>, vector<1x1x8x8xf32>
    %129 = vector.shape_cast %128 : vector<1x1x8x8xf32> to vector<8x8xf32>
    %130 = vector.shape_cast %127 : vector<8x8xf32> to vector<1x1x8x8xf32>
    tpu.vector_store %arg24[%c1_116, %c2_117, %c0_118, %c0_119], %130 {strides = array<i32>} : memref<2x4x8x8xf32, #tpu.memory_space<vmem>>, vector<1x1x8x8xf32>,
    %131 = vector.extract_strided_slice %32 {offsets = [8, 24], sizes = [8, 8], strides = [1, 1]} : vector<16x32xf32> to vector<8x8xf32>
    %c1_120 = arith.constant 1 : index
    %c3_121 = arith.constant 3 : index
    %c0_122 = arith.constant 0 : index
    %c0_123 = arith.constant 0 : index
    %132 = vector.load %arg22[%c1_120, %c3_121, %c0_122, %c0_123] : memref<2x4x8x8xf32, #tpu.memory_space<vmem>>, vector<1x1x8x8xf32>
    %133 = vector.shape_cast %132 : vector<1x1x8x8xf32> to vector<8x8xf32>
    %134 = vector.shape_cast %131 : vector<8x8xf32> to vector<1x1x8x8xf32>
    tpu.vector_store %arg22[%c1_120, %c3_121, %c0_122, %c0_123], %134 {strides = array<i32>} : memref<2x4x8x8xf32, #tpu.memory_space<vmem>>, vector<1x1x8x8xf32>,
    %135 = vector.extract_strided_slice %39 {offsets = [8, 24], sizes = [8, 8], strides = [1, 1]} : vector<16x32xf32> to vector<8x8xf32>
    %c1_124 = arith.constant 1 : index
    %c3_125 = arith.constant 3 : index
    %c0_126 = arith.constant 0 : index
    %c0_127 = arith.constant 0 : index
    %136 = vector.load %arg23[%c1_124, %c3_125, %c0_126, %c0_127] : memref<2x4x8x8xf32, #tpu.memory_space<vmem>>, vector<1x1x8x8xf32>
    %137 = vector.shape_cast %136 : vector<1x1x8x8xf32> to vector<8x8xf32>
    %138 = vector.shape_cast %135 : vector<8x8xf32> to vector<1x1x8x8xf32>
    tpu.vector_store %arg23[%c1_124, %c3_125, %c0_126, %c0_127], %138 {strides = array<i32>} : memref<2x4x8x8xf32, #tpu.memory_space<vmem>>, vector<1x1x8x8xf32>,
    %139 = vector.extract_strided_slice %46 {offsets = [8, 24], sizes = [8, 8], strides = [1, 1]} : vector<16x32xf32> to vector<8x8xf32>
    %c1_128 = arith.constant 1 : index
    %c3_129 = arith.constant 3 : index
    %c0_130 = arith.constant 0 : index
    %c0_131 = arith.constant 0 : index
    %140 = vector.load %arg24[%c1_128, %c3_129, %c0_130, %c0_131] : memref<2x4x8x8xf32, #tpu.memory_space<vmem>>, vector<1x1x8x8xf32>
    %141 = vector.shape_cast %140 : vector<1x1x8x8xf32> to vector<8x8xf32>
    %142 = vector.shape_cast %139 : vector<8x8xf32> to vector<1x1x8x8xf32>
    tpu.vector_store %arg24[%c1_128, %c3_129, %c0_130, %c0_131], %142 {strides = array<i32>} : memref<2x4x8x8xf32, #tpu.memory_space<vmem>>, vector<1x1x8x8xf32>,
    %c0_132 = arith.constant 0 : index
    %c0_133 = arith.constant 0 : index
    %c0_134 = arith.constant 0 : index
    %c0_135 = arith.constant 0 : index
    %143 = vector.load %arg8[%c0_132, %c0_133, %c0_134, %c0_135] : memref<2x4x8x32xf32, #tpu.memory_space<vmem>>, vector<1x4x8x32xf32>
    %144 = vector.shape_cast %143 : vector<1x4x8x32xf32> to vector<4x8x32xf32>
    %c0_136 = arith.constant 0 : index
    %c0_137 = arith.constant 0 : index
    %c0_138 = arith.constant 0 : index
    %c0_139 = arith.constant 0 : index
    %145 = vector.load %arg22[%c0_136, %c0_137, %c0_138, %c0_139] : memref<2x4x8x8xf32, #tpu.memory_space<vmem>>, vector<1x4x8x8xf32>
    %146 = vector.shape_cast %145 : vector<1x4x8x8xf32> to vector<4x8x8xf32>
    %c0_140 = arith.constant 0 : index
    %c0_141 = arith.constant 0 : index
    %c0_142 = arith.constant 0 : index
    %c0_143 = arith.constant 0 : index
    %147 = vector.load %arg23[%c0_140, %c0_141, %c0_142, %c0_143] : memref<2x4x8x8xf32, #tpu.memory_space<vmem>>, vector<1x4x8x8xf32>
    %148 = vector.shape_cast %147 : vector<1x4x8x8xf32> to vector<4x8x8xf32>
    %c0_144 = arith.constant 0 : index
    %c0_145 = arith.constant 0 : index
    %c0_146 = arith.constant 0 : index
    %c0_147 = arith.constant 0 : index
    %149 = vector.load %arg24[%c0_144, %c0_145, %c0_146, %c0_147] : memref<2x4x8x8xf32, #tpu.memory_space<vmem>>, vector<1x4x8x8xf32>
    %150 = vector.shape_cast %149 : vector<1x4x8x8xf32> to vector<4x8x8xf32>
    "tpu.trace_start"() <{level = 10 : i32, message = "hqd,hkd->hqk"}> : () -> ()
    %cst_148 = arith.constant dense<0.000000e+00> : vector<4x8x8xf32>
    %151 = tpu.matmul %146, %148, %cst_148 {dimension_numbers = #tpu.dot_dimension_numbers<[2], [2], [1], [1], [0, 0, 0, 1, 1, 1], [0], [0]>} : vector<4x8x8xf32>, vector<4x8x8xf32>, vector<4x8x8xf32> -> vector<4x8x8xf32>
    "tpu.trace_stop"() : () -> ()
    %cst_149 = arith.constant 0.353553385 : f32
    %152 = vector.broadcast %cst_149 : f32 to vector<4x8x8xf32>
    %153 = arith.mulf %151, %152 : vector<4x8x8xf32>
    %154 = vector.extract_strided_slice %25 {offsets = [0, 0, 0], sizes = [1, 1, 8], strides = [1, 1, 1]} : vector<2x1x8xf32> to vector<1x1x8xf32>
    %155 = vector.shape_cast %154 : vector<1x1x8xf32> to vector<1x8xf32>
    %156 = vector.shape_cast %155 : vector<1x8xf32> to vector<1x1x8xf32>
    %157 = vector.broadcast %156 : vector<1x1x8xf32> to vector<4x8x8xf32>
    %158 = arith.addf %153, %157 : vector<4x8x8xf32>
    %cst_150 = arith.constant dense<0xFF800000> : vector<4x8xf32>
    %159 = vector.multi_reduction <maximumf>, %158, %cst_150 [2] : vector<4x8x8xf32> to vector<4x8xf32>
    %160 = vector.shape_cast %159 : vector<4x8xf32> to vector<4x8x1xf32>
    %161 = vector.broadcast %160 : vector<4x8x1xf32> to vector<4x8x8xf32>
    %162 = arith.subf %158, %161 : vector<4x8x8xf32>
    %163 = math.exp %162 : vector<4x8x8xf32>
    %cst_151 = arith.constant dense<0.000000e+00> : vector<4x8xf32>
    %164 = vector.multi_reduction <add>, %163, %cst_151 [2] : vector<4x8x8xf32> to vector<4x8xf32>
    %165 = vector.shape_cast %164 : vector<4x8xf32> to vector<4x8x1xf32>
    %166 = vector.broadcast %165 : vector<4x8x1xf32> to vector<4x8x8xf32>
    %167 = arith.divf %163, %166 : vector<4x8x8xf32>
    "tpu.trace_start"() <{level = 10 : i32, message = "hqk,hkd->hqd"}> : () -> ()
    %cst_152 = arith.constant dense<0.000000e+00> : vector<4x8x8xf32>
    %168 = tpu.matmul %167, %150, %cst_152 {dimension_numbers = #tpu.dot_dimension_numbers<[2], [1], [1], [2], [0, 0, 0, 1, 1, 2], [0], [0]>} : vector<4x8x8xf32>, vector<4x8x8xf32>, vector<4x8x8xf32> -> vector<4x8x8xf32>
    "tpu.trace_stop"() : () -> ()
    "tpu.trace_start"() <{level = 10 : i32, message = "hqd,hdo->hqo"}> : () -> ()
    %cst_153 = arith.constant dense<0.000000e+00> : vector<4x8x32xf32>
    %169 = tpu.matmul %168, %144, %cst_153 {dimension_numbers = #tpu.dot_dimension_numbers<[2], [1], [1], [2], [0, 0, 0, 1, 1, 2], [0], [0]>} : vector<4x8x8xf32>, vector<4x8x32xf32>, vector<4x8x32xf32> -> vector<4x8x32xf32>
    "tpu.trace_stop"() : () -> ()
    %170 = vector.extract_strided_slice %169 {offsets = [0, 0, 0], sizes = [1, 8, 32], strides = [1, 1, 1]} : vector<4x8x32xf32> to vector<1x8x32xf32>
    %171 = vector.shape_cast %170 : vector<1x8x32xf32> to vector<8x32xf32>
    %172 = vector.extract_strided_slice %169 {offsets = [1, 0, 0], sizes = [1, 8, 32], strides = [1, 1, 1]} : vector<4x8x32xf32> to vector<1x8x32xf32>
    %173 = vector.shape_cast %172 : vector<1x8x32xf32> to vector<8x32xf32>
    %174 = arith.addf %171, %173 : vector<8x32xf32>
    %175 = vector.extract_strided_slice %169 {offsets = [2, 0, 0], sizes = [1, 8, 32], strides = [1, 1, 1]} : vector<4x8x32xf32> to vector<1x8x32xf32>
    %176 = vector.shape_cast %175 : vector<1x8x32xf32> to vector<8x32xf32>
    %177 = arith.addf %174, %176 : vector<8x32xf32>
    %178 = vector.extract_strided_slice %169 {offsets = [3, 0, 0], sizes = [1, 8, 32], strides = [1, 1, 1]} : vector<4x8x32xf32> to vector<1x8x32xf32>
    %179 = vector.shape_cast %178 : vector<1x8x32xf32> to vector<8x32xf32>
    %180 = arith.addf %177, %179 : vector<8x32xf32>
    %c0_154 = arith.constant 0 : index
    %c0_155 = arith.constant 0 : index
    %181 = vector.load %arg25[%c0_154, %c0_155] : memref<16x32xf32, #tpu.memory_space<vmem>>, vector<8x32xf32>
    tpu.vector_store %arg25[%c0_154, %c0_155], %180 {strides = array<i32>} : memref<16x32xf32, #tpu.memory_space<vmem>>, vector<8x32xf32>,
    %c1_156 = arith.constant 1 : index
    %c0_157 = arith.constant 0 : index
    %c0_158 = arith.constant 0 : index
    %c0_159 = arith.constant 0 : index
    %182 = vector.load %arg22[%c1_156, %c0_157, %c0_158, %c0_159] : memref<2x4x8x8xf32, #tpu.memory_space<vmem>>, vector<1x4x8x8xf32>
    %183 = vector.shape_cast %182 : vector<1x4x8x8xf32> to vector<4x8x8xf32>
    %c1_160 = arith.constant 1 : index
    %c0_161 = arith.constant 0 : index
    %c0_162 = arith.constant 0 : index
    %c0_163 = arith.constant 0 : index
    %184 = vector.load %arg23[%c1_160, %c0_161, %c0_162, %c0_163] : memref<2x4x8x8xf32, #tpu.memory_space<vmem>>, vector<1x4x8x8xf32>
    %185 = vector.shape_cast %184 : vector<1x4x8x8xf32> to vector<4x8x8xf32>
    %c1_164 = arith.constant 1 : index
    %c0_165 = arith.constant 0 : index
    %c0_166 = arith.constant 0 : index
    %c0_167 = arith.constant 0 : index
    %186 = vector.load %arg24[%c1_164, %c0_165, %c0_166, %c0_167] : memref<2x4x8x8xf32, #tpu.memory_space<vmem>>, vector<1x4x8x8xf32>
    %187 = vector.shape_cast %186 : vector<1x4x8x8xf32> to vector<4x8x8xf32>
    "tpu.trace_start"() <{level = 10 : i32, message = "hqd,hkd->hqk"}> : () -> ()
    %cst_168 = arith.constant dense<0.000000e+00> : vector<4x8x8xf32>
    %188 = tpu.matmul %183, %185, %cst_168 {dimension_numbers = #tpu.dot_dimension_numbers<[2], [2], [1], [1], [0, 0, 0, 1, 1, 1], [0], [0]>} : vector<4x8x8xf32>, vector<4x8x8xf32>, vector<4x8x8xf32> -> vector<4x8x8xf32>
    "tpu.trace_stop"() : () -> ()
    %cst_169 = arith.constant 0.353553385 : f32
    %189 = vector.broadcast %cst_169 : f32 to vector<4x8x8xf32>
    %190 = arith.mulf %188, %189 : vector<4x8x8xf32>
    %191 = vector.extract_strided_slice %25 {offsets = [1, 0, 0], sizes = [1, 1, 8], strides = [1, 1, 1]} : vector<2x1x8xf32> to vector<1x1x8xf32>
    %192 = vector.shape_cast %191 : vector<1x1x8xf32> to vector<1x8xf32>
    %193 = vector.shape_cast %192 : vector<1x8xf32> to vector<1x1x8xf32>
    %194 = vector.broadcast %193 : vector<1x1x8xf32> to vector<4x8x8xf32>
    %195 = arith.addf %190, %194 : vector<4x8x8xf32>
    %cst_170 = arith.constant dense<0xFF800000> : vector<4x8xf32>
    %196 = vector.multi_reduction <maximumf>, %195, %cst_170 [2] : vector<4x8x8xf32> to vector<4x8xf32>
    %197 = vector.shape_cast %196 : vector<4x8xf32> to vector<4x8x1xf32>
    %198 = vector.broadcast %197 : vector<4x8x1xf32> to vector<4x8x8xf32>
    %199 = arith.subf %195, %198 : vector<4x8x8xf32>
    %200 = math.exp %199 : vector<4x8x8xf32>
    %cst_171 = arith.constant dense<0.000000e+00> : vector<4x8xf32>
    %201 = vector.multi_reduction <add>, %200, %cst_171 [2] : vector<4x8x8xf32> to vector<4x8xf32>
    %202 = vector.shape_cast %201 : vector<4x8xf32> to vector<4x8x1xf32>
    %203 = vector.broadcast %202 : vector<4x8x1xf32> to vector<4x8x8xf32>
    %204 = arith.divf %200, %203 : vector<4x8x8xf32>
    "tpu.trace_start"() <{level = 10 : i32, message = "hqk,hkd->hqd"}> : () -> ()
    %cst_172 = arith.constant dense<0.000000e+00> : vector<4x8x8xf32>
    %205 = tpu.matmul %204, %187, %cst_172 {dimension_numbers = #tpu.dot_dimension_numbers<[2], [1], [1], [2], [0, 0, 0, 1, 1, 2], [0], [0]>} : vector<4x8x8xf32>, vector<4x8x8xf32>, vector<4x8x8xf32> -> vector<4x8x8xf32>
    "tpu.trace_stop"() : () -> ()
    "tpu.trace_start"() <{level = 10 : i32, message = "hqd,hdo->hqo"}> : () -> ()
    %cst_173 = arith.constant dense<0.000000e+00> : vector<4x8x32xf32>
    %206 = tpu.matmul %205, %144, %cst_173 {dimension_numbers = #tpu.dot_dimension_numbers<[2], [1], [1], [2], [0, 0, 0, 1, 1, 2], [0], [0]>} : vector<4x8x8xf32>, vector<4x8x32xf32>, vector<4x8x32xf32> -> vector<4x8x32xf32>
    "tpu.trace_stop"() : () -> ()
    %207 = vector.extract_strided_slice %206 {offsets = [0, 0, 0], sizes = [1, 8, 32], strides = [1, 1, 1]} : vector<4x8x32xf32> to vector<1x8x32xf32>
    %208 = vector.shape_cast %207 : vector<1x8x32xf32> to vector<8x32xf32>
    %209 = vector.extract_strided_slice %206 {offsets = [1, 0, 0], sizes = [1, 8, 32], strides = [1, 1, 1]} : vector<4x8x32xf32> to vector<1x8x32xf32>
    %210 = vector.shape_cast %209 : vector<1x8x32xf32> to vector<8x32xf32>
    %211 = arith.addf %208, %210 : vector<8x32xf32>
    %212 = vector.extract_strided_slice %206 {offsets = [2, 0, 0], sizes = [1, 8, 32], strides = [1, 1, 1]} : vector<4x8x32xf32> to vector<1x8x32xf32>
    %213 = vector.shape_cast %212 : vector<1x8x32xf32> to vector<8x32xf32>
    %214 = arith.addf %211, %213 : vector<8x32xf32>
    %215 = vector.extract_strided_slice %206 {offsets = [3, 0, 0], sizes = [1, 8, 32], strides = [1, 1, 1]} : vector<4x8x32xf32> to vector<1x8x32xf32>
    %216 = vector.shape_cast %215 : vector<1x8x32xf32> to vector<8x32xf32>
    %217 = arith.addf %214, %216 : vector<8x32xf32>
    %c8 = arith.constant 8 : index
    %c0_174 = arith.constant 0 : index
    %218 = vector.load %arg25[%c8, %c0_174] : memref<16x32xf32, #tpu.memory_space<vmem>>, vector<8x32xf32>
    tpu.vector_store %arg25[%c8, %c0_174], %217 {strides = array<i32>} : memref<16x32xf32, #tpu.memory_space<vmem>>, vector<8x32xf32>,
    %c0_175 = arith.constant 0 : index
    %c0_176 = arith.constant 0 : index
    %219 = vector.load %arg25[%c0_175, %c0_176] : memref<16x32xf32, #tpu.memory_space<vmem>>, vector<16x32xf32>
    %220 = arith.addf %24, %219 : vector<16x32xf32>
    %c0_177 = arith.constant 0 : index
    %c0_178 = arith.constant 0 : index
    %c0_179 = arith.constant 0 : index
    %221 = vector.load %arg9[%c0_177, %c0_178, %c0_179] : memref<2x1x32xf32, #tpu.memory_space<vmem>>, vector<1x1x32xf32>
    %222 = vector.shape_cast %221 : vector<1x1x32xf32> to vector<1x32xf32>
    %223 = vector.broadcast %222 : vector<1x32xf32> to vector<16x32xf32>
    %224 = arith.addf %220, %223 : vector<16x32xf32>
    %c0_180 = arith.constant 0 : index
    %c0_181 = arith.constant 0 : index
    %c0_182 = arith.constant 0 : index
    %225 = vector.load %arg10[%c0_180, %c0_181, %c0_182] : memref<2x1x32xf32, #tpu.memory_space<vmem>>, vector<1x1x32xf32>
    %226 = vector.shape_cast %225 : vector<1x1x32xf32> to vector<1x32xf32>
    %c0_183 = arith.constant 0 : index
    %c0_184 = arith.constant 0 : index
    %c0_185 = arith.constant 0 : index
    %227 = vector.load %arg11[%c0_183, %c0_184, %c0_185] : memref<2x1x32xf32, #tpu.memory_space<vmem>>, vector<1x1x32xf32>
    %228 = vector.shape_cast %227 : vector<1x1x32xf32> to vector<1x32xf32>
    %cst_186 = arith.constant dense<0.000000e+00> : vector<16xf32>
    %229 = vector.multi_reduction <add>, %224, %cst_186 [1] : vector<16x32xf32> to vector<16xf32>
    %230 = vector.shape_cast %229 : vector<16xf32> to vector<16x1xf32>
    %cst_187 = arith.constant 3.200000e+01 : f32
    %231 = vector.broadcast %cst_187 : f32 to vector<16x1xf32>
    %232 = arith.divf %230, %231 : vector<16x1xf32>
    %233 = vector.broadcast %232 : vector<16x1xf32> to vector<16x32xf32>
    %234 = arith.subf %224, %233 : vector<16x32xf32>
    %235 = arith.mulf %234, %234 : vector<16x32xf32>
    %cst_188 = arith.constant dense<0.000000e+00> : vector<16xf32>
    %236 = vector.multi_reduction <add>, %235, %cst_188 [1] : vector<16x32xf32> to vector<16xf32>
    %237 = vector.shape_cast %236 : vector<16xf32> to vector<16x1xf32>
    %cst_189 = arith.constant 3.200000e+01 : f32
    %238 = vector.broadcast %cst_189 : f32 to vector<16x1xf32>
    %239 = arith.divf %237, %238 : vector<16x1xf32>
    %240 = vector.broadcast %232 : vector<16x1xf32> to vector<16x32xf32>
    %241 = arith.subf %224, %240 : vector<16x32xf32>
    %cst_190 = arith.constant 9.99999996E-13 : f32
    %242 = vector.broadcast %cst_190 : f32 to vector<16x1xf32>
    %243 = arith.addf %239, %242 : vector<16x1xf32>
    %244 = math.rsqrt %243 : vector<16x1xf32>
    %245 = vector.broadcast %244 : vector<16x1xf32> to vector<16x32xf32>
    %246 = arith.mulf %241, %245 : vector<16x32xf32>
    %247 = vector.broadcast %226 : vector<1x32xf32> to vector<16x32xf32>
    %248 = arith.mulf %246, %247 : vector<16x32xf32>
    %249 = vector.broadcast %228 : vector<1x32xf32> to vector<16x32xf32>
    %250 = arith.addf %248, %249 : vector<16x32xf32>
    %c0_191 = arith.constant 0 : index
    %c0_192 = arith.constant 0 : index
    %c0_193 = arith.constant 0 : index
    %251 = vector.load %arg12[%c0_191, %c0_192, %c0_193] : memref<2x32x64xf32, #tpu.memory_space<vmem>>, vector<1x32x64xf32>
    %252 = vector.shape_cast %251 : vector<1x32x64xf32> to vector<32x64xf32>
    %cst_194 = arith.constant dense<0.000000e+00> : vector<16x64xf32>
    %253 = tpu.matmul %250, %252, %cst_194 {dimension_numbers = #tpu.dot_dimension_numbers<[1], [0], [0], [1], [0, 0, 1, 1], [], []>} : vector<16x32xf32>, vector<32x64xf32>, vector<16x64xf32> -> vector<16x64xf32>
    %c0_195 = arith.constant 0 : index
    %c0_196 = arith.constant 0 : index
    %c0_197 = arith.constant 0 : index
    %254 = vector.load %arg13[%c0_195, %c0_196, %c0_197] : memref<2x1x64xf32, #tpu.memory_space<vmem>>, vector<1x1x64xf32>
    %255 = vector.shape_cast %254 : vector<1x1x64xf32> to vector<1x64xf32>
    %256 = vector.broadcast %255 : vector<1x64xf32> to vector<16x64xf32>
    %257 = arith.addf %253, %256 : vector<16x64xf32>
    %258 = arith.mulf %257, %257 : vector<16x64xf32>
    %259 = arith.mulf %257, %258 : vector<16x64xf32>
    %cst_198 = arith.constant 4.471500e-02 : f32
    %260 = vector.broadcast %cst_198 : f32 to vector<16x64xf32>
    %261 = arith.mulf %260, %259 : vector<16x64xf32>
    %262 = arith.addf %257, %261 : vector<16x64xf32>
    %cst_199 = arith.constant 0.797884583 : f32
    %263 = vector.broadcast %cst_199 : f32 to vector<16x64xf32>
    %264 = arith.mulf %263, %262 : vector<16x64xf32>
    %265 = math.tanh %264 : vector<16x64xf32>
    %cst_200 = arith.constant 1.000000e+00 : f32
    %266 = vector.broadcast %cst_200 : f32 to vector<16x64xf32>
    %267 = arith.addf %266, %265 : vector<16x64xf32>
    %cst_201 = arith.constant 5.000000e-01 : f32
    %268 = vector.broadcast %cst_201 : f32 to vector<16x64xf32>
    %269 = arith.mulf %268, %267 : vector<16x64xf32>
    %270 = arith.mulf %257, %269 : vector<16x64xf32>
    %c0_202 = arith.constant 0 : index
    %c0_203 = arith.constant 0 : index
    %c0_204 = arith.constant 0 : index
    %271 = vector.load %arg14[%c0_202, %c0_203, %c0_204] : memref<2x64x32xf32, #tpu.memory_space<vmem>>, vector<1x64x32xf32>
    %272 = vector.shape_cast %271 : vector<1x64x32xf32> to vector<64x32xf32>
    %cst_205 = arith.constant dense<0.000000e+00> : vector<16x32xf32>
    %273 = tpu.matmul %270, %272, %cst_205 {dimension_numbers = #tpu.dot_dimension_numbers<[1], [0], [0], [1], [0, 0, 1, 1], [], []>} : vector<16x64xf32>, vector<64x32xf32>, vector<16x32xf32> -> vector<16x32xf32>
    %c0_206 = arith.constant 0 : index
    %c0_207 = arith.constant 0 : index
    %c0_208 = arith.constant 0 : index
    %274 = vector.load %arg15[%c0_206, %c0_207, %c0_208] : memref<2x1x32xf32, #tpu.memory_space<vmem>>, vector<1x1x32xf32>
    %275 = vector.shape_cast %274 : vector<1x1x32xf32> to vector<1x32xf32>
    %276 = vector.broadcast %275 : vector<1x32xf32> to vector<16x32xf32>
    %277 = arith.addf %273, %276 : vector<16x32xf32>
    %278 = arith.addf %250, %277 : vector<16x32xf32>
    %c0_209 = arith.constant 0 : index
    %c0_210 = arith.constant 0 : index
    %c0_211 = arith.constant 0 : index
    %279 = vector.load %arg16[%c0_209, %c0_210, %c0_211] : memref<2x1x32xf32, #tpu.memory_space<vmem>>, vector<1x1x32xf32>
    %280 = vector.shape_cast %279 : vector<1x1x32xf32> to vector<1x32xf32>
    %c0_212 = arith.constant 0 : index
    %c0_213 = arith.constant 0 : index
    %c0_214 = arith.constant 0 : index
    %281 = vector.load %arg17[%c0_212, %c0_213, %c0_214] : memref<2x1x32xf32, #tpu.memory_space<vmem>>, vector<1x1x32xf32>
    %282 = vector.shape_cast %281 : vector<1x1x32xf32> to vector<1x32xf32>
    %cst_215 = arith.constant dense<0.000000e+00> : vector<16xf32>
    %283 = vector.multi_reduction <add>, %278, %cst_215 [1] : vector<16x32xf32> to vector<16xf32>
    %284 = vector.shape_cast %283 : vector<16xf32> to vector<16x1xf32>
    %cst_216 = arith.constant 3.200000e+01 : f32
    %285 = vector.broadcast %cst_216 : f32 to vector<16x1xf32>
    %286 = arith.divf %284, %285 : vector<16x1xf32>
    %287 = vector.broadcast %286 : vector<16x1xf32> to vector<16x32xf32>
    %288 = arith.subf %278, %287 : vector<16x32xf32>
    %289 = arith.mulf %288, %288 : vector<16x32xf32>
    %cst_217 = arith.constant dense<0.000000e+00> : vector<16xf32>
    %290 = vector.multi_reduction <add>, %289, %cst_217 [1] : vector<16x32xf32> to vector<16xf32>
    %291 = vector.shape_cast %290 : vector<16xf32> to vector<16x1xf32>
    %cst_218 = arith.constant 3.200000e+01 : f32
    %292 = vector.broadcast %cst_218 : f32 to vector<16x1xf32>
    %293 = arith.divf %291, %292 : vector<16x1xf32>
    %294 = vector.broadcast %286 : vector<16x1xf32> to vector<16x32xf32>
    %295 = arith.subf %278, %294 : vector<16x32xf32>
    %cst_219 = arith.constant 9.99999996E-13 : f32
    %296 = vector.broadcast %cst_219 : f32 to vector<16x1xf32>
    %297 = arith.addf %293, %296 : vector<16x1xf32>
    %298 = math.rsqrt %297 : vector<16x1xf32>
    %299 = vector.broadcast %298 : vector<16x1xf32> to vector<16x32xf32>
    %300 = arith.mulf %295, %299 : vector<16x32xf32>
    %301 = vector.broadcast %280 : vector<1x32xf32> to vector<16x32xf32>
    %302 = arith.mulf %300, %301 : vector<16x32xf32>
    %303 = vector.broadcast %282 : vector<1x32xf32> to vector<16x32xf32>
    %304 = arith.addf %302, %303 : vector<16x32xf32>
    %c1_220 = arith.constant 1 : index
    %c0_221 = arith.constant 0 : index
    %c0_222 = arith.constant 0 : index
    %c0_223 = arith.constant 0 : index
    %305 = vector.load %arg6[%c1_220, %c0_221, %c0_222, %c0_223] : memref<2x3x32x32xf32, #tpu.memory_space<vmem>>, vector<1x1x32x32xf32>
    %306 = vector.shape_cast %305 : vector<1x1x32x32xf32> to vector<32x32xf32>
    %cst_224 = arith.constant dense<0.000000e+00> : vector<16x32xf32>
    %307 = tpu.matmul %304, %306, %cst_224 {dimension_numbers = #tpu.dot_dimension_numbers<[1], [0], [0], [1], [0, 0, 1, 1], [], []>} : vector<16x32xf32>, vector<32x32xf32>, vector<16x32xf32> -> vector<16x32xf32>
    %c1_225 = arith.constant 1 : index
    %c0_226 = arith.constant 0 : index
    %c0_227 = arith.constant 0 : index
    %c0_228 = arith.constant 0 : index
    %308 = vector.load %arg7[%c1_225, %c0_226, %c0_227, %c0_228] : memref<2x3x1x32xf32, #tpu.memory_space<vmem>>, vector<1x1x1x32xf32>
    %309 = vector.shape_cast %308 : vector<1x1x1x32xf32> to vector<1x32xf32>
    %310 = vector.broadcast %309 : vector<1x32xf32> to vector<16x32xf32>
    %311 = arith.addf %307, %310 : vector<16x32xf32>
    %c1_229 = arith.constant 1 : index
    %c1_230 = arith.constant 1 : index
    %c0_231 = arith.constant 0 : index
    %c0_232 = arith.constant 0 : index
    %312 = vector.load %arg6[%c1_229, %c1_230, %c0_231, %c0_232] : memref<2x3x32x32xf32, #tpu.memory_space<vmem>>, vector<1x1x32x32xf32>
    %313 = vector.shape_cast %312 : vector<1x1x32x32xf32> to vector<32x32xf32>
    %cst_233 = arith.constant dense<0.000000e+00> : vector<16x32xf32>
    %314 = tpu.matmul %304, %313, %cst_233 {dimension_numbers = #tpu.dot_dimension_numbers<[1], [0], [0], [1], [0, 0, 1, 1], [], []>} : vector<16x32xf32>, vector<32x32xf32>, vector<16x32xf32> -> vector<16x32xf32>
    %c1_234 = arith.constant 1 : index
    %c1_235 = arith.constant 1 : index
    %c0_236 = arith.constant 0 : index
    %c0_237 = arith.constant 0 : index
    %315 = vector.load %arg7[%c1_234, %c1_235, %c0_236, %c0_237] : memref<2x3x1x32xf32, #tpu.memory_space<vmem>>, vector<1x1x1x32xf32>
    %316 = vector.shape_cast %315 : vector<1x1x1x32xf32> to vector<1x32xf32>
    %317 = vector.broadcast %316 : vector<1x32xf32> to vector<16x32xf32>
    %318 = arith.addf %314, %317 : vector<16x32xf32>
    %c1_238 = arith.constant 1 : index
    %c2_239 = arith.constant 2 : index
    %c0_240 = arith.constant 0 : index
    %c0_241 = arith.constant 0 : index
    %319 = vector.load %arg6[%c1_238, %c2_239, %c0_240, %c0_241] : memref<2x3x32x32xf32, #tpu.memory_space<vmem>>, vector<1x1x32x32xf32>
    %320 = vector.shape_cast %319 : vector<1x1x32x32xf32> to vector<32x32xf32>
    %cst_242 = arith.constant dense<0.000000e+00> : vector<16x32xf32>
    %321 = tpu.matmul %304, %320, %cst_242 {dimension_numbers = #tpu.dot_dimension_numbers<[1], [0], [0], [1], [0, 0, 1, 1], [], []>} : vector<16x32xf32>, vector<32x32xf32>, vector<16x32xf32> -> vector<16x32xf32>
    %c1_243 = arith.constant 1 : index
    %c2_244 = arith.constant 2 : index
    %c0_245 = arith.constant 0 : index
    %c0_246 = arith.constant 0 : index
    %322 = vector.load %arg7[%c1_243, %c2_244, %c0_245, %c0_246] : memref<2x3x1x32xf32, #tpu.memory_space<vmem>>, vector<1x1x1x32xf32>
    %323 = vector.shape_cast %322 : vector<1x1x1x32xf32> to vector<1x32xf32>
    %324 = vector.broadcast %323 : vector<1x32xf32> to vector<16x32xf32>
    %325 = arith.addf %321, %324 : vector<16x32xf32>
    %326 = vector.extract_strided_slice %311 {offsets = [0, 0], sizes = [8, 8], strides = [1, 1]} : vector<16x32xf32> to vector<8x8xf32>
    %c0_247 = arith.constant 0 : index
    %c0_248 = arith.constant 0 : index
    %c0_249 = arith.constant 0 : index
    %c0_250 = arith.constant 0 : index
    %327 = vector.load %arg22[%c0_247, %c0_248, %c0_249, %c0_250] : memref<2x4x8x8xf32, #tpu.memory_space<vmem>>, vector<1x1x8x8xf32>
    %328 = vector.shape_cast %327 : vector<1x1x8x8xf32> to vector<8x8xf32>
    %329 = vector.shape_cast %326 : vector<8x8xf32> to vector<1x1x8x8xf32>
    tpu.vector_store %arg22[%c0_247, %c0_248, %c0_249, %c0_250], %329 {strides = array<i32>} : memref<2x4x8x8xf32, #tpu.memory_space<vmem>>, vector<1x1x8x8xf32>,
    %330 = vector.extract_strided_slice %318 {offsets = [0, 0], sizes = [8, 8], strides = [1, 1]} : vector<16x32xf32> to vector<8x8xf32>
    %c0_251 = arith.constant 0 : index
    %c0_252 = arith.constant 0 : index
    %c0_253 = arith.constant 0 : index
    %c0_254 = arith.constant 0 : index
    %331 = vector.load %arg23[%c0_251, %c0_252, %c0_253, %c0_254] : memref<2x4x8x8xf32, #tpu.memory_space<vmem>>, vector<1x1x8x8xf32>
    %332 = vector.shape_cast %331 : vector<1x1x8x8xf32> to vector<8x8xf32>
    %333 = vector.shape_cast %330 : vector<8x8xf32> to vector<1x1x8x8xf32>
    tpu.vector_store %arg23[%c0_251, %c0_252, %c0_253, %c0_254], %333 {strides = array<i32>} : memref<2x4x8x8xf32, #tpu.memory_space<vmem>>, vector<1x1x8x8xf32>,
    %334 = vector.extract_strided_slice %325 {offsets = [0, 0], sizes = [8, 8], strides = [1, 1]} : vector<16x32xf32> to vector<8x8xf32>
    %c0_255 = arith.constant 0 : index
    %c0_256 = arith.constant 0 : index
    %c0_257 = arith.constant 0 : index
    %c0_258 = arith.constant 0 : index
    %335 = vector.load %arg24[%c0_255, %c0_256, %c0_257, %c0_258] : memref<2x4x8x8xf32, #tpu.memory_space<vmem>>, vector<1x1x8x8xf32>
    %336 = vector.shape_cast %335 : vector<1x1x8x8xf32> to vector<8x8xf32>
    %337 = vector.shape_cast %334 : vector<8x8xf32> to vector<1x1x8x8xf32>
    tpu.vector_store %arg24[%c0_255, %c0_256, %c0_257, %c0_258], %337 {strides = array<i32>} : memref<2x4x8x8xf32, #tpu.memory_space<vmem>>, vector<1x1x8x8xf32>,
    %338 = vector.extract_strided_slice %311 {offsets = [0, 8], sizes = [8, 8], strides = [1, 1]} : vector<16x32xf32> to vector<8x8xf32>
    %c0_259 = arith.constant 0 : index
    %c1_260 = arith.constant 1 : index
    %c0_261 = arith.constant 0 : index
    %c0_262 = arith.constant 0 : index
    %339 = vector.load %arg22[%c0_259, %c1_260, %c0_261, %c0_262] : memref<2x4x8x8xf32, #tpu.memory_space<vmem>>, vector<1x1x8x8xf32>
    %340 = vector.shape_cast %339 : vector<1x1x8x8xf32> to vector<8x8xf32>
    %341 = vector.shape_cast %338 : vector<8x8xf32> to vector<1x1x8x8xf32>
    tpu.vector_store %arg22[%c0_259, %c1_260, %c0_261, %c0_262], %341 {strides = array<i32>} : memref<2x4x8x8xf32, #tpu.memory_space<vmem>>, vector<1x1x8x8xf32>,
    %342 = vector.extract_strided_slice %318 {offsets = [0, 8], sizes = [8, 8], strides = [1, 1]} : vector<16x32xf32> to vector<8x8xf32>
    %c0_263 = arith.constant 0 : index
    %c1_264 = arith.constant 1 : index
    %c0_265 = arith.constant 0 : index
    %c0_266 = arith.constant 0 : index
    %343 = vector.load %arg23[%c0_263, %c1_264, %c0_265, %c0_266] : memref<2x4x8x8xf32, #tpu.memory_space<vmem>>, vector<1x1x8x8xf32>
    %344 = vector.shape_cast %343 : vector<1x1x8x8xf32> to vector<8x8xf32>
    %345 = vector.shape_cast %342 : vector<8x8xf32> to vector<1x1x8x8xf32>
    tpu.vector_store %arg23[%c0_263, %c1_264, %c0_265, %c0_266], %345 {strides = array<i32>} : memref<2x4x8x8xf32, #tpu.memory_space<vmem>>, vector<1x1x8x8xf32>,
    %346 = vector.extract_strided_slice %325 {offsets = [0, 8], sizes = [8, 8], strides = [1, 1]} : vector<16x32xf32> to vector<8x8xf32>
    %c0_267 = arith.constant 0 : index
    %c1_268 = arith.constant 1 : index
    %c0_269 = arith.constant 0 : index
    %c0_270 = arith.constant 0 : index
    %347 = vector.load %arg24[%c0_267, %c1_268, %c0_269, %c0_270] : memref<2x4x8x8xf32, #tpu.memory_space<vmem>>, vector<1x1x8x8xf32>
    %348 = vector.shape_cast %347 : vector<1x1x8x8xf32> to vector<8x8xf32>
    %349 = vector.shape_cast %346 : vector<8x8xf32> to vector<1x1x8x8xf32>
    tpu.vector_store %arg24[%c0_267, %c1_268, %c0_269, %c0_270], %349 {strides = array<i32>} : memref<2x4x8x8xf32, #tpu.memory_space<vmem>>, vector<1x1x8x8xf32>,
    %350 = vector.extract_strided_slice %311 {offsets = [0, 16], sizes = [8, 8], strides = [1, 1]} : vector<16x32xf32> to vector<8x8xf32>
    %c0_271 = arith.constant 0 : index
    %c2_272 = arith.constant 2 : index
    %c0_273 = arith.constant 0 : index
    %c0_274 = arith.constant 0 : index
    %351 = vector.load %arg22[%c0_271, %c2_272, %c0_273, %c0_274] : memref<2x4x8x8xf32, #tpu.memory_space<vmem>>, vector<1x1x8x8xf32>
    %352 = vector.shape_cast %351 : vector<1x1x8x8xf32> to vector<8x8xf32>
    %353 = vector.shape_cast %350 : vector<8x8xf32> to vector<1x1x8x8xf32>
    tpu.vector_store %arg22[%c0_271, %c2_272, %c0_273, %c0_274], %353 {strides = array<i32>} : memref<2x4x8x8xf32, #tpu.memory_space<vmem>>, vector<1x1x8x8xf32>,
    %354 = vector.extract_strided_slice %318 {offsets = [0, 16], sizes = [8, 8], strides = [1, 1]} : vector<16x32xf32> to vector<8x8xf32>
    %c0_275 = arith.constant 0 : index
    %c2_276 = arith.constant 2 : index
    %c0_277 = arith.constant 0 : index
    %c0_278 = arith.constant 0 : index
    %355 = vector.load %arg23[%c0_275, %c2_276, %c0_277, %c0_278] : memref<2x4x8x8xf32, #tpu.memory_space<vmem>>, vector<1x1x8x8xf32>
    %356 = vector.shape_cast %355 : vector<1x1x8x8xf32> to vector<8x8xf32>
    %357 = vector.shape_cast %354 : vector<8x8xf32> to vector<1x1x8x8xf32>
    tpu.vector_store %arg23[%c0_275, %c2_276, %c0_277, %c0_278], %357 {strides = array<i32>} : memref<2x4x8x8xf32, #tpu.memory_space<vmem>>, vector<1x1x8x8xf32>,
    %358 = vector.extract_strided_slice %325 {offsets = [0, 16], sizes = [8, 8], strides = [1, 1]} : vector<16x32xf32> to vector<8x8xf32>
    %c0_279 = arith.constant 0 : index
    %c2_280 = arith.constant 2 : index
    %c0_281 = arith.constant 0 : index
    %c0_282 = arith.constant 0 : index
    %359 = vector.load %arg24[%c0_279, %c2_280, %c0_281, %c0_282] : memref<2x4x8x8xf32, #tpu.memory_space<vmem>>, vector<1x1x8x8xf32>
    %360 = vector.shape_cast %359 : vector<1x1x8x8xf32> to vector<8x8xf32>
    %361 = vector.shape_cast %358 : vector<8x8xf32> to vector<1x1x8x8xf32>
    tpu.vector_store %arg24[%c0_279, %c2_280, %c0_281, %c0_282], %361 {strides = array<i32>} : memref<2x4x8x8xf32, #tpu.memory_space<vmem>>, vector<1x1x8x8xf32>,
    %362 = vector.extract_strided_slice %311 {offsets = [0, 24], sizes = [8, 8], strides = [1, 1]} : vector<16x32xf32> to vector<8x8xf32>
    %c0_283 = arith.constant 0 : index
    %c3_284 = arith.constant 3 : index
    %c0_285 = arith.constant 0 : index
    %c0_286 = arith.constant 0 : index
    %363 = vector.load %arg22[%c0_283, %c3_284, %c0_285, %c0_286] : memref<2x4x8x8xf32, #tpu.memory_space<vmem>>, vector<1x1x8x8xf32>
    %364 = vector.shape_cast %363 : vector<1x1x8x8xf32> to vector<8x8xf32>
    %365 = vector.shape_cast %362 : vector<8x8xf32> to vector<1x1x8x8xf32>
    tpu.vector_store %arg22[%c0_283, %c3_284, %c0_285, %c0_286], %365 {strides = array<i32>} : memref<2x4x8x8xf32, #tpu.memory_space<vmem>>, vector<1x1x8x8xf32>,
    %366 = vector.extract_strided_slice %318 {offsets = [0, 24], sizes = [8, 8], strides = [1, 1]} : vector<16x32xf32> to vector<8x8xf32>
    %c0_287 = arith.constant 0 : index
    %c3_288 = arith.constant 3 : index
    %c0_289 = arith.constant 0 : index
    %c0_290 = arith.constant 0 : index
    %367 = vector.load %arg23[%c0_287, %c3_288, %c0_289, %c0_290] : memref<2x4x8x8xf32, #tpu.memory_space<vmem>>, vector<1x1x8x8xf32>
    %368 = vector.shape_cast %367 : vector<1x1x8x8xf32> to vector<8x8xf32>
    %369 = vector.shape_cast %366 : vector<8x8xf32> to vector<1x1x8x8xf32>
    tpu.vector_store %arg23[%c0_287, %c3_288, %c0_289, %c0_290], %369 {strides = array<i32>} : memref<2x4x8x8xf32, #tpu.memory_space<vmem>>, vector<1x1x8x8xf32>,
    %370 = vector.extract_strided_slice %325 {offsets = [0, 24], sizes = [8, 8], strides = [1, 1]} : vector<16x32xf32> to vector<8x8xf32>
    %c0_291 = arith.constant 0 : index
    %c3_292 = arith.constant 3 : index
    %c0_293 = arith.constant 0 : index
    %c0_294 = arith.constant 0 : index
    %371 = vector.load %arg24[%c0_291, %c3_292, %c0_293, %c0_294] : memref<2x4x8x8xf32, #tpu.memory_space<vmem>>, vector<1x1x8x8xf32>
    %372 = vector.shape_cast %371 : vector<1x1x8x8xf32> to vector<8x8xf32>
    %373 = vector.shape_cast %370 : vector<8x8xf32> to vector<1x1x8x8xf32>
    tpu.vector_store %arg24[%c0_291, %c3_292, %c0_293, %c0_294], %373 {strides = array<i32>} : memref<2x4x8x8xf32, #tpu.memory_space<vmem>>, vector<1x1x8x8xf32>,
    %374 = vector.extract_strided_slice %311 {offsets = [8, 0], sizes = [8, 8], strides = [1, 1]} : vector<16x32xf32> to vector<8x8xf32>
    %c1_295 = arith.constant 1 : index
    %c0_296 = arith.constant 0 : index
    %c0_297 = arith.constant 0 : index
    %c0_298 = arith.constant 0 : index
    %375 = vector.load %arg22[%c1_295, %c0_296, %c0_297, %c0_298] : memref<2x4x8x8xf32, #tpu.memory_space<vmem>>, vector<1x1x8x8xf32>
    %376 = vector.shape_cast %375 : vector<1x1x8x8xf32> to vector<8x8xf32>
    %377 = vector.shape_cast %374 : vector<8x8xf32> to vector<1x1x8x8xf32>
    tpu.vector_store %arg22[%c1_295, %c0_296, %c0_297, %c0_298], %377 {strides = array<i32>} : memref<2x4x8x8xf32, #tpu.memory_space<vmem>>, vector<1x1x8x8xf32>,
    %378 = vector.extract_strided_slice %318 {offsets = [8, 0], sizes = [8, 8], strides = [1, 1]} : vector<16x32xf32> to vector<8x8xf32>
    %c1_299 = arith.constant 1 : index
    %c0_300 = arith.constant 0 : index
    %c0_301 = arith.constant 0 : index
    %c0_302 = arith.constant 0 : index
    %379 = vector.load %arg23[%c1_299, %c0_300, %c0_301, %c0_302] : memref<2x4x8x8xf32, #tpu.memory_space<vmem>>, vector<1x1x8x8xf32>
    %380 = vector.shape_cast %379 : vector<1x1x8x8xf32> to vector<8x8xf32>
    %381 = vector.shape_cast %378 : vector<8x8xf32> to vector<1x1x8x8xf32>
    tpu.vector_store %arg23[%c1_299, %c0_300, %c0_301, %c0_302], %381 {strides = array<i32>} : memref<2x4x8x8xf32, #tpu.memory_space<vmem>>, vector<1x1x8x8xf32>,
    %382 = vector.extract_strided_slice %325 {offsets = [8, 0], sizes = [8, 8], strides = [1, 1]} : vector<16x32xf32> to vector<8x8xf32>
    %c1_303 = arith.constant 1 : index
    %c0_304 = arith.constant 0 : index
    %c0_305 = arith.constant 0 : index
    %c0_306 = arith.constant 0 : index
    %383 = vector.load %arg24[%c1_303, %c0_304, %c0_305, %c0_306] : memref<2x4x8x8xf32, #tpu.memory_space<vmem>>, vector<1x1x8x8xf32>
    %384 = vector.shape_cast %383 : vector<1x1x8x8xf32> to vector<8x8xf32>
    %385 = vector.shape_cast %382 : vector<8x8xf32> to vector<1x1x8x8xf32>
    tpu.vector_store %arg24[%c1_303, %c0_304, %c0_305, %c0_306], %385 {strides = array<i32>} : memref<2x4x8x8xf32, #tpu.memory_space<vmem>>, vector<1x1x8x8xf32>,
    %386 = vector.extract_strided_slice %311 {offsets = [8, 8], sizes = [8, 8], strides = [1, 1]} : vector<16x32xf32> to vector<8x8xf32>
    %c1_307 = arith.constant 1 : index
    %c1_308 = arith.constant 1 : index
    %c0_309 = arith.constant 0 : index
    %c0_310 = arith.constant 0 : index
    %387 = vector.load %arg22[%c1_307, %c1_308, %c0_309, %c0_310] : memref<2x4x8x8xf32, #tpu.memory_space<vmem>>, vector<1x1x8x8xf32>
    %388 = vector.shape_cast %387 : vector<1x1x8x8xf32> to vector<8x8xf32>
    %389 = vector.shape_cast %386 : vector<8x8xf32> to vector<1x1x8x8xf32>
    tpu.vector_store %arg22[%c1_307, %c1_308, %c0_309, %c0_310], %389 {strides = array<i32>} : memref<2x4x8x8xf32, #tpu.memory_space<vmem>>, vector<1x1x8x8xf32>,
    %390 = vector.extract_strided_slice %318 {offsets = [8, 8], sizes = [8, 8], strides = [1, 1]} : vector<16x32xf32> to vector<8x8xf32>
    %c1_311 = arith.constant 1 : index
    %c1_312 = arith.constant 1 : index
    %c0_313 = arith.constant 0 : index
    %c0_314 = arith.constant 0 : index
    %391 = vector.load %arg23[%c1_311, %c1_312, %c0_313, %c0_314] : memref<2x4x8x8xf32, #tpu.memory_space<vmem>>, vector<1x1x8x8xf32>
    %392 = vector.shape_cast %391 : vector<1x1x8x8xf32> to vector<8x8xf32>
    %393 = vector.shape_cast %390 : vector<8x8xf32> to vector<1x1x8x8xf32>
    tpu.vector_store %arg23[%c1_311, %c1_312, %c0_313, %c0_314], %393 {strides = array<i32>} : memref<2x4x8x8xf32, #tpu.memory_space<vmem>>, vector<1x1x8x8xf32>,
    %394 = vector.extract_strided_slice %325 {offsets = [8, 8], sizes = [8, 8], strides = [1, 1]} : vector<16x32xf32> to vector<8x8xf32>
    %c1_315 = arith.constant 1 : index
    %c1_316 = arith.constant 1 : index
    %c0_317 = arith.constant 0 : index
    %c0_318 = arith.constant 0 : index
    %395 = vector.load %arg24[%c1_315, %c1_316, %c0_317, %c0_318] : memref<2x4x8x8xf32, #tpu.memory_space<vmem>>, vector<1x1x8x8xf32>
    %396 = vector.shape_cast %395 : vector<1x1x8x8xf32> to vector<8x8xf32>
    %397 = vector.shape_cast %394 : vector<8x8xf32> to vector<1x1x8x8xf32>
    tpu.vector_store %arg24[%c1_315, %c1_316, %c0_317, %c0_318], %397 {strides = array<i32>} : memref<2x4x8x8xf32, #tpu.memory_space<vmem>>, vector<1x1x8x8xf32>,
    %398 = vector.extract_strided_slice %311 {offsets = [8, 16], sizes = [8, 8], strides = [1, 1]} : vector<16x32xf32> to vector<8x8xf32>
    %c1_319 = arith.constant 1 : index
    %c2_320 = arith.constant 2 : index
    %c0_321 = arith.constant 0 : index
    %c0_322 = arith.constant 0 : index
    %399 = vector.load %arg22[%c1_319, %c2_320, %c0_321, %c0_322] : memref<2x4x8x8xf32, #tpu.memory_space<vmem>>, vector<1x1x8x8xf32>
    %400 = vector.shape_cast %399 : vector<1x1x8x8xf32> to vector<8x8xf32>
    %401 = vector.shape_cast %398 : vector<8x8xf32> to vector<1x1x8x8xf32>
    tpu.vector_store %arg22[%c1_319, %c2_320, %c0_321, %c0_322], %401 {strides = array<i32>} : memref<2x4x8x8xf32, #tpu.memory_space<vmem>>, vector<1x1x8x8xf32>,
    %402 = vector.extract_strided_slice %318 {offsets = [8, 16], sizes = [8, 8], strides = [1, 1]} : vector<16x32xf32> to vector<8x8xf32>
    %c1_323 = arith.constant 1 : index
    %c2_324 = arith.constant 2 : index
    %c0_325 = arith.constant 0 : index
    %c0_326 = arith.constant 0 : index
    %403 = vector.load %arg23[%c1_323, %c2_324, %c0_325, %c0_326] : memref<2x4x8x8xf32, #tpu.memory_space<vmem>>, vector<1x1x8x8xf32>
    %404 = vector.shape_cast %403 : vector<1x1x8x8xf32> to vector<8x8xf32>
    %405 = vector.shape_cast %402 : vector<8x8xf32> to vector<1x1x8x8xf32>
    tpu.vector_store %arg23[%c1_323, %c2_324, %c0_325, %c0_326], %405 {strides = array<i32>} : memref<2x4x8x8xf32, #tpu.memory_space<vmem>>, vector<1x1x8x8xf32>,
    %406 = vector.extract_strided_slice %325 {offsets = [8, 16], sizes = [8, 8], strides = [1, 1]} : vector<16x32xf32> to vector<8x8xf32>
    %c1_327 = arith.constant 1 : index
    %c2_328 = arith.constant 2 : index
    %c0_329 = arith.constant 0 : index
    %c0_330 = arith.constant 0 : index
    %407 = vector.load %arg24[%c1_327, %c2_328, %c0_329, %c0_330] : memref<2x4x8x8xf32, #tpu.memory_space<vmem>>, vector<1x1x8x8xf32>
    %408 = vector.shape_cast %407 : vector<1x1x8x8xf32> to vector<8x8xf32>
    %409 = vector.shape_cast %406 : vector<8x8xf32> to vector<1x1x8x8xf32>
    tpu.vector_store %arg24[%c1_327, %c2_328, %c0_329, %c0_330], %409 {strides = array<i32>} : memref<2x4x8x8xf32, #tpu.memory_space<vmem>>, vector<1x1x8x8xf32>,
    %410 = vector.extract_strided_slice %311 {offsets = [8, 24], sizes = [8, 8], strides = [1, 1]} : vector<16x32xf32> to vector<8x8xf32>
    %c1_331 = arith.constant 1 : index
    %c3_332 = arith.constant 3 : index
    %c0_333 = arith.constant 0 : index
    %c0_334 = arith.constant 0 : index
    %411 = vector.load %arg22[%c1_331, %c3_332, %c0_333, %c0_334] : memref<2x4x8x8xf32, #tpu.memory_space<vmem>>, vector<1x1x8x8xf32>
    %412 = vector.shape_cast %411 : vector<1x1x8x8xf32> to vector<8x8xf32>
    %413 = vector.shape_cast %410 : vector<8x8xf32> to vector<1x1x8x8xf32>
    tpu.vector_store %arg22[%c1_331, %c3_332, %c0_333, %c0_334], %413 {strides = array<i32>} : memref<2x4x8x8xf32, #tpu.memory_space<vmem>>, vector<1x1x8x8xf32>,
    %414 = vector.extract_strided_slice %318 {offsets = [8, 24], sizes = [8, 8], strides = [1, 1]} : vector<16x32xf32> to vector<8x8xf32>
    %c1_335 = arith.constant 1 : index
    %c3_336 = arith.constant 3 : index
    %c0_337 = arith.constant 0 : index
    %c0_338 = arith.constant 0 : index
    %415 = vector.load %arg23[%c1_335, %c3_336, %c0_337, %c0_338] : memref<2x4x8x8xf32, #tpu.memory_space<vmem>>, vector<1x1x8x8xf32>
    %416 = vector.shape_cast %415 : vector<1x1x8x8xf32> to vector<8x8xf32>
    %417 = vector.shape_cast %414 : vector<8x8xf32> to vector<1x1x8x8xf32>
    tpu.vector_store %arg23[%c1_335, %c3_336, %c0_337, %c0_338], %417 {strides = array<i32>} : memref<2x4x8x8xf32, #tpu.memory_space<vmem>>, vector<1x1x8x8xf32>,
    %418 = vector.extract_strided_slice %325 {offsets = [8, 24], sizes = [8, 8], strides = [1, 1]} : vector<16x32xf32> to vector<8x8xf32>
    %c1_339 = arith.constant 1 : index
    %c3_340 = arith.constant 3 : index
    %c0_341 = arith.constant 0 : index
    %c0_342 = arith.constant 0 : index
    %419 = vector.load %arg24[%c1_339, %c3_340, %c0_341, %c0_342] : memref<2x4x8x8xf32, #tpu.memory_space<vmem>>, vector<1x1x8x8xf32>
    %420 = vector.shape_cast %419 : vector<1x1x8x8xf32> to vector<8x8xf32>
    %421 = vector.shape_cast %418 : vector<8x8xf32> to vector<1x1x8x8xf32>
    tpu.vector_store %arg24[%c1_339, %c3_340, %c0_341, %c0_342], %421 {strides = array<i32>} : memref<2x4x8x8xf32, #tpu.memory_space<vmem>>, vector<1x1x8x8xf32>,
    %c1_343 = arith.constant 1 : index
    %c0_344 = arith.constant 0 : index
    %c0_345 = arith.constant 0 : index
    %c0_346 = arith.constant 0 : index
    %422 = vector.load %arg8[%c1_343, %c0_344, %c0_345, %c0_346] : memref<2x4x8x32xf32, #tpu.memory_space<vmem>>, vector<1x4x8x32xf32>
    %423 = vector.shape_cast %422 : vector<1x4x8x32xf32> to vector<4x8x32xf32>
    %c0_347 = arith.constant 0 : index
    %c0_348 = arith.constant 0 : index
    %c0_349 = arith.constant 0 : index
    %c0_350 = arith.constant 0 : index
    %424 = vector.load %arg22[%c0_347, %c0_348, %c0_349, %c0_350] : memref<2x4x8x8xf32, #tpu.memory_space<vmem>>, vector<1x4x8x8xf32>
    %425 = vector.shape_cast %424 : vector<1x4x8x8xf32> to vector<4x8x8xf32>
    %c0_351 = arith.constant 0 : index
    %c0_352 = arith.constant 0 : index
    %c0_353 = arith.constant 0 : index
    %c0_354 = arith.constant 0 : index
    %426 = vector.load %arg23[%c0_351, %c0_352, %c0_353, %c0_354] : memref<2x4x8x8xf32, #tpu.memory_space<vmem>>, vector<1x4x8x8xf32>
    %427 = vector.shape_cast %426 : vector<1x4x8x8xf32> to vector<4x8x8xf32>
    %c0_355 = arith.constant 0 : index
    %c0_356 = arith.constant 0 : index
    %c0_357 = arith.constant 0 : index
    %c0_358 = arith.constant 0 : index
    %428 = vector.load %arg24[%c0_355, %c0_356, %c0_357, %c0_358] : memref<2x4x8x8xf32, #tpu.memory_space<vmem>>, vector<1x4x8x8xf32>
    %429 = vector.shape_cast %428 : vector<1x4x8x8xf32> to vector<4x8x8xf32>
    "tpu.trace_start"() <{level = 10 : i32, message = "hqd,hkd->hqk"}> : () -> ()
    %cst_359 = arith.constant dense<0.000000e+00> : vector<4x8x8xf32>
    %430 = tpu.matmul %425, %427, %cst_359 {dimension_numbers = #tpu.dot_dimension_numbers<[2], [2], [1], [1], [0, 0, 0, 1, 1, 1], [0], [0]>} : vector<4x8x8xf32>, vector<4x8x8xf32>, vector<4x8x8xf32> -> vector<4x8x8xf32>
    "tpu.trace_stop"() : () -> ()
    %cst_360 = arith.constant 0.353553385 : f32
    %431 = vector.broadcast %cst_360 : f32 to vector<4x8x8xf32>
    %432 = arith.mulf %430, %431 : vector<4x8x8xf32>
    %433 = vector.extract_strided_slice %25 {offsets = [0, 0, 0], sizes = [1, 1, 8], strides = [1, 1, 1]} : vector<2x1x8xf32> to vector<1x1x8xf32>
    %434 = vector.shape_cast %433 : vector<1x1x8xf32> to vector<1x8xf32>
    %435 = vector.shape_cast %434 : vector<1x8xf32> to vector<1x1x8xf32>
    %436 = vector.broadcast %435 : vector<1x1x8xf32> to vector<4x8x8xf32>
    %437 = arith.addf %432, %436 : vector<4x8x8xf32>
    %cst_361 = arith.constant dense<0xFF800000> : vector<4x8xf32>
    %438 = vector.multi_reduction <maximumf>, %437, %cst_361 [2] : vector<4x8x8xf32> to vector<4x8xf32>
    %439 = vector.shape_cast %438 : vector<4x8xf32> to vector<4x8x1xf32>
    %440 = vector.broadcast %439 : vector<4x8x1xf32> to vector<4x8x8xf32>
    %441 = arith.subf %437, %440 : vector<4x8x8xf32>
    %442 = math.exp %441 : vector<4x8x8xf32>
    %cst_362 = arith.constant dense<0.000000e+00> : vector<4x8xf32>
    %443 = vector.multi_reduction <add>, %442, %cst_362 [2] : vector<4x8x8xf32> to vector<4x8xf32>
    %444 = vector.shape_cast %443 : vector<4x8xf32> to vector<4x8x1xf32>
    %445 = vector.broadcast %444 : vector<4x8x1xf32> to vector<4x8x8xf32>
    %446 = arith.divf %442, %445 : vector<4x8x8xf32>
    "tpu.trace_start"() <{level = 10 : i32, message = "hqk,hkd->hqd"}> : () -> ()
    %cst_363 = arith.constant dense<0.000000e+00> : vector<4x8x8xf32>
    %447 = tpu.matmul %446, %429, %cst_363 {dimension_numbers = #tpu.dot_dimension_numbers<[2], [1], [1], [2], [0, 0, 0, 1, 1, 2], [0], [0]>} : vector<4x8x8xf32>, vector<4x8x8xf32>, vector<4x8x8xf32> -> vector<4x8x8xf32>
    "tpu.trace_stop"() : () -> ()
    "tpu.trace_start"() <{level = 10 : i32, message = "hqd,hdo->hqo"}> : () -> ()
    %cst_364 = arith.constant dense<0.000000e+00> : vector<4x8x32xf32>
    %448 = tpu.matmul %447, %423, %cst_364 {dimension_numbers = #tpu.dot_dimension_numbers<[2], [1], [1], [2], [0, 0, 0, 1, 1, 2], [0], [0]>} : vector<4x8x8xf32>, vector<4x8x32xf32>, vector<4x8x32xf32> -> vector<4x8x32xf32>
    "tpu.trace_stop"() : () -> ()
    %449 = vector.extract_strided_slice %448 {offsets = [0, 0, 0], sizes = [1, 8, 32], strides = [1, 1, 1]} : vector<4x8x32xf32> to vector<1x8x32xf32>
    %450 = vector.shape_cast %449 : vector<1x8x32xf32> to vector<8x32xf32>
    %451 = vector.extract_strided_slice %448 {offsets = [1, 0, 0], sizes = [1, 8, 32], strides = [1, 1, 1]} : vector<4x8x32xf32> to vector<1x8x32xf32>
    %452 = vector.shape_cast %451 : vector<1x8x32xf32> to vector<8x32xf32>
    %453 = arith.addf %450, %452 : vector<8x32xf32>
    %454 = vector.extract_strided_slice %448 {offsets = [2, 0, 0], sizes = [1, 8, 32], strides = [1, 1, 1]} : vector<4x8x32xf32> to vector<1x8x32xf32>
    %455 = vector.shape_cast %454 : vector<1x8x32xf32> to vector<8x32xf32>
    %456 = arith.addf %453, %455 : vector<8x32xf32>
    %457 = vector.extract_strided_slice %448 {offsets = [3, 0, 0], sizes = [1, 8, 32], strides = [1, 1, 1]} : vector<4x8x32xf32> to vector<1x8x32xf32>
    %458 = vector.shape_cast %457 : vector<1x8x32xf32> to vector<8x32xf32>
    %459 = arith.addf %456, %458 : vector<8x32xf32>
    %c0_365 = arith.constant 0 : index
    %c0_366 = arith.constant 0 : index
    %460 = vector.load %arg25[%c0_365, %c0_366] : memref<16x32xf32, #tpu.memory_space<vmem>>, vector<8x32xf32>
    tpu.vector_store %arg25[%c0_365, %c0_366], %459 {strides = array<i32>} : memref<16x32xf32, #tpu.memory_space<vmem>>, vector<8x32xf32>,
    %c1_367 = arith.constant 1 : index
    %c0_368 = arith.constant 0 : index
    %c0_369 = arith.constant 0 : index
    %c0_370 = arith.constant 0 : index
    %461 = vector.load %arg22[%c1_367, %c0_368, %c0_369, %c0_370] : memref<2x4x8x8xf32, #tpu.memory_space<vmem>>, vector<1x4x8x8xf32>
    %462 = vector.shape_cast %461 : vector<1x4x8x8xf32> to vector<4x8x8xf32>
    %c1_371 = arith.constant 1 : index
    %c0_372 = arith.constant 0 : index
    %c0_373 = arith.constant 0 : index
    %c0_374 = arith.constant 0 : index
    %463 = vector.load %arg23[%c1_371, %c0_372, %c0_373, %c0_374] : memref<2x4x8x8xf32, #tpu.memory_space<vmem>>, vector<1x4x8x8xf32>
    %464 = vector.shape_cast %463 : vector<1x4x8x8xf32> to vector<4x8x8xf32>
    %c1_375 = arith.constant 1 : index
    %c0_376 = arith.constant 0 : index
    %c0_377 = arith.constant 0 : index
    %c0_378 = arith.constant 0 : index
    %465 = vector.load %arg24[%c1_375, %c0_376, %c0_377, %c0_378] : memref<2x4x8x8xf32, #tpu.memory_space<vmem>>, vector<1x4x8x8xf32>
    %466 = vector.shape_cast %465 : vector<1x4x8x8xf32> to vector<4x8x8xf32>
    "tpu.trace_start"() <{level = 10 : i32, message = "hqd,hkd->hqk"}> : () -> ()
    %cst_379 = arith.constant dense<0.000000e+00> : vector<4x8x8xf32>
    %467 = tpu.matmul %462, %464, %cst_379 {dimension_numbers = #tpu.dot_dimension_numbers<[2], [2], [1], [1], [0, 0, 0, 1, 1, 1], [0], [0]>} : vector<4x8x8xf32>, vector<4x8x8xf32>, vector<4x8x8xf32> -> vector<4x8x8xf32>
    "tpu.trace_stop"() : () -> ()
    %cst_380 = arith.constant 0.353553385 : f32
    %468 = vector.broadcast %cst_380 : f32 to vector<4x8x8xf32>
    %469 = arith.mulf %467, %468 : vector<4x8x8xf32>
    %470 = vector.extract_strided_slice %25 {offsets = [1, 0, 0], sizes = [1, 1, 8], strides = [1, 1, 1]} : vector<2x1x8xf32> to vector<1x1x8xf32>
    %471 = vector.shape_cast %470 : vector<1x1x8xf32> to vector<1x8xf32>
    %472 = vector.shape_cast %471 : vector<1x8xf32> to vector<1x1x8xf32>
    %473 = vector.broadcast %472 : vector<1x1x8xf32> to vector<4x8x8xf32>
    %474 = arith.addf %469, %473 : vector<4x8x8xf32>
    %cst_381 = arith.constant dense<0xFF800000> : vector<4x8xf32>
    %475 = vector.multi_reduction <maximumf>, %474, %cst_381 [2] : vector<4x8x8xf32> to vector<4x8xf32>
    %476 = vector.shape_cast %475 : vector<4x8xf32> to vector<4x8x1xf32>
    %477 = vector.broadcast %476 : vector<4x8x1xf32> to vector<4x8x8xf32>
    %478 = arith.subf %474, %477 : vector<4x8x8xf32>
    %479 = math.exp %478 : vector<4x8x8xf32>
    %cst_382 = arith.constant dense<0.000000e+00> : vector<4x8xf32>
    %480 = vector.multi_reduction <add>, %479, %cst_382 [2] : vector<4x8x8xf32> to vector<4x8xf32>
    %481 = vector.shape_cast %480 : vector<4x8xf32> to vector<4x8x1xf32>
    %482 = vector.broadcast %481 : vector<4x8x1xf32> to vector<4x8x8xf32>
    %483 = arith.divf %479, %482 : vector<4x8x8xf32>
    "tpu.trace_start"() <{level = 10 : i32, message = "hqk,hkd->hqd"}> : () -> ()
    %cst_383 = arith.constant dense<0.000000e+00> : vector<4x8x8xf32>
    %484 = tpu.matmul %483, %466, %cst_383 {dimension_numbers = #tpu.dot_dimension_numbers<[2], [1], [1], [2], [0, 0, 0, 1, 1, 2], [0], [0]>} : vector<4x8x8xf32>, vector<4x8x8xf32>, vector<4x8x8xf32> -> vector<4x8x8xf32>
    "tpu.trace_stop"() : () -> ()
    "tpu.trace_start"() <{level = 10 : i32, message = "hqd,hdo->hqo"}> : () -> ()
    %cst_384 = arith.constant dense<0.000000e+00> : vector<4x8x32xf32>
    %485 = tpu.matmul %484, %423, %cst_384 {dimension_numbers = #tpu.dot_dimension_numbers<[2], [1], [1], [2], [0, 0, 0, 1, 1, 2], [0], [0]>} : vector<4x8x8xf32>, vector<4x8x32xf32>, vector<4x8x32xf32> -> vector<4x8x32xf32>
    "tpu.trace_stop"() : () -> ()
    %486 = vector.extract_strided_slice %485 {offsets = [0, 0, 0], sizes = [1, 8, 32], strides = [1, 1, 1]} : vector<4x8x32xf32> to vector<1x8x32xf32>
    %487 = vector.shape_cast %486 : vector<1x8x32xf32> to vector<8x32xf32>
    %488 = vector.extract_strided_slice %485 {offsets = [1, 0, 0], sizes = [1, 8, 32], strides = [1, 1, 1]} : vector<4x8x32xf32> to vector<1x8x32xf32>
    %489 = vector.shape_cast %488 : vector<1x8x32xf32> to vector<8x32xf32>
    %490 = arith.addf %487, %489 : vector<8x32xf32>
    %491 = vector.extract_strided_slice %485 {offsets = [2, 0, 0], sizes = [1, 8, 32], strides = [1, 1, 1]} : vector<4x8x32xf32> to vector<1x8x32xf32>
    %492 = vector.shape_cast %491 : vector<1x8x32xf32> to vector<8x32xf32>
    %493 = arith.addf %490, %492 : vector<8x32xf32>
    %494 = vector.extract_strided_slice %485 {offsets = [3, 0, 0], sizes = [1, 8, 32], strides = [1, 1, 1]} : vector<4x8x32xf32> to vector<1x8x32xf32>
    %495 = vector.shape_cast %494 : vector<1x8x32xf32> to vector<8x32xf32>
    %496 = arith.addf %493, %495 : vector<8x32xf32>
    %c8_385 = arith.constant 8 : index
    %c0_386 = arith.constant 0 : index
    %497 = vector.load %arg25[%c8_385, %c0_386] : memref<16x32xf32, #tpu.memory_space<vmem>>, vector<8x32xf32>
    tpu.vector_store %arg25[%c8_385, %c0_386], %496 {strides = array<i32>} : memref<16x32xf32, #tpu.memory_space<vmem>>, vector<8x32xf32>,
    %c0_387 = arith.constant 0 : index
    %c0_388 = arith.constant 0 : index
    %498 = vector.load %arg25[%c0_387, %c0_388] : memref<16x32xf32, #tpu.memory_space<vmem>>, vector<16x32xf32>
    %499 = arith.addf %304, %498 : vector<16x32xf32>
    %c1_389 = arith.constant 1 : index
    %c0_390 = arith.constant 0 : index
    %c0_391 = arith.constant 0 : index
    %500 = vector.load %arg9[%c1_389, %c0_390, %c0_391] : memref<2x1x32xf32, #tpu.memory_space<vmem>>, vector<1x1x32xf32>
    %501 = vector.shape_cast %500 : vector<1x1x32xf32> to vector<1x32xf32>
    %502 = vector.broadcast %501 : vector<1x32xf32> to vector<16x32xf32>
    %503 = arith.addf %499, %502 : vector<16x32xf32>
    %c1_392 = arith.constant 1 : index
    %c0_393 = arith.constant 0 : index
    %c0_394 = arith.constant 0 : index
    %504 = vector.load %arg10[%c1_392, %c0_393, %c0_394] : memref<2x1x32xf32, #tpu.memory_space<vmem>>, vector<1x1x32xf32>
    %505 = vector.shape_cast %504 : vector<1x1x32xf32> to vector<1x32xf32>
    %c1_395 = arith.constant 1 : index
    %c0_396 = arith.constant 0 : index
    %c0_397 = arith.constant 0 : index
    %506 = vector.load %arg11[%c1_395, %c0_396, %c0_397] : memref<2x1x32xf32, #tpu.memory_space<vmem>>, vector<1x1x32xf32>
    %507 = vector.shape_cast %506 : vector<1x1x32xf32> to vector<1x32xf32>
    %cst_398 = arith.constant dense<0.000000e+00> : vector<16xf32>
    %508 = vector.multi_reduction <add>, %503, %cst_398 [1] : vector<16x32xf32> to vector<16xf32>
    %509 = vector.shape_cast %508 : vector<16xf32> to vector<16x1xf32>
    %cst_399 = arith.constant 3.200000e+01 : f32
    %510 = vector.broadcast %cst_399 : f32 to vector<16x1xf32>
    %511 = arith.divf %509, %510 : vector<16x1xf32>
    %512 = vector.broadcast %511 : vector<16x1xf32> to vector<16x32xf32>
    %513 = arith.subf %503, %512 : vector<16x32xf32>
    %514 = arith.mulf %513, %513 : vector<16x32xf32>
    %cst_400 = arith.constant dense<0.000000e+00> : vector<16xf32>
    %515 = vector.multi_reduction <add>, %514, %cst_400 [1] : vector<16x32xf32> to vector<16xf32>
    %516 = vector.shape_cast %515 : vector<16xf32> to vector<16x1xf32>
    %cst_401 = arith.constant 3.200000e+01 : f32
    %517 = vector.broadcast %cst_401 : f32 to vector<16x1xf32>
    %518 = arith.divf %516, %517 : vector<16x1xf32>
    %519 = vector.broadcast %511 : vector<16x1xf32> to vector<16x32xf32>
    %520 = arith.subf %503, %519 : vector<16x32xf32>
    %cst_402 = arith.constant 9.99999996E-13 : f32
    %521 = vector.broadcast %cst_402 : f32 to vector<16x1xf32>
    %522 = arith.addf %518, %521 : vector<16x1xf32>
    %523 = math.rsqrt %522 : vector<16x1xf32>
    %524 = vector.broadcast %523 : vector<16x1xf32> to vector<16x32xf32>
    %525 = arith.mulf %520, %524 : vector<16x32xf32>
    %526 = vector.broadcast %505 : vector<1x32xf32> to vector<16x32xf32>
    %527 = arith.mulf %525, %526 : vector<16x32xf32>
    %528 = vector.broadcast %507 : vector<1x32xf32> to vector<16x32xf32>
    %529 = arith.addf %527, %528 : vector<16x32xf32>
    %c1_403 = arith.constant 1 : index
    %c0_404 = arith.constant 0 : index
    %c0_405 = arith.constant 0 : index
    %530 = vector.load %arg12[%c1_403, %c0_404, %c0_405] : memref<2x32x64xf32, #tpu.memory_space<vmem>>, vector<1x32x64xf32>
    %531 = vector.shape_cast %530 : vector<1x32x64xf32> to vector<32x64xf32>
    %cst_406 = arith.constant dense<0.000000e+00> : vector<16x64xf32>
    %532 = tpu.matmul %529, %531, %cst_406 {dimension_numbers = #tpu.dot_dimension_numbers<[1], [0], [0], [1], [0, 0, 1, 1], [], []>} : vector<16x32xf32>, vector<32x64xf32>, vector<16x64xf32> -> vector<16x64xf32>
    %c1_407 = arith.constant 1 : index
    %c0_408 = arith.constant 0 : index
    %c0_409 = arith.constant 0 : index
    %533 = vector.load %arg13[%c1_407, %c0_408, %c0_409] : memref<2x1x64xf32, #tpu.memory_space<vmem>>, vector<1x1x64xf32>
    %534 = vector.shape_cast %533 : vector<1x1x64xf32> to vector<1x64xf32>
    %535 = vector.broadcast %534 : vector<1x64xf32> to vector<16x64xf32>
    %536 = arith.addf %532, %535 : vector<16x64xf32>
    %537 = arith.mulf %536, %536 : vector<16x64xf32>
    %538 = arith.mulf %536, %537 : vector<16x64xf32>
    %cst_410 = arith.constant 4.471500e-02 : f32
    %539 = vector.broadcast %cst_410 : f32 to vector<16x64xf32>
    %540 = arith.mulf %539, %538 : vector<16x64xf32>
    %541 = arith.addf %536, %540 : vector<16x64xf32>
    %cst_411 = arith.constant 0.797884583 : f32
    %542 = vector.broadcast %cst_411 : f32 to vector<16x64xf32>
    %543 = arith.mulf %542, %541 : vector<16x64xf32>
    %544 = math.tanh %543 : vector<16x64xf32>
    %cst_412 = arith.constant 1.000000e+00 : f32
    %545 = vector.broadcast %cst_412 : f32 to vector<16x64xf32>
    %546 = arith.addf %545, %544 : vector<16x64xf32>
    %cst_413 = arith.constant 5.000000e-01 : f32
    %547 = vector.broadcast %cst_413 : f32 to vector<16x64xf32>
    %548 = arith.mulf %547, %546 : vector<16x64xf32>
    %549 = arith.mulf %536, %548 : vector<16x64xf32>
    %c1_414 = arith.constant 1 : index
    %c0_415 = arith.constant 0 : index
    %c0_416 = arith.constant 0 : index
    %550 = vector.load %arg14[%c1_414, %c0_415, %c0_416] : memref<2x64x32xf32, #tpu.memory_space<vmem>>, vector<1x64x32xf32>
    %551 = vector.shape_cast %550 : vector<1x64x32xf32> to vector<64x32xf32>
    %cst_417 = arith.constant dense<0.000000e+00> : vector<16x32xf32>
    %552 = tpu.matmul %549, %551, %cst_417 {dimension_numbers = #tpu.dot_dimension_numbers<[1], [0], [0], [1], [0, 0, 1, 1], [], []>} : vector<16x64xf32>, vector<64x32xf32>, vector<16x32xf32> -> vector<16x32xf32>
    %c1_418 = arith.constant 1 : index
    %c0_419 = arith.constant 0 : index
    %c0_420 = arith.constant 0 : index
    %553 = vector.load %arg15[%c1_418, %c0_419, %c0_420] : memref<2x1x32xf32, #tpu.memory_space<vmem>>, vector<1x1x32xf32>
    %554 = vector.shape_cast %553 : vector<1x1x32xf32> to vector<1x32xf32>
    %555 = vector.broadcast %554 : vector<1x32xf32> to vector<16x32xf32>
    %556 = arith.addf %552, %555 : vector<16x32xf32>
    %557 = arith.addf %529, %556 : vector<16x32xf32>
    %c1_421 = arith.constant 1 : index
    %c0_422 = arith.constant 0 : index
    %c0_423 = arith.constant 0 : index
    %558 = vector.load %arg16[%c1_421, %c0_422, %c0_423] : memref<2x1x32xf32, #tpu.memory_space<vmem>>, vector<1x1x32xf32>
    %559 = vector.shape_cast %558 : vector<1x1x32xf32> to vector<1x32xf32>
    %c1_424 = arith.constant 1 : index
    %c0_425 = arith.constant 0 : index
    %c0_426 = arith.constant 0 : index
    %560 = vector.load %arg17[%c1_424, %c0_425, %c0_426] : memref<2x1x32xf32, #tpu.memory_space<vmem>>, vector<1x1x32xf32>
    %561 = vector.shape_cast %560 : vector<1x1x32xf32> to vector<1x32xf32>
    %cst_427 = arith.constant dense<0.000000e+00> : vector<16xf32>
    %562 = vector.multi_reduction <add>, %557, %cst_427 [1] : vector<16x32xf32> to vector<16xf32>
    %563 = vector.shape_cast %562 : vector<16xf32> to vector<16x1xf32>
    %cst_428 = arith.constant 3.200000e+01 : f32
    %564 = vector.broadcast %cst_428 : f32 to vector<16x1xf32>
    %565 = arith.divf %563, %564 : vector<16x1xf32>
    %566 = vector.broadcast %565 : vector<16x1xf32> to vector<16x32xf32>
    %567 = arith.subf %557, %566 : vector<16x32xf32>
    %568 = arith.mulf %567, %567 : vector<16x32xf32>
    %cst_429 = arith.constant dense<0.000000e+00> : vector<16xf32>
    %569 = vector.multi_reduction <add>, %568, %cst_429 [1] : vector<16x32xf32> to vector<16xf32>
    %570 = vector.shape_cast %569 : vector<16xf32> to vector<16x1xf32>
    %cst_430 = arith.constant 3.200000e+01 : f32
    %571 = vector.broadcast %cst_430 : f32 to vector<16x1xf32>
    %572 = arith.divf %570, %571 : vector<16x1xf32>
    %573 = vector.broadcast %565 : vector<16x1xf32> to vector<16x32xf32>
    %574 = arith.subf %557, %573 : vector<16x32xf32>
    %cst_431 = arith.constant 9.99999996E-13 : f32
    %575 = vector.broadcast %cst_431 : f32 to vector<16x1xf32>
    %576 = arith.addf %572, %575 : vector<16x1xf32>
    %577 = math.rsqrt %576 : vector<16x1xf32>
    %578 = vector.broadcast %577 : vector<16x1xf32> to vector<16x32xf32>
    %579 = arith.mulf %574, %578 : vector<16x32xf32>
    %580 = vector.broadcast %559 : vector<1x32xf32> to vector<16x32xf32>
    %581 = arith.mulf %579, %580 : vector<16x32xf32>
    %582 = vector.broadcast %561 : vector<1x32xf32> to vector<16x32xf32>
    %583 = arith.addf %581, %582 : vector<16x32xf32>
    %c0_432 = arith.constant 0 : index
    %c0_433 = arith.constant 0 : index
    %584 = vector.load %arg18[%c0_432, %c0_433] : memref<32x8xf32, #tpu.memory_space<vmem>>, vector<32x8xf32>
    %cst_434 = arith.constant dense<0.000000e+00> : vector<16x8xf32>
    %585 = tpu.matmul %583, %584, %cst_434 {dimension_numbers = #tpu.dot_dimension_numbers<[1], [0], [0], [1], [0, 0, 1, 1], [], []>} : vector<16x32xf32>, vector<32x8xf32>, vector<16x8xf32> -> vector<16x8xf32>
    %c0_435 = arith.constant 0 : index
    %c0_436 = arith.constant 0 : index
    %586 = vector.load %arg19[%c0_435, %c0_436] : memref<1x8xf32, #tpu.memory_space<vmem>>, vector<1x8xf32>
    %587 = vector.broadcast %586 : vector<1x8xf32> to vector<16x8xf32>
    %588 = arith.addf %585, %587 : vector<16x8xf32>
    %589 = tpu.iota {dimensions = array<i32: 1>} : vector<16x8xi32>
    %cst_437 = arith.constant dense<0xFF800000> : vector<16xf32>
    %590 = vector.multi_reduction <maximumf>, %588, %cst_437 [1] : vector<16x8xf32> to vector<16xf32>
    %591 = vector.shape_cast %590 : vector<16xf32> to vector<16x1xf32>
    %592 = vector.broadcast %591 : vector<16x1xf32> to vector<16x8xf32>
    %593 = arith.cmpf oeq, %588, %592 : vector<16x8xf32>
    %c8_i32 = arith.constant 8 : i32
    %594 = vector.broadcast %c8_i32 : i32 to vector<16x8xi32>
    %595 = arith.select %593, %589, %594 : vector<16x8xi1>, vector<16x8xi32>
    %cst_438 = arith.constant dense<2147483647> : vector<16xi32>
    %596 = vector.multi_reduction <minsi>, %595, %cst_438 [1] : vector<16x8xi32> to vector<16xi32>
    %597 = vector.shape_cast %596 : vector<16xi32> to vector<16x1xi32>
    %598 = vector.broadcast %591 : vector<16x1xf32> to vector<16x8xf32>
    %599 = arith.subf %588, %598 : vector<16x8xf32>
    %600 = math.exp %599 : vector<16x8xf32>
    %cst_439 = arith.constant dense<0.000000e+00> : vector<16xf32>
    %601 = vector.multi_reduction <add>, %600, %cst_439 [1] : vector<16x8xf32> to vector<16xf32>
    %602 = vector.shape_cast %601 : vector<16xf32> to vector<16x1xf32>
    %603 = math.log %602 : vector<16x1xf32>
    %604 = arith.addf %603, %591 : vector<16x1xf32>
    %c0_440 = arith.constant 0 : index
    %c0_441 = arith.constant 0 : index
    %605 = vector.load %arg3[%c0_440, %c0_441] : memref<16x1xi32, #tpu.memory_space<vmem>>, vector<16x1xi32>
    %606 = vector.broadcast %605 : vector<16x1xi32> to vector<16x8xi32>
    %607 = arith.cmpi eq, %589, %606 : vector<16x8xi32>
    %cst_442 = arith.constant 0.000000e+00 : f32
    %608 = vector.broadcast %cst_442 : f32 to vector<16x8xf32>
    %609 = arith.select %607, %588, %608 : vector<16x8xi1>, vector<16x8xf32>
    %cst_443 = arith.constant dense<0.000000e+00> : vector<16xf32>
    %610 = vector.multi_reduction <add>, %609, %cst_443 [1] : vector<16x8xf32> to vector<16xf32>
    %611 = vector.shape_cast %610 : vector<16xf32> to vector<16x1xf32>
    %612 = arith.subf %604, %611 : vector<16x1xf32>
    %613 = tpu.transpose %597, [1, 0] : vector<16x1xi32> -> vector<1x16xi32>
    %c0_444 = arith.constant 0 : index
    %c0_445 = arith.constant 0 : index
    %614 = vector.load %arg21[%c0_444, %c0_445] : memref<1x16xi32, #tpu.memory_space<vmem>>, vector<1x16xi32>
    tpu.vector_store %arg21[%c0_444, %c0_445], %613 {strides = array<i32>} : memref<1x16xi32, #tpu.memory_space<vmem>>, vector<1x16xi32>,
    %615 = tpu.transpose %612, [1, 0] : vector<16x1xf32> -> vector<1x16xf32>
    %c0_446 = arith.constant 0 : index
    %c0_447 = arith.constant 0 : index
    %616 = vector.load %arg20[%c0_446, %c0_447] : memref<1x16xf32, #tpu.memory_space<vmem>>, vector<1x16xf32>
    tpu.vector_store %arg20[%c0_446, %c0_447], %615 {strides = array<i32>} : memref<1x16xf32, #tpu.memory_space<vmem>>, vector<1x16xf32>,
    return
  }
  func.func @transform_0(%arg0: i32) -> (i32, i32) {
    %c0_i32 = arith.constant 0 : i32
    %c0_i32_0 = arith.constant 0 : i32
    return %arg0, %c0_i32 : i32, i32
  }
  func.func @transform_1(%arg0: i32) -> (i32, i32, i32) {
    %c0_i32 = arith.constant 0 : i32
    %c0_i32_0 = arith.constant 0 : i32
    %c0_i32_1 = arith.constant 0 : i32
    return %arg0, %c0_i32, %c0_i32_0 : i32, i32, i32
  }
  func.func @transform_2(%arg0: i32) -> (i32, i32) {
    %c0_i32 = arith.constant 0 : i32
    %c0_i32_0 = arith.constant 0 : i32
    return %arg0, %c0_i32 : i32, i32
  }
  func.func @transform_3(%arg0: i32) -> (i32, i32) {
    %c0_i32 = arith.constant 0 : i32
    %c0_i32_0 = arith.constant 0 : i32
    %c0_i32_1 = arith.constant 0 : i32
    return %c0_i32, %c0_i32_0 : i32, i32
  }
  func.func @transform_4(%arg0: i32) -> (i32, i32) {
    %c0_i32 = arith.constant 0 : i32
    %c0_i32_0 = arith.constant 0 : i32
    %c0_i32_1 = arith.constant 0 : i32
    return %c0_i32, %c0_i32_0 : i32, i32
  }
  func.func @transform_5(%arg0: i32) -> (i32, i32, i32, i32) {
    %c0_i32 = arith.constant 0 : i32
    %c0_i32_0 = arith.constant 0 : i32
    %c0_i32_1 = arith.constant 0 : i32
    %c0_i32_2 = arith.constant 0 : i32
    %c0_i32_3 = arith.constant 0 : i32
    return %c0_i32, %c0_i32_0, %c0_i32_1, %c0_i32_2 : i32, i32, i32, i32
  }
  func.func @transform_6(%arg0: i32) -> (i32, i32, i32, i32) {
    %c0_i32 = arith.constant 0 : i32
    %c0_i32_0 = arith.constant 0 : i32
    %c0_i32_1 = arith.constant 0 : i32
    %c0_i32_2 = arith.constant 0 : i32
    %c0_i32_3 = arith.constant 0 : i32
    return %c0_i32, %c0_i32_0, %c0_i32_1, %c0_i32_2 : i32, i32, i32, i32
  }
  func.func @transform_7(%arg0: i32) -> (i32, i32, i32, i32) {
    %c0_i32 = arith.constant 0 : i32
    %c0_i32_0 = arith.constant 0 : i32
    %c0_i32_1 = arith.constant 0 : i32
    %c0_i32_2 = arith.constant 0 : i32
    %c0_i32_3 = arith.constant 0 : i32
    return %c0_i32, %c0_i32_0, %c0_i32_1, %c0_i32_2 : i32, i32, i32, i32
  }
  func.func @transform_8(%arg0: i32) -> (i32, i32, i32) {
    %c0_i32 = arith.constant 0 : i32
    %c0_i32_0 = arith.constant 0 : i32
    %c0_i32_1 = arith.constant 0 : i32
    %c0_i32_2 = arith.constant 0 : i32
    return %c0_i32, %c0_i32_0, %c0_i32_1 : i32, i32, i32
  }
  func.func @transform_9(%arg0: i32) -> (i32, i32, i32) {
    %c0_i32 = arith.constant 0 : i32
    %c0_i32_0 = arith.constant 0 : i32
    %c0_i32_1 = arith.constant 0 : i32
    %c0_i32_2 = arith.constant 0 : i32
    return %c0_i32, %c0_i32_0, %c0_i32_1 : i32, i32, i32
  }
  func.func @transform_10(%arg0: i32) -> (i32, i32, i32) {
    %c0_i32 = arith.constant 0 : i32
    %c0_i32_0 = arith.constant 0 : i32
    %c0_i32_1 = arith.constant 0 : i32
    %c0_i32_2 = arith.constant 0 : i32
    return %c0_i32, %c0_i32_0, %c0_i32_1 : i32, i32, i32
  }
  func.func @transform_11(%arg0: i32) -> (i32, i32, i32) {
    %c0_i32 = arith.constant 0 : i32
    %c0_i32_0 = arith.constant 0 : i32
    %c0_i32_1 = arith.constant 0 : i32
    %c0_i32_2 = arith.constant 0 : i32
    return %c0_i32, %c0_i32_0, %c0_i32_1 : i32, i32, i32
  }
  func.func @transform_12(%arg0: i32) -> (i32, i32, i32) {
    %c0_i32 = arith.constant 0 : i32
    %c0_i32_0 = arith.constant 0 : i32
    %c0_i32_1 = arith.constant 0 : i32
    %c0_i32_2 = arith.constant 0 : i32
    return %c0_i32, %c0_i32_0, %c0_i32_1 : i32, i32, i32
  }
  func.func @transform_13(%arg0: i32) -> (i32, i32, i32) {
    %c0_i32 = arith.constant 0 : i32
    %c0_i32_0 = arith.constant 0 : i32
    %c0_i32_1 = arith.constant 0 : i32
    %c0_i32_2 = arith.constant 0 : i32
    return %c0_i32, %c0_i32_0, %c0_i32_1 : i32, i32, i32
  }
  func.func @transform_14(%arg0: i32) -> (i32, i32, i32) {
    %c0_i32 = arith.constant 0 : i32
    %c0_i32_0 = arith.constant 0 : i32
    %c0_i32_1 = arith.constant 0 : i32
    %c0_i32_2 = arith.constant 0 : i32
    return %c0_i32, %c0_i32_0, %c0_i32_1 : i32, i32, i32
  }
  func.func @transform_15(%arg0: i32) -> (i32, i32, i32) {
    %c0_i32 = arith.constant 0 : i32
    %c0_i32_0 = arith.constant 0 : i32
    %c0_i32_1 = arith.constant 0 : i32
    %c0_i32_2 = arith.constant 0 : i32
    return %c0_i32, %c0_i32_0, %c0_i32_1 : i32, i32, i32
  }
  func.func @transform_16(%arg0: i32) -> (i32, i32, i32) {
    %c0_i32 = arith.constant 0 : i32
    %c0_i32_0 = arith.constant 0 : i32
    %c0_i32_1 = arith.constant 0 : i32
    %c0_i32_2 = arith.constant 0 : i32
    return %c0_i32, %c0_i32_0, %c0_i32_1 : i32, i32, i32
  }
  func.func @transform_17(%arg0: i32) -> (i32, i32) {
    %c0_i32 = arith.constant 0 : i32
    %c0_i32_0 = arith.constant 0 : i32
    %c0_i32_1 = arith.constant 0 : i32
    return %c0_i32, %c0_i32_0 : i32, i32
  }
  func.func @transform_18(%arg0: i32) -> (i32, i32) {
    %c0_i32 = arith.constant 0 : i32
    %c0_i32_0 = arith.constant 0 : i32
    %c0_i32_1 = arith.constant 0 : i32
    return %c0_i32, %c0_i32_0 : i32, i32
  }
  func.func @transform_19(%arg0: i32) -> (i32, i32) {
    %c0_i32 = arith.constant 0 : i32
    %c0_i32_0 = arith.constant 0 : i32
    return %arg0, %c0_i32 : i32, i32
  }
  func.func @transform_20(%arg0: i32) -> (i32, i32) {
    %c0_i32 = arith.constant 0 : i32
    %c0_i32_0 = arith.constant 0 : i32
    return %arg0, %c0_i32 : i32, i32
  }
}

</mosaic_0001>

<llo_original>
// kernel: _lambda_.1
$region0: #{_lambda_.1}
  #allocation0 [shape = 'u32[]', space=smem, size = 0x4, offset = 0x4, fixed_abs, tag = 'smem constant byte address 0x4 - core index']
  #allocation1 [shape = 'u32[144,128]{1,0:T(1,128)}', space=vmem, size = 0x12000, scoped, tag = 'internal scratch']
  #allocation2 [shape = 'f32[2,4,8,8]{3,2,1,0:T(8,128)}', space=vmem, size = 0x8000, scoped, tag = 'scratch operand']
  #allocation3 [shape = 'f32[2,4,8,8]{3,2,1,0:T(8,128)}', space=vmem, size = 0x8000, scoped, tag = 'scratch operand']
  #allocation4 [shape = 'f32[2,4,8,8]{3,2,1,0:T(8,128)}', space=vmem, size = 0x8000, scoped, tag = 'scratch operand']
  #allocation5 [shape = 'f32[16,32]{1,0:T(8,128)}', space=vmem, size = 0x2000, scoped, tag = 'scratch operand']
  %s0 = inlined_call_operand.vmem [shape: f32[16,32], index: 0, kind: input, shape index: {}]
  %s1 = inlined_call_operand.vmem [shape: f32[2,1,8], index: 1, kind: input, shape index: {}]
  %s2 = inlined_call_operand.vmem [shape: s32[16,1], index: 2, kind: input, shape index: {}]
  %s3 = inlined_call_operand.vmem [shape: f32[1,32], index: 3, kind: input, shape index: {}]
  %s4 = inlined_call_operand.vmem [shape: f32[1,32], index: 4, kind: input, shape index: {}]
  %s5 = inlined_call_operand.vmem [shape: f32[2,3,32,32], index: 5, kind: input, shape index: {}]
  %s6 = inlined_call_operand.vmem [shape: f32[2,3,1,32], index: 6, kind: input, shape index: {}]
  %s7 = inlined_call_operand.vmem [shape: f32[2,4,8,32], index: 7, kind: input, shape index: {}]
  %s8 = inlined_call_operand.vmem [shape: f32[2,1,32], index: 8, kind: input, shape index: {}]
  %s9 = inlined_call_operand.vmem [shape: f32[2,1,32], index: 9, kind: input, shape index: {}]
  %s10 = inlined_call_operand.vmem [shape: f32[2,1,32], index: 10, kind: input, shape index: {}]
  %s11 = inlined_call_operand.vmem [shape: f32[2,32,64], index: 11, kind: input, shape index: {}]
  %s12 = inlined_call_operand.vmem [shape: f32[2,1,64], index: 12, kind: input, shape index: {}]
  %s13 = inlined_call_operand.vmem [shape: f32[2,64,32], index: 13, kind: input, shape index: {}]
  %s14 = inlined_call_operand.vmem [shape: f32[2,1,32], index: 14, kind: input, shape index: {}]
  %s15 = inlined_call_operand.vmem [shape: f32[2,1,32], index: 15, kind: input, shape index: {}]
  %s16 = inlined_call_operand.vmem [shape: f32[2,1,32], index: 16, kind: input, shape index: {}]
  %s17 = inlined_call_operand.vmem [shape: f32[32,8], index: 17, kind: input, shape index: {}]
  %s18 = inlined_call_operand.vmem [shape: f32[1,8], index: 18, kind: input, shape index: {}]
  %s19 = inlined_call_operand.vmem [shape: f32[1,16], index: 19, kind: output, shape index: {0}]
  %s20 = inlined_call_operand.vmem [shape: s32[1,16], index: 20, kind: output, shape index: {1}]
  %21 = xla_tuple %s19, %s20
  %s22 = sld [smem:[#allocation0]]
  $region94: #{_lambda_.1} parent=0
    _
  %s24 = ssub.s32 1, %s22
  %s25 = scalar_select 0, %s24, %s22
  // Predicated region
  $region2: #{_lambda_.1} parent=0 // pred_check
    _
  $region3: #{_lambda_.1} parent=0 // pred_check_branch
    %27 = sbr.rel (0) target = $region5
  $region4: #{_lambda_.1} parent=0 // pred_region
    _
  $region5: #{_lambda_.1} parent=0 // pred_fallthru
    _
  // Predicated region
  $region6: #{_lambda_.1} parent=0 // pred_check
    _
  $region7: #{_lambda_.1} parent=0 // pred_check_branch
    %29 = sbr.rel (0) target = $region9
  $region8: #{_lambda_.1} parent=0 // pred_region
    _
  $region9: #{_lambda_.1} parent=0 // pred_fallthru
    _
  // Predicated region
  $region10: #{_lambda_.1} parent=0 // pred_check
    _
  $region11: #{_lambda_.1} parent=0 // pred_check_branch
    %31 = sbr.rel (0) target = $region13
  $region12: #{_lambda_.1} parent=0 // pred_region
    _
  $region13: #{_lambda_.1} parent=0 // pred_fallthru
    _
  // Predicated region
  $region14: #{_lambda_.1} parent=0 // pred_check
    _
  $region15: #{_lambda_.1} parent=0 // pred_check_branch
    %33 = sbr.rel (0) target = $region17
  $region16: #{_lambda_.1} parent=0 // pred_region
    _
  $region17: #{_lambda_.1} parent=0 // pred_fallthru
    _
  // Predicated region
  $region18: #{_lambda_.1} parent=0 // pred_check
    _
  $region19: #{_lambda_.1} parent=0 // pred_check_branch
    %35 = sbr.rel (0) target = $region21
  $region20: #{_lambda_.1} parent=0 // pred_region
    _
  $region21: #{_lambda_.1} parent=0 // pred_fallthru
    _
  // Predicated region
  $region22: #{_lambda_.1} parent=0 // pred_check
    _
  $region23: #{_lambda_.1} parent=0 // pred_check_branch
    %37 = sbr.rel (0) target = $region25
  $region24: #{_lambda_.1} parent=0 // pred_region
    _
  $region25: #{_lambda_.1} parent=0 // pred_fallthru
    _
  // Predicated region
  $region26: #{_lambda_.1} parent=0 // pred_check
    _
  $region27: #{_lambda_.1} parent=0 // pred_check_branch
    %39 = sbr.rel (0) target = $region29
  $region28: #{_lambda_.1} parent=0 // pred_region
    _
  $region29: #{_lambda_.1} parent=0 // pred_fallthru
    _
  // Predicated region
  $region30: #{_lambda_.1} parent=0 // pred_check
    _
  $region31: #{_lambda_.1} parent=0 // pred_check_branch
    %41 = sbr.rel (0) target = $region33
  $region32: #{_lambda_.1} parent=0 // pred_region
    _
  $region33: #{_lambda_.1} parent=0 // pred_fallthru
    _
  // Predicated region
  $region34: #{_lambda_.1} parent=0 // pred_check
    _
  $region35: #{_lambda_.1} parent=0 // pred_check_branch
    %43 = sbr.rel (0) target = $region37
  $region36: #{_lambda_.1} parent=0 // pred_region
    _
  $region37: #{_lambda_.1} parent=0 // pred_fallthru
    _
  // Predicated region
  $region38: #{_lambda_.1} parent=0 // pred_check
    _
  $region39: #{_lambda_.1} parent=0 // pred_check_branch
    %45 = sbr.rel (0) target = $region41
  $region40: #{_lambda_.1} parent=0 // pred_region
    _
  $region41: #{_lambda_.1} parent=0 // pred_fallthru
    _
  // Predicated region
  $region42: #{_lambda_.1} parent=0 // pred_check
    _
  $region43: #{_lambda_.1} parent=0 // pred_check_branch
    %47 = sbr.rel (0) target = $region45
  $region44: #{_lambda_.1} parent=0 // pred_region
    _
  $region45: #{_lambda_.1} parent=0 // pred_fallthru
    _
  // Predicated region
  $region46: #{_lambda_.1} parent=0 // pred_check
    _
  $region47: #{_lambda_.1} parent=0 // pred_check_branch
    %49 = sbr.rel (0) target = $region49
  $region48: #{_lambda_.1} parent=0 // pred_region
    _
  $region49: #{_lambda_.1} parent=0 // pred_fallthru
    _
  // Predicated region
  $region50: #{_lambda_.1} parent=0 // pred_check
    _
  $region51: #{_lambda_.1} parent=0 // pred_check_branch
    %51 = sbr.rel (0) target = $region53
  $region52: #{_lambda_.1} parent=0 // pred_region
    _
  $region53: #{_lambda_.1} parent=0 // pred_fallthru
    _
  // Predicated region
  $region54: #{_lambda_.1} parent=0 // pred_check
    _
  $region55: #{_lambda_.1} parent=0 // pred_check_branch
    %53 = sbr.rel (0) target = $region57
  $region56: #{_lambda_.1} parent=0 // pred_region
    _
  $region57: #{_lambda_.1} parent=0 // pred_fallthru
    _
  // Predicated region
  $region58: #{_lambda_.1} parent=0 // pred_check
    _
  $region59: #{_lambda_.1} parent=0 // pred_check_branch
    %55 = sbr.rel (0) target = $region61
  $region60: #{_lambda_.1} parent=0 // pred_region
    _
  $region61: #{_lambda_.1} parent=0 // pred_fallthru
    _
  // Predicated region
  $region62: #{_lambda_.1} parent=0 // pred_check
    _
  $region63: #{_lambda_.1} parent=0 // pred_check_branch
    %57 = sbr.rel (0) target = $region65
  $region64: #{_lambda_.1} parent=0 // pred_region
    _
  $region65: #{_lambda_.1} parent=0 // pred_fallthru
    _
  // Predicated region
  $region66: #{_lambda_.1} parent=0 // pred_check
    _
  $region67: #{_lambda_.1} parent=0 // pred_check_branch
    %59 = sbr.rel (0) target = $region69
  $region68: #{_lambda_.1} parent=0 // pred_region
    _
  $region69: #{_lambda_.1} parent=0 // pred_fallthru
    _
  // Predicated region
  $region70: #{_lambda_.1} parent=0 // pred_check
    _
  $region71: #{_lambda_.1} parent=0 // pred_check_branch
    %61 = sbr.rel (0) target = $region73
  $region72: #{_lambda_.1} parent=0 // pred_region
    _
  $region73: #{_lambda_.1} parent=0 // pred_fallthru
    _
  // Predicated region
  $region74: #{_lambda_.1} parent=0 // pred_check
    _
  $region75: #{_lambda_.1} parent=0 // pred_check_branch
    %63 = sbr.rel (0) target = $region77
  $region76: #{_lambda_.1} parent=0 // pred_region
    _
  $region77: #{_lambda_.1} parent=0 // pred_fallthru
    _
  %v64 = vld [vmem:[%s0] sm:$0xff]
  %v65 = vld [vmem:[%s0 + $0x8] sm:$0xff]
  %v66 = vld [vmem:[%s3] sm:$0x1]
  %v67 = vld [vmem:[%s4] sm:$0x1]
  %vm68 = vcmask 261120
  %v69 = vsel %vm68, %v64, 0.0
  %70 = vadd.xlane.f32.xlu0 %v69
  %v71 = vpop.xlane.xlu0 %70
  %v72 = vsel %vm68, %v65, 0.0
  %73 = vadd.xlane.f32.xlu0 %v72
  %v74 = vpop.xlane.xlu0 %73
  %v75 = vrcp.pop 32.0
  %v76 = vmul.f32 %v71, %v75
  %v77 = vmul.f32 %v74, %v75
  %v78 = vsub.f32 %v64, %v76
  %v79 = vsub.f32 %v65, %v77
  %v80 = vmul.f32 %v78, %v78
  %v81 = vmul.f32 %v79, %v79
  %v82 = vsel %vm68, %v80, 0.0
  %83 = vadd.xlane.f32.xlu0 %v82
  %v84 = vpop.xlane.xlu0 %83
  %v85 = vsel %vm68, %v81, 0.0
  %86 = vadd.xlane.f32.xlu0 %v85
  %v87 = vpop.xlane.xlu0 %86
  %v88 = vmul.f32 %v84, %v75
  %v89 = vmul.f32 %v87, %v75
  %v90 = vadd.f32 %v88, 1e-12
  %v91 = vadd.f32 %v89, 1e-12
  %v92 = vrsqrt.pop %v90
  %v93 = vrsqrt.pop %v91
  %v94 = vmul.f32 %v78, %v92
  %v95 = vmul.f32 %v79, %v93
  %v97 = vlaneseq
  %v98 = vshrl.u32 %v97, 7
  %v99 = vsub.s32 0, %v98
  %v100 = vrot.slane %v66, %v99
  %v102 = vmul.f32 %v94, %v100
  %v103 = vmul.f32 %v95, %v100
  %v105 = vlaneseq
  %v106 = vshrl.u32 %v105, 7
  %v107 = vsub.s32 0, %v106
  %v108 = vrot.slane %v67, %v107
  %v110 = vadd.f32 %v102, %v108
  %v111 = vadd.f32 %v103, %v108
  %v112 = vld [vmem:[%s1] sm:$0x1]
  %v113 = vld [vmem:[%s1 + $0x1] sm:$0x1]
  %v114 = vld [vmem:[%s5] sm:$0xff]
  %v115 = vld [vmem:[%s5 + $0x8] sm:$0xff]
  %v116 = vld [vmem:[%s5 + $0x10] sm:$0xff]
  %v117 = vld [vmem:[%s5 + $0x18] sm:$0xff]
  %v118 = vld [vmem:[%s6] sm:$0x1]
  %v120 = vlaneseq
  %v121 = vshrl.u32 %v120, 7
  %v122 = vsub.s32 0, %v121
  %v123 = vrot.slane %v118, %v122
  %v126 = vsel %vm68, %v110, 0
  %v129 = vsel %vm68, %v111, 0
  %131 = vmatprep.subr.mxu0 0.0
  %132 = vmatpush1.msra.mxu0 %v114
  %133 = vmatprep.subr.mxu0 0.0
  %134 = vmatpush1.msra.mxu0 %v115
  %135 = vmatprep.subr.mxu0 0.0
  %136 = vmatpush1.msra.mxu0 %v116
  %137 = vmatprep.subr.mxu0 0.0
  %138 = vmatpush1.msra.mxu0 %v117
  %139 = vmatprep.subr.mxu0 0.0
  %140 = vmatpush1.msra.mxu0 0.0
  %141 = vmatprep.subr.mxu0 0.0
  %142 = vmatpush1.msra.mxu0 0.0
  %143 = vmatprep.subr.mxu0 0.0
  %144 = vmatpush1.msra.mxu0 0.0
  %145 = vmatprep.subr.mxu0 0.0
  %146 = vmatpush1.msra.mxu0 0.0
  %147 = vmatprep.subr.mxu0 0.0
  %148 = vmatpush1.msra.mxu0 0.0
  %149 = vmatprep.subr.mxu0 0.0
  %150 = vmatpush1.msra.mxu0 0.0
  %151 = vmatprep.subr.mxu0 0.0
  %152 = vmatpush1.msra.mxu0 0.0
  %153 = vmatprep.subr.mxu0 0.0
  %154 = vmatpush1.msra.mxu0 0.0
  %155 = vmatprep.subr.mxu0 0.0
  %156 = vmatpush1.msra.mxu0 0.0
  %157 = vmatprep.subr.mxu0 0.0
  %158 = vmatpush1.msra.mxu0 0.0
  %159 = vmatprep.subr.mxu0 0.0
  %160 = vmatpush1.msra.mxu0 0.0
  %161 = vmatprep.subr.mxu0 0.0
  %162 = vmatpush1.msra.mxu0 0.0
  %163 = vmatprep.subr.mxu0 0.0
  %164 = vmatpush1.msra.mxu0 0.0
  %165 = vmatprep.subr.mxu0 0.0
  %166 = vmatpush1.msra.mxu0 0.0
  %167 = vmatprep.subr.mxu0 0.0
  %168 = vmatpush1.msra.mxu0 0.0
  %169 = vmatprep.subr.mxu0 0.0
  %170 = vmatpush1.msra.mxu0 0.0
  %171 = vmatprep.subr.mxu0 0.0
  %172 = vmatpush1.msra.mxu0 0.0
  %173 = vmatprep.subr.mxu0 0.0
  %174 = vmatpush1.msra.mxu0 0.0
  %175 = vmatprep.subr.mxu0 0.0
  %176 = vmatpush1.msra.mxu0 0.0
  %177 = vmatprep.subr.mxu0 0.0
  %178 = vmatpush1.msra.mxu0 0.0
  %179 = vmatprep.subr.mxu0 0.0
  %180 = vmatpush1.msra.mxu0 0.0
  %181 = vmatprep.subr.mxu0 0.0
  %182 = vmatpush1.msra.mxu0 0.0
  %183 = vmatprep.subr.mxu0 0.0
  %184 = vmatpush1.msra.mxu0 0.0
  %185 = vmatprep.subr.mxu0 0.0
  %186 = vmatpush1.msra.mxu0 0.0
  %187 = vmatprep.subr.mxu0 0.0
  %188 = vmatpush1.msra.mxu0 0.0
  %189 = vmatprep.subr.mxu0 0.0
  %190 = vmatpush1.msra.mxu0 0.0
  %191 = vmatprep.subr.mxu0 0.0
  %192 = vmatpush1.msra.mxu0 0.0
  %193 = vmatprep.subr.mxu0 0.0
  %194 = vmatpush1.msra.mxu0 0.0
  %195 = vmatprep.mubr.f32.mxu0 0.0
  %196 = vmatmul.mubr.f32.gmra.mrb[0].mxu0 %v126
  %v197 = vpop.f32.mrb[0].mxu0
  %v198 = vadd.f32 %v123, %v197
  %v199 = vpop.f32.mrb[0].mxu0
  %200 = vmatprep.mubr.f32.mxu0 0.0
  %201 = vmatmul.mubr.f32.gmra.mrb[0].mxu0 %v129
  %v202 = vpop.f32.mrb[0].mxu0
  %v203 = vadd.f32 %v123, %v202
  %v204 = vpop.f32.mrb[0].mxu0
  %205 = vdwg.mxu0
  %s206 = scalar_lea.vmem %s5, 32
  %v207 = vld [vmem:[%s206] sm:$0xff]
  %v208 = vld [vmem:[%s206 + $0x8] sm:$0xff]
  %v209 = vld [vmem:[%s206 + $0x10] sm:$0xff]
  %v210 = vld [vmem:[%s206 + $0x18] sm:$0xff]
  %s211 = scalar_lea.vmem %s6, 1
  %v212 = vld [vmem:[%s211] sm:$0x1]
  %v214 = vlaneseq
  %v215 = vshrl.u32 %v214, 7
  %v216 = vsub.s32 0, %v215
  %v217 = vrot.slane %v212, %v216
  %219 = vmatprep.subr.mxu0 0.0
  %220 = vmatpush1.msra.mxu0 %v207
  %221 = vmatprep.subr.mxu0 0.0
  %222 = vmatpush1.msra.mxu0 %v208
  %223 = vmatprep.subr.mxu0 0.0
  %224 = vmatpush1.msra.mxu0 %v209
  %225 = vmatprep.subr.mxu0 0.0
  %226 = vmatpush1.msra.mxu0 %v210
  %227 = vmatprep.subr.mxu0 0.0
  %228 = vmatpush1.msra.mxu0 0.0
  %229 = vmatprep.subr.mxu0 0.0
  %230 = vmatpush1.msra.mxu0 0.0
  %231 = vmatprep.subr.mxu0 0.0
  %232 = vmatpush1.msra.mxu0 0.0
  %233 = vmatprep.subr.mxu0 0.0
  %234 = vmatpush1.msra.mxu0 0.0
  %235 = vmatprep.subr.mxu0 0.0
  %236 = vmatpush1.msra.mxu0 0.0
  %237 = vmatprep.subr.mxu0 0.0
  %238 = vmatpush1.msra.mxu0 0.0
  %239 = vmatprep.subr.mxu0 0.0
  %240 = vmatpush1.msra.mxu0 0.0
  %241 = vmatprep.subr.mxu0 0.0
  %242 = vmatpush1.msra.mxu0 0.0
  %243 = vmatprep.subr.mxu0 0.0
  %244 = vmatpush1.msra.mxu0 0.0
  %245 = vmatprep.subr.mxu0 0.0
  %246 = vmatpush1.msra.mxu0 0.0
  %247 = vmatprep.subr.mxu0 0.0
  %248 = vmatpush1.msra.mxu0 0.0
  %249 = vmatprep.subr.mxu0 0.0
  %250 = vmatpush1.msra.mxu0 0.0
  %251 = vmatprep.subr.mxu0 0.0
  %252 = vmatpush1.msra.mxu0 0.0
  %253 = vmatprep.subr.mxu0 0.0
  %254 = vmatpush1.msra.mxu0 0.0
  %255 = vmatprep.subr.mxu0 0.0
  %256 = vmatpush1.msra.mxu0 0.0
  %257 = vmatprep.subr.mxu0 0.0
  %258 = vmatpush1.msra.mxu0 0.0
  %259 = vmatprep.subr.mxu0 0.0
  %260 = vmatpush1.msra.mxu0 0.0
  %261 = vmatprep.subr.mxu0 0.0
  %262 = vmatpush1.msra.mxu0 0.0
  %263 = vmatprep.subr.mxu0 0.0
  %264 = vmatpush1.msra.mxu0 0.0
  %265 = vmatprep.subr.mxu0 0.0
  %266 = vmatpush1.msra.mxu0 0.0
  %267 = vmatprep.subr.mxu0 0.0
  %268 = vmatpush1.msra.mxu0 0.0
  %269 = vmatprep.subr.mxu0 0.0
  %270 = vmatpush1.msra.mxu0 0.0
  %271 = vmatprep.subr.mxu0 0.0
  %272 = vmatpush1.msra.mxu0 0.0
  %273 = vmatprep.subr.mxu0 0.0
  %274 = vmatpush1.msra.mxu0 0.0
  %275 = vmatprep.subr.mxu0 0.0
  %276 = vmatpush1.msra.mxu0 0.0
  %277 = vmatprep.subr.mxu0 0.0
  %278 = vmatpush1.msra.mxu0 0.0
  %279 = vmatprep.subr.mxu0 0.0
  %280 = vmatpush1.msra.mxu0 0.0
  %281 = vmatprep.subr.mxu0 0.0
  %282 = vmatpush1.msra.mxu0 0.0
  %283 = vmatprep.mubr.f32.mxu0 0.0
  %284 = vmatmul.mubr.f32.gmra.mrb[0].mxu0 %v126
  %v285 = vpop.f32.mrb[0].mxu0
  %v286 = vadd.f32 %v217, %v285
  %v287 = vpop.f32.mrb[0].mxu0
  %288 = vmatprep.mubr.f32.mxu0 0.0
  %289 = vmatmul.mubr.f32.gmra.mrb[0].mxu0 %v129
  %v290 = vpop.f32.mrb[0].mxu0
  %v291 = vadd.f32 %v217, %v290
  %v292 = vpop.f32.mrb[0].mxu0
  %293 = vdwg.mxu0
  %s294 = scalar_lea.vmem %s5, 64
  %v295 = vld [vmem:[%s294] sm:$0xff]
  %v296 = vld [vmem:[%s294 + $0x8] sm:$0xff]
  %v297 = vld [vmem:[%s294 + $0x10] sm:$0xff]
  %v298 = vld [vmem:[%s294 + $0x18] sm:$0xff]
  %s299 = scalar_lea.vmem %s6, 2
  %v300 = vld [vmem:[%s299] sm:$0x1]
  %v302 = vlaneseq
  %v303 = vshrl.u32 %v302, 7
  %v304 = vsub.s32 0, %v303
  %v305 = vrot.slane %v300, %v304
  %307 = vmatprep.subr.mxu0 0.0
  %308 = vmatpush1.msra.mxu0 %v295
  %309 = vmatprep.subr.mxu0 0.0
  %310 = vmatpush1.msra.mxu0 %v296
  %311 = vmatprep.subr.mxu0 0.0
  %312 = vmatpush1.msra.mxu0 %v297
  %313 = vmatprep.subr.mxu0 0.0
  %314 = vmatpush1.msra.mxu0 %v298
  %315 = vmatprep.subr.mxu0 0.0
  %316 = vmatpush1.msra.mxu0 0.0
  %317 = vmatprep.subr.mxu0 0.0
  %318 = vmatpush1.msra.mxu0 0.0
  %319 = vmatprep.subr.mxu0 0.0
  %320 = vmatpush1.msra.mxu0 0.0
  %321 = vmatprep.subr.mxu0 0.0
  %322 = vmatpush1.msra.mxu0 0.0
  %323 = vmatprep.subr.mxu0 0.0
  %324 = vmatpush1.msra.mxu0 0.0
  %325 = vmatprep.subr.mxu0 0.0
  %326 = vmatpush1.msra.mxu0 0.0
  %327 = vmatprep.subr.mxu0 0.0
  %328 = vmatpush1.msra.mxu0 0.0
  %329 = vmatprep.subr.mxu0 0.0
  %330 = vmatpush1.msra.mxu0 0.0
  %331 = vmatprep.subr.mxu0 0.0
  %332 = vmatpush1.msra.mxu0 0.0
  %333 = vmatprep.subr.mxu0 0.0
  %334 = vmatpush1.msra.mxu0 0.0
  %335 = vmatprep.subr.mxu0 0.0
  %336 = vmatpush1.msra.mxu0 0.0
  %337 = vmatprep.subr.mxu0 0.0
  %338 = vmatpush1.msra.mxu0 0.0
  %339 = vmatprep.subr.mxu0 0.0
  %340 = vmatpush1.msra.mxu0 0.0
  %341 = vmatprep.subr.mxu0 0.0
  %342 = vmatpush1.msra.mxu0 0.0
  %343 = vmatprep.subr.mxu0 0.0
  %344 = vmatpush1.msra.mxu0 0.0
  %345 = vmatprep.subr.mxu0 0.0
  %346 = vmatpush1.msra.mxu0 0.0
  %347 = vmatprep.subr.mxu0 0.0
  %348 = vmatpush1.msra.mxu0 0.0
  %349 = vmatprep.subr.mxu0 0.0
  %350 = vmatpush1.msra.mxu0 0.0
  %351 = vmatprep.subr.mxu0 0.0
  %352 = vmatpush1.msra.mxu0 0.0
  %353 = vmatprep.subr.mxu0 0.0
  %354 = vmatpush1.msra.mxu0 0.0
  %355 = vmatprep.subr.mxu0 0.0
  %356 = vmatpush1.msra.mxu0 0.0
  %357 = vmatprep.subr.mxu0 0.0
  %358 = vmatpush1.msra.mxu0 0.0
  %359 = vmatprep.subr.mxu0 0.0
  %360 = vmatpush1.msra.mxu0 0.0
  %361 = vmatprep.subr.mxu0 0.0
  %362 = vmatpush1.msra.mxu0 0.0
  %363 = vmatprep.subr.mxu0 0.0
  %364 = vmatpush1.msra.mxu0 0.0
  %365 = vmatprep.subr.mxu0 0.0
  %366 = vmatpush1.msra.mxu0 0.0
  %367 = vmatprep.subr.mxu0 0.0
  %368 = vmatpush1.msra.mxu0 0.0
  %369 = vmatprep.subr.mxu0 0.0
  %370 = vmatpush1.msra.mxu0 0.0
  %371 = vmatprep.mubr.f32.mxu0 0.0
  %372 = vmatmul.mubr.f32.gmra.mrb[0].mxu0 %v126
  %v373 = vpop.f32.mrb[0].mxu0
  %v374 = vadd.f32 %v305, %v373
  %v375 = vpop.f32.mrb[0].mxu0
  %376 = vmatprep.mubr.f32.mxu0 0.0
  %377 = vmatmul.mubr.f32.gmra.mrb[0].mxu0 %v129
  %v378 = vpop.f32.mrb[0].mxu0
  %v379 = vadd.f32 %v305, %v378
  %v380 = vpop.f32.mrb[0].mxu0
  %381 = vdwg.mxu0
  %vm382 = vcmask 64512
  %383 = vst.msk [vmem:[#allocation2] sm:$0xff] %vm382, %v198
  %384 = vst.msk [vmem:[#allocation3] sm:$0xff] %vm382, %v286
  %385 = vst.msk [vmem:[#allocation4] sm:$0xff] %vm382, %v374
  %387 = vrot.lane.b32.xlu0 %v198, 120
  %v388 = vpop.permute.xlu0 %387
  %s390 = scalar_lea.vmem [#allocation2], 8
  %391 = vst.msk [vmem:[%s390] sm:$0xff] %vm382, %v388
  %393 = vrot.lane.b32.xlu0 %v286, 120
  %v394 = vpop.permute.xlu0 %393
  %s396 = scalar_lea.vmem [#allocation3], 8
  %397 = vst.msk [vmem:[%s396] sm:$0xff] %vm382, %v394
  %399 = vrot.lane.b32.xlu0 %v374, 120
  %v400 = vpop.permute.xlu0 %399
  %s402 = scalar_lea.vmem [#allocation4], 8
  %403 = vst.msk [vmem:[%s402] sm:$0xff] %vm382, %v400
  %404 = vrot.lane.b32.xlu0 %v198, 112
  %v405 = vpop.permute.xlu0 %404
  %s407 = scalar_lea.vmem [#allocation2], 16
  %408 = vst.msk [vmem:[%s407] sm:$0xff] %vm382, %v405
  %409 = vrot.lane.b32.xlu0 %v286, 112
  %v410 = vpop.permute.xlu0 %409
  %s412 = scalar_lea.vmem [#allocation3], 16
  %413 = vst.msk [vmem:[%s412] sm:$0xff] %vm382, %v410
  %414 = vrot.lane.b32.xlu0 %v374, 112
  %v415 = vpop.permute.xlu0 %414
  %s417 = scalar_lea.vmem [#allocation4], 16
  %418 = vst.msk [vmem:[%s417] sm:$0xff] %vm382, %v415
  %419 = vrot.lane.b32.xlu0 %v198, 104
  %v420 = vpop.permute.xlu0 %419
  %s422 = scalar_lea.vmem [#allocation2], 24
  %423 = vst.msk [vmem:[%s422] sm:$0xff] %vm382, %v420
  %424 = vrot.lane.b32.xlu0 %v286, 104
  %v425 = vpop.permute.xlu0 %424
  %s427 = scalar_lea.vmem [#allocation3], 24
  %428 = vst.msk [vmem:[%s427] sm:$0xff] %vm382, %v425
  %429 = vrot.lane.b32.xlu0 %v374, 104
  %v430 = vpop.permute.xlu0 %429
  %s432 = scalar_lea.vmem [#allocation4], 24
  %433 = vst.msk [vmem:[%s432] sm:$0xff] %vm382, %v430
  %s434 = scalar_lea.vmem [#allocation2], 32
  %435 = vst.msk [vmem:[%s434] sm:$0xff] %vm382, %v203
  %s436 = scalar_lea.vmem [#allocation3], 32
  %437 = vst.msk [vmem:[%s436] sm:$0xff] %vm382, %v291
  %s438 = scalar_lea.vmem [#allocation4], 32
  %439 = vst.msk [vmem:[%s438] sm:$0xff] %vm382, %v379
  %441 = vrot.lane.b32.xlu0 %v203, 120
  %v442 = vpop.permute.xlu0 %441
  %s444 = scalar_lea.vmem [#allocation2], 40
  %445 = vst.msk [vmem:[%s444] sm:$0xff] %vm382, %v442
  %447 = vrot.lane.b32.xlu0 %v291, 120
  %v448 = vpop.permute.xlu0 %447
  %s450 = scalar_lea.vmem [#allocation3], 40
  %451 = vst.msk [vmem:[%s450] sm:$0xff] %vm382, %v448
  %453 = vrot.lane.b32.xlu0 %v379, 120
  %v454 = vpop.permute.xlu0 %453
  %s456 = scalar_lea.vmem [#allocation4], 40
  %457 = vst.msk [vmem:[%s456] sm:$0xff] %vm382, %v454
  %458 = vrot.lane.b32.xlu0 %v203, 112
  %v459 = vpop.permute.xlu0 %458
  %s461 = scalar_lea.vmem [#allocation2], 48
  %462 = vst.msk [vmem:[%s461] sm:$0xff] %vm382, %v459
  %463 = vrot.lane.b32.xlu0 %v291, 112
  %v464 = vpop.permute.xlu0 %463
  %s466 = scalar_lea.vmem [#allocation3], 48
  %467 = vst.msk [vmem:[%s466] sm:$0xff] %vm382, %v464
  %468 = vrot.lane.b32.xlu0 %v379, 112
  %v469 = vpop.permute.xlu0 %468
  %s471 = scalar_lea.vmem [#allocation4], 48
  %472 = vst.msk [vmem:[%s471] sm:$0xff] %vm382, %v469
  %473 = vrot.lane.b32.xlu0 %v203, 104
  %v474 = vpop.permute.xlu0 %473
  %s476 = scalar_lea.vmem [#allocation2], 56
  %477 = vst.msk [vmem:[%s476] sm:$0xff] %vm382, %v474
  %478 = vrot.lane.b32.xlu0 %v291, 104
  %v479 = vpop.permute.xlu0 %478
  %s481 = scalar_lea.vmem [#allocation3], 56
  %482 = vst.msk [vmem:[%s481] sm:$0xff] %vm382, %v479
  %483 = vrot.lane.b32.xlu0 %v379, 104
  %v484 = vpop.permute.xlu0 %483
  %s486 = scalar_lea.vmem [#allocation4], 56
  %487 = vst.msk [vmem:[%s486] sm:$0xff] %vm382, %v484
  %v488 = vld [vmem:[%s7] sm:$0xff]
  %v489 = vld [vmem:[%s7 + $0x8] sm:$0xff]
  %v490 = vld [vmem:[%s7 + $0x10] sm:$0xff]
  %v491 = vld [vmem:[%s7 + $0x18] sm:$0xff]
  %v492 = vld [vmem:[#allocation2] sm:$0xff]
  %v493 = vld [vmem:[#allocation2 + $0x8] sm:$0xff]
  %v494 = vld [vmem:[#allocation2 + $0x10] sm:$0xff]
  %v495 = vld [vmem:[#allocation2 + $0x18] sm:$0xff]
  %v496 = vld [vmem:[#allocation3] sm:$0xff]
  %v497 = vld [vmem:[#allocation3 + $0x8] sm:$0xff]
  %v498 = vld [vmem:[#allocation3 + $0x10] sm:$0xff]
  %v499 = vld [vmem:[#allocation3 + $0x18] sm:$0xff]
  %v500 = vld [vmem:[#allocation4] sm:$0xff]
  %v501 = vld [vmem:[#allocation4 + $0x8] sm:$0xff]
  %v502 = vld [vmem:[#allocation4 + $0x10] sm:$0xff]
  %v503 = vld [vmem:[#allocation4 + $0x18] sm:$0xff]
  %v505 = vsel %vm382, %v492, 0
  %v508 = vsel %vm382, %v496, 0
  %510 = vmatprep.subr.mxu0 0.0
  %511 = vmatpush1.xpose.msra.mxu0 %v508
  %512 = vmatprep.subr.mxu0 0.0
  %513 = vmatpush1.xpose.msra.mxu0 0.0
  %514 = vmatprep.subr.mxu0 0.0
  %515 = vmatpush1.xpose.msra.mxu0 0.0
  %516 = vmatprep.subr.mxu0 0.0
  %517 = vmatpush1.xpose.msra.mxu0 0.0
  %518 = vmatprep.subr.mxu0 0.0
  %519 = vmatpush1.xpose.msra.mxu0 0.0
  %520 = vmatprep.subr.mxu0 0.0
  %521 = vmatpush1.xpose.msra.mxu0 0.0
  %522 = vmatprep.subr.mxu0 0.0
  %523 = vmatpush1.xpose.msra.mxu0 0.0
  %524 = vmatprep.subr.mxu0 0.0
  %525 = vmatpush1.xpose.msra.mxu0 0.0
  %526 = vmatprep.subr.mxu0 0.0
  %527 = vmatpush1.xpose.msra.mxu0 0.0
  %528 = vmatprep.subr.mxu0 0.0
  %529 = vmatpush1.xpose.msra.mxu0 0.0
  %530 = vmatprep.subr.mxu0 0.0
  %531 = vmatpush1.xpose.msra.mxu0 0.0
  %532 = vmatprep.subr.mxu0 0.0
  %533 = vmatpush1.xpose.msra.mxu0 0.0
  %534 = vmatprep.subr.mxu0 0.0
  %535 = vmatpush1.xpose.msra.mxu0 0.0
  %536 = vmatprep.subr.mxu0 0.0
  %537 = vmatpush1.xpose.msra.mxu0 0.0
  %538 = vmatprep.subr.mxu0 0.0
  %539 = vmatpush1.xpose.msra.mxu0 0.0
  %540 = vmatprep.subr.mxu0 0.0
  %541 = vmatpush1.xpose.msra.mxu0 0.0
  %542 = vmatprep.subr.mxu0 0.0
  %543 = vmatpush1.xpose.msra.mxu0 0.0
  %544 = vmatprep.subr.mxu0 0.0
  %545 = vmatpush1.xpose.msra.mxu0 0.0
  %546 = vmatprep.subr.mxu0 0.0
  %547 = vmatpush1.xpose.msra.mxu0 0.0
  %548 = vmatprep.subr.mxu0 0.0
  %549 = vmatpush1.xpose.msra.mxu0 0.0
  %550 = vmatprep.subr.mxu0 0.0
  %551 = vmatpush1.xpose.msra.mxu0 0.0
  %552 = vmatprep.subr.mxu0 0.0
  %553 = vmatpush1.xpose.msra.mxu0 0.0
  %554 = vmatprep.subr.mxu0 0.0
  %555 = vmatpush1.xpose.msra.mxu0 0.0
  %556 = vmatprep.subr.mxu0 0.0
  %557 = vmatpush1.xpose.msra.mxu0 0.0
  %558 = vmatprep.subr.mxu0 0.0
  %559 = vmatpush1.xpose.msra.mxu0 0.0
  %560 = vmatprep.subr.mxu0 0.0
  %561 = vmatpush1.xpose.msra.mxu0 0.0
  %562 = vmatprep.subr.mxu0 0.0
  %563 = vmatpush1.xpose.msra.mxu0 0.0
  %564 = vmatprep.subr.mxu0 0.0
  %565 = vmatpush1.xpose.msra.mxu0 0.0
  %566 = vmatprep.subr.mxu0 0.0
  %567 = vmatpush1.xpose.msra.mxu0 0.0
  %568 = vmatprep.subr.mxu0 0.0
  %569 = vmatpush1.xpose.msra.mxu0 0.0
  %570 = vmatprep.subr.mxu0 0.0
  %571 = vmatpush1.xpose.msra.mxu0 0.0
  %572 = vmatprep.subr.mxu0 0.0
  %573 = vmatpush1.xpose.msra.mxu0 0.0
  %574 = vmatprep.mubr.f32.mxu0 0.0
  %575 = vmatmul.mubr.f32.gmra.mrb[0].mxu0 %v505
  %v576 = vpop.f32.mrb[0].mxu0
  %v577 = vadd.f32 0.0, %v576
  %v578 = vpop.f32.mrb[0].mxu0
  %579 = vdwg.mxu0
  %v581 = vsel %vm382, %v493, 0
  %v584 = vsel %vm382, %v497, 0
  %586 = vmatprep.subr.mxu0 0.0
  %587 = vmatpush1.xpose.msra.mxu0 %v584
  %588 = vmatprep.subr.mxu0 0.0
  %589 = vmatpush1.xpose.msra.mxu0 0.0
  %590 = vmatprep.subr.mxu0 0.0
  %591 = vmatpush1.xpose.msra.mxu0 0.0
  %592 = vmatprep.subr.mxu0 0.0
  %593 = vmatpush1.xpose.msra.mxu0 0.0
  %594 = vmatprep.subr.mxu0 0.0
  %595 = vmatpush1.xpose.msra.mxu0 0.0
  %596 = vmatprep.subr.mxu0 0.0
  %597 = vmatpush1.xpose.msra.mxu0 0.0
  %598 = vmatprep.subr.mxu0 0.0
  %599 = vmatpush1.xpose.msra.mxu0 0.0
  %600 = vmatprep.subr.mxu0 0.0
  %601 = vmatpush1.xpose.msra.mxu0 0.0
  %602 = vmatprep.subr.mxu0 0.0
  %603 = vmatpush1.xpose.msra.mxu0 0.0
  %604 = vmatprep.subr.mxu0 0.0
  %605 = vmatpush1.xpose.msra.mxu0 0.0
  %606 = vmatprep.subr.mxu0 0.0
  %607 = vmatpush1.xpose.msra.mxu0 0.0
  %608 = vmatprep.subr.mxu0 0.0
  %609 = vmatpush1.xpose.msra.mxu0 0.0
  %610 = vmatprep.subr.mxu0 0.0
  %611 = vmatpush1.xpose.msra.mxu0 0.0
  %612 = vmatprep.subr.mxu0 0.0
  %613 = vmatpush1.xpose.msra.mxu0 0.0
  %614 = vmatprep.subr.mxu0 0.0
  %615 = vmatpush1.xpose.msra.mxu0 0.0
  %616 = vmatprep.subr.mxu0 0.0
  %617 = vmatpush1.xpose.msra.mxu0 0.0
  %618 = vmatprep.subr.mxu0 0.0
  %619 = vmatpush1.xpose.msra.mxu0 0.0
  %620 = vmatprep.subr.mxu0 0.0
  %621 = vmatpush1.xpose.msra.mxu0 0.0
  %622 = vmatprep.subr.mxu0 0.0
  %623 = vmatpush1.xpose.msra.mxu0 0.0
  %624 = vmatprep.subr.mxu0 0.0
  %625 = vmatpush1.xpose.msra.mxu0 0.0
  %626 = vmatprep.subr.mxu0 0.0
  %627 = vmatpush1.xpose.msra.mxu0 0.0
  %628 = vmatprep.subr.mxu0 0.0
  %629 = vmatpush1.xpose.msra.mxu0 0.0
  %630 = vmatprep.subr.mxu0 0.0
  %631 = vmatpush1.xpose.msra.mxu0 0.0
  %632 = vmatprep.subr.mxu0 0.0
  %633 = vmatpush1.xpose.msra.mxu0 0.0
  %634 = vmatprep.subr.mxu0 0.0
  %635 = vmatpush1.xpose.msra.mxu0 0.0
  %636 = vmatprep.subr.mxu0 0.0
  %637 = vmatpush1.xpose.msra.mxu0 0.0
  %638 = vmatprep.subr.mxu0 0.0
  %639 = vmatpush1.xpose.msra.mxu0 0.0
  %640 = vmatprep.subr.mxu0 0.0
  %641 = vmatpush1.xpose.msra.mxu0 0.0
  %642 = vmatprep.subr.mxu0 0.0
  %643 = vmatpush1.xpose.msra.mxu0 0.0
  %644 = vmatprep.subr.mxu0 0.0
  %645 = vmatpush1.xpose.msra.mxu0 0.0
  %646 = vmatprep.subr.mxu0 0.0
  %647 = vmatpush1.xpose.msra.mxu0 0.0
  %648 = vmatprep.subr.mxu0 0.0
  %649 = vmatpush1.xpose.msra.mxu0 0.0
  %650 = vmatprep.mubr.f32.mxu0 0.0
  %651 = vmatmul.mubr.f32.gmra.mrb[0].mxu0 %v581
  %v652 = vpop.f32.mrb[0].mxu0
  %v653 = vadd.f32 0.0, %v652
  %v654 = vpop.f32.mrb[0].mxu0
  %655 = vdwg.mxu0
  %v657 = vsel %vm382, %v494, 0
  %v660 = vsel %vm382, %v498, 0
  %662 = vmatprep.subr.mxu0 0.0
  %663 = vmatpush1.xpose.msra.mxu0 %v660
  %664 = vmatprep.subr.mxu0 0.0
  %665 = vmatpush1.xpose.msra.mxu0 0.0
  %666 = vmatprep.subr.mxu0 0.0
  %667 = vmatpush1.xpose.msra.mxu0 0.0
  %668 = vmatprep.subr.mxu0 0.0
  %669 = vmatpush1.xpose.msra.mxu0 0.0
  %670 = vmatprep.subr.mxu0 0.0
  %671 = vmatpush1.xpose.msra.mxu0 0.0
  %672 = vmatprep.subr.mxu0 0.0
  %673 = vmatpush1.xpose.msra.mxu0 0.0
  %674 = vmatprep.subr.mxu0 0.0
  %675 = vmatpush1.xpose.msra.mxu0 0.0
  %676 = vmatprep.subr.mxu0 0.0
  %677 = vmatpush1.xpose.msra.mxu0 0.0
  %678 = vmatprep.subr.mxu0 0.0
  %679 = vmatpush1.xpose.msra.mxu0 0.0
  %680 = vmatprep.subr.mxu0 0.0
  %681 = vmatpush1.xpose.msra.mxu0 0.0
  %682 = vmatprep.subr.mxu0 0.0
  %683 = vmatpush1.xpose.msra.mxu0 0.0
  %684 = vmatprep.subr.mxu0 0.0
  %685 = vmatpush1.xpose.msra.mxu0 0.0
  %686 = vmatprep.subr.mxu0 0.0
  %687 = vmatpush1.xpose.msra.mxu0 0.0
  %688 = vmatprep.subr.mxu0 0.0
  %689 = vmatpush1.xpose.msra.mxu0 0.0
  %690 = vmatprep.subr.mxu0 0.0
  %691 = vmatpush1.xpose.msra.mxu0 0.0
  %692 = vmatprep.subr.mxu0 0.0
  %693 = vmatpush1.xpose.msra.mxu0 0.0
  %694 = vmatprep.subr.mxu0 0.0
  %695 = vmatpush1.xpose.msra.mxu0 0.0
  %696 = vmatprep.subr.mxu0 0.0
  %697 = vmatpush1.xpose.msra.mxu0 0.0
  %698 = vmatprep.subr.mxu0 0.0
  %699 = vmatpush1.xpose.msra.mxu0 0.0
  %700 = vmatprep.subr.mxu0 0.0
  %701 = vmatpush1.xpose.msra.mxu0 0.0
  %702 = vmatprep.subr.mxu0 0.0
  %703 = vmatpush1.xpose.msra.mxu0 0.0
  %704 = vmatprep.subr.mxu0 0.0
  %705 = vmatpush1.xpose.msra.mxu0 0.0
  %706 = vmatprep.subr.mxu0 0.0
  %707 = vmatpush1.xpose.msra.mxu0 0.0
  %708 = vmatprep.subr.mxu0 0.0
  %709 = vmatpush1.xpose.msra.mxu0 0.0
  %710 = vmatprep.subr.mxu0 0.0
  %711 = vmatpush1.xpose.msra.mxu0 0.0
  %712 = vmatprep.subr.mxu0 0.0
  %713 = vmatpush1.xpose.msra.mxu0 0.0
  %714 = vmatprep.subr.mxu0 0.0
  %715 = vmatpush1.xpose.msra.mxu0 0.0
  %716 = vmatprep.subr.mxu0 0.0
  %717 = vmatpush1.xpose.msra.mxu0 0.0
  %718 = vmatprep.subr.mxu0 0.0
  %719 = vmatpush1.xpose.msra.mxu0 0.0
  %720 = vmatprep.subr.mxu0 0.0
  %721 = vmatpush1.xpose.msra.mxu0 0.0
  %722 = vmatprep.subr.mxu0 0.0
  %723 = vmatpush1.xpose.msra.mxu0 0.0
  %724 = vmatprep.subr.mxu0 0.0
  %725 = vmatpush1.xpose.msra.mxu0 0.0
  %726 = vmatprep.mubr.f32.mxu0 0.0
  %727 = vmatmul.mubr.f32.gmra.mrb[0].mxu0 %v657
  %v728 = vpop.f32.mrb[0].mxu0
  %v729 = vadd.f32 0.0, %v728
  %v730 = vpop.f32.mrb[0].mxu0
  %731 = vdwg.mxu0
  %v733 = vsel %vm382, %v495, 0
  %v736 = vsel %vm382, %v499, 0
  %738 = vmatprep.subr.mxu0 0.0
  %739 = vmatpush1.xpose.msra.mxu0 %v736
  %740 = vmatprep.subr.mxu0 0.0
  %741 = vmatpush1.xpose.msra.mxu0 0.0
  %742 = vmatprep.subr.mxu0 0.0
  %743 = vmatpush1.xpose.msra.mxu0 0.0
  %744 = vmatprep.subr.mxu0 0.0
  %745 = vmatpush1.xpose.msra.mxu0 0.0
  %746 = vmatprep.subr.mxu0 0.0
  %747 = vmatpush1.xpose.msra.mxu0 0.0
  %748 = vmatprep.subr.mxu0 0.0
  %749 = vmatpush1.xpose.msra.mxu0 0.0
  %750 = vmatprep.subr.mxu0 0.0
  %751 = vmatpush1.xpose.msra.mxu0 0.0
  %752 = vmatprep.subr.mxu0 0.0
  %753 = vmatpush1.xpose.msra.mxu0 0.0
  %754 = vmatprep.subr.mxu0 0.0
  %755 = vmatpush1.xpose.msra.mxu0 0.0
  %756 = vmatprep.subr.mxu0 0.0
  %757 = vmatpush1.xpose.msra.mxu0 0.0
  %758 = vmatprep.subr.mxu0 0.0
  %759 = vmatpush1.xpose.msra.mxu0 0.0
  %760 = vmatprep.subr.mxu0 0.0
  %761 = vmatpush1.xpose.msra.mxu0 0.0
  %762 = vmatprep.subr.mxu0 0.0
  %763 = vmatpush1.xpose.msra.mxu0 0.0
  %764 = vmatprep.subr.mxu0 0.0
  %765 = vmatpush1.xpose.msra.mxu0 0.0
  %766 = vmatprep.subr.mxu0 0.0
  %767 = vmatpush1.xpose.msra.mxu0 0.0
  %768 = vmatprep.subr.mxu0 0.0
  %769 = vmatpush1.xpose.msra.mxu0 0.0
  %770 = vmatprep.subr.mxu0 0.0
  %771 = vmatpush1.xpose.msra.mxu0 0.0
  %772 = vmatprep.subr.mxu0 0.0
  %773 = vmatpush1.xpose.msra.mxu0 0.0
  %774 = vmatprep.subr.mxu0 0.0
  %775 = vmatpush1.xpose.msra.mxu0 0.0
  %776 = vmatprep.subr.mxu0 0.0
  %777 = vmatpush1.xpose.msra.mxu0 0.0
  %778 = vmatprep.subr.mxu0 0.0
  %779 = vmatpush1.xpose.msra.mxu0 0.0
  %780 = vmatprep.subr.mxu0 0.0
  %781 = vmatpush1.xpose.msra.mxu0 0.0
  %782 = vmatprep.subr.mxu0 0.0
  %783 = vmatpush1.xpose.msra.mxu0 0.0
  %784 = vmatprep.subr.mxu0 0.0
  %785 = vmatpush1.xpose.msra.mxu0 0.0
  %786 = vmatprep.subr.mxu0 0.0
  %787 = vmatpush1.xpose.msra.mxu0 0.0
  %788 = vmatprep.subr.mxu0 0.0
  %789 = vmatpush1.xpose.msra.mxu0 0.0
  %790 = vmatprep.subr.mxu0 0.0
  %791 = vmatpush1.xpose.msra.mxu0 0.0
  %792 = vmatprep.subr.mxu0 0.0
  %793 = vmatpush1.xpose.msra.mxu0 0.0
  %794 = vmatprep.subr.mxu0 0.0
  %795 = vmatpush1.xpose.msra.mxu0 0.0
  %796 = vmatprep.subr.mxu0 0.0
  %797 = vmatpush1.xpose.msra.mxu0 0.0
  %798 = vmatprep.subr.mxu0 0.0
  %799 = vmatpush1.xpose.msra.mxu0 0.0
  %800 = vmatprep.subr.mxu0 0.0
  %801 = vmatpush1.xpose.msra.mxu0 0.0
  %802 = vmatprep.mubr.f32.mxu0 0.0
  %803 = vmatmul.mubr.f32.gmra.mrb[0].mxu0 %v733
  %v804 = vpop.f32.mrb[0].mxu0
  %v805 = vadd.f32 0.0, %v804
  %v806 = vpop.f32.mrb[0].mxu0
  %807 = vdwg.mxu0
  %v808 = vmul.f32 %v577, 0.35355338
  %v809 = vmul.f32 %v653, 0.35355338
  %v810 = vmul.f32 %v729, 0.35355338
  %v811 = vmul.f32 %v805, 0.35355338
  %v813 = vlaneseq
  %v814 = vshrl.u32 %v813, 7
  %v815 = vsub.s32 0, %v814
  %v816 = vrot.slane %v112, %v815
  %v818 = vadd.f32 %v808, %v816
  %v819 = vadd.f32 %v809, %v816
  %v820 = vadd.f32 %v810, %v816
  %v821 = vadd.f32 %v811, %v816
  %v822 = vsel %vm382, %v818, -inf
  %823 = vmax.xlane.f32.xlu0 %v822
  %v824 = vpop.xlane.xlu0 %823
  %v825 = vsel %vm382, %v819, -inf
  %826 = vmax.xlane.f32.xlu0 %v825
  %v827 = vpop.xlane.xlu0 %826
  %v828 = vsel %vm382, %v820, -inf
  %829 = vmax.xlane.f32.xlu0 %v828
  %v830 = vpop.xlane.xlu0 %829
  %v831 = vsel %vm382, %v821, -inf
  %832 = vmax.xlane.f32.xlu0 %v831
  %v833 = vpop.xlane.xlu0 %832
  %v834 = vsub.f32 %v818, %v824
  %v835 = vsub.f32 %v819, %v827
  %v836 = vsub.f32 %v820, %v830
  %v837 = vsub.f32 %v821, %v833
  %v838 = vmul.f32 %v834, 1.442695
  %v839 = vpow.pop %v838
  %v840 = vmul.f32 %v835, 1.442695
  %v841 = vpow.pop %v840
  %v842 = vmul.f32 %v836, 1.442695
  %v843 = vpow.pop %v842
  %v844 = vmul.f32 %v837, 1.442695
  %v845 = vpow.pop %v844
  %v846 = vsel %vm382, %v839, 0.0
  %847 = vadd.xlane.f32.xlu0 %v846
  %v848 = vpop.xlane.xlu0 %847
  %v849 = vsel %vm382, %v841, 0.0
  %850 = vadd.xlane.f32.xlu0 %v849
  %v851 = vpop.xlane.xlu0 %850
  %v852 = vsel %vm382, %v843, 0.0
  %853 = vadd.xlane.f32.xlu0 %v852
  %v854 = vpop.xlane.xlu0 %853
  %v855 = vsel %vm382, %v845, 0.0
  %856 = vadd.xlane.f32.xlu0 %v855
  %v857 = vpop.xlane.xlu0 %856
  %v858 = vrcp.pop %v848
  %v859 = vmul.f32 %v839, %v858
  %v860 = vrcp.pop %v851
  %v861 = vmul.f32 %v841, %v860
  %v862 = vrcp.pop %v854
  %v863 = vmul.f32 %v843, %v862
  %v864 = vrcp.pop %v857
  %v865 = vmul.f32 %v845, %v864
  %v867 = vsel %vm382, %v859, 0
  %869 = vmatprep.subr.mxu0 0.0
  %870 = vmatpush1.msra.mxu0 %v500
  %871 = vmatprep.subr.mxu0 0.0
  %872 = vmatpush1.msra.mxu0 0.0
  %873 = vmatprep.subr.mxu0 0.0
  %874 = vmatpush1.msra.mxu0 0.0
  %875 = vmatprep.subr.mxu0 0.0
  %876 = vmatpush1.msra.mxu0 0.0
  %877 = vmatprep.subr.mxu0 0.0
  %878 = vmatpush1.msra.mxu0 0.0
  %879 = vmatprep.subr.mxu0 0.0
  %880 = vmatpush1.msra.mxu0 0.0
  %881 = vmatprep.subr.mxu0 0.0
  %882 = vmatpush1.msra.mxu0 0.0
  %883 = vmatprep.subr.mxu0 0.0
  %884 = vmatpush1.msra.mxu0 0.0
  %885 = vmatprep.subr.mxu0 0.0
  %886 = vmatpush1.msra.mxu0 0.0
  %887 = vmatprep.subr.mxu0 0.0
  %888 = vmatpush1.msra.mxu0 0.0
  %889 = vmatprep.subr.mxu0 0.0
  %890 = vmatpush1.msra.mxu0 0.0
  %891 = vmatprep.subr.mxu0 0.0
  %892 = vmatpush1.msra.mxu0 0.0
  %893 = vmatprep.subr.mxu0 0.0
  %894 = vmatpush1.msra.mxu0 0.0
  %895 = vmatprep.subr.mxu0 0.0
  %896 = vmatpush1.msra.mxu0 0.0
  %897 = vmatprep.subr.mxu0 0.0
  %898 = vmatpush1.msra.mxu0 0.0
  %899 = vmatprep.subr.mxu0 0.0
  %900 = vmatpush1.msra.mxu0 0.0
  %901 = vmatprep.subr.mxu0 0.0
  %902 = vmatpush1.msra.mxu0 0.0
  %903 = vmatprep.subr.mxu0 0.0
  %904 = vmatpush1.msra.mxu0 0.0
  %905 = vmatprep.subr.mxu0 0.0
  %906 = vmatpush1.msra.mxu0 0.0
  %907 = vmatprep.subr.mxu0 0.0
  %908 = vmatpush1.msra.mxu0 0.0
  %909 = vmatprep.subr.mxu0 0.0
  %910 = vmatpush1.msra.mxu0 0.0
  %911 = vmatprep.subr.mxu0 0.0
  %912 = vmatpush1.msra.mxu0 0.0
  %913 = vmatprep.subr.mxu0 0.0
  %914 = vmatpush1.msra.mxu0 0.0
  %915 = vmatprep.subr.mxu0 0.0
  %916 = vmatpush1.msra.mxu0 0.0
  %917 = vmatprep.subr.mxu0 0.0
  %918 = vmatpush1.msra.mxu0 0.0
  %919 = vmatprep.subr.mxu0 0.0
  %920 = vmatpush1.msra.mxu0 0.0
  %921 = vmatprep.subr.mxu0 0.0
  %922 = vmatpush1.msra.mxu0 0.0
  %923 = vmatprep.subr.mxu0 0.0
  %924 = vmatpush1.msra.mxu0 0.0
  %925 = vmatprep.subr.mxu0 0.0
  %926 = vmatpush1.msra.mxu0 0.0
  %927 = vmatprep.subr.mxu0 0.0
  %928 = vmatpush1.msra.mxu0 0.0
  %929 = vmatprep.subr.mxu0 0.0
  %930 = vmatpush1.msra.mxu0 0.0
  %931 = vmatprep.subr.mxu0 0.0
  %932 = vmatpush1.msra.mxu0 0.0
  %933 = vmatprep.mubr.f32.mxu0 0.0
  %934 = vmatmul.mubr.f32.gmra.mrb[0].mxu0 %v867
  %v935 = vpop.f32.mrb[0].mxu0
  %v936 = vadd.f32 0.0, %v935
  %v937 = vpop.f32.mrb[0].mxu0
  %938 = vdwg.mxu0
  %v940 = vsel %vm382, %v861, 0
  %942 = vmatprep.subr.mxu0 0.0
  %943 = vmatpush1.msra.mxu0 %v501
  %944 = vmatprep.subr.mxu0 0.0
  %945 = vmatpush1.msra.mxu0 0.0
  %946 = vmatprep.subr.mxu0 0.0
  %947 = vmatpush1.msra.mxu0 0.0
  %948 = vmatprep.subr.mxu0 0.0
  %949 = vmatpush1.msra.mxu0 0.0
  %950 = vmatprep.subr.mxu0 0.0
  %951 = vmatpush1.msra.mxu0 0.0
  %952 = vmatprep.subr.mxu0 0.0
  %953 = vmatpush1.msra.mxu0 0.0
  %954 = vmatprep.subr.mxu0 0.0
  %955 = vmatpush1.msra.mxu0 0.0
  %956 = vmatprep.subr.mxu0 0.0
  %957 = vmatpush1.msra.mxu0 0.0
  %958 = vmatprep.subr.mxu0 0.0
  %959 = vmatpush1.msra.mxu0 0.0
  %960 = vmatprep.subr.mxu0 0.0
  %961 = vmatpush1.msra.mxu0 0.0
  %962 = vmatprep.subr.mxu0 0.0
  %963 = vmatpush1.msra.mxu0 0.0
  %964 = vmatprep.subr.mxu0 0.0
  %965 = vmatpush1.msra.mxu0 0.0
  %966 = vmatprep.subr.mxu0 0.0
  %967 = vmatpush1.msra.mxu0 0.0
  %968 = vmatprep.subr.mxu0 0.0
  %969 = vmatpush1.msra.mxu0 0.0
  %970 = vmatprep.subr.mxu0 0.0
  %971 = vmatpush1.msra.mxu0 0.0
  %972 = vmatprep.subr.mxu0 0.0
  %973 = vmatpush1.msra.mxu0 0.0
  %974 = vmatprep.subr.mxu0 0.0
  %975 = vmatpush1.msra.mxu0 0.0
  %976 = vmatprep.subr.mxu0 0.0
  %977 = vmatpush1.msra.mxu0 0.0
  %978 = vmatprep.subr.mxu0 0.0
  %979 = vmatpush1.msra.mxu0 0.0
  %980 = vmatprep.subr.mxu0 0.0
  %981 = vmatpush1.msra.mxu0 0.0
  %982 = vmatprep.subr.mxu0 0.0
  %983 = vmatpush1.msra.mxu0 0.0
  %984 = vmatprep.subr.mxu0 0.0
  %985 = vmatpush1.msra.mxu0 0.0
  %986 = vmatprep.subr.mxu0 0.0
  %987 = vmatpush1.msra.mxu0 0.0
  %988 = vmatprep.subr.mxu0 0.0
  %989 = vmatpush1.msra.mxu0 0.0
  %990 = vmatprep.subr.mxu0 0.0
  %991 = vmatpush1.msra.mxu0 0.0
  %992 = vmatprep.subr.mxu0 0.0
  %993 = vmatpush1.msra.mxu0 0.0
  %994 = vmatprep.subr.mxu0 0.0
  %995 = vmatpush1.msra.mxu0 0.0
  %996 = vmatprep.subr.mxu0 0.0
  %997 = vmatpush1.msra.mxu0 0.0
  %998 = vmatprep.subr.mxu0 0.0
  %999 = vmatpush1.msra.mxu0 0.0
  %1000 = vmatprep.subr.mxu0 0.0
  %1001 = vmatpush1.msra.mxu0 0.0
  %1002 = vmatprep.subr.mxu0 0.0
  %1003 = vmatpush1.msra.mxu0 0.0
  %1004 = vmatprep.subr.mxu0 0.0
  %1005 = vmatpush1.msra.mxu0 0.0
  %1006 = vmatprep.mubr.f32.mxu0 0.0
  %1007 = vmatmul.mubr.f32.gmra.mrb[0].mxu0 %v940
  %v1008 = vpop.f32.mrb[0].mxu0
  %v1009 = vadd.f32 0.0, %v1008
  %v1010 = vpop.f32.mrb[0].mxu0
  %1011 = vdwg.mxu0
  %v1013 = vsel %vm382, %v863, 0
  %1015 = vmatprep.subr.mxu0 0.0
  %1016 = vmatpush1.msra.mxu0 %v502
  %1017 = vmatprep.subr.mxu0 0.0
  %1018 = vmatpush1.msra.mxu0 0.0
  %1019 = vmatprep.subr.mxu0 0.0
  %1020 = vmatpush1.msra.mxu0 0.0
  %1021 = vmatprep.subr.mxu0 0.0
  %1022 = vmatpush1.msra.mxu0 0.0
  %1023 = vmatprep.subr.mxu0 0.0
  %1024 = vmatpush1.msra.mxu0 0.0
  %1025 = vmatprep.subr.mxu0 0.0
  %1026 = vmatpush1.msra.mxu0 0.0
  %1027 = vmatprep.subr.mxu0 0.0
  %1028 = vmatpush1.msra.mxu0 0.0
  %1029 = vmatprep.subr.mxu0 0.0
  %1030 = vmatpush1.msra.mxu0 0.0
  %1031 = vmatprep.subr.mxu0 0.0
  %1032 = vmatpush1.msra.mxu0 0.0
  %1033 = vmatprep.subr.mxu0 0.0
  %1034 = vmatpush1.msra.mxu0 0.0
  %1035 = vmatprep.subr.mxu0 0.0
  %1036 = vmatpush1.msra.mxu0 0.0
  %1037 = vmatprep.subr.mxu0 0.0
  %1038 = vmatpush1.msra.mxu0 0.0
  %1039 = vmatprep.subr.mxu0 0.0
  %1040 = vmatpush1.msra.mxu0 0.0
  %1041 = vmatprep.subr.mxu0 0.0
  %1042 = vmatpush1.msra.mxu0 0.0
  %1043 = vmatprep.subr.mxu0 0.0
  %1044 = vmatpush1.msra.mxu0 0.0
  %1045 = vmatprep.subr.mxu0 0.0
  %1046 = vmatpush1.msra.mxu0 0.0
  %1047 = vmatprep.subr.mxu0 0.0
  %1048 = vmatpush1.msra.mxu0 0.0
  %1049 = vmatprep.subr.mxu0 0.0
  %1050 = vmatpush1.msra.mxu0 0.0
  %1051 = vmatprep.subr.mxu0 0.0
  %1052 = vmatpush1.msra.mxu0 0.0
  %1053 = vmatprep.subr.mxu0 0.0
  %1054 = vmatpush1.msra.mxu0 0.0
  %1055 = vmatprep.subr.mxu0 0.0
  %1056 = vmatpush1.msra.mxu0 0.0
  %1057 = vmatprep.subr.mxu0 0.0
  %1058 = vmatpush1.msra.mxu0 0.0
  %1059 = vmatprep.subr.mxu0 0.0
  %1060 = vmatpush1.msra.mxu0 0.0
  %1061 = vmatprep.subr.mxu0 0.0
  %1062 = vmatpush1.msra.mxu0 0.0
  %1063 = vmatprep.subr.mxu0 0.0
  %1064 = vmatpush1.msra.mxu0 0.0
  %1065 = vmatprep.subr.mxu0 0.0
  %1066 = vmatpush1.msra.mxu0 0.0
  %1067 = vmatprep.subr.mxu0 0.0
  %1068 = vmatpush1.msra.mxu0 0.0
  %1069 = vmatprep.subr.mxu0 0.0
  %1070 = vmatpush1.msra.mxu0 0.0
  %1071 = vmatprep.subr.mxu0 0.0
  %1072 = vmatpush1.msra.mxu0 0.0
  %1073 = vmatprep.subr.mxu0 0.0
  %1074 = vmatpush1.msra.mxu0 0.0
  %1075 = vmatprep.subr.mxu0 0.0
  %1076 = vmatpush1.msra.mxu0 0.0
  %1077 = vmatprep.subr.mxu0 0.0
  %1078 = vmatpush1.msra.mxu0 0.0
  %1079 = vmatprep.mubr.f32.mxu0 0.0
  %1080 = vmatmul.mubr.f32.gmra.mrb[0].mxu0 %v1013
  %v1081 = vpop.f32.mrb[0].mxu0
  %v1082 = vadd.f32 0.0, %v1081
  %v1083 = vpop.f32.mrb[0].mxu0
  %1084 = vdwg.mxu0
  %v1086 = vsel %vm382, %v865, 0
  %1088 = vmatprep.subr.mxu0 0.0
  %1089 = vmatpush1.msra.mxu0 %v503
  %1090 = vmatprep.subr.mxu0 0.0
  %1091 = vmatpush1.msra.mxu0 0.0
  %1092 = vmatprep.subr.mxu0 0.0
  %1093 = vmatpush1.msra.mxu0 0.0
  %1094 = vmatprep.subr.mxu0 0.0
  %1095 = vmatpush1.msra.mxu0 0.0
  %1096 = vmatprep.subr.mxu0 0.0
  %1097 = vmatpush1.msra.mxu0 0.0
  %1098 = vmatprep.subr.mxu0 0.0
  %1099 = vmatpush1.msra.mxu0 0.0
  %1100 = vmatprep.subr.mxu0 0.0
  %1101 = vmatpush1.msra.mxu0 0.0
  %1102 = vmatprep.subr.mxu0 0.0
  %1103 = vmatpush1.msra.mxu0 0.0
  %1104 = vmatprep.subr.mxu0 0.0
  %1105 = vmatpush1.msra.mxu0 0.0
  %1106 = vmatprep.subr.mxu0 0.0
  %1107 = vmatpush1.msra.mxu0 0.0
  %1108 = vmatprep.subr.mxu0 0.0
  %1109 = vmatpush1.msra.mxu0 0.0
  %1110 = vmatprep.subr.mxu0 0.0
  %1111 = vmatpush1.msra.mxu0 0.0
  %1112 = vmatprep.subr.mxu0 0.0
  %1113 = vmatpush1.msra.mxu0 0.0
  %1114 = vmatprep.subr.mxu0 0.0
  %1115 = vmatpush1.msra.mxu0 0.0
  %1116 = vmatprep.subr.mxu0 0.0
  %1117 = vmatpush1.msra.mxu0 0.0
  %1118 = vmatprep.subr.mxu0 0.0
  %1119 = vmatpush1.msra.mxu0 0.0
  %1120 = vmatprep.subr.mxu0 0.0
  %1121 = vmatpush1.msra.mxu0 0.0
  %1122 = vmatprep.subr.mxu0 0.0
  %1123 = vmatpush1.msra.mxu0 0.0
  %1124 = vmatprep.subr.mxu0 0.0
  %1125 = vmatpush1.msra.mxu0 0.0
  %1126 = vmatprep.subr.mxu0 0.0
  %1127 = vmatpush1.msra.mxu0 0.0
  %1128 = vmatprep.subr.mxu0 0.0
  %1129 = vmatpush1.msra.mxu0 0.0
  %1130 = vmatprep.subr.mxu0 0.0
  %1131 = vmatpush1.msra.mxu0 0.0
  %1132 = vmatprep.subr.mxu0 0.0
  %1133 = vmatpush1.msra.mxu0 0.0
  %1134 = vmatprep.subr.mxu0 0.0
  %1135 = vmatpush1.msra.mxu0 0.0
  %1136 = vmatprep.subr.mxu0 0.0
  %1137 = vmatpush1.msra.mxu0 0.0
  %1138 = vmatprep.subr.mxu0 0.0
  %1139 = vmatpush1.msra.mxu0 0.0
  %1140 = vmatprep.subr.mxu0 0.0
  %1141 = vmatpush1.msra.mxu0 0.0
  %1142 = vmatprep.subr.mxu0 0.0
  %1143 = vmatpush1.msra.mxu0 0.0
  %1144 = vmatprep.subr.mxu0 0.0
  %1145 = vmatpush1.msra.mxu0 0.0
  %1146 = vmatprep.subr.mxu0 0.0
  %1147 = vmatpush1.msra.mxu0 0.0
  %1148 = vmatprep.subr.mxu0 0.0
  %1149 = vmatpush1.msra.mxu0 0.0
  %1150 = vmatprep.subr.mxu0 0.0
  %1151 = vmatpush1.msra.mxu0 0.0
  %1152 = vmatprep.mubr.f32.mxu0 0.0
  %1153 = vmatmul.mubr.f32.gmra.mrb[0].mxu0 %v1086
  %v1154 = vpop.f32.mrb[0].mxu0
  %v1155 = vadd.f32 0.0, %v1154
  %v1156 = vpop.f32.mrb[0].mxu0
  %1157 = vdwg.mxu0
  %v1159 = vsel %vm382, %v936, 0
  %1161 = vmatprep.subr.mxu0 0.0
  %1162 = vmatpush1.msra.mxu0 %v488
  %1163 = vmatprep.subr.mxu0 0.0
  %1164 = vmatpush1.msra.mxu0 0.0
  %1165 = vmatprep.subr.mxu0 0.0
  %1166 = vmatpush1.msra.mxu0 0.0
  %1167 = vmatprep.subr.mxu0 0.0
  %1168 = vmatpush1.msra.mxu0 0.0
  %1169 = vmatprep.subr.mxu0 0.0
  %1170 = vmatpush1.msra.mxu0 0.0
  %1171 = vmatprep.subr.mxu0 0.0
  %1172 = vmatpush1.msra.mxu0 0.0
  %1173 = vmatprep.subr.mxu0 0.0
  %1174 = vmatpush1.msra.mxu0 0.0
  %1175 = vmatprep.subr.mxu0 0.0
  %1176 = vmatpush1.msra.mxu0 0.0
  %1177 = vmatprep.subr.mxu0 0.0
  %1178 = vmatpush1.msra.mxu0 0.0
  %1179 = vmatprep.subr.mxu0 0.0
  %1180 = vmatpush1.msra.mxu0 0.0
  %1181 = vmatprep.subr.mxu0 0.0
  %1182 = vmatpush1.msra.mxu0 0.0
  %1183 = vmatprep.subr.mxu0 0.0
  %1184 = vmatpush1.msra.mxu0 0.0
  %1185 = vmatprep.subr.mxu0 0.0
  %1186 = vmatpush1.msra.mxu0 0.0
  %1187 = vmatprep.subr.mxu0 0.0
  %1188 = vmatpush1.msra.mxu0 0.0
  %1189 = vmatprep.subr.mxu0 0.0
  %1190 = vmatpush1.msra.mxu0 0.0
  %1191 = vmatprep.subr.mxu0 0.0
  %1192 = vmatpush1.msra.mxu0 0.0
  %1193 = vmatprep.subr.mxu0 0.0
  %1194 = vmatpush1.msra.mxu0 0.0
  %1195 = vmatprep.subr.mxu0 0.0
  %1196 = vmatpush1.msra.mxu0 0.0
  %1197 = vmatprep.subr.mxu0 0.0
  %1198 = vmatpush1.msra.mxu0 0.0
  %1199 = vmatprep.subr.mxu0 0.0
  %1200 = vmatpush1.msra.mxu0 0.0
  %1201 = vmatprep.subr.mxu0 0.0
  %1202 = vmatpush1.msra.mxu0 0.0
  %1203 = vmatprep.subr.mxu0 0.0
  %1204 = vmatpush1.msra.mxu0 0.0
  %1205 = vmatprep.subr.mxu0 0.0
  %1206 = vmatpush1.msra.mxu0 0.0
  %1207 = vmatprep.subr.mxu0 0.0
  %1208 = vmatpush1.msra.mxu0 0.0
  %1209 = vmatprep.subr.mxu0 0.0
  %1210 = vmatpush1.msra.mxu0 0.0
  %1211 = vmatprep.subr.mxu0 0.0
  %1212 = vmatpush1.msra.mxu0 0.0
  %1213 = vmatprep.subr.mxu0 0.0
  %1214 = vmatpush1.msra.mxu0 0.0
  %1215 = vmatprep.subr.mxu0 0.0
  %1216 = vmatpush1.msra.mxu0 0.0
  %1217 = vmatprep.subr.mxu0 0.0
  %1218 = vmatpush1.msra.mxu0 0.0
  %1219 = vmatprep.subr.mxu0 0.0
  %1220 = vmatpush1.msra.mxu0 0.0
  %1221 = vmatprep.subr.mxu0 0.0
  %1222 = vmatpush1.msra.mxu0 0.0
  %1223 = vmatprep.subr.mxu0 0.0
  %1224 = vmatpush1.msra.mxu0 0.0
  %1225 = vmatprep.mubr.f32.mxu0 0.0
  %1226 = vmatmul.mubr.f32.gmra.mrb[0].mxu0 %v1159
  %v1227 = vpop.f32.mrb[0].mxu0
  %v1228 = vadd.f32 0.0, %v1227
  %v1229 = vpop.f32.mrb[0].mxu0
  %1230 = vdwg.mxu0
  %v1232 = vsel %vm382, %v1009, 0
  %1234 = vmatprep.subr.mxu0 0.0
  %1235 = vmatpush1.msra.mxu0 %v489
  %1236 = vmatprep.subr.mxu0 0.0
  %1237 = vmatpush1.msra.mxu0 0.0
  %1238 = vmatprep.subr.mxu0 0.0
  %1239 = vmatpush1.msra.mxu0 0.0
  %1240 = vmatprep.subr.mxu0 0.0
  %1241 = vmatpush1.msra.mxu0 0.0
  %1242 = vmatprep.subr.mxu0 0.0
  %1243 = vmatpush1.msra.mxu0 0.0
  %1244 = vmatprep.subr.mxu0 0.0
  %1245 = vmatpush1.msra.mxu0 0.0
  %1246 = vmatprep.subr.mxu0 0.0
  %1247 = vmatpush1.msra.mxu0 0.0
  %1248 = vmatprep.subr.mxu0 0.0
  %1249 = vmatpush1.msra.mxu0 0.0
  %1250 = vmatprep.subr.mxu0 0.0
  %1251 = vmatpush1.msra.mxu0 0.0
  %1252 = vmatprep.subr.mxu0 0.0
  %1253 = vmatpush1.msra.mxu0 0.0
  %1254 = vmatprep.subr.mxu0 0.0
  %1255 = vmatpush1.msra.mxu0 0.0
  %1256 = vmatprep.subr.mxu0 0.0
  %1257 = vmatpush1.msra.mxu0 0.0
  %1258 = vmatprep.subr.mxu0 0.0
  %1259 = vmatpush1.msra.mxu0 0.0
  %1260 = vmatprep.subr.mxu0 0.0
  %1261 = vmatpush1.msra.mxu0 0.0
  %1262 = vmatprep.subr.mxu0 0.0
  %1263 = vmatpush1.msra.mxu0 0.0
  %1264 = vmatprep.subr.mxu0 0.0
  %1265 = vmatpush1.msra.mxu0 0.0
  %1266 = vmatprep.subr.mxu0 0.0
  %1267 = vmatpush1.msra.mxu0 0.0
  %1268 = vmatprep.subr.mxu0 0.0
  %1269 = vmatpush1.msra.mxu0 0.0
  %1270 = vmatprep.subr.mxu0 0.0
  %1271 = vmatpush1.msra.mxu0 0.0
  %1272 = vmatprep.subr.mxu0 0.0
  %1273 = vmatpush1.msra.mxu0 0.0
  %1274 = vmatprep.subr.mxu0 0.0
  %1275 = vmatpush1.msra.mxu0 0.0
  %1276 = vmatprep.subr.mxu0 0.0
  %1277 = vmatpush1.msra.mxu0 0.0
  %1278 = vmatprep.subr.mxu0 0.0
  %1279 = vmatpush1.msra.mxu0 0.0
  %1280 = vmatprep.subr.mxu0 0.0
  %1281 = vmatpush1.msra.mxu0 0.0
  %1282 = vmatprep.subr.mxu0 0.0
  %1283 = vmatpush1.msra.mxu0 0.0
  %1284 = vmatprep.subr.mxu0 0.0
  %1285 = vmatpush1.msra.mxu0 0.0
  %1286 = vmatprep.subr.mxu0 0.0
  %1287 = vmatpush1.msra.mxu0 0.0
  %1288 = vmatprep.subr.mxu0 0.0
  %1289 = vmatpush1.msra.mxu0 0.0
  %1290 = vmatprep.subr.mxu0 0.0
  %1291 = vmatpush1.msra.mxu0 0.0
  %1292 = vmatprep.subr.mxu0 0.0
  %1293 = vmatpush1.msra.mxu0 0.0
  %1294 = vmatprep.subr.mxu0 0.0
  %1295 = vmatpush1.msra.mxu0 0.0
  %1296 = vmatprep.subr.mxu0 0.0
  %1297 = vmatpush1.msra.mxu0 0.0
  %1298 = vmatprep.mubr.f32.mxu0 0.0
  %1299 = vmatmul.mubr.f32.gmra.mrb[0].mxu0 %v1232
  %v1300 = vpop.f32.mrb[0].mxu0
  %v1301 = vadd.f32 0.0, %v1300
  %v1302 = vpop.f32.mrb[0].mxu0
  %1303 = vdwg.mxu0
  %v1305 = vsel %vm382, %v1082, 0
  %1307 = vmatprep.subr.mxu0 0.0
  %1308 = vmatpush1.msra.mxu0 %v490
  %1309 = vmatprep.subr.mxu0 0.0
  %1310 = vmatpush1.msra.mxu0 0.0
  %1311 = vmatprep.subr.mxu0 0.0
  %1312 = vmatpush1.msra.mxu0 0.0
  %1313 = vmatprep.subr.mxu0 0.0
  %1314 = vmatpush1.msra.mxu0 0.0
  %1315 = vmatprep.subr.mxu0 0.0
  %1316 = vmatpush1.msra.mxu0 0.0
  %1317 = vmatprep.subr.mxu0 0.0
  %1318 = vmatpush1.msra.mxu0 0.0
  %1319 = vmatprep.subr.mxu0 0.0
  %1320 = vmatpush1.msra.mxu0 0.0
  %1321 = vmatprep.subr.mxu0 0.0
  %1322 = vmatpush1.msra.mxu0 0.0
  %1323 = vmatprep.subr.mxu0 0.0
  %1324 = vmatpush1.msra.mxu0 0.0
  %1325 = vmatprep.subr.mxu0 0.0
  %1326 = vmatpush1.msra.mxu0 0.0
  %1327 = vmatprep.subr.mxu0 0.0
  %1328 = vmatpush1.msra.mxu0 0.0
  %1329 = vmatprep.subr.mxu0 0.0
  %1330 = vmatpush1.msra.mxu0 0.0
  %1331 = vmatprep.subr.mxu0 0.0
  %1332 = vmatpush1.msra.mxu0 0.0
  %1333 = vmatprep.subr.mxu0 0.0
  %1334 = vmatpush1.msra.mxu0 0.0
  %1335 = vmatprep.subr.mxu0 0.0
  %1336 = vmatpush1.msra.mxu0 0.0
  %1337 = vmatprep.subr.mxu0 0.0
  %1338 = vmatpush1.msra.mxu0 0.0
  %1339 = vmatprep.subr.mxu0 0.0
  %1340 = vmatpush1.msra.mxu0 0.0
  %1341 = vmatprep.subr.mxu0 0.0
  %1342 = vmatpush1.msra.mxu0 0.0
  %1343 = vmatprep.subr.mxu0 0.0
  %1344 = vmatpush1.msra.mxu0 0.0
  %1345 = vmatprep.subr.mxu0 0.0
  %1346 = vmatpush1.msra.mxu0 0.0
  %1347 = vmatprep.subr.mxu0 0.0
  %1348 = vmatpush1.msra.mxu0 0.0
  %1349 = vmatprep.subr.mxu0 0.0
  %1350 = vmatpush1.msra.mxu0 0.0
  %1351 = vmatprep.subr.mxu0 0.0
  %1352 = vmatpush1.msra.mxu0 0.0
  %1353 = vmatprep.subr.mxu0 0.0
  %1354 = vmatpush1.msra.mxu0 0.0
  %1355 = vmatprep.subr.mxu0 0.0
  %1356 = vmatpush1.msra.mxu0 0.0
  %1357 = vmatprep.subr.mxu0 0.0
  %1358 = vmatpush1.msra.mxu0 0.0
  %1359 = vmatprep.subr.mxu0 0.0
  %1360 = vmatpush1.msra.mxu0 0.0
  %1361 = vmatprep.subr.mxu0 0.0
  %1362 = vmatpush1.msra.mxu0 0.0
  %1363 = vmatprep.subr.mxu0 0.0
  %1364 = vmatpush1.msra.mxu0 0.0
  %1365 = vmatprep.subr.mxu0 0.0
  %1366 = vmatpush1.msra.mxu0 0.0
  %1367 = vmatprep.subr.mxu0 0.0
  %1368 = vmatpush1.msra.mxu0 0.0
  %1369 = vmatprep.subr.mxu0 0.0
  %1370 = vmatpush1.msra.mxu0 0.0
  %1371 = vmatprep.mubr.f32.mxu0 0.0
  %1372 = vmatmul.mubr.f32.gmra.mrb[0].mxu0 %v1305
  %v1373 = vpop.f32.mrb[0].mxu0
  %v1374 = vadd.f32 0.0, %v1373
  %v1375 = vpop.f32.mrb[0].mxu0
  %1376 = vdwg.mxu0
  %v1378 = vsel %vm382, %v1155, 0
  %1380 = vmatprep.subr.mxu0 0.0
  %1381 = vmatpush1.msra.mxu0 %v491
  %1382 = vmatprep.subr.mxu0 0.0
  %1383 = vmatpush1.msra.mxu0 0.0
  %1384 = vmatprep.subr.mxu0 0.0
  %1385 = vmatpush1.msra.mxu0 0.0
  %1386 = vmatprep.subr.mxu0 0.0
  %1387 = vmatpush1.msra.mxu0 0.0
  %1388 = vmatprep.subr.mxu0 0.0
  %1389 = vmatpush1.msra.mxu0 0.0
  %1390 = vmatprep.subr.mxu0 0.0
  %1391 = vmatpush1.msra.mxu0 0.0
  %1392 = vmatprep.subr.mxu0 0.0
  %1393 = vmatpush1.msra.mxu0 0.0
  %1394 = vmatprep.subr.mxu0 0.0
  %1395 = vmatpush1.msra.mxu0 0.0
  %1396 = vmatprep.subr.mxu0 0.0
  %1397 = vmatpush1.msra.mxu0 0.0
  %1398 = vmatprep.subr.mxu0 0.0
  %1399 = vmatpush1.msra.mxu0 0.0
  %1400 = vmatprep.subr.mxu0 0.0
  %1401 = vmatpush1.msra.mxu0 0.0
  %1402 = vmatprep.subr.mxu0 0.0
  %1403 = vmatpush1.msra.mxu0 0.0
  %1404 = vmatprep.subr.mxu0 0.0
  %1405 = vmatpush1.msra.mxu0 0.0
  %1406 = vmatprep.subr.mxu0 0.0
  %1407 = vmatpush1.msra.mxu0 0.0
  %1408 = vmatprep.subr.mxu0 0.0
  %1409 = vmatpush1.msra.mxu0 0.0
  %1410 = vmatprep.subr.mxu0 0.0
  %1411 = vmatpush1.msra.mxu0 0.0
  %1412 = vmatprep.subr.mxu0 0.0
  %1413 = vmatpush1.msra.mxu0 0.0
  %1414 = vmatprep.subr.mxu0 0.0
  %1415 = vmatpush1.msra.mxu0 0.0
  %1416 = vmatprep.subr.mxu0 0.0
  %1417 = vmatpush1.msra.mxu0 0.0
  %1418 = vmatprep.subr.mxu0 0.0
  %1419 = vmatpush1.msra.mxu0 0.0
  %1420 = vmatprep.subr.mxu0 0.0
  %1421 = vmatpush1.msra.mxu0 0.0
  %1422 = vmatprep.subr.mxu0 0.0
  %1423 = vmatpush1.msra.mxu0 0.0
  %1424 = vmatprep.subr.mxu0 0.0
  %1425 = vmatpush1.msra.mxu0 0.0
  %1426 = vmatprep.subr.mxu0 0.0
  %1427 = vmatpush1.msra.mxu0 0.0
  %1428 = vmatprep.subr.mxu0 0.0
  %1429 = vmatpush1.msra.mxu0 0.0
  %1430 = vmatprep.subr.mxu0 0.0
  %1431 = vmatpush1.msra.mxu0 0.0
  %1432 = vmatprep.subr.mxu0 0.0
  %1433 = vmatpush1.msra.mxu0 0.0
  %1434 = vmatprep.subr.mxu0 0.0
  %1435 = vmatpush1.msra.mxu0 0.0
  %1436 = vmatprep.subr.mxu0 0.0
  %1437 = vmatpush1.msra.mxu0 0.0
  %1438 = vmatprep.subr.mxu0 0.0
  %1439 = vmatpush1.msra.mxu0 0.0
  %1440 = vmatprep.subr.mxu0 0.0
  %1441 = vmatpush1.msra.mxu0 0.0
  %1442 = vmatprep.subr.mxu0 0.0
  %1443 = vmatpush1.msra.mxu0 0.0
  %1444 = vmatprep.mubr.f32.mxu0 0.0
  %1445 = vmatmul.mubr.f32.gmra.mrb[0].mxu0 %v1378
  %v1446 = vpop.f32.mrb[0].mxu0
  %v1447 = vadd.f32 0.0, %v1446
  %v1448 = vpop.f32.mrb[0].mxu0
  %1449 = vdwg.mxu0
  %v1450 = vadd.f32 %v1228, %v1301
  %v1451 = vadd.f32 %v1450, %v1374
  %v1452 = vadd.f32 %v1451, %v1447
  %1453 = vst.msk [vmem:[#allocation5] sm:$0xff] %vm68, %v1452
  %v1454 = vld [vmem:[%s434] sm:$0xff]
  %v1455 = vld [vmem:[%s434 + $0x8] sm:$0xff]
  %v1456 = vld [vmem:[%s434 + $0x10] sm:$0xff]
  %v1457 = vld [vmem:[%s434 + $0x18] sm:$0xff]
  %v1458 = vld [vmem:[%s436] sm:$0xff]
  %v1459 = vld [vmem:[%s436 + $0x8] sm:$0xff]
  %v1460 = vld [vmem:[%s436 + $0x10] sm:$0xff]
  %v1461 = vld [vmem:[%s436 + $0x18] sm:$0xff]
  %v1462 = vld [vmem:[%s438] sm:$0xff]
  %v1463 = vld [vmem:[%s438 + $0x8] sm:$0xff]
  %v1464 = vld [vmem:[%s438 + $0x10] sm:$0xff]
  %v1465 = vld [vmem:[%s438 + $0x18] sm:$0xff]
  %v1467 = vsel %vm382, %v1454, 0
  %v1470 = vsel %vm382, %v1458, 0
  %1472 = vmatprep.subr.mxu0 0.0
  %1473 = vmatpush1.xpose.msra.mxu0 %v1470
  %1474 = vmatprep.subr.mxu0 0.0
  %1475 = vmatpush1.xpose.msra.mxu0 0.0
  %1476 = vmatprep.subr.mxu0 0.0
  %1477 = vmatpush1.xpose.msra.mxu0 0.0
  %1478 = vmatprep.subr.mxu0 0.0
  %1479 = vmatpush1.xpose.msra.mxu0 0.0
  %1480 = vmatprep.subr.mxu0 0.0
  %1481 = vmatpush1.xpose.msra.mxu0 0.0
  %1482 = vmatprep.subr.mxu0 0.0
  %1483 = vmatpush1.xpose.msra.mxu0 0.0
  %1484 = vmatprep.subr.mxu0 0.0
  %1485 = vmatpush1.xpose.msra.mxu0 0.0
  %1486 = vmatprep.subr.mxu0 0.0
  %1487 = vmatpush1.xpose.msra.mxu0 0.0
  %1488 = vmatprep.subr.mxu0 0.0
  %1489 = vmatpush1.xpose.msra.mxu0 0.0
  %1490 = vmatprep.subr.mxu0 0.0
  %1491 = vmatpush1.xpose.msra.mxu0 0.0
  %1492 = vmatprep.subr.mxu0 0.0
  %1493 = vmatpush1.xpose.msra.mxu0 0.0
  %1494 = vmatprep.subr.mxu0 0.0
  %1495 = vmatpush1.xpose.msra.mxu0 0.0
  %1496 = vmatprep.subr.mxu0 0.0
  %1497 = vmatpush1.xpose.msra.mxu0 0.0
  %1498 = vmatprep.subr.mxu0 0.0
  %1499 = vmatpush1.xpose.msra.mxu0 0.0
  %1500 = vmatprep.subr.mxu0 0.0
  %1501 = vmatpush1.xpose.msra.mxu0 0.0
  %1502 = vmatprep.subr.mxu0 0.0
  %1503 = vmatpush1.xpose.msra.mxu0 0.0
  %1504 = vmatprep.subr.mxu0 0.0
  %1505 = vmatpush1.xpose.msra.mxu0 0.0
  %1506 = vmatprep.subr.mxu0 0.0
  %1507 = vmatpush1.xpose.msra.mxu0 0.0
  %1508 = vmatprep.subr.mxu0 0.0
  %1509 = vmatpush1.xpose.msra.mxu0 0.0
  %1510 = vmatprep.subr.mxu0 0.0
  %1511 = vmatpush1.xpose.msra.mxu0 0.0
  %1512 = vmatprep.subr.mxu0 0.0
  %1513 = vmatpush1.xpose.msra.mxu0 0.0
  %1514 = vmatprep.subr.mxu0 0.0
  %1515 = vmatpush1.xpose.msra.mxu0 0.0
  %1516 = vmatprep.subr.mxu0 0.0
  %1517 = vmatpush1.xpose.msra.mxu0 0.0
  %1518 = vmatprep.subr.mxu0 0.0
  %1519 = vmatpush1.xpose.msra.mxu0 0.0
  %1520 = vmatprep.subr.mxu0 0.0
  %1521 = vmatpush1.xpose.msra.mxu0 0.0
  %1522 = vmatprep.subr.mxu0 0.0
  %1523 = vmatpush1.xpose.msra.mxu0 0.0
  %1524 = vmatprep.subr.mxu0 0.0
  %1525 = vmatpush1.xpose.msra.mxu0 0.0
  %1526 = vmatprep.subr.mxu0 0.0
  %1527 = vmatpush1.xpose.msra.mxu0 0.0
  %1528 = vmatprep.subr.mxu0 0.0
  %1529 = vmatpush1.xpose.msra.mxu0 0.0
  %1530 = vmatprep.subr.mxu0 0.0
  %1531 = vmatpush1.xpose.msra.mxu0 0.0
  %1532 = vmatprep.subr.mxu0 0.0
  %1533 = vmatpush1.xpose.msra.mxu0 0.0
  %1534 = vmatprep.subr.mxu0 0.0
  %1535 = vmatpush1.xpose.msra.mxu0 0.0
  %1536 = vmatprep.mubr.f32.mxu0 0.0
  %1537 = vmatmul.mubr.f32.gmra.mrb[0].mxu0 %v1467
  %v1538 = vpop.f32.mrb[0].mxu0
  %v1539 = vadd.f32 0.0, %v1538
  %v1540 = vpop.f32.mrb[0].mxu0
  %1541 = vdwg.mxu0
  %v1543 = vsel %vm382, %v1455, 0
  %v1546 = vsel %vm382, %v1459, 0
  %1548 = vmatprep.subr.mxu0 0.0
  %1549 = vmatpush1.xpose.msra.mxu0 %v1546
  %1550 = vmatprep.subr.mxu0 0.0
  %1551 = vmatpush1.xpose.msra.mxu0 0.0
  %1552 = vmatprep.subr.mxu0 0.0
  %1553 = vmatpush1.xpose.msra.mxu0 0.0
  %1554 = vmatprep.subr.mxu0 0.0
  %1555 = vmatpush1.xpose.msra.mxu0 0.0
  %1556 = vmatprep.subr.mxu0 0.0
  %1557 = vmatpush1.xpose.msra.mxu0 0.0
  %1558 = vmatprep.subr.mxu0 0.0
  %1559 = vmatpush1.xpose.msra.mxu0 0.0
  %1560 = vmatprep.subr.mxu0 0.0
  %1561 = vmatpush1.xpose.msra.mxu0 0.0
  %1562 = vmatprep.subr.mxu0 0.0
  %1563 = vmatpush1.xpose.msra.mxu0 0.0
  %1564 = vmatprep.subr.mxu0 0.0
  %1565 = vmatpush1.xpose.msra.mxu0 0.0
  %1566 = vmatprep.subr.mxu0 0.0
  %1567 = vmatpush1.xpose.msra.mxu0 0.0
  %1568 = vmatprep.subr.mxu0 0.0
  %1569 = vmatpush1.xpose.msra.mxu0 0.0
  %1570 = vmatprep.subr.mxu0 0.0
  %1571 = vmatpush1.xpose.msra.mxu0 0.0
  %1572 = vmatprep.subr.mxu0 0.0
  %1573 = vmatpush1.xpose.msra.mxu0 0.0
  %1574 = vmatprep.subr.mxu0 0.0
  %1575 = vmatpush1.xpose.msra.mxu0 0.0
  %1576 = vmatprep.subr.mxu0 0.0
  %1577 = vmatpush1.xpose.msra.mxu0 0.0
  %1578 = vmatprep.subr.mxu0 0.0
  %1579 = vmatpush1.xpose.msra.mxu0 0.0
  %1580 = vmatprep.subr.mxu0 0.0
  %1581 = vmatpush1.xpose.msra.mxu0 0.0
  %1582 = vmatprep.subr.mxu0 0.0
  %1583 = vmatpush1.xpose.msra.mxu0 0.0
  %1584 = vmatprep.subr.mxu0 0.0
  %1585 = vmatpush1.xpose.msra.mxu0 0.0
  %1586 = vmatprep.subr.mxu0 0.0
  %1587 = vmatpush1.xpose.msra.mxu0 0.0
  %1588 = vmatprep.subr.mxu0 0.0
  %1589 = vmatpush1.xpose.msra.mxu0 0.0
  %1590 = vmatprep.subr.mxu0 0.0
  %1591 = vmatpush1.xpose.msra.mxu0 0.0
  %1592 = vmatprep.subr.mxu0 0.0
  %1593 = vmatpush1.xpose.msra.mxu0 0.0
  %1594 = vmatprep.subr.mxu0 0.0
  %1595 = vmatpush1.xpose.msra.mxu0 0.0
  %1596 = vmatprep.subr.mxu0 0.0
  %1597 = vmatpush1.xpose.msra.mxu0 0.0
  %1598 = vmatprep.subr.mxu0 0.0
  %1599 = vmatpush1.xpose.msra.mxu0 0.0
  %1600 = vmatprep.subr.mxu0 0.0
  %1601 = vmatpush1.xpose.msra.mxu0 0.0
  %1602 = vmatprep.subr.mxu0 0.0
  %1603 = vmatpush1.xpose.msra.mxu0 0.0
  %1604 = vmatprep.subr.mxu0 0.0
  %1605 = vmatpush1.xpose.msra.mxu0 0.0
  %1606 = vmatprep.subr.mxu0 0.0
  %1607 = vmatpush1.xpose.msra.mxu0 0.0
  %1608 = vmatprep.subr.mxu0 0.0
  %1609 = vmatpush1.xpose.msra.mxu0 0.0
  %1610 = vmatprep.subr.mxu0 0.0
  %1611 = vmatpush1.xpose.msra.mxu0 0.0
  %1612 = vmatprep.mubr.f32.mxu0 0.0
  %1613 = vmatmul.mubr.f32.gmra.mrb[0].mxu0 %v1543
  %v1614 = vpop.f32.mrb[0].mxu0
  %v1615 = vadd.f32 0.0, %v1614
  %v1616 = vpop.f32.mrb[0].mxu0
  %1617 = vdwg.mxu0
  %v1619 = vsel %vm382, %v1456, 0
  %v1622 = vsel %vm382, %v1460, 0
  %1624 = vmatprep.subr.mxu0 0.0
  %1625 = vmatpush1.xpose.msra.mxu0 %v1622
  %1626 = vmatprep.subr.mxu0 0.0
  %1627 = vmatpush1.xpose.msra.mxu0 0.0
  %1628 = vmatprep.subr.mxu0 0.0
  %1629 = vmatpush1.xpose.msra.mxu0 0.0
  %1630 = vmatprep.subr.mxu0 0.0
  %1631 = vmatpush1.xpose.msra.mxu0 0.0
  %1632 = vmatprep.subr.mxu0 0.0
  %1633 = vmatpush1.xpose.msra.mxu0 0.0
  %1634 = vmatprep.subr.mxu0 0.0
  %1635 = vmatpush1.xpose.msra.mxu0 0.0
  %1636 = vmatprep.subr.mxu0 0.0
  %1637 = vmatpush1.xpose.msra.mxu0 0.0
  %1638 = vmatprep.subr.mxu0 0.0
  %1639 = vmatpush1.xpose.msra.mxu0 0.0
  %1640 = vmatprep.subr.mxu0 0.0
  %1641 = vmatpush1.xpose.msra.mxu0 0.0
  %1642 = vmatprep.subr.mxu0 0.0
  %1643 = vmatpush1.xpose.msra.mxu0 0.0
  %1644 = vmatprep.subr.mxu0 0.0
  %1645 = vmatpush1.xpose.msra.mxu0 0.0
  %1646 = vmatprep.subr.mxu0 0.0
  %1647 = vmatpush1.xpose.msra.mxu0 0.0
  %1648 = vmatprep.subr.mxu0 0.0
  %1649 = vmatpush1.xpose.msra.mxu0 0.0
  %1650 = vmatprep.subr.mxu0 0.0
  %1651 = vmatpush1.xpose.msra.mxu0 0.0
  %1652 = vmatprep.subr.mxu0 0.0
  %1653 = vmatpush1.xpose.msra.mxu0 0.0
  %1654 = vmatprep.subr.mxu0 0.0
  %1655 = vmatpush1.xpose.msra.mxu0 0.0
  %1656 = vmatprep.subr.mxu0 0.0
  %1657 = vmatpush1.xpose.msra.mxu0 0.0
  %1658 = vmatprep.subr.mxu0 0.0
  %1659 = vmatpush1.xpose.msra.mxu0 0.0
  %1660 = vmatprep.subr.mxu0 0.0
  %1661 = vmatpush1.xpose.msra.mxu0 0.0
  %1662 = vmatprep.subr.mxu0 0.0
  %1663 = vmatpush1.xpose.msra.mxu0 0.0
  %1664 = vmatprep.subr.mxu0 0.0
  %1665 = vmatpush1.xpose.msra.mxu0 0.0
  %1666 = vmatprep.subr.mxu0 0.0
  %1667 = vmatpush1.xpose.msra.mxu0 0.0
  %1668 = vmatprep.subr.mxu0 0.0
  %1669 = vmatpush1.xpose.msra.mxu0 0.0
  %1670 = vmatprep.subr.mxu0 0.0
  %1671 = vmatpush1.xpose.msra.mxu0 0.0
  %1672 = vmatprep.subr.mxu0 0.0
  %1673 = vmatpush1.xpose.msra.mxu0 0.0
  %1674 = vmatprep.subr.mxu0 0.0
  %1675 = vmatpush1.xpose.msra.mxu0 0.0
  %1676 = vmatprep.subr.mxu0 0.0
  %1677 = vmatpush1.xpose.msra.mxu0 0.0
  %1678 = vmatprep.subr.mxu0 0.0
  %1679 = vmatpush1.xpose.msra.mxu0 0.0
  %1680 = vmatprep.subr.mxu0 0.0
  %1681 = vmatpush1.xpose.msra.mxu0 0.0
  %1682 = vmatprep.subr.mxu0 0.0
  %1683 = vmatpush1.xpose.msra.mxu0 0.0
  %1684 = vmatprep.subr.mxu0 0.0
  %1685 = vmatpush1.xpose.msra.mxu0 0.0
  %1686 = vmatprep.subr.mxu0 0.0
  %1687 = vmatpush1.xpose.msra.mxu0 0.0
  %1688 = vmatprep.mubr.f32.mxu0 0.0
  %1689 = vmatmul.mubr.f32.gmra.mrb[0].mxu0 %v1619
  %v1690 = vpop.f32.mrb[0].mxu0
  %v1691 = vadd.f32 0.0, %v1690
  %v1692 = vpop.f32.mrb[0].mxu0
  %1693 = vdwg.mxu0
  %v1695 = vsel %vm382, %v1457, 0
  %v1698 = vsel %vm382, %v1461, 0
  %1700 = vmatprep.subr.mxu0 0.0
  %1701 = vmatpush1.xpose.msra.mxu0 %v1698
  %1702 = vmatprep.subr.mxu0 0.0
  %1703 = vmatpush1.xpose.msra.mxu0 0.0
  %1704 = vmatprep.subr.mxu0 0.0
  %1705 = vmatpush1.xpose.msra.mxu0 0.0
  %1706 = vmatprep.subr.mxu0 0.0
  %1707 = vmatpush1.xpose.msra.mxu0 0.0
  %1708 = vmatprep.subr.mxu0 0.0
  %1709 = vmatpush1.xpose.msra.mxu0 0.0
  %1710 = vmatprep.subr.mxu0 0.0
  %1711 = vmatpush1.xpose.msra.mxu0 0.0
  %1712 = vmatprep.subr.mxu0 0.0
  %1713 = vmatpush1.xpose.msra.mxu0 0.0
  %1714 = vmatprep.subr.mxu0 0.0
  %1715 = vmatpush1.xpose.msra.mxu0 0.0
  %1716 = vmatprep.subr.mxu0 0.0
  %1717 = vmatpush1.xpose.msra.mxu0 0.0
  %1718 = vmatprep.subr.mxu0 0.0
  %1719 = vmatpush1.xpose.msra.mxu0 0.0
  %1720 = vmatprep.subr.mxu0 0.0
  %1721 = vmatpush1.xpose.msra.mxu0 0.0
  %1722 = vmatprep.subr.mxu0 0.0
  %1723 = vmatpush1.xpose.msra.mxu0 0.0
  %1724 = vmatprep.subr.mxu0 0.0
  %1725 = vmatpush1.xpose.msra.mxu0 0.0
  %1726 = vmatprep.subr.mxu0 0.0
  %1727 = vmatpush1.xpose.msra.mxu0 0.0
  %1728 = vmatprep.subr.mxu0 0.0
  %1729 = vmatpush1.xpose.msra.mxu0 0.0
  %1730 = vmatprep.subr.mxu0 0.0
  %1731 = vmatpush1.xpose.msra.mxu0 0.0
  %1732 = vmatprep.subr.mxu0 0.0
  %1733 = vmatpush1.xpose.msra.mxu0 0.0
  %1734 = vmatprep.subr.mxu0 0.0
  %1735 = vmatpush1.xpose.msra.mxu0 0.0
  %1736 = vmatprep.subr.mxu0 0.0
  %1737 = vmatpush1.xpose.msra.mxu0 0.0
  %1738 = vmatprep.subr.mxu0 0.0
  %1739 = vmatpush1.xpose.msra.mxu0 0.0
  %1740 = vmatprep.subr.mxu0 0.0
  %1741 = vmatpush1.xpose.msra.mxu0 0.0
  %1742 = vmatprep.subr.mxu0 0.0
  %1743 = vmatpush1.xpose.msra.mxu0 0.0
  %1744 = vmatprep.subr.mxu0 0.0
  %1745 = vmatpush1.xpose.msra.mxu0 0.0
  %1746 = vmatprep.subr.mxu0 0.0
  %1747 = vmatpush1.xpose.msra.mxu0 0.0
  %1748 = vmatprep.subr.mxu0 0.0
  %1749 = vmatpush1.xpose.msra.mxu0 0.0
  %1750 = vmatprep.subr.mxu0 0.0
  %1751 = vmatpush1.xpose.msra.mxu0 0.0
  %1752 = vmatprep.subr.mxu0 0.0
  %1753 = vmatpush1.xpose.msra.mxu0 0.0
  %1754 = vmatprep.subr.mxu0 0.0
  %1755 = vmatpush1.xpose.msra.mxu0 0.0
  %1756 = vmatprep.subr.mxu0 0.0
  %1757 = vmatpush1.xpose.msra.mxu0 0.0
  %1758 = vmatprep.subr.mxu0 0.0
  %1759 = vmatpush1.xpose.msra.mxu0 0.0
  %1760 = vmatprep.subr.mxu0 0.0
  %1761 = vmatpush1.xpose.msra.mxu0 0.0
  %1762 = vmatprep.subr.mxu0 0.0
  %1763 = vmatpush1.xpose.msra.mxu0 0.0
  %1764 = vmatprep.mubr.f32.mxu0 0.0
  %1765 = vmatmul.mubr.f32.gmra.mrb[0].mxu0 %v1695
  %v1766 = vpop.f32.mrb[0].mxu0
  %v1767 = vadd.f32 0.0, %v1766
  %v1768 = vpop.f32.mrb[0].mxu0
  %1769 = vdwg.mxu0
  %v1770 = vmul.f32 %v1539, 0.35355338
  %v1771 = vmul.f32 %v1615, 0.35355338
  %v1772 = vmul.f32 %v1691, 0.35355338
  %v1773 = vmul.f32 %v1767, 0.35355338
  %v1775 = vlaneseq
  %v1776 = vshrl.u32 %v1775, 7
  %v1777 = vsub.s32 0, %v1776
  %v1778 = vrot.slane %v113, %v1777
  %v1780 = vadd.f32 %v1770, %v1778
  %v1781 = vadd.f32 %v1771, %v1778
  %v1782 = vadd.f32 %v1772, %v1778
  %v1783 = vadd.f32 %v1773, %v1778
  %v1784 = vsel %vm382, %v1780, -inf
  %1785 = vmax.xlane.f32.xlu0 %v1784
  %v1786 = vpop.xlane.xlu0 %1785
  %v1787 = vsel %vm382, %v1781, -inf
  %1788 = vmax.xlane.f32.xlu0 %v1787
  %v1789 = vpop.xlane.xlu0 %1788
  %v1790 = vsel %vm382, %v1782, -inf
  %1791 = vmax.xlane.f32.xlu0 %v1790
  %v1792 = vpop.xlane.xlu0 %1791
  %v1793 = vsel %vm382, %v1783, -inf
  %1794 = vmax.xlane.f32.xlu0 %v1793
  %v1795 = vpop.xlane.xlu0 %1794
  %v1796 = vsub.f32 %v1780, %v1786
  %v1797 = vsub.f32 %v1781, %v1789
  %v1798 = vsub.f32 %v1782, %v1792
  %v1799 = vsub.f32 %v1783, %v1795
  %v1800 = vmul.f32 %v1796, 1.442695
  %v1801 = vpow.pop %v1800
  %v1802 = vmul.f32 %v1797, 1.442695
  %v1803 = vpow.pop %v1802
  %v1804 = vmul.f32 %v1798, 1.442695
  %v1805 = vpow.pop %v1804
  %v1806 = vmul.f32 %v1799, 1.442695
  %v1807 = vpow.pop %v1806
  %v1808 = vsel %vm382, %v1801, 0.0
  %1809 = vadd.xlane.f32.xlu0 %v1808
  %v1810 = vpop.xlane.xlu0 %1809
  %v1811 = vsel %vm382, %v1803, 0.0
  %1812 = vadd.xlane.f32.xlu0 %v1811
  %v1813 = vpop.xlane.xlu0 %1812
  %v1814 = vsel %vm382, %v1805, 0.0
  %1815 = vadd.xlane.f32.xlu0 %v1814
  %v1816 = vpop.xlane.xlu0 %1815
  %v1817 = vsel %vm382, %v1807, 0.0
  %1818 = vadd.xlane.f32.xlu0 %v1817
  %v1819 = vpop.xlane.xlu0 %1818
  %v1820 = vrcp.pop %v1810
  %v1821 = vmul.f32 %v1801, %v1820
  %v1822 = vrcp.pop %v1813
  %v1823 = vmul.f32 %v1803, %v1822
  %v1824 = vrcp.pop %v1816
  %v1825 = vmul.f32 %v1805, %v1824
  %v1826 = vrcp.pop %v1819
  %v1827 = vmul.f32 %v1807, %v1826
  %v1829 = vsel %vm382, %v1821, 0
  %1831 = vmatprep.subr.mxu0 0.0
  %1832 = vmatpush1.msra.mxu0 %v1462
  %1833 = vmatprep.subr.mxu0 0.0
  %1834 = vmatpush1.msra.mxu0 0.0
  %1835 = vmatprep.subr.mxu0 0.0
  %1836 = vmatpush1.msra.mxu0 0.0
  %1837 = vmatprep.subr.mxu0 0.0
  %1838 = vmatpush1.msra.mxu0 0.0
  %1839 = vmatprep.subr.mxu0 0.0
  %1840 = vmatpush1.msra.mxu0 0.0
  %1841 = vmatprep.subr.mxu0 0.0
  %1842 = vmatpush1.msra.mxu0 0.0
  %1843 = vmatprep.subr.mxu0 0.0
  %1844 = vmatpush1.msra.mxu0 0.0
  %1845 = vmatprep.subr.mxu0 0.0
  %1846 = vmatpush1.msra.mxu0 0.0
  %1847 = vmatprep.subr.mxu0 0.0
  %1848 = vmatpush1.msra.mxu0 0.0
  %1849 = vmatprep.subr.mxu0 0.0
  %1850 = vmatpush1.msra.mxu0 0.0
  %1851 = vmatprep.subr.mxu0 0.0
  %1852 = vmatpush1.msra.mxu0 0.0
  %1853 = vmatprep.subr.mxu0 0.0
  %1854 = vmatpush1.msra.mxu0 0.0
  %1855 = vmatprep.subr.mxu0 0.0
  %1856 = vmatpush1.msra.mxu0 0.0
  %1857 = vmatprep.subr.mxu0 0.0
  %1858 = vmatpush1.msra.mxu0 0.0
  %1859 = vmatprep.subr.mxu0 0.0
  %1860 = vmatpush1.msra.mxu0 0.0
  %1861 = vmatprep.subr.mxu0 0.0
  %1862 = vmatpush1.msra.mxu0 0.0
  %1863 = vmatprep.subr.mxu0 0.0
  %1864 = vmatpush1.msra.mxu0 0.0
  %1865 = vmatprep.subr.mxu0 0.0
  %1866 = vmatpush1.msra.mxu0 0.0
  %1867 = vmatprep.subr.mxu0 0.0
  %1868 = vmatpush1.msra.mxu0 0.0
  %1869 = vmatprep.subr.mxu0 0.0
  %1870 = vmatpush1.msra.mxu0 0.0
  %1871 = vmatprep.subr.mxu0 0.0
  %1872 = vmatpush1.msra.mxu0 0.0
  %1873 = vmatprep.subr.mxu0 0.0
  %1874 = vmatpush1.msra.mxu0 0.0
  %1875 = vmatprep.subr.mxu0 0.0
  %1876 = vmatpush1.msra.mxu0 0.0
  %1877 = vmatprep.subr.mxu0 0.0
  %1878 = vmatpush1.msra.mxu0 0.0
  %1879 = vmatprep.subr.mxu0 0.0
  %1880 = vmatpush1.msra.mxu0 0.0
  %1881 = vmatprep.subr.mxu0 0.0
  %1882 = vmatpush1.msra.mxu0 0.0
  %1883 = vmatprep.subr.mxu0 0.0
  %1884 = vmatpush1.msra.mxu0 0.0
  %1885 = vmatprep.subr.mxu0 0.0
  %1886 = vmatpush1.msra.mxu0 0.0
  %1887 = vmatprep.subr.mxu0 0.0
  %1888 = vmatpush1.msra.mxu0 0.0
  %1889 = vmatprep.subr.mxu0 0.0
  %1890 = vmatpush1.msra.mxu0 0.0
  %1891 = vmatprep.subr.mxu0 0.0
  %1892 = vmatpush1.msra.mxu0 0.0
  %1893 = vmatprep.subr.mxu0 0.0
  %1894 = vmatpush1.msra.mxu0 0.0
  %1895 = vmatprep.mubr.f32.mxu0 0.0
  %1896 = vmatmul.mubr.f32.gmra.mrb[0].mxu0 %v1829
  %v1897 = vpop.f32.mrb[0].mxu0
  %v1898 = vadd.f32 0.0, %v1897
  %v1899 = vpop.f32.mrb[0].mxu0
  %1900 = vdwg.mxu0
  %v1902 = vsel %vm382, %v1823, 0
  %1904 = vmatprep.subr.mxu0 0.0
  %1905 = vmatpush1.msra.mxu0 %v1463
  %1906 = vmatprep.subr.mxu0 0.0
  %1907 = vmatpush1.msra.mxu0 0.0
  %1908 = vmatprep.subr.mxu0 0.0
  %1909 = vmatpush1.msra.mxu0 0.0
  %1910 = vmatprep.subr.mxu0 0.0
  %1911 = vmatpush1.msra.mxu0 0.0
  %1912 = vmatprep.subr.mxu0 0.0
  %1913 = vmatpush1.msra.mxu0 0.0
  %1914 = vmatprep.subr.mxu0 0.0
  %1915 = vmatpush1.msra.mxu0 0.0
  %1916 = vmatprep.subr.mxu0 0.0
  %1917 = vmatpush1.msra.mxu0 0.0
  %1918 = vmatprep.subr.mxu0 0.0
  %1919 = vmatpush1.msra.mxu0 0.0
  %1920 = vmatprep.subr.mxu0 0.0
  %1921 = vmatpush1.msra.mxu0 0.0
  %1922 = vmatprep.subr.mxu0 0.0
  %1923 = vmatpush1.msra.mxu0 0.0
  %1924 = vmatprep.subr.mxu0 0.0
  %1925 = vmatpush1.msra.mxu0 0.0
  %1926 = vmatprep.subr.mxu0 0.0
  %1927 = vmatpush1.msra.mxu0 0.0
  %1928 = vmatprep.subr.mxu0 0.0
  %1929 = vmatpush1.msra.mxu0 0.0
  %1930 = vmatprep.subr.mxu0 0.0
  %1931 = vmatpush1.msra.mxu0 0.0
  %1932 = vmatprep.subr.mxu0 0.0
  %1933 = vmatpush1.msra.mxu0 0.0
  %1934 = vmatprep.subr.mxu0 0.0
  %1935 = vmatpush1.msra.mxu0 0.0
  %1936 = vmatprep.subr.mxu0 0.0
  %1937 = vmatpush1.msra.mxu0 0.0
  %1938 = vmatprep.subr.mxu0 0.0
  %1939 = vmatpush1.msra.mxu0 0.0
  %1940 = vmatprep.subr.mxu0 0.0
  %1941 = vmatpush1.msra.mxu0 0.0
  %1942 = vmatprep.subr.mxu0 0.0
  %1943 = vmatpush1.msra.mxu0 0.0
  %1944 = vmatprep.subr.mxu0 0.0
  %1945 = vmatpush1.msra.mxu0 0.0
  %1946 = vmatprep.subr.mxu0 0.0
  %1947 = vmatpush1.msra.mxu0 0.0
  %1948 = vmatprep.subr.mxu0 0.0
  %1949 = vmatpush1.msra.mxu0 0.0
  %1950 = vmatprep.subr.mxu0 0.0
  %1951 = vmatpush1.msra.mxu0 0.0
  %1952 = vmatprep.subr.mxu0 0.0
  %1953 = vmatpush1.msra.mxu0 0.0
  %1954 = vmatprep.subr.mxu0 0.0
  %1955 = vmatpush1.msra.mxu0 0.0
  %1956 = vmatprep.subr.mxu0 0.0
  %1957 = vmatpush1.msra.mxu0 0.0
  %1958 = vmatprep.subr.mxu0 0.0
  %1959 = vmatpush1.msra.mxu0 0.0
  %1960 = vmatprep.subr.mxu0 0.0
  %1961 = vmatpush1.msra.mxu0 0.0
  %1962 = vmatprep.subr.mxu0 0.0
  %1963 = vmatpush1.msra.mxu0 0.0
  %1964 = vmatprep.subr.mxu0 0.0
  %1965 = vmatpush1.msra.mxu0 0.0
  %1966 = vmatprep.subr.mxu0 0.0
  %1967 = vmatpush1.msra.mxu0 0.0
  %1968 = vmatprep.mubr.f32.mxu0 0.0
  %1969 = vmatmul.mubr.f32.gmra.mrb[0].mxu0 %v1902
  %v1970 = vpop.f32.mrb[0].mxu0
  %v1971 = vadd.f32 0.0, %v1970
  %v1972 = vpop.f32.mrb[0].mxu0
  %1973 = vdwg.mxu0
  %v1975 = vsel %vm382, %v1825, 0
  %1977 = vmatprep.subr.mxu0 0.0
  %1978 = vmatpush1.msra.mxu0 %v1464
  %1979 = vmatprep.subr.mxu0 0.0
  %1980 = vmatpush1.msra.mxu0 0.0
  %1981 = vmatprep.subr.mxu0 0.0
  %1982 = vmatpush1.msra.mxu0 0.0
  %1983 = vmatprep.subr.mxu0 0.0
  %1984 = vmatpush1.msra.mxu0 0.0
  %1985 = vmatprep.subr.mxu0 0.0
  %1986 = vmatpush1.msra.mxu0 0.0
  %1987 = vmatprep.subr.mxu0 0.0
  %1988 = vmatpush1.msra.mxu0 0.0
  %1989 = vmatprep.subr.mxu0 0.0
  %1990 = vmatpush1.msra.mxu0 0.0
  %1991 = vmatprep.subr.mxu0 0.0
  %1992 = vmatpush1.msra.mxu0 0.0
  %1993 = vmatprep.subr.mxu0 0.0
  %1994 = vmatpush1.msra.mxu0 0.0
  %1995 = vmatprep.subr.mxu0 0.0
  %1996 = vmatpush1.msra.mxu0 0.0
  %1997 = vmatprep.subr.mxu0 0.0
  %1998 = vmatpush1.msra.mxu0 0.0
  %1999 = vmatprep.subr.mxu0 0.0
  %2000 = vmatpush1.msra.mxu0 0.0
  %2001 = vmatprep.subr.mxu0 0.0
  %2002 = vmatpush1.msra.mxu0 0.0
  %2003 = vmatprep.subr.mxu0 0.0
  %2004 = vmatpush1.msra.mxu0 0.0
  %2005 = vmatprep.subr.mxu0 0.0
  %2006 = vmatpush1.msra.mxu0 0.0
  %2007 = vmatprep.subr.mxu0 0.0
  %2008 = vmatpush1.msra.mxu0 0.0
  %2009 = vmatprep.subr.mxu0 0.0
  %2010 = vmatpush1.msra.mxu0 0.0
  %2011 = vmatprep.subr.mxu0 0.0
  %2012 = vmatpush1.msra.mxu0 0.0
  %2013 = vmatprep.subr.mxu0 0.0
  %2014 = vmatpush1.msra.mxu0 0.0
  %2015 = vmatprep.subr.mxu0 0.0
  %2016 = vmatpush1.msra.mxu0 0.0
  %2017 = vmatprep.subr.mxu0 0.0
  %2018 = vmatpush1.msra.mxu0 0.0
  %2019 = vmatprep.subr.mxu0 0.0
  %2020 = vmatpush1.msra.mxu0 0.0
  %2021 = vmatprep.subr.mxu0 0.0
  %2022 = vmatpush1.msra.mxu0 0.0
  %2023 = vmatprep.subr.mxu0 0.0
  %2024 = vmatpush1.msra.mxu0 0.0
  %2025 = vmatprep.subr.mxu0 0.0
  %2026 = vmatpush1.msra.mxu0 0.0
  %2027 = vmatprep.subr.mxu0 0.0
  %2028 = vmatpush1.msra.mxu0 0.0
  %2029 = vmatprep.subr.mxu0 0.0
  %2030 = vmatpush1.msra.mxu0 0.0
  %2031 = vmatprep.subr.mxu0 0.0
  %2032 = vmatpush1.msra.mxu0 0.0
  %2033 = vmatprep.subr.mxu0 0.0
  %2034 = vmatpush1.msra.mxu0 0.0
  %2035 = vmatprep.subr.mxu0 0.0
  %2036 = vmatpush1.msra.mxu0 0.0
  %2037 = vmatprep.subr.mxu0 0.0
  %2038 = vmatpush1.msra.mxu0 0.0
  %2039 = vmatprep.subr.mxu0 0.0
  %2040 = vmatpush1.msra.mxu0 0.0
  %2041 = vmatprep.mubr.f32.mxu0 0.0
  %2042 = vmatmul.mubr.f32.gmra.mrb[0].mxu0 %v1975
  %v2043 = vpop.f32.mrb[0].mxu0
  %v2044 = vadd.f32 0.0, %v2043
  %v2045 = vpop.f32.mrb[0].mxu0
  %2046 = vdwg.mxu0
  %v2048 = vsel %vm382, %v1827, 0
  %2050 = vmatprep.subr.mxu0 0.0
  %2051 = vmatpush1.msra.mxu0 %v1465
  %2052 = vmatprep.subr.mxu0 0.0
  %2053 = vmatpush1.msra.mxu0 0.0
  %2054 = vmatprep.subr.mxu0 0.0
  %2055 = vmatpush1.msra.mxu0 0.0
  %2056 = vmatprep.subr.mxu0 0.0
  %2057 = vmatpush1.msra.mxu0 0.0
  %2058 = vmatprep.subr.mxu0 0.0
  %2059 = vmatpush1.msra.mxu0 0.0
  %2060 = vmatprep.subr.mxu0 0.0
  %2061 = vmatpush1.msra.mxu0 0.0
  %2062 = vmatprep.subr.mxu0 0.0
  %2063 = vmatpush1.msra.mxu0 0.0
  %2064 = vmatprep.subr.mxu0 0.0
  %2065 = vmatpush1.msra.mxu0 0.0
  %2066 = vmatprep.subr.mxu0 0.0
  %2067 = vmatpush1.msra.mxu0 0.0
  %2068 = vmatprep.subr.mxu0 0.0
  %2069 = vmatpush1.msra.mxu0 0.0
  %2070 = vmatprep.subr.mxu0 0.0
  %2071 = vmatpush1.msra.mxu0 0.0
  %2072 = vmatprep.subr.mxu0 0.0
  %2073 = vmatpush1.msra.mxu0 0.0
  %2074 = vmatprep.subr.mxu0 0.0
  %2075 = vmatpush1.msra.mxu0 0.0
  %2076 = vmatprep.subr.mxu0 0.0
  %2077 = vmatpush1.msra.mxu0 0.0
  %2078 = vmatprep.subr.mxu0 0.0
  %2079 = vmatpush1.msra.mxu0 0.0
  %2080 = vmatprep.subr.mxu0 0.0
  %2081 = vmatpush1.msra.mxu0 0.0
  %2082 = vmatprep.subr.mxu0 0.0
  %2083 = vmatpush1.msra.mxu0 0.0
  %2084 = vmatprep.subr.mxu0 0.0
  %2085 = vmatpush1.msra.mxu0 0.0
  %2086 = vmatprep.subr.mxu0 0.0
  %2087 = vmatpush1.msra.mxu0 0.0
  %2088 = vmatprep.subr.mxu0 0.0
  %2089 = vmatpush1.msra.mxu0 0.0
  %2090 = vmatprep.subr.mxu0 0.0
  %2091 = vmatpush1.msra.mxu0 0.0
  %2092 = vmatprep.subr.mxu0 0.0
  %2093 = vmatpush1.msra.mxu0 0.0
  %2094 = vmatprep.subr.mxu0 0.0
  %2095 = vmatpush1.msra.mxu0 0.0
  %2096 = vmatprep.subr.mxu0 0.0
  %2097 = vmatpush1.msra.mxu0 0.0
  %2098 = vmatprep.subr.mxu0 0.0
  %2099 = vmatpush1.msra.mxu0 0.0
  %2100 = vmatprep.subr.mxu0 0.0
  %2101 = vmatpush1.msra.mxu0 0.0
  %2102 = vmatprep.subr.mxu0 0.0
  %2103 = vmatpush1.msra.mxu0 0.0
  %2104 = vmatprep.subr.mxu0 0.0
  %2105 = vmatpush1.msra.mxu0 0.0
  %2106 = vmatprep.subr.mxu0 0.0
  %2107 = vmatpush1.msra.mxu0 0.0
  %2108 = vmatprep.subr.mxu0 0.0
  %2109 = vmatpush1.msra.mxu0 0.0
  %2110 = vmatprep.subr.mxu0 0.0
  %2111 = vmatpush1.msra.mxu0 0.0
  %2112 = vmatprep.subr.mxu0 0.0
  %2113 = vmatpush1.msra.mxu0 0.0
  %2114 = vmatprep.mubr.f32.mxu0 0.0
  %2115 = vmatmul.mubr.f32.gmra.mrb[0].mxu0 %v2048
  %v2116 = vpop.f32.mrb[0].mxu0
  %v2117 = vadd.f32 0.0, %v2116
  %v2118 = vpop.f32.mrb[0].mxu0
  %2119 = vdwg.mxu0
  %v2121 = vsel %vm382, %v1898, 0
  %2123 = vmatprep.subr.mxu0 0.0
  %2124 = vmatpush1.msra.mxu0 %v488
  %2125 = vmatprep.subr.mxu0 0.0
  %2126 = vmatpush1.msra.mxu0 0.0
  %2127 = vmatprep.subr.mxu0 0.0
  %2128 = vmatpush1.msra.mxu0 0.0
  %2129 = vmatprep.subr.mxu0 0.0
  %2130 = vmatpush1.msra.mxu0 0.0
  %2131 = vmatprep.subr.mxu0 0.0
  %2132 = vmatpush1.msra.mxu0 0.0
  %2133 = vmatprep.subr.mxu0 0.0
  %2134 = vmatpush1.msra.mxu0 0.0
  %2135 = vmatprep.subr.mxu0 0.0
  %2136 = vmatpush1.msra.mxu0 0.0
  %2137 = vmatprep.subr.mxu0 0.0
  %2138 = vmatpush1.msra.mxu0 0.0
  %2139 = vmatprep.subr.mxu0 0.0
  %2140 = vmatpush1.msra.mxu0 0.0
  %2141 = vmatprep.subr.mxu0 0.0
  %2142 = vmatpush1.msra.mxu0 0.0
  %2143 = vmatprep.subr.mxu0 0.0
  %2144 = vmatpush1.msra.mxu0 0.0
  %2145 = vmatprep.subr.mxu0 0.0
  %2146 = vmatpush1.msra.mxu0 0.0
  %2147 = vmatprep.subr.mxu0 0.0
  %2148 = vmatpush1.msra.mxu0 0.0
  %2149 = vmatprep.subr.mxu0 0.0
  %2150 = vmatpush1.msra.mxu0 0.0
  %2151 = vmatprep.subr.mxu0 0.0
  %2152 = vmatpush1.msra.mxu0 0.0
  %2153 = vmatprep.subr.mxu0 0.0
  %2154 = vmatpush1.msra.mxu0 0.0
  %2155 = vmatprep.subr.mxu0 0.0
  %2156 = vmatpush1.msra.mxu0 0.0
  %2157 = vmatprep.subr.mxu0 0.0
  %2158 = vmatpush1.msra.mxu0 0.0
  %2159 = vmatprep.subr.mxu0 0.0
  %2160 = vmatpush1.msra.mxu0 0.0
  %2161 = vmatprep.subr.mxu0 0.0
  %2162 = vmatpush1.msra.mxu0 0.0
  %2163 = vmatprep.subr.mxu0 0.0
  %2164 = vmatpush1.msra.mxu0 0.0
  %2165 = vmatprep.subr.mxu0 0.0
  %2166 = vmatpush1.msra.mxu0 0.0
  %2167 = vmatprep.subr.mxu0 0.0
  %2168 = vmatpush1.msra.mxu0 0.0
  %2169 = vmatprep.subr.mxu0 0.0
  %2170 = vmatpush1.msra.mxu0 0.0
  %2171 = vmatprep.subr.mxu0 0.0
  %2172 = vmatpush1.msra.mxu0 0.0
  %2173 = vmatprep.subr.mxu0 0.0
  %2174 = vmatpush1.msra.mxu0 0.0
  %2175 = vmatprep.subr.mxu0 0.0
  %2176 = vmatpush1.msra.mxu0 0.0
  %2177 = vmatprep.subr.mxu0 0.0
  %2178 = vmatpush1.msra.mxu0 0.0
  %2179 = vmatprep.subr.mxu0 0.0
  %2180 = vmatpush1.msra.mxu0 0.0
  %2181 = vmatprep.subr.mxu0 0.0
  %2182 = vmatpush1.msra.mxu0 0.0
  %2183 = vmatprep.subr.mxu0 0.0
  %2184 = vmatpush1.msra.mxu0 0.0
  %2185 = vmatprep.subr.mxu0 0.0
  %2186 = vmatpush1.msra.mxu0 0.0
  %2187 = vmatprep.mubr.f32.mxu0 0.0
  %2188 = vmatmul.mubr.f32.gmra.mrb[0].mxu0 %v2121
  %v2189 = vpop.f32.mrb[0].mxu0
  %v2190 = vadd.f32 0.0, %v2189
  %v2191 = vpop.f32.mrb[0].mxu0
  %2192 = vdwg.mxu0
  %v2194 = vsel %vm382, %v1971, 0
  %2196 = vmatprep.subr.mxu0 0.0
  %2197 = vmatpush1.msra.mxu0 %v489
  %2198 = vmatprep.subr.mxu0 0.0
  %2199 = vmatpush1.msra.mxu0 0.0
  %2200 = vmatprep.subr.mxu0 0.0
  %2201 = vmatpush1.msra.mxu0 0.0
  %2202 = vmatprep.subr.mxu0 0.0
  %2203 = vmatpush1.msra.mxu0 0.0
  %2204 = vmatprep.subr.mxu0 0.0
  %2205 = vmatpush1.msra.mxu0 0.0
  %2206 = vmatprep.subr.mxu0 0.0
  %2207 = vmatpush1.msra.mxu0 0.0
  %2208 = vmatprep.subr.mxu0 0.0
  %2209 = vmatpush1.msra.mxu0 0.0
  %2210 = vmatprep.subr.mxu0 0.0
  %2211 = vmatpush1.msra.mxu0 0.0
  %2212 = vmatprep.subr.mxu0 0.0
  %2213 = vmatpush1.msra.mxu0 0.0
  %2214 = vmatprep.subr.mxu0 0.0
  %2215 = vmatpush1.msra.mxu0 0.0
  %2216 = vmatprep.subr.mxu0 0.0
  %2217 = vmatpush1.msra.mxu0 0.0
  %2218 = vmatprep.subr.mxu0 0.0
  %2219 = vmatpush1.msra.mxu0 0.0
  %2220 = vmatprep.subr.mxu0 0.0
  %2221 = vmatpush1.msra.mxu0 0.0
  %2222 = vmatprep.subr.mxu0 0.0
  %2223 = vmatpush1.msra.mxu0 0.0
  %2224 = vmatprep.subr.mxu0 0.0
  %2225 = vmatpush1.msra.mxu0 0.0
  %2226 = vmatprep.subr.mxu0 0.0
  %2227 = vmatpush1.msra.mxu0 0.0
  %2228 = vmatprep.subr.mxu0 0.0
  %2229 = vmatpush1.msra.mxu0 0.0
  %2230 = vmatprep.subr.mxu0 0.0
  %2231 = vmatpush1.msra.mxu0 0.0
  %2232 = vmatprep.subr.mxu0 0.0
  %2233 = vmatpush1.msra.mxu0 0.0
  %2234 = vmatprep.subr.mxu0 0.0
  %2235 = vmatpush1.msra.mxu0 0.0
  %2236 = vmatprep.subr.mxu0 0.0
  %2237 = vmatpush1.msra.mxu0 0.0
  %2238 = vmatprep.subr.mxu0 0.0
  %2239 = vmatpush1.msra.mxu0 0.0
  %2240 = vmatprep.subr.mxu0 0.0
  %2241 = vmatpush1.msra.mxu0 0.0
  %2242 = vmatprep.subr.mxu0 0.0
  %2243 = vmatpush1.msra.mxu0 0.0
  %2244 = vmatprep.subr.mxu0 0.0
  %2245 = vmatpush1.msra.mxu0 0.0
  %2246 = vmatprep.subr.mxu0 0.0
  %2247 = vmatpush1.msra.mxu0 0.0
  %2248 = vmatprep.subr.mxu0 0.0
  %2249 = vmatpush1.msra.mxu0 0.0
  %2250 = vmatprep.subr.mxu0 0.0
  %2251 = vmatpush1.msra.mxu0 0.0
  %2252 = vmatprep.subr.mxu0 0.0
  %2253 = vmatpush1.msra.mxu0 0.0
  %2254 = vmatprep.subr.mxu0 0.0
  %2255 = vmatpush1.msra.mxu0 0.0
  %2256 = vmatprep.subr.mxu0 0.0
  %2257 = vmatpush1.msra.mxu0 0.0
  %2258 = vmatprep.subr.mxu0 0.0
  %2259 = vmatpush1.msra.mxu0 0.0
  %2260 = vmatprep.mubr.f32.mxu0 0.0
  %2261 = vmatmul.mubr.f32.gmra.mrb[0].mxu0 %v2194
  %v2262 = vpop.f32.mrb[0].mxu0
  %v2263 = vadd.f32 0.0, %v2262
  %v2264 = vpop.f32.mrb[0].mxu0
  %2265 = vdwg.mxu0
  %v2267 = vsel %vm382, %v2044, 0
  %2269 = vmatprep.subr.mxu0 0.0
  %2270 = vmatpush1.msra.mxu0 %v490
  %2271 = vmatprep.subr.mxu0 0.0
  %2272 = vmatpush1.msra.mxu0 0.0
  %2273 = vmatprep.subr.mxu0 0.0
  %2274 = vmatpush1.msra.mxu0 0.0
  %2275 = vmatprep.subr.mxu0 0.0
  %2276 = vmatpush1.msra.mxu0 0.0
  %2277 = vmatprep.subr.mxu0 0.0
  %2278 = vmatpush1.msra.mxu0 0.0
  %2279 = vmatprep.subr.mxu0 0.0
  %2280 = vmatpush1.msra.mxu0 0.0
  %2281 = vmatprep.subr.mxu0 0.0
  %2282 = vmatpush1.msra.mxu0 0.0
  %2283 = vmatprep.subr.mxu0 0.0
  %2284 = vmatpush1.msra.mxu0 0.0
  %2285 = vmatprep.subr.mxu0 0.0
  %2286 = vmatpush1.msra.mxu0 0.0
  %2287 = vmatprep.subr.mxu0 0.0
  %2288 = vmatpush1.msra.mxu0 0.0
  %2289 = vmatprep.subr.mxu0 0.0
  %2290 = vmatpush1.msra.mxu0 0.0
  %2291 = vmatprep.subr.mxu0 0.0
  %2292 = vmatpush1.msra.mxu0 0.0
  %2293 = vmatprep.subr.mxu0 0.0
  %2294 = vmatpush1.msra.mxu0 0.0
  %2295 = vmatprep.subr.mxu0 0.0
  %2296 = vmatpush1.msra.mxu0 0.0
  %2297 = vmatprep.subr.mxu0 0.0
  %2298 = vmatpush1.msra.mxu0 0.0
  %2299 = vmatprep.subr.mxu0 0.0
  %2300 = vmatpush1.msra.mxu0 0.0
  %2301 = vmatprep.subr.mxu0 0.0
  %2302 = vmatpush1.msra.mxu0 0.0
  %2303 = vmatprep.subr.mxu0 0.0
  %2304 = vmatpush1.msra.mxu0 0.0
  %2305 = vmatprep.subr.mxu0 0.0
  %2306 = vmatpush1.msra.mxu0 0.0
  %2307 = vmatprep.subr.mxu0 0.0
  %2308 = vmatpush1.msra.mxu0 0.0
  %2309 = vmatprep.subr.mxu0 0.0
  %2310 = vmatpush1.msra.mxu0 0.0
  %2311 = vmatprep.subr.mxu0 0.0
  %2312 = vmatpush1.msra.mxu0 0.0
  %2313 = vmatprep.subr.mxu0 0.0
  %2314 = vmatpush1.msra.mxu0 0.0
  %2315 = vmatprep.subr.mxu0 0.0
  %2316 = vmatpush1.msra.mxu0 0.0
  %2317 = vmatprep.subr.mxu0 0.0
  %2318 = vmatpush1.msra.mxu0 0.0
  %2319 = vmatprep.subr.mxu0 0.0
  %2320 = vmatpush1.msra.mxu0 0.0
  %2321 = vmatprep.subr.mxu0 0.0
  %2322 = vmatpush1.msra.mxu0 0.0
  %2323 = vmatprep.subr.mxu0 0.0
  %2324 = vmatpush1.msra.mxu0 0.0
  %2325 = vmatprep.subr.mxu0 0.0
  %2326 = vmatpush1.msra.mxu0 0.0
  %2327 = vmatprep.subr.mxu0 0.0
  %2328 = vmatpush1.msra.mxu0 0.0
  %2329 = vmatprep.subr.mxu0 0.0
  %2330 = vmatpush1.msra.mxu0 0.0
  %2331 = vmatprep.subr.mxu0 0.0
  %2332 = vmatpush1.msra.mxu0 0.0
  %2333 = vmatprep.mubr.f32.mxu0 0.0
  %2334 = vmatmul.mubr.f32.gmra.mrb[0].mxu0 %v2267
  %v2335 = vpop.f32.mrb[0].mxu0
  %v2336 = vadd.f32 0.0, %v2335
  %v2337 = vpop.f32.mrb[0].mxu0
  %2338 = vdwg.mxu0
  %v2340 = vsel %vm382, %v2117, 0
  %2342 = vmatprep.subr.mxu0 0.0
  %2343 = vmatpush1.msra.mxu0 %v491
  %2344 = vmatprep.subr.mxu0 0.0
  %2345 = vmatpush1.msra.mxu0 0.0
  %2346 = vmatprep.subr.mxu0 0.0
  %2347 = vmatpush1.msra.mxu0 0.0
  %2348 = vmatprep.subr.mxu0 0.0
  %2349 = vmatpush1.msra.mxu0 0.0
  %2350 = vmatprep.subr.mxu0 0.0
  %2351 = vmatpush1.msra.mxu0 0.0
  %2352 = vmatprep.subr.mxu0 0.0
  %2353 = vmatpush1.msra.mxu0 0.0
  %2354 = vmatprep.subr.mxu0 0.0
  %2355 = vmatpush1.msra.mxu0 0.0
  %2356 = vmatprep.subr.mxu0 0.0
  %2357 = vmatpush1.msra.mxu0 0.0
  %2358 = vmatprep.subr.mxu0 0.0
  %2359 = vmatpush1.msra.mxu0 0.0
  %2360 = vmatprep.subr.mxu0 0.0
  %2361 = vmatpush1.msra.mxu0 0.0
  %2362 = vmatprep.subr.mxu0 0.0
  %2363 = vmatpush1.msra.mxu0 0.0
  %2364 = vmatprep.subr.mxu0 0.0
  %2365 = vmatpush1.msra.mxu0 0.0
  %2366 = vmatprep.subr.mxu0 0.0
  %2367 = vmatpush1.msra.mxu0 0.0
  %2368 = vmatprep.subr.mxu0 0.0
  %2369 = vmatpush1.msra.mxu0 0.0
  %2370 = vmatprep.subr.mxu0 0.0
  %2371 = vmatpush1.msra.mxu0 0.0
  %2372 = vmatprep.subr.mxu0 0.0
  %2373 = vmatpush1.msra.mxu0 0.0
  %2374 = vmatprep.subr.mxu0 0.0
  %2375 = vmatpush1.msra.mxu0 0.0
  %2376 = vmatprep.subr.mxu0 0.0
  %2377 = vmatpush1.msra.mxu0 0.0
  %2378 = vmatprep.subr.mxu0 0.0
  %2379 = vmatpush1.msra.mxu0 0.0
  %2380 = vmatprep.subr.mxu0 0.0
  %2381 = vmatpush1.msra.mxu0 0.0
  %2382 = vmatprep.subr.mxu0 0.0
  %2383 = vmatpush1.msra.mxu0 0.0
  %2384 = vmatprep.subr.mxu0 0.0
  %2385 = vmatpush1.msra.mxu0 0.0
  %2386 = vmatprep.subr.mxu0 0.0
  %2387 = vmatpush1.msra.mxu0 0.0
  %2388 = vmatprep.subr.mxu0 0.0
  %2389 = vmatpush1.msra.mxu0 0.0
  %2390 = vmatprep.subr.mxu0 0.0
  %2391 = vmatpush1.msra.mxu0 0.0
  %2392 = vmatprep.subr.mxu0 0.0
  %2393 = vmatpush1.msra.mxu0 0.0
  %2394 = vmatprep.subr.mxu0 0.0
  %2395 = vmatpush1.msra.mxu0 0.0
  %2396 = vmatprep.subr.mxu0 0.0
  %2397 = vmatpush1.msra.mxu0 0.0
  %2398 = vmatprep.subr.mxu0 0.0
  %2399 = vmatpush1.msra.mxu0 0.0
  %2400 = vmatprep.subr.mxu0 0.0
  %2401 = vmatpush1.msra.mxu0 0.0
  %2402 = vmatprep.subr.mxu0 0.0
  %2403 = vmatpush1.msra.mxu0 0.0
  %2404 = vmatprep.subr.mxu0 0.0
  %2405 = vmatpush1.msra.mxu0 0.0
  %2406 = vmatprep.mubr.f32.mxu0 0.0
  %2407 = vmatmul.mubr.f32.gmra.mrb[0].mxu0 %v2340
  %v2408 = vpop.f32.mrb[0].mxu0
  %v2409 = vadd.f32 0.0, %v2408
  %v2410 = vpop.f32.mrb[0].mxu0
  %2411 = vdwg.mxu0
  %v2412 = vadd.f32 %v2190, %v2263
  %v2413 = vadd.f32 %v2412, %v2336
  %v2414 = vadd.f32 %v2413, %v2409
  %2415 = vst.msk [vmem:[#allocation5 + $0x8] sm:$0xff] %vm68, %v2414
  %v2416 = vld [vmem:[#allocation5] sm:$0xff]
  %v2417 = vld [vmem:[#allocation5 + $0x8] sm:$0xff]
  %v2418 = vadd.f32 %v110, %v2416
  %v2419 = vadd.f32 %v111, %v2417
  %v2420 = vld [vmem:[%s8] sm:$0x1]
  %v2422 = vlaneseq
  %v2423 = vshrl.u32 %v2422, 7
  %v2424 = vsub.s32 0, %v2423
  %v2425 = vrot.slane %v2420, %v2424
  %v2427 = vadd.f32 %v2418, %v2425
  %v2428 = vadd.f32 %v2419, %v2425
  %v2429 = vld [vmem:[%s9] sm:$0x1]
  %v2430 = vld [vmem:[%s10] sm:$0x1]
  %v2431 = vsel %vm68, %v2427, 0.0
  %2432 = vadd.xlane.f32.xlu0 %v2431
  %v2433 = vpop.xlane.xlu0 %2432
  %v2434 = vsel %vm68, %v2428, 0.0
  %2435 = vadd.xlane.f32.xlu0 %v2434
  %v2436 = vpop.xlane.xlu0 %2435
  %v2437 = vmul.f32 %v2433, %v75
  %v2438 = vmul.f32 %v2436, %v75
  %v2439 = vsub.f32 %v2427, %v2437
  %v2440 = vsub.f32 %v2428, %v2438
  %v2441 = vmul.f32 %v2439, %v2439
  %v2442 = vmul.f32 %v2440, %v2440
  %v2443 = vsel %vm68, %v2441, 0.0
  %2444 = vadd.xlane.f32.xlu0 %v2443
  %v2445 = vpop.xlane.xlu0 %2444
  %v2446 = vsel %vm68, %v2442, 0.0
  %2447 = vadd.xlane.f32.xlu0 %v2446
  %v2448 = vpop.xlane.xlu0 %2447
  %v2449 = vmul.f32 %v2445, %v75
  %v2450 = vmul.f32 %v2448, %v75
  %v2451 = vadd.f32 %v2449, 1e-12
  %v2452 = vadd.f32 %v2450, 1e-12
  %v2453 = vrsqrt.pop %v2451
  %v2454 = vrsqrt.pop %v2452
  %v2455 = vmul.f32 %v2439, %v2453
  %v2456 = vmul.f32 %v2440, %v2454
  %v2458 = vlaneseq
  %v2459 = vshrl.u32 %v2458, 7
  %v2460 = vsub.s32 0, %v2459
  %v2461 = vrot.slane %v2429, %v2460
  %v2463 = vmul.f32 %v2455, %v2461
  %v2464 = vmul.f32 %v2456, %v2461
  %v2466 = vlaneseq
  %v2467 = vshrl.u32 %v2466, 7
  %v2468 = vsub.s32 0, %v2467
  %v2469 = vrot.slane %v2430, %v2468
  %v2471 = vadd.f32 %v2463, %v2469
  %v2472 = vadd.f32 %v2464, %v2469
  %v2473 = vld [vmem:[%s11] sm:$0xff]
  %v2474 = vld [vmem:[%s11 + $0x8] sm:$0xff]
  %v2475 = vld [vmem:[%s11 + $0x10] sm:$0xff]
  %v2476 = vld [vmem:[%s11 + $0x18] sm:$0xff]
  %v2477 = vld [vmem:[%s12] sm:$0x1]
  %v2479 = vlaneseq
  %v2480 = vshrl.u32 %v2479, 7
  %v2481 = vsub.s32 0, %v2480
  %v2482 = vrot.slane %v2477, %v2481
  %v2485 = vsel %vm68, %v2471, 0
  %v2488 = vsel %vm68, %v2472, 0
  %2490 = vmatprep.subr.mxu0 0.0
  %2491 = vmatpush1.msra.mxu0 %v2473
  %2492 = vmatprep.subr.mxu0 0.0
  %2493 = vmatpush1.msra.mxu0 %v2474
  %2494 = vmatprep.subr.mxu0 0.0
  %2495 = vmatpush1.msra.mxu0 %v2475
  %2496 = vmatprep.subr.mxu0 0.0
  %2497 = vmatpush1.msra.mxu0 %v2476
  %2498 = vmatprep.subr.mxu0 0.0
  %2499 = vmatpush1.msra.mxu0 0.0
  %2500 = vmatprep.subr.mxu0 0.0
  %2501 = vmatpush1.msra.mxu0 0.0
  %2502 = vmatprep.subr.mxu0 0.0
  %2503 = vmatpush1.msra.mxu0 0.0
  %2504 = vmatprep.subr.mxu0 0.0
  %2505 = vmatpush1.msra.mxu0 0.0
  %2506 = vmatprep.subr.mxu0 0.0
  %2507 = vmatpush1.msra.mxu0 0.0
  %2508 = vmatprep.subr.mxu0 0.0
  %2509 = vmatpush1.msra.mxu0 0.0
  %2510 = vmatprep.subr.mxu0 0.0
  %2511 = vmatpush1.msra.mxu0 0.0
  %2512 = vmatprep.subr.mxu0 0.0
  %2513 = vmatpush1.msra.mxu0 0.0
  %2514 = vmatprep.subr.mxu0 0.0
  %2515 = vmatpush1.msra.mxu0 0.0
  %2516 = vmatprep.subr.mxu0 0.0
  %2517 = vmatpush1.msra.mxu0 0.0
  %2518 = vmatprep.subr.mxu0 0.0
  %2519 = vmatpush1.msra.mxu0 0.0
  %2520 = vmatprep.subr.mxu0 0.0
  %2521 = vmatpush1.msra.mxu0 0.0
  %2522 = vmatprep.subr.mxu0 0.0
  %2523 = vmatpush1.msra.mxu0 0.0
  %2524 = vmatprep.subr.mxu0 0.0
  %2525 = vmatpush1.msra.mxu0 0.0
  %2526 = vmatprep.subr.mxu0 0.0
  %2527 = vmatpush1.msra.mxu0 0.0
  %2528 = vmatprep.subr.mxu0 0.0
  %2529 = vmatpush1.msra.mxu0 0.0
  %2530 = vmatprep.subr.mxu0 0.0
  %2531 = vmatpush1.msra.mxu0 0.0
  %2532 = vmatprep.subr.mxu0 0.0
  %2533 = vmatpush1.msra.mxu0 0.0
  %2534 = vmatprep.subr.mxu0 0.0
  %2535 = vmatpush1.msra.mxu0 0.0
  %2536 = vmatprep.subr.mxu0 0.0
  %2537 = vmatpush1.msra.mxu0 0.0
  %2538 = vmatprep.subr.mxu0 0.0
  %2539 = vmatpush1.msra.mxu0 0.0
  %2540 = vmatprep.subr.mxu0 0.0
  %2541 = vmatpush1.msra.mxu0 0.0
  %2542 = vmatprep.subr.mxu0 0.0
  %2543 = vmatpush1.msra.mxu0 0.0
  %2544 = vmatprep.subr.mxu0 0.0
  %2545 = vmatpush1.msra.mxu0 0.0
  %2546 = vmatprep.subr.mxu0 0.0
  %2547 = vmatpush1.msra.mxu0 0.0
  %2548 = vmatprep.subr.mxu0 0.0
  %2549 = vmatpush1.msra.mxu0 0.0
  %2550 = vmatprep.subr.mxu0 0.0
  %2551 = vmatpush1.msra.mxu0 0.0
  %2552 = vmatprep.subr.mxu0 0.0
  %2553 = vmatpush1.msra.mxu0 0.0
  %2554 = vmatprep.mubr.f32.mxu0 0.0
  %2555 = vmatmul.mubr.f32.gmra.mrb[0].mxu0 %v2485
  %v2556 = vpop.f32.mrb[0].mxu0
  %v2557 = vadd.f32 %v2482, %v2556
  %v2558 = vpop.f32.mrb[0].mxu0
  %2559 = vmatprep.mubr.f32.mxu0 0.0
  %2560 = vmatmul.mubr.f32.gmra.mrb[0].mxu0 %v2488
  %v2561 = vpop.f32.mrb[0].mxu0
  %v2562 = vadd.f32 %v2482, %v2561
  %v2563 = vpop.f32.mrb[0].mxu0
  %2564 = vdwg.mxu0
  %v2565 = vmul.f32 %v2557, %v2557
  %v2566 = vmul.f32 %v2562, %v2562
  %v2567 = vmul.f32 %v2557, %v2565
  %v2568 = vmul.f32 %v2562, %v2566
  %v2569 = vmul.f32 %v2567, 0.044715
  %v2570 = vmul.f32 %v2568, 0.044715
  %v2571 = vadd.f32 %v2557, %v2569
  %v2572 = vadd.f32 %v2562, %v2570
  %v2573 = vmul.f32 %v2571, 0.7978846
  %v2574 = vmul.f32 %v2572, 0.7978846
  %v2575 = vtanh.pop %v2573
  %v2576 = vtanh.pop %v2574
  %v2577 = vadd.f32 %v2575, 1.0
  %v2578 = vadd.f32 %v2576, 1.0
  %v2579 = vmul.f32 %v2577, 0.5
  %v2580 = vmul.f32 %v2578, 0.5
  %v2581 = vmul.f32 %v2557, %v2579
  %v2582 = vmul.f32 %v2562, %v2580
  %v2583 = vld [vmem:[%s13] sm:$0xff]
  %v2584 = vld [vmem:[%s13 + $0x8] sm:$0xff]
  %v2585 = vld [vmem:[%s13 + $0x10] sm:$0xff]
  %v2586 = vld [vmem:[%s13 + $0x18] sm:$0xff]
  %v2587 = vld [vmem:[%s13 + $0x20] sm:$0xff]
  %v2588 = vld [vmem:[%s13 + $0x28] sm:$0xff]
  %v2589 = vld [vmem:[%s13 + $0x30] sm:$0xff]
  %v2590 = vld [vmem:[%s13 + $0x38] sm:$0xff]
  %v2591 = vld [vmem:[%s14] sm:$0x1]
  %v2593 = vlaneseq
  %v2594 = vshrl.u32 %v2593, 7
  %v2595 = vsub.s32 0, %v2594
  %v2596 = vrot.slane %v2591, %v2595
  %vm2598 = vcmask 523264
  %v2600 = vsel %vm2598, %v2581, 0
  %v2603 = vsel %vm2598, %v2582, 0
  %2605 = vmatprep.subr.mxu0 0.0
  %2606 = vmatpush1.msra.mxu0 %v2583
  %2607 = vmatprep.subr.mxu0 0.0
  %2608 = vmatpush1.msra.mxu0 %v2584
  %2609 = vmatprep.subr.mxu0 0.0
  %2610 = vmatpush1.msra.mxu0 %v2585
  %2611 = vmatprep.subr.mxu0 0.0
  %2612 = vmatpush1.msra.mxu0 %v2586
  %2613 = vmatprep.subr.mxu0 0.0
  %2614 = vmatpush1.msra.mxu0 %v2587
  %2615 = vmatprep.subr.mxu0 0.0
  %2616 = vmatpush1.msra.mxu0 %v2588
  %2617 = vmatprep.subr.mxu0 0.0
  %2618 = vmatpush1.msra.mxu0 %v2589
  %2619 = vmatprep.subr.mxu0 0.0
  %2620 = vmatpush1.msra.mxu0 %v2590
  %2621 = vmatprep.subr.mxu0 0.0
  %2622 = vmatpush1.msra.mxu0 0.0
  %2623 = vmatprep.subr.mxu0 0.0
  %2624 = vmatpush1.msra.mxu0 0.0
  %2625 = vmatprep.subr.mxu0 0.0
  %2626 = vmatpush1.msra.mxu0 0.0
  %2627 = vmatprep.subr.mxu0 0.0
  %2628 = vmatpush1.msra.mxu0 0.0
  %2629 = vmatprep.subr.mxu0 0.0
  %2630 = vmatpush1.msra.mxu0 0.0
  %2631 = vmatprep.subr.mxu0 0.0
  %2632 = vmatpush1.msra.mxu0 0.0
  %2633 = vmatprep.subr.mxu0 0.0
  %2634 = vmatpush1.msra.mxu0 0.0
  %2635 = vmatprep.subr.mxu0 0.0
  %2636 = vmatpush1.msra.mxu0 0.0
  %2637 = vmatprep.subr.mxu0 0.0
  %2638 = vmatpush1.msra.mxu0 0.0
  %2639 = vmatprep.subr.mxu0 0.0
  %2640 = vmatpush1.msra.mxu0 0.0
  %2641 = vmatprep.subr.mxu0 0.0
  %2642 = vmatpush1.msra.mxu0 0.0
  %2643 = vmatprep.subr.mxu0 0.0
  %2644 = vmatpush1.msra.mxu0 0.0
  %2645 = vmatprep.subr.mxu0 0.0
  %2646 = vmatpush1.msra.mxu0 0.0
  %2647 = vmatprep.subr.mxu0 0.0
  %2648 = vmatpush1.msra.mxu0 0.0
  %2649 = vmatprep.subr.mxu0 0.0
  %2650 = vmatpush1.msra.mxu0 0.0
  %2651 = vmatprep.subr.mxu0 0.0
  %2652 = vmatpush1.msra.mxu0 0.0
  %2653 = vmatprep.subr.mxu0 0.0
  %2654 = vmatpush1.msra.mxu0 0.0
  %2655 = vmatprep.subr.mxu0 0.0
  %2656 = vmatpush1.msra.mxu0 0.0
  %2657 = vmatprep.subr.mxu0 0.0
  %2658 = vmatpush1.msra.mxu0 0.0
  %2659 = vmatprep.subr.mxu0 0.0
  %2660 = vmatpush1.msra.mxu0 0.0
  %2661 = vmatprep.subr.mxu0 0.0
  %2662 = vmatpush1.msra.mxu0 0.0
  %2663 = vmatprep.subr.mxu0 0.0
  %2664 = vmatpush1.msra.mxu0 0.0
  %2665 = vmatprep.subr.mxu0 0.0
  %2666 = vmatpush1.msra.mxu0 0.0
  %2667 = vmatprep.subr.mxu0 0.0
  %2668 = vmatpush1.msra.mxu0 0.0
  %2669 = vmatprep.mubr.f32.mxu0 0.0
  %2670 = vmatmul.mubr.f32.gmra.mrb[0].mxu0 %v2600
  %v2671 = vpop.f32.mrb[0].mxu0
  %v2672 = vadd.f32 %v2596, %v2671
  %v2673 = vpop.f32.mrb[0].mxu0
  %2674 = vmatprep.mubr.f32.mxu0 0.0
  %2675 = vmatmul.mubr.f32.gmra.mrb[0].mxu0 %v2603
  %v2676 = vpop.f32.mrb[0].mxu0
  %v2677 = vadd.f32 %v2596, %v2676
  %v2678 = vpop.f32.mrb[0].mxu0
  %2679 = vdwg.mxu0
  %v2680 = vadd.f32 %v2471, %v2672
  %v2681 = vadd.f32 %v2472, %v2677
  %v2682 = vld [vmem:[%s15] sm:$0x1]
  %v2683 = vld [vmem:[%s16] sm:$0x1]
  %v2684 = vsel %vm68, %v2680, 0.0
  %2685 = vadd.xlane.f32.xlu0 %v2684
  %v2686 = vpop.xlane.xlu0 %2685
  %v2687 = vsel %vm68, %v2681, 0.0
  %2688 = vadd.xlane.f32.xlu0 %v2687
  %v2689 = vpop.xlane.xlu0 %2688
  %v2690 = vmul.f32 %v2686, %v75
  %v2691 = vmul.f32 %v2689, %v75
  %v2692 = vsub.f32 %v2680, %v2690
  %v2693 = vsub.f32 %v2681, %v2691
  %v2694 = vmul.f32 %v2692, %v2692
  %v2695 = vmul.f32 %v2693, %v2693
  %v2696 = vsel %vm68, %v2694, 0.0
  %2697 = vadd.xlane.f32.xlu0 %v2696
  %v2698 = vpop.xlane.xlu0 %2697
  %v2699 = vsel %vm68, %v2695, 0.0
  %2700 = vadd.xlane.f32.xlu0 %v2699
  %v2701 = vpop.xlane.xlu0 %2700
  %v2702 = vmul.f32 %v2698, %v75
  %v2703 = vmul.f32 %v2701, %v75
  %v2704 = vadd.f32 %v2702, 1e-12
  %v2705 = vadd.f32 %v2703, 1e-12
  %v2706 = vrsqrt.pop %v2704
  %v2707 = vrsqrt.pop %v2705
  %v2708 = vmul.f32 %v2692, %v2706
  %v2709 = vmul.f32 %v2693, %v2707
  %v2711 = vlaneseq
  %v2712 = vshrl.u32 %v2711, 7
  %v2713 = vsub.s32 0, %v2712
  %v2714 = vrot.slane %v2682, %v2713
  %v2716 = vmul.f32 %v2708, %v2714
  %v2717 = vmul.f32 %v2709, %v2714
  %v2719 = vlaneseq
  %v2720 = vshrl.u32 %v2719, 7
  %v2721 = vsub.s32 0, %v2720
  %v2722 = vrot.slane %v2683, %v2721
  %v2724 = vadd.f32 %v2716, %v2722
  %v2725 = vadd.f32 %v2717, %v2722
  %s2726 = scalar_lea.vmem %s5, 96
  %v2727 = vld [vmem:[%s2726] sm:$0xff]
  %v2728 = vld [vmem:[%s2726 + $0x8] sm:$0xff]
  %v2729 = vld [vmem:[%s2726 + $0x10] sm:$0xff]
  %v2730 = vld [vmem:[%s2726 + $0x18] sm:$0xff]
  %s2731 = scalar_lea.vmem %s6, 3
  %v2732 = vld [vmem:[%s2731] sm:$0x1]
  %v2734 = vlaneseq
  %v2735 = vshrl.u32 %v2734, 7
  %v2736 = vsub.s32 0, %v2735
  %v2737 = vrot.slane %v2732, %v2736
  %v2740 = vsel %vm68, %v2724, 0
  %v2743 = vsel %vm68, %v2725, 0
  %2745 = vmatprep.subr.mxu0 0.0
  %2746 = vmatpush1.msra.mxu0 %v2727
  %2747 = vmatprep.subr.mxu0 0.0
  %2748 = vmatpush1.msra.mxu0 %v2728
  %2749 = vmatprep.subr.mxu0 0.0
  %2750 = vmatpush1.msra.mxu0 %v2729
  %2751 = vmatprep.subr.mxu0 0.0
  %2752 = vmatpush1.msra.mxu0 %v2730
  %2753 = vmatprep.subr.mxu0 0.0
  %2754 = vmatpush1.msra.mxu0 0.0
  %2755 = vmatprep.subr.mxu0 0.0
  %2756 = vmatpush1.msra.mxu0 0.0
  %2757 = vmatprep.subr.mxu0 0.0
  %2758 = vmatpush1.msra.mxu0 0.0
  %2759 = vmatprep.subr.mxu0 0.0
  %2760 = vmatpush1.msra.mxu0 0.0
  %2761 = vmatprep.subr.mxu0 0.0
  %2762 = vmatpush1.msra.mxu0 0.0
  %2763 = vmatprep.subr.mxu0 0.0
  %2764 = vmatpush1.msra.mxu0 0.0
  %2765 = vmatprep.subr.mxu0 0.0
  %2766 = vmatpush1.msra.mxu0 0.0
  %2767 = vmatprep.subr.mxu0 0.0
  %2768 = vmatpush1.msra.mxu0 0.0
  %2769 = vmatprep.subr.mxu0 0.0
  %2770 = vmatpush1.msra.mxu0 0.0
  %2771 = vmatprep.subr.mxu0 0.0
  %2772 = vmatpush1.msra.mxu0 0.0
  %2773 = vmatprep.subr.mxu0 0.0
  %2774 = vmatpush1.msra.mxu0 0.0
  %2775 = vmatprep.subr.mxu0 0.0
  %2776 = vmatpush1.msra.mxu0 0.0
  %2777 = vmatprep.subr.mxu0 0.0
  %2778 = vmatpush1.msra.mxu0 0.0
  %2779 = vmatprep.subr.mxu0 0.0
  %2780 = vmatpush1.msra.mxu0 0.0
  %2781 = vmatprep.subr.mxu0 0.0
  %2782 = vmatpush1.msra.mxu0 0.0
  %2783 = vmatprep.subr.mxu0 0.0
  %2784 = vmatpush1.msra.mxu0 0.0
  %2785 = vmatprep.subr.mxu0 0.0
  %2786 = vmatpush1.msra.mxu0 0.0
  %2787 = vmatprep.subr.mxu0 0.0
  %2788 = vmatpush1.msra.mxu0 0.0
  %2789 = vmatprep.subr.mxu0 0.0
  %2790 = vmatpush1.msra.mxu0 0.0
  %2791 = vmatprep.subr.mxu0 0.0
  %2792 = vmatpush1.msra.mxu0 0.0
  %2793 = vmatprep.subr.mxu0 0.0
  %2794 = vmatpush1.msra.mxu0 0.0
  %2795 = vmatprep.subr.mxu0 0.0
  %2796 = vmatpush1.msra.mxu0 0.0
  %2797 = vmatprep.subr.mxu0 0.0
  %2798 = vmatpush1.msra.mxu0 0.0
  %2799 = vmatprep.subr.mxu0 0.0
  %2800 = vmatpush1.msra.mxu0 0.0
  %2801 = vmatprep.subr.mxu0 0.0
  %2802 = vmatpush1.msra.mxu0 0.0
  %2803 = vmatprep.subr.mxu0 0.0
  %2804 = vmatpush1.msra.mxu0 0.0
  %2805 = vmatprep.subr.mxu0 0.0
  %2806 = vmatpush1.msra.mxu0 0.0
  %2807 = vmatprep.subr.mxu0 0.0
  %2808 = vmatpush1.msra.mxu0 0.0
  %2809 = vmatprep.mubr.f32.mxu0 0.0
  %2810 = vmatmul.mubr.f32.gmra.mrb[0].mxu0 %v2740
  %v2811 = vpop.f32.mrb[0].mxu0
  %v2812 = vadd.f32 %v2737, %v2811
  %v2813 = vpop.f32.mrb[0].mxu0
  %2814 = vmatprep.mubr.f32.mxu0 0.0
  %2815 = vmatmul.mubr.f32.gmra.mrb[0].mxu0 %v2743
  %v2816 = vpop.f32.mrb[0].mxu0
  %v2817 = vadd.f32 %v2737, %v2816
  %v2818 = vpop.f32.mrb[0].mxu0
  %2819 = vdwg.mxu0
  %s2820 = scalar_lea.vmem %s5, 128
  %v2821 = vld [vmem:[%s2820] sm:$0xff]
  %v2822 = vld [vmem:[%s2820 + $0x8] sm:$0xff]
  %v2823 = vld [vmem:[%s2820 + $0x10] sm:$0xff]
  %v2824 = vld [vmem:[%s2820 + $0x18] sm:$0xff]
  %s2825 = scalar_lea.vmem %s6, 4
  %v2826 = vld [vmem:[%s2825] sm:$0x1]
  %v2828 = vlaneseq
  %v2829 = vshrl.u32 %v2828, 7
  %v2830 = vsub.s32 0, %v2829
  %v2831 = vrot.slane %v2826, %v2830
  %2833 = vmatprep.subr.mxu0 0.0
  %2834 = vmatpush1.msra.mxu0 %v2821
  %2835 = vmatprep.subr.mxu0 0.0
  %2836 = vmatpush1.msra.mxu0 %v2822
  %2837 = vmatprep.subr.mxu0 0.0
  %2838 = vmatpush1.msra.mxu0 %v2823
  %2839 = vmatprep.subr.mxu0 0.0
  %2840 = vmatpush1.msra.mxu0 %v2824
  %2841 = vmatprep.subr.mxu0 0.0
  %2842 = vmatpush1.msra.mxu0 0.0
  %2843 = vmatprep.subr.mxu0 0.0
  %2844 = vmatpush1.msra.mxu0 0.0
  %2845 = vmatprep.subr.mxu0 0.0
  %2846 = vmatpush1.msra.mxu0 0.0
  %2847 = vmatprep.subr.mxu0 0.0
  %2848 = vmatpush1.msra.mxu0 0.0
  %2849 = vmatprep.subr.mxu0 0.0
  %2850 = vmatpush1.msra.mxu0 0.0
  %2851 = vmatprep.subr.mxu0 0.0
  %2852 = vmatpush1.msra.mxu0 0.0
  %2853 = vmatprep.subr.mxu0 0.0
  %2854 = vmatpush1.msra.mxu0 0.0
  %2855 = vmatprep.subr.mxu0 0.0
  %2856 = vmatpush1.msra.mxu0 0.0
  %2857 = vmatprep.subr.mxu0 0.0
  %2858 = vmatpush1.msra.mxu0 0.0
  %2859 = vmatprep.subr.mxu0 0.0
  %2860 = vmatpush1.msra.mxu0 0.0
  %2861 = vmatprep.subr.mxu0 0.0
  %2862 = vmatpush1.msra.mxu0 0.0
  %2863 = vmatprep.subr.mxu0 0.0
  %2864 = vmatpush1.msra.mxu0 0.0
  %2865 = vmatprep.subr.mxu0 0.0
  %2866 = vmatpush1.msra.mxu0 0.0
  %2867 = vmatprep.subr.mxu0 0.0
  %2868 = vmatpush1.msra.mxu0 0.0
  %2869 = vmatprep.subr.mxu0 0.0
  %2870 = vmatpush1.msra.mxu0 0.0
  %2871 = vmatprep.subr.mxu0 0.0
  %2872 = vmatpush1.msra.mxu0 0.0
  %2873 = vmatprep.subr.mxu0 0.0
  %2874 = vmatpush1.msra.mxu0 0.0
  %2875 = vmatprep.subr.mxu0 0.0
  %2876 = vmatpush1.msra.mxu0 0.0
  %2877 = vmatprep.subr.mxu0 0.0
  %2878 = vmatpush1.msra.mxu0 0.0
  %2879 = vmatprep.subr.mxu0 0.0
  %2880 = vmatpush1.msra.mxu0 0.0
  %2881 = vmatprep.subr.mxu0 0.0
  %2882 = vmatpush1.msra.mxu0 0.0
  %2883 = vmatprep.subr.mxu0 0.0
  %2884 = vmatpush1.msra.mxu0 0.0
  %2885 = vmatprep.subr.mxu0 0.0
  %2886 = vmatpush1.msra.mxu0 0.0
  %2887 = vmatprep.subr.mxu0 0.0
  %2888 = vmatpush1.msra.mxu0 0.0
  %2889 = vmatprep.subr.mxu0 0.0
  %2890 = vmatpush1.msra.mxu0 0.0
  %2891 = vmatprep.subr.mxu0 0.0
  %2892 = vmatpush1.msra.mxu0 0.0
  %2893 = vmatprep.subr.mxu0 0.0
  %2894 = vmatpush1.msra.mxu0 0.0
  %2895 = vmatprep.subr.mxu0 0.0
  %2896 = vmatpush1.msra.mxu0 0.0
  %2897 = vmatprep.mubr.f32.mxu0 0.0
  %2898 = vmatmul.mubr.f32.gmra.mrb[0].mxu0 %v2740
  %v2899 = vpop.f32.mrb[0].mxu0
  %v2900 = vadd.f32 %v2831, %v2899
  %v2901 = vpop.f32.mrb[0].mxu0
  %2902 = vmatprep.mubr.f32.mxu0 0.0
  %2903 = vmatmul.mubr.f32.gmra.mrb[0].mxu0 %v2743
  %v2904 = vpop.f32.mrb[0].mxu0
  %v2905 = vadd.f32 %v2831, %v2904
  %v2906 = vpop.f32.mrb[0].mxu0
  %2907 = vdwg.mxu0
  %s2908 = scalar_lea.vmem %s5, 160
  %v2909 = vld [vmem:[%s2908] sm:$0xff]
  %v2910 = vld [vmem:[%s2908 + $0x8] sm:$0xff]
  %v2911 = vld [vmem:[%s2908 + $0x10] sm:$0xff]
  %v2912 = vld [vmem:[%s2908 + $0x18] sm:$0xff]
  %s2913 = scalar_lea.vmem %s6, 5
  %v2914 = vld [vmem:[%s2913] sm:$0x1]
  %v2916 = vlaneseq
  %v2917 = vshrl.u32 %v2916, 7
  %v2918 = vsub.s32 0, %v2917
  %v2919 = vrot.slane %v2914, %v2918
  %2921 = vmatprep.subr.mxu0 0.0
  %2922 = vmatpush1.msra.mxu0 %v2909
  %2923 = vmatprep.subr.mxu0 0.0
  %2924 = vmatpush1.msra.mxu0 %v2910
  %2925 = vmatprep.subr.mxu0 0.0
  %2926 = vmatpush1.msra.mxu0 %v2911
  %2927 = vmatprep.subr.mxu0 0.0
  %2928 = vmatpush1.msra.mxu0 %v2912
  %2929 = vmatprep.subr.mxu0 0.0
  %2930 = vmatpush1.msra.mxu0 0.0
  %2931 = vmatprep.subr.mxu0 0.0
  %2932 = vmatpush1.msra.mxu0 0.0
  %2933 = vmatprep.subr.mxu0 0.0
  %2934 = vmatpush1.msra.mxu0 0.0
  %2935 = vmatprep.subr.mxu0 0.0
  %2936 = vmatpush1.msra.mxu0 0.0
  %2937 = vmatprep.subr.mxu0 0.0
  %2938 = vmatpush1.msra.mxu0 0.0
  %2939 = vmatprep.subr.mxu0 0.0
  %2940 = vmatpush1.msra.mxu0 0.0
  %2941 = vmatprep.subr.mxu0 0.0
  %2942 = vmatpush1.msra.mxu0 0.0
  %2943 = vmatprep.subr.mxu0 0.0
  %2944 = vmatpush1.msra.mxu0 0.0
  %2945 = vmatprep.subr.mxu0 0.0
  %2946 = vmatpush1.msra.mxu0 0.0
  %2947 = vmatprep.subr.mxu0 0.0
  %2948 = vmatpush1.msra.mxu0 0.0
  %2949 = vmatprep.subr.mxu0 0.0
  %2950 = vmatpush1.msra.mxu0 0.0
  %2951 = vmatprep.subr.mxu0 0.0
  %2952 = vmatpush1.msra.mxu0 0.0
  %2953 = vmatprep.subr.mxu0 0.0
  %2954 = vmatpush1.msra.mxu0 0.0
  %2955 = vmatprep.subr.mxu0 0.0
  %2956 = vmatpush1.msra.mxu0 0.0
  %2957 = vmatprep.subr.mxu0 0.0
  %2958 = vmatpush1.msra.mxu0 0.0
  %2959 = vmatprep.subr.mxu0 0.0
  %2960 = vmatpush1.msra.mxu0 0.0
  %2961 = vmatprep.subr.mxu0 0.0
  %2962 = vmatpush1.msra.mxu0 0.0
  %2963 = vmatprep.subr.mxu0 0.0
  %2964 = vmatpush1.msra.mxu0 0.0
  %2965 = vmatprep.subr.mxu0 0.0
  %2966 = vmatpush1.msra.mxu0 0.0
  %2967 = vmatprep.subr.mxu0 0.0
  %2968 = vmatpush1.msra.mxu0 0.0
  %2969 = vmatprep.subr.mxu0 0.0
  %2970 = vmatpush1.msra.mxu0 0.0
  %2971 = vmatprep.subr.mxu0 0.0
  %2972 = vmatpush1.msra.mxu0 0.0
  %2973 = vmatprep.subr.mxu0 0.0
  %2974 = vmatpush1.msra.mxu0 0.0
  %2975 = vmatprep.subr.mxu0 0.0
  %2976 = vmatpush1.msra.mxu0 0.0
  %2977 = vmatprep.subr.mxu0 0.0
  %2978 = vmatpush1.msra.mxu0 0.0
  %2979 = vmatprep.subr.mxu0 0.0
  %2980 = vmatpush1.msra.mxu0 0.0
  %2981 = vmatprep.subr.mxu0 0.0
  %2982 = vmatpush1.msra.mxu0 0.0
  %2983 = vmatprep.subr.mxu0 0.0
  %2984 = vmatpush1.msra.mxu0 0.0
  %2985 = vmatprep.mubr.f32.mxu0 0.0
  %2986 = vmatmul.mubr.f32.gmra.mrb[0].mxu0 %v2740
  %v2987 = vpop.f32.mrb[0].mxu0
  %v2988 = vadd.f32 %v2919, %v2987
  %v2989 = vpop.f32.mrb[0].mxu0
  %2990 = vmatprep.mubr.f32.mxu0 0.0
  %2991 = vmatmul.mubr.f32.gmra.mrb[0].mxu0 %v2743
  %v2992 = vpop.f32.mrb[0].mxu0
  %v2993 = vadd.f32 %v2919, %v2992
  %v2994 = vpop.f32.mrb[0].mxu0
  %2995 = vdwg.mxu0
  %2996 = vst.msk [vmem:[#allocation2] sm:$0xff] %vm382, %v2812
  %2997 = vst.msk [vmem:[#allocation3] sm:$0xff] %vm382, %v2900
  %2998 = vst.msk [vmem:[#allocation4] sm:$0xff] %vm382, %v2988
  %3000 = vrot.lane.b32.xlu0 %v2812, 120
  %v3001 = vpop.permute.xlu0 %3000
  %3003 = vst.msk [vmem:[%s390] sm:$0xff] %vm382, %v3001
  %3005 = vrot.lane.b32.xlu0 %v2900, 120
  %v3006 = vpop.permute.xlu0 %3005
  %3008 = vst.msk [vmem:[%s396] sm:$0xff] %vm382, %v3006
  %3010 = vrot.lane.b32.xlu0 %v2988, 120
  %v3011 = vpop.permute.xlu0 %3010
  %3013 = vst.msk [vmem:[%s402] sm:$0xff] %vm382, %v3011
  %3014 = vrot.lane.b32.xlu0 %v2812, 112
  %v3015 = vpop.permute.xlu0 %3014
  %3017 = vst.msk [vmem:[%s407] sm:$0xff] %vm382, %v3015
  %3018 = vrot.lane.b32.xlu0 %v2900, 112
  %v3019 = vpop.permute.xlu0 %3018
  %3021 = vst.msk [vmem:[%s412] sm:$0xff] %vm382, %v3019
  %3022 = vrot.lane.b32.xlu0 %v2988, 112
  %v3023 = vpop.permute.xlu0 %3022
  %3025 = vst.msk [vmem:[%s417] sm:$0xff] %vm382, %v3023
  %3026 = vrot.lane.b32.xlu0 %v2812, 104
  %v3027 = vpop.permute.xlu0 %3026
  %3029 = vst.msk [vmem:[%s422] sm:$0xff] %vm382, %v3027
  %3030 = vrot.lane.b32.xlu0 %v2900, 104
  %v3031 = vpop.permute.xlu0 %3030
  %3033 = vst.msk [vmem:[%s427] sm:$0xff] %vm382, %v3031
  %3034 = vrot.lane.b32.xlu0 %v2988, 104
  %v3035 = vpop.permute.xlu0 %3034
  %3037 = vst.msk [vmem:[%s432] sm:$0xff] %vm382, %v3035
  %3038 = vst.msk [vmem:[%s434] sm:$0xff] %vm382, %v2817
  %3039 = vst.msk [vmem:[%s436] sm:$0xff] %vm382, %v2905
  %3040 = vst.msk [vmem:[%s438] sm:$0xff] %vm382, %v2993
  %3042 = vrot.lane.b32.xlu0 %v2817, 120
  %v3043 = vpop.permute.xlu0 %3042
  %3045 = vst.msk [vmem:[%s444] sm:$0xff] %vm382, %v3043
  %3047 = vrot.lane.b32.xlu0 %v2905, 120
  %v3048 = vpop.permute.xlu0 %3047
  %3050 = vst.msk [vmem:[%s450] sm:$0xff] %vm382, %v3048
  %3052 = vrot.lane.b32.xlu0 %v2993, 120
  %v3053 = vpop.permute.xlu0 %3052
  %3055 = vst.msk [vmem:[%s456] sm:$0xff] %vm382, %v3053
  %3056 = vrot.lane.b32.xlu0 %v2817, 112
  %v3057 = vpop.permute.xlu0 %3056
  %3059 = vst.msk [vmem:[%s461] sm:$0xff] %vm382, %v3057
  %3060 = vrot.lane.b32.xlu0 %v2905, 112
  %v3061 = vpop.permute.xlu0 %3060
  %3063 = vst.msk [vmem:[%s466] sm:$0xff] %vm382, %v3061
  %3064 = vrot.lane.b32.xlu0 %v2993, 112
  %v3065 = vpop.permute.xlu0 %3064
  %3067 = vst.msk [vmem:[%s471] sm:$0xff] %vm382, %v3065
  %3068 = vrot.lane.b32.xlu0 %v2817, 104
  %v3069 = vpop.permute.xlu0 %3068
  %3071 = vst.msk [vmem:[%s476] sm:$0xff] %vm382, %v3069
  %3072 = vrot.lane.b32.xlu0 %v2905, 104
  %v3073 = vpop.permute.xlu0 %3072
  %3075 = vst.msk [vmem:[%s481] sm:$0xff] %vm382, %v3073
  %3076 = vrot.lane.b32.xlu0 %v2993, 104
  %v3077 = vpop.permute.xlu0 %3076
  %3079 = vst.msk [vmem:[%s486] sm:$0xff] %vm382, %v3077
  %s3080 = scalar_lea.vmem %s7, 32
  %v3081 = vld [vmem:[%s3080] sm:$0xff]
  %v3082 = vld [vmem:[%s3080 + $0x8] sm:$0xff]
  %v3083 = vld [vmem:[%s3080 + $0x10] sm:$0xff]
  %v3084 = vld [vmem:[%s3080 + $0x18] sm:$0xff]
  %v3085 = vld [vmem:[#allocation2] sm:$0xff]
  %v3086 = vld [vmem:[#allocation2 + $0x8] sm:$0xff]
  %v3087 = vld [vmem:[#allocation2 + $0x10] sm:$0xff]
  %v3088 = vld [vmem:[#allocation2 + $0x18] sm:$0xff]
  %v3089 = vld [vmem:[#allocation3] sm:$0xff]
  %v3090 = vld [vmem:[#allocation3 + $0x8] sm:$0xff]
  %v3091 = vld [vmem:[#allocation3 + $0x10] sm:$0xff]
  %v3092 = vld [vmem:[#allocation3 + $0x18] sm:$0xff]
  %v3093 = vld [vmem:[#allocation4] sm:$0xff]
  %v3094 = vld [vmem:[#allocation4 + $0x8] sm:$0xff]
  %v3095 = vld [vmem:[#allocation4 + $0x10] sm:$0xff]
  %v3096 = vld [vmem:[#allocation4 + $0x18] sm:$0xff]
  %v3098 = vsel %vm382, %v3085, 0
  %v3101 = vsel %vm382, %v3089, 0
  %3103 = vmatprep.subr.mxu0 0.0
  %3104 = vmatpush1.xpose.msra.mxu0 %v3101
  %3105 = vmatprep.subr.mxu0 0.0
  %3106 = vmatpush1.xpose.msra.mxu0 0.0
  %3107 = vmatprep.subr.mxu0 0.0
  %3108 = vmatpush1.xpose.msra.mxu0 0.0
  %3109 = vmatprep.subr.mxu0 0.0
  %3110 = vmatpush1.xpose.msra.mxu0 0.0
  %3111 = vmatprep.subr.mxu0 0.0
  %3112 = vmatpush1.xpose.msra.mxu0 0.0
  %3113 = vmatprep.subr.mxu0 0.0
  %3114 = vmatpush1.xpose.msra.mxu0 0.0
  %3115 = vmatprep.subr.mxu0 0.0
  %3116 = vmatpush1.xpose.msra.mxu0 0.0
  %3117 = vmatprep.subr.mxu0 0.0
  %3118 = vmatpush1.xpose.msra.mxu0 0.0
  %3119 = vmatprep.subr.mxu0 0.0
  %3120 = vmatpush1.xpose.msra.mxu0 0.0
  %3121 = vmatprep.subr.mxu0 0.0
  %3122 = vmatpush1.xpose.msra.mxu0 0.0
  %3123 = vmatprep.subr.mxu0 0.0
  %3124 = vmatpush1.xpose.msra.mxu0 0.0
  %3125 = vmatprep.subr.mxu0 0.0
  %3126 = vmatpush1.xpose.msra.mxu0 0.0
  %3127 = vmatprep.subr.mxu0 0.0
  %3128 = vmatpush1.xpose.msra.mxu0 0.0
  %3129 = vmatprep.subr.mxu0 0.0
  %3130 = vmatpush1.xpose.msra.mxu0 0.0
  %3131 = vmatprep.subr.mxu0 0.0
  %3132 = vmatpush1.xpose.msra.mxu0 0.0
  %3133 = vmatprep.subr.mxu0 0.0
  %3134 = vmatpush1.xpose.msra.mxu0 0.0
  %3135 = vmatprep.subr.mxu0 0.0
  %3136 = vmatpush1.xpose.msra.mxu0 0.0
  %3137 = vmatprep.subr.mxu0 0.0
  %3138 = vmatpush1.xpose.msra.mxu0 0.0
  %3139 = vmatprep.subr.mxu0 0.0
  %3140 = vmatpush1.xpose.msra.mxu0 0.0
  %3141 = vmatprep.subr.mxu0 0.0
  %3142 = vmatpush1.xpose.msra.mxu0 0.0
  %3143 = vmatprep.subr.mxu0 0.0
  %3144 = vmatpush1.xpose.msra.mxu0 0.0
  %3145 = vmatprep.subr.mxu0 0.0
  %3146 = vmatpush1.xpose.msra.mxu0 0.0
  %3147 = vmatprep.subr.mxu0 0.0
  %3148 = vmatpush1.xpose.msra.mxu0 0.0
  %3149 = vmatprep.subr.mxu0 0.0
  %3150 = vmatpush1.xpose.msra.mxu0 0.0
  %3151 = vmatprep.subr.mxu0 0.0
  %3152 = vmatpush1.xpose.msra.mxu0 0.0
  %3153 = vmatprep.subr.mxu0 0.0
  %3154 = vmatpush1.xpose.msra.mxu0 0.0
  %3155 = vmatprep.subr.mxu0 0.0
  %3156 = vmatpush1.xpose.msra.mxu0 0.0
  %3157 = vmatprep.subr.mxu0 0.0
  %3158 = vmatpush1.xpose.msra.mxu0 0.0
  %3159 = vmatprep.subr.mxu0 0.0
  %3160 = vmatpush1.xpose.msra.mxu0 0.0
  %3161 = vmatprep.subr.mxu0 0.0
  %3162 = vmatpush1.xpose.msra.mxu0 0.0
  %3163 = vmatprep.subr.mxu0 0.0
  %3164 = vmatpush1.xpose.msra.mxu0 0.0
  %3165 = vmatprep.subr.mxu0 0.0
  %3166 = vmatpush1.xpose.msra.mxu0 0.0
  %3167 = vmatprep.mubr.f32.mxu0 0.0
  %3168 = vmatmul.mubr.f32.gmra.mrb[0].mxu0 %v3098
  %v3169 = vpop.f32.mrb[0].mxu0
  %v3170 = vadd.f32 0.0, %v3169
  %v3171 = vpop.f32.mrb[0].mxu0
  %3172 = vdwg.mxu0
  %v3174 = vsel %vm382, %v3086, 0
  %v3177 = vsel %vm382, %v3090, 0
  %3179 = vmatprep.subr.mxu0 0.0
  %3180 = vmatpush1.xpose.msra.mxu0 %v3177
  %3181 = vmatprep.subr.mxu0 0.0
  %3182 = vmatpush1.xpose.msra.mxu0 0.0
  %3183 = vmatprep.subr.mxu0 0.0
  %3184 = vmatpush1.xpose.msra.mxu0 0.0
  %3185 = vmatprep.subr.mxu0 0.0
  %3186 = vmatpush1.xpose.msra.mxu0 0.0
  %3187 = vmatprep.subr.mxu0 0.0
  %3188 = vmatpush1.xpose.msra.mxu0 0.0
  %3189 = vmatprep.subr.mxu0 0.0
  %3190 = vmatpush1.xpose.msra.mxu0 0.0
  %3191 = vmatprep.subr.mxu0 0.0
  %3192 = vmatpush1.xpose.msra.mxu0 0.0
  %3193 = vmatprep.subr.mxu0 0.0
  %3194 = vmatpush1.xpose.msra.mxu0 0.0
  %3195 = vmatprep.subr.mxu0 0.0
  %3196 = vmatpush1.xpose.msra.mxu0 0.0
  %3197 = vmatprep.subr.mxu0 0.0
  %3198 = vmatpush1.xpose.msra.mxu0 0.0
  %3199 = vmatprep.subr.mxu0 0.0
  %3200 = vmatpush1.xpose.msra.mxu0 0.0
  %3201 = vmatprep.subr.mxu0 0.0
  %3202 = vmatpush1.xpose.msra.mxu0 0.0
  %3203 = vmatprep.subr.mxu0 0.0
  %3204 = vmatpush1.xpose.msra.mxu0 0.0
  %3205 = vmatprep.subr.mxu0 0.0
  %3206 = vmatpush1.xpose.msra.mxu0 0.0
  %3207 = vmatprep.subr.mxu0 0.0
  %3208 = vmatpush1.xpose.msra.mxu0 0.0
  %3209 = vmatprep.subr.mxu0 0.0
  %3210 = vmatpush1.xpose.msra.mxu0 0.0
  %3211 = vmatprep.subr.mxu0 0.0
  %3212 = vmatpush1.xpose.msra.mxu0 0.0
  %3213 = vmatprep.subr.mxu0 0.0
  %3214 = vmatpush1.xpose.msra.mxu0 0.0
  %3215 = vmatprep.subr.mxu0 0.0
  %3216 = vmatpush1.xpose.msra.mxu0 0.0
  %3217 = vmatprep.subr.mxu0 0.0
  %3218 = vmatpush1.xpose.msra.mxu0 0.0
  %3219 = vmatprep.subr.mxu0 0.0
  %3220 = vmatpush1.xpose.msra.mxu0 0.0
  %3221 = vmatprep.subr.mxu0 0.0
  %3222 = vmatpush1.xpose.msra.mxu0 0.0
  %3223 = vmatprep.subr.mxu0 0.0
  %3224 = vmatpush1.xpose.msra.mxu0 0.0
  %3225 = vmatprep.subr.mxu0 0.0
  %3226 = vmatpush1.xpose.msra.mxu0 0.0
  %3227 = vmatprep.subr.mxu0 0.0
  %3228 = vmatpush1.xpose.msra.mxu0 0.0
  %3229 = vmatprep.subr.mxu0 0.0
  %3230 = vmatpush1.xpose.msra.mxu0 0.0
  %3231 = vmatprep.subr.mxu0 0.0
  %3232 = vmatpush1.xpose.msra.mxu0 0.0
  %3233 = vmatprep.subr.mxu0 0.0
  %3234 = vmatpush1.xpose.msra.mxu0 0.0
  %3235 = vmatprep.subr.mxu0 0.0
  %3236 = vmatpush1.xpose.msra.mxu0 0.0
  %3237 = vmatprep.subr.mxu0 0.0
  %3238 = vmatpush1.xpose.msra.mxu0 0.0
  %3239 = vmatprep.subr.mxu0 0.0
  %3240 = vmatpush1.xpose.msra.mxu0 0.0
  %3241 = vmatprep.subr.mxu0 0.0
  %3242 = vmatpush1.xpose.msra.mxu0 0.0
  %3243 = vmatprep.mubr.f32.mxu0 0.0
  %3244 = vmatmul.mubr.f32.gmra.mrb[0].mxu0 %v3174
  %v3245 = vpop.f32.mrb[0].mxu0
  %v3246 = vadd.f32 0.0, %v3245
  %v3247 = vpop.f32.mrb[0].mxu0
  %3248 = vdwg.mxu0
  %v3250 = vsel %vm382, %v3087, 0
  %v3253 = vsel %vm382, %v3091, 0
  %3255 = vmatprep.subr.mxu0 0.0
  %3256 = vmatpush1.xpose.msra.mxu0 %v3253
  %3257 = vmatprep.subr.mxu0 0.0
  %3258 = vmatpush1.xpose.msra.mxu0 0.0
  %3259 = vmatprep.subr.mxu0 0.0
  %3260 = vmatpush1.xpose.msra.mxu0 0.0
  %3261 = vmatprep.subr.mxu0 0.0
  %3262 = vmatpush1.xpose.msra.mxu0 0.0
  %3263 = vmatprep.subr.mxu0 0.0
  %3264 = vmatpush1.xpose.msra.mxu0 0.0
  %3265 = vmatprep.subr.mxu0 0.0
  %3266 = vmatpush1.xpose.msra.mxu0 0.0
  %3267 = vmatprep.subr.mxu0 0.0
  %3268 = vmatpush1.xpose.msra.mxu0 0.0
  %3269 = vmatprep.subr.mxu0 0.0
  %3270 = vmatpush1.xpose.msra.mxu0 0.0
  %3271 = vmatprep.subr.mxu0 0.0
  %3272 = vmatpush1.xpose.msra.mxu0 0.0
  %3273 = vmatprep.subr.mxu0 0.0
  %3274 = vmatpush1.xpose.msra.mxu0 0.0
  %3275 = vmatprep.subr.mxu0 0.0
  %3276 = vmatpush1.xpose.msra.mxu0 0.0
  %3277 = vmatprep.subr.mxu0 0.0
  %3278 = vmatpush1.xpose.msra.mxu0 0.0
  %3279 = vmatprep.subr.mxu0 0.0
  %3280 = vmatpush1.xpose.msra.mxu0 0.0
  %3281 = vmatprep.subr.mxu0 0.0
  %3282 = vmatpush1.xpose.msra.mxu0 0.0
  %3283 = vmatprep.subr.mxu0 0.0
  %3284 = vmatpush1.xpose.msra.mxu0 0.0
  %3285 = vmatprep.subr.mxu0 0.0
  %3286 = vmatpush1.xpose.msra.mxu0 0.0
  %3287 = vmatprep.subr.mxu0 0.0
  %3288 = vmatpush1.xpose.msra.mxu0 0.0
  %3289 = vmatprep.subr.mxu0 0.0
  %3290 = vmatpush1.xpose.msra.mxu0 0.0
  %3291 = vmatprep.subr.mxu0 0.0
  %3292 = vmatpush1.xpose.msra.mxu0 0.0
  %3293 = vmatprep.subr.mxu0 0.0
  %3294 = vmatpush1.xpose.msra.mxu0 0.0
  %3295 = vmatprep.subr.mxu0 0.0
  %3296 = vmatpush1.xpose.msra.mxu0 0.0
  %3297 = vmatprep.subr.mxu0 0.0
  %3298 = vmatpush1.xpose.msra.mxu0 0.0
  %3299 = vmatprep.subr.mxu0 0.0
  %3300 = vmatpush1.xpose.msra.mxu0 0.0
  %3301 = vmatprep.subr.mxu0 0.0
  %3302 = vmatpush1.xpose.msra.mxu0 0.0
  %3303 = vmatprep.subr.mxu0 0.0
  %3304 = vmatpush1.xpose.msra.mxu0 0.0
  %3305 = vmatprep.subr.mxu0 0.0
  %3306 = vmatpush1.xpose.msra.mxu0 0.0
  %3307 = vmatprep.subr.mxu0 0.0
  %3308 = vmatpush1.xpose.msra.mxu0 0.0
  %3309 = vmatprep.subr.mxu0 0.0
  %3310 = vmatpush1.xpose.msra.mxu0 0.0
  %3311 = vmatprep.subr.mxu0 0.0
  %3312 = vmatpush1.xpose.msra.mxu0 0.0
  %3313 = vmatprep.subr.mxu0 0.0
  %3314 = vmatpush1.xpose.msra.mxu0 0.0
  %3315 = vmatprep.subr.mxu0 0.0
  %3316 = vmatpush1.xpose.msra.mxu0 0.0
  %3317 = vmatprep.subr.mxu0 0.0
  %3318 = vmatpush1.xpose.msra.mxu0 0.0
  %3319 = vmatprep.mubr.f32.mxu0 0.0
  %3320 = vmatmul.mubr.f32.gmra.mrb[0].mxu0 %v3250
  %v3321 = vpop.f32.mrb[0].mxu0
  %v3322 = vadd.f32 0.0, %v3321
  %v3323 = vpop.f32.mrb[0].mxu0
  %3324 = vdwg.mxu0
  %v3326 = vsel %vm382, %v3088, 0
  %v3329 = vsel %vm382, %v3092, 0
  %3331 = vmatprep.subr.mxu0 0.0
  %3332 = vmatpush1.xpose.msra.mxu0 %v3329
  %3333 = vmatprep.subr.mxu0 0.0
  %3334 = vmatpush1.xpose.msra.mxu0 0.0
  %3335 = vmatprep.subr.mxu0 0.0
  %3336 = vmatpush1.xpose.msra.mxu0 0.0
  %3337 = vmatprep.subr.mxu0 0.0
  %3338 = vmatpush1.xpose.msra.mxu0 0.0
  %3339 = vmatprep.subr.mxu0 0.0
  %3340 = vmatpush1.xpose.msra.mxu0 0.0
  %3341 = vmatprep.subr.mxu0 0.0
  %3342 = vmatpush1.xpose.msra.mxu0 0.0
  %3343 = vmatprep.subr.mxu0 0.0
  %3344 = vmatpush1.xpose.msra.mxu0 0.0
  %3345 = vmatprep.subr.mxu0 0.0
  %3346 = vmatpush1.xpose.msra.mxu0 0.0
  %3347 = vmatprep.subr.mxu0 0.0
  %3348 = vmatpush1.xpose.msra.mxu0 0.0
  %3349 = vmatprep.subr.mxu0 0.0
  %3350 = vmatpush1.xpose.msra.mxu0 0.0
  %3351 = vmatprep.subr.mxu0 0.0
  %3352 = vmatpush1.xpose.msra.mxu0 0.0
  %3353 = vmatprep.subr.mxu0 0.0
  %3354 = vmatpush1.xpose.msra.mxu0 0.0
  %3355 = vmatprep.subr.mxu0 0.0
  %3356 = vmatpush1.xpose.msra.mxu0 0.0
  %3357 = vmatprep.subr.mxu0 0.0
  %3358 = vmatpush1.xpose.msra.mxu0 0.0
  %3359 = vmatprep.subr.mxu0 0.0
  %3360 = vmatpush1.xpose.msra.mxu0 0.0
  %3361 = vmatprep.subr.mxu0 0.0
  %3362 = vmatpush1.xpose.msra.mxu0 0.0
  %3363 = vmatprep.subr.mxu0 0.0
  %3364 = vmatpush1.xpose.msra.mxu0 0.0
  %3365 = vmatprep.subr.mxu0 0.0
  %3366 = vmatpush1.xpose.msra.mxu0 0.0
  %3367 = vmatprep.subr.mxu0 0.0
  %3368 = vmatpush1.xpose.msra.mxu0 0.0
  %3369 = vmatprep.subr.mxu0 0.0
  %3370 = vmatpush1.xpose.msra.mxu0 0.0
  %3371 = vmatprep.subr.mxu0 0.0
  %3372 = vmatpush1.xpose.msra.mxu0 0.0
  %3373 = vmatprep.subr.mxu0 0.0
  %3374 = vmatpush1.xpose.msra.mxu0 0.0
  %3375 = vmatprep.subr.mxu0 0.0
  %3376 = vmatpush1.xpose.msra.mxu0 0.0
  %3377 = vmatprep.subr.mxu0 0.0
  %3378 = vmatpush1.xpose.msra.mxu0 0.0
  %3379 = vmatprep.subr.mxu0 0.0
  %3380 = vmatpush1.xpose.msra.mxu0 0.0
  %3381 = vmatprep.subr.mxu0 0.0
  %3382 = vmatpush1.xpose.msra.mxu0 0.0
  %3383 = vmatprep.subr.mxu0 0.0
  %3384 = vmatpush1.xpose.msra.mxu0 0.0
  %3385 = vmatprep.subr.mxu0 0.0
  %3386 = vmatpush1.xpose.msra.mxu0 0.0
  %3387 = vmatprep.subr.mxu0 0.0
  %3388 = vmatpush1.xpose.msra.mxu0 0.0
  %3389 = vmatprep.subr.mxu0 0.0
  %3390 = vmatpush1.xpose.msra.mxu0 0.0
  %3391 = vmatprep.subr.mxu0 0.0
  %3392 = vmatpush1.xpose.msra.mxu0 0.0
  %3393 = vmatprep.subr.mxu0 0.0
  %3394 = vmatpush1.xpose.msra.mxu0 0.0
  %3395 = vmatprep.mubr.f32.mxu0 0.0
  %3396 = vmatmul.mubr.f32.gmra.mrb[0].mxu0 %v3326
  %v3397 = vpop.f32.mrb[0].mxu0
  %v3398 = vadd.f32 0.0, %v3397
  %v3399 = vpop.f32.mrb[0].mxu0
  %3400 = vdwg.mxu0
  %v3401 = vmul.f32 %v3170, 0.35355338
  %v3402 = vmul.f32 %v3246, 0.35355338
  %v3403 = vmul.f32 %v3322, 0.35355338
  %v3404 = vmul.f32 %v3398, 0.35355338
  %v3405 = vadd.f32 %v3401, %v816
  %v3406 = vadd.f32 %v3402, %v816
  %v3407 = vadd.f32 %v3403, %v816
  %v3408 = vadd.f32 %v3404, %v816
  %v3409 = vsel %vm382, %v3405, -inf
  %3410 = vmax.xlane.f32.xlu0 %v3409
  %v3411 = vpop.xlane.xlu0 %3410
  %v3412 = vsel %vm382, %v3406, -inf
  %3413 = vmax.xlane.f32.xlu0 %v3412
  %v3414 = vpop.xlane.xlu0 %3413
  %v3415 = vsel %vm382, %v3407, -inf
  %3416 = vmax.xlane.f32.xlu0 %v3415
  %v3417 = vpop.xlane.xlu0 %3416
  %v3418 = vsel %vm382, %v3408, -inf
  %3419 = vmax.xlane.f32.xlu0 %v3418
  %v3420 = vpop.xlane.xlu0 %3419
  %v3421 = vsub.f32 %v3405, %v3411
  %v3422 = vsub.f32 %v3406, %v3414
  %v3423 = vsub.f32 %v3407, %v3417
  %v3424 = vsub.f32 %v3408, %v3420
  %v3425 = vmul.f32 %v3421, 1.442695
  %v3426 = vpow.pop %v3425
  %v3427 = vmul.f32 %v3422, 1.442695
  %v3428 = vpow.pop %v3427
  %v3429 = vmul.f32 %v3423, 1.442695
  %v3430 = vpow.pop %v3429
  %v3431 = vmul.f32 %v3424, 1.442695
  %v3432 = vpow.pop %v3431
  %v3433 = vsel %vm382, %v3426, 0.0
  %3434 = vadd.xlane.f32.xlu0 %v3433
  %v3435 = vpop.xlane.xlu0 %3434
  %v3436 = vsel %vm382, %v3428, 0.0
  %3437 = vadd.xlane.f32.xlu0 %v3436
  %v3438 = vpop.xlane.xlu0 %3437
  %v3439 = vsel %vm382, %v3430, 0.0
  %3440 = vadd.xlane.f32.xlu0 %v3439
  %v3441 = vpop.xlane.xlu0 %3440
  %v3442 = vsel %vm382, %v3432, 0.0
  %3443 = vadd.xlane.f32.xlu0 %v3442
  %v3444 = vpop.xlane.xlu0 %3443
  %v3445 = vrcp.pop %v3435
  %v3446 = vmul.f32 %v3426, %v3445
  %v3447 = vrcp.pop %v3438
  %v3448 = vmul.f32 %v3428, %v3447
  %v3449 = vrcp.pop %v3441
  %v3450 = vmul.f32 %v3430, %v3449
  %v3451 = vrcp.pop %v3444
  %v3452 = vmul.f32 %v3432, %v3451
  %v3454 = vsel %vm382, %v3446, 0
  %3456 = vmatprep.subr.mxu0 0.0
  %3457 = vmatpush1.msra.mxu0 %v3093
  %3458 = vmatprep.subr.mxu0 0.0
  %3459 = vmatpush1.msra.mxu0 0.0
  %3460 = vmatprep.subr.mxu0 0.0
  %3461 = vmatpush1.msra.mxu0 0.0
  %3462 = vmatprep.subr.mxu0 0.0
  %3463 = vmatpush1.msra.mxu0 0.0
  %3464 = vmatprep.subr.mxu0 0.0
  %3465 = vmatpush1.msra.mxu0 0.0
  %3466 = vmatprep.subr.mxu0 0.0
  %3467 = vmatpush1.msra.mxu0 0.0
  %3468 = vmatprep.subr.mxu0 0.0
  %3469 = vmatpush1.msra.mxu0 0.0
  %3470 = vmatprep.subr.mxu0 0.0
  %3471 = vmatpush1.msra.mxu0 0.0
  %3472 = vmatprep.subr.mxu0 0.0
  %3473 = vmatpush1.msra.mxu0 0.0
  %3474 = vmatprep.subr.mxu0 0.0
  %3475 = vmatpush1.msra.mxu0 0.0
  %3476 = vmatprep.subr.mxu0 0.0
  %3477 = vmatpush1.msra.mxu0 0.0
  %3478 = vmatprep.subr.mxu0 0.0
  %3479 = vmatpush1.msra.mxu0 0.0
  %3480 = vmatprep.subr.mxu0 0.0
  %3481 = vmatpush1.msra.mxu0 0.0
  %3482 = vmatprep.subr.mxu0 0.0
  %3483 = vmatpush1.msra.mxu0 0.0
  %3484 = vmatprep.subr.mxu0 0.0
  %3485 = vmatpush1.msra.mxu0 0.0
  %3486 = vmatprep.subr.mxu0 0.0
  %3487 = vmatpush1.msra.mxu0 0.0
  %3488 = vmatprep.subr.mxu0 0.0
  %3489 = vmatpush1.msra.mxu0 0.0
  %3490 = vmatprep.subr.mxu0 0.0
  %3491 = vmatpush1.msra.mxu0 0.0
  %3492 = vmatprep.subr.mxu0 0.0
  %3493 = vmatpush1.msra.mxu0 0.0
  %3494 = vmatprep.subr.mxu0 0.0
  %3495 = vmatpush1.msra.mxu0 0.0
  %3496 = vmatprep.subr.mxu0 0.0
  %3497 = vmatpush1.msra.mxu0 0.0
  %3498 = vmatprep.subr.mxu0 0.0
  %3499 = vmatpush1.msra.mxu0 0.0
  %3500 = vmatprep.subr.mxu0 0.0
  %3501 = vmatpush1.msra.mxu0 0.0
  %3502 = vmatprep.subr.mxu0 0.0
  %3503 = vmatpush1.msra.mxu0 0.0
  %3504 = vmatprep.subr.mxu0 0.0
  %3505 = vmatpush1.msra.mxu0 0.0
  %3506 = vmatprep.subr.mxu0 0.0
  %3507 = vmatpush1.msra.mxu0 0.0
  %3508 = vmatprep.subr.mxu0 0.0
  %3509 = vmatpush1.msra.mxu0 0.0
  %3510 = vmatprep.subr.mxu0 0.0
  %3511 = vmatpush1.msra.mxu0 0.0
  %3512 = vmatprep.subr.mxu0 0.0
  %3513 = vmatpush1.msra.mxu0 0.0
  %3514 = vmatprep.subr.mxu0 0.0
  %3515 = vmatpush1.msra.mxu0 0.0
  %3516 = vmatprep.subr.mxu0 0.0
  %3517 = vmatpush1.msra.mxu0 0.0
  %3518 = vmatprep.subr.mxu0 0.0
  %3519 = vmatpush1.msra.mxu0 0.0
  %3520 = vmatprep.mubr.f32.mxu0 0.0
  %3521 = vmatmul.mubr.f32.gmra.mrb[0].mxu0 %v3454
  %v3522 = vpop.f32.mrb[0].mxu0
  %v3523 = vadd.f32 0.0, %v3522
  %v3524 = vpop.f32.mrb[0].mxu0
  %3525 = vdwg.mxu0
  %v3527 = vsel %vm382, %v3448, 0
  %3529 = vmatprep.subr.mxu0 0.0
  %3530 = vmatpush1.msra.mxu0 %v3094
  %3531 = vmatprep.subr.mxu0 0.0
  %3532 = vmatpush1.msra.mxu0 0.0
  %3533 = vmatprep.subr.mxu0 0.0
  %3534 = vmatpush1.msra.mxu0 0.0
  %3535 = vmatprep.subr.mxu0 0.0
  %3536 = vmatpush1.msra.mxu0 0.0
  %3537 = vmatprep.subr.mxu0 0.0
  %3538 = vmatpush1.msra.mxu0 0.0
  %3539 = vmatprep.subr.mxu0 0.0
  %3540 = vmatpush1.msra.mxu0 0.0
  %3541 = vmatprep.subr.mxu0 0.0
  %3542 = vmatpush1.msra.mxu0 0.0
  %3543 = vmatprep.subr.mxu0 0.0
  %3544 = vmatpush1.msra.mxu0 0.0
  %3545 = vmatprep.subr.mxu0 0.0
  %3546 = vmatpush1.msra.mxu0 0.0
  %3547 = vmatprep.subr.mxu0 0.0
  %3548 = vmatpush1.msra.mxu0 0.0
  %3549 = vmatprep.subr.mxu0 0.0
  %3550 = vmatpush1.msra.mxu0 0.0
  %3551 = vmatprep.subr.mxu0 0.0
  %3552 = vmatpush1.msra.mxu0 0.0
  %3553 = vmatprep.subr.mxu0 0.0
  %3554 = vmatpush1.msra.mxu0 0.0
  %3555 = vmatprep.subr.mxu0 0.0
  %3556 = vmatpush1.msra.mxu0 0.0
  %3557 = vmatprep.subr.mxu0 0.0
  %3558 = vmatpush1.msra.mxu0 0.0
  %3559 = vmatprep.subr.mxu0 0.0
  %3560 = vmatpush1.msra.mxu0 0.0
  %3561 = vmatprep.subr.mxu0 0.0
  %3562 = vmatpush1.msra.mxu0 0.0
  %3563 = vmatprep.subr.mxu0 0.0
  %3564 = vmatpush1.msra.mxu0 0.0
  %3565 = vmatprep.subr.mxu0 0.0
  %3566 = vmatpush1.msra.mxu0 0.0
  %3567 = vmatprep.subr.mxu0 0.0
  %3568 = vmatpush1.msra.mxu0 0.0
  %3569 = vmatprep.subr.mxu0 0.0
  %3570 = vmatpush1.msra.mxu0 0.0
  %3571 = vmatprep.subr.mxu0 0.0
  %3572 = vmatpush1.msra.mxu0 0.0
  %3573 = vmatprep.subr.mxu0 0.0
  %3574 = vmatpush1.msra.mxu0 0.0
  %3575 = vmatprep.subr.mxu0 0.0
  %3576 = vmatpush1.msra.mxu0 0.0
  %3577 = vmatprep.subr.mxu0 0.0
  %3578 = vmatpush1.msra.mxu0 0.0
  %3579 = vmatprep.subr.mxu0 0.0
  %3580 = vmatpush1.msra.mxu0 0.0
  %3581 = vmatprep.subr.mxu0 0.0
  %3582 = vmatpush1.msra.mxu0 0.0
  %3583 = vmatprep.subr.mxu0 0.0
  %3584 = vmatpush1.msra.mxu0 0.0
  %3585 = vmatprep.subr.mxu0 0.0
  %3586 = vmatpush1.msra.mxu0 0.0
  %3587 = vmatprep.subr.mxu0 0.0
  %3588 = vmatpush1.msra.mxu0 0.0
  %3589 = vmatprep.subr.mxu0 0.0
  %3590 = vmatpush1.msra.mxu0 0.0
  %3591 = vmatprep.subr.mxu0 0.0
  %3592 = vmatpush1.msra.mxu0 0.0
  %3593 = vmatprep.mubr.f32.mxu0 0.0
  %3594 = vmatmul.mubr.f32.gmra.mrb[0].mxu0 %v3527
  %v3595 = vpop.f32.mrb[0].mxu0
  %v3596 = vadd.f32 0.0, %v3595
  %v3597 = vpop.f32.mrb[0].mxu0
  %3598 = vdwg.mxu0
  %v3600 = vsel %vm382, %v3450, 0
  %3602 = vmatprep.subr.mxu0 0.0
  %3603 = vmatpush1.msra.mxu0 %v3095
  %3604 = vmatprep.subr.mxu0 0.0
  %3605 = vmatpush1.msra.mxu0 0.0
  %3606 = vmatprep.subr.mxu0 0.0
  %3607 = vmatpush1.msra.mxu0 0.0
  %3608 = vmatprep.subr.mxu0 0.0
  %3609 = vmatpush1.msra.mxu0 0.0
  %3610 = vmatprep.subr.mxu0 0.0
  %3611 = vmatpush1.msra.mxu0 0.0
  %3612 = vmatprep.subr.mxu0 0.0
  %3613 = vmatpush1.msra.mxu0 0.0
  %3614 = vmatprep.subr.mxu0 0.0
  %3615 = vmatpush1.msra.mxu0 0.0
  %3616 = vmatprep.subr.mxu0 0.0
  %3617 = vmatpush1.msra.mxu0 0.0
  %3618 = vmatprep.subr.mxu0 0.0
  %3619 = vmatpush1.msra.mxu0 0.0
  %3620 = vmatprep.subr.mxu0 0.0
  %3621 = vmatpush1.msra.mxu0 0.0
  %3622 = vmatprep.subr.mxu0 0.0
  %3623 = vmatpush1.msra.mxu0 0.0
  %3624 = vmatprep.subr.mxu0 0.0
  %3625 = vmatpush1.msra.mxu0 0.0
  %3626 = vmatprep.subr.mxu0 0.0
  %3627 = vmatpush1.msra.mxu0 0.0
  %3628 = vmatprep.subr.mxu0 0.0
  %3629 = vmatpush1.msra.mxu0 0.0
  %3630 = vmatprep.subr.mxu0 0.0
  %3631 = vmatpush1.msra.mxu0 0.0
  %3632 = vmatprep.subr.mxu0 0.0
  %3633 = vmatpush1.msra.mxu0 0.0
  %3634 = vmatprep.subr.mxu0 0.0
  %3635 = vmatpush1.msra.mxu0 0.0
  %3636 = vmatprep.subr.mxu0 0.0
  %3637 = vmatpush1.msra.mxu0 0.0
  %3638 = vmatprep.subr.mxu0 0.0
  %3639 = vmatpush1.msra.mxu0 0.0
  %3640 = vmatprep.subr.mxu0 0.0
  %3641 = vmatpush1.msra.mxu0 0.0
  %3642 = vmatprep.subr.mxu0 0.0
  %3643 = vmatpush1.msra.mxu0 0.0
  %3644 = vmatprep.subr.mxu0 0.0
  %3645 = vmatpush1.msra.mxu0 0.0
  %3646 = vmatprep.subr.mxu0 0.0
  %3647 = vmatpush1.msra.mxu0 0.0
  %3648 = vmatprep.subr.mxu0 0.0
  %3649 = vmatpush1.msra.mxu0 0.0
  %3650 = vmatprep.subr.mxu0 0.0
  %3651 = vmatpush1.msra.mxu0 0.0
  %3652 = vmatprep.subr.mxu0 0.0
  %3653 = vmatpush1.msra.mxu0 0.0
  %3654 = vmatprep.subr.mxu0 0.0
  %3655 = vmatpush1.msra.mxu0 0.0
  %3656 = vmatprep.subr.mxu0 0.0
  %3657 = vmatpush1.msra.mxu0 0.0
  %3658 = vmatprep.subr.mxu0 0.0
  %3659 = vmatpush1.msra.mxu0 0.0
  %3660 = vmatprep.subr.mxu0 0.0
  %3661 = vmatpush1.msra.mxu0 0.0
  %3662 = vmatprep.subr.mxu0 0.0
  %3663 = vmatpush1.msra.mxu0 0.0
  %3664 = vmatprep.subr.mxu0 0.0
  %3665 = vmatpush1.msra.mxu0 0.0
  %3666 = vmatprep.mubr.f32.mxu0 0.0
  %3667 = vmatmul.mubr.f32.gmra.mrb[0].mxu0 %v3600
  %v3668 = vpop.f32.mrb[0].mxu0
  %v3669 = vadd.f32 0.0, %v3668
  %v3670 = vpop.f32.mrb[0].mxu0
  %3671 = vdwg.mxu0
  %v3673 = vsel %vm382, %v3452, 0
  %3675 = vmatprep.subr.mxu0 0.0
  %3676 = vmatpush1.msra.mxu0 %v3096
  %3677 = vmatprep.subr.mxu0 0.0
  %3678 = vmatpush1.msra.mxu0 0.0
  %3679 = vmatprep.subr.mxu0 0.0
  %3680 = vmatpush1.msra.mxu0 0.0
  %3681 = vmatprep.subr.mxu0 0.0
  %3682 = vmatpush1.msra.mxu0 0.0
  %3683 = vmatprep.subr.mxu0 0.0
  %3684 = vmatpush1.msra.mxu0 0.0
  %3685 = vmatprep.subr.mxu0 0.0
  %3686 = vmatpush1.msra.mxu0 0.0
  %3687 = vmatprep.subr.mxu0 0.0
  %3688 = vmatpush1.msra.mxu0 0.0
  %3689 = vmatprep.subr.mxu0 0.0
  %3690 = vmatpush1.msra.mxu0 0.0
  %3691 = vmatprep.subr.mxu0 0.0
  %3692 = vmatpush1.msra.mxu0 0.0
  %3693 = vmatprep.subr.mxu0 0.0
  %3694 = vmatpush1.msra.mxu0 0.0
  %3695 = vmatprep.subr.mxu0 0.0
  %3696 = vmatpush1.msra.mxu0 0.0
  %3697 = vmatprep.subr.mxu0 0.0
  %3698 = vmatpush1.msra.mxu0 0.0
  %3699 = vmatprep.subr.mxu0 0.0
  %3700 = vmatpush1.msra.mxu0 0.0
  %3701 = vmatprep.subr.mxu0 0.0
  %3702 = vmatpush1.msra.mxu0 0.0
  %3703 = vmatprep.subr.mxu0 0.0
  %3704 = vmatpush1.msra.mxu0 0.0
  %3705 = vmatprep.subr.mxu0 0.0
  %3706 = vmatpush1.msra.mxu0 0.0
  %3707 = vmatprep.subr.mxu0 0.0
  %3708 = vmatpush1.msra.mxu0 0.0
  %3709 = vmatprep.subr.mxu0 0.0
  %3710 = vmatpush1.msra.mxu0 0.0
  %3711 = vmatprep.subr.mxu0 0.0
  %3712 = vmatpush1.msra.mxu0 0.0
  %3713 = vmatprep.subr.mxu0 0.0
  %3714 = vmatpush1.msra.mxu0 0.0
  %3715 = vmatprep.subr.mxu0 0.0
  %3716 = vmatpush1.msra.mxu0 0.0
  %3717 = vmatprep.subr.mxu0 0.0
  %3718 = vmatpush1.msra.mxu0 0.0
  %3719 = vmatprep.subr.mxu0 0.0
  %3720 = vmatpush1.msra.mxu0 0.0
  %3721 = vmatprep.subr.mxu0 0.0
  %3722 = vmatpush1.msra.mxu0 0.0
  %3723 = vmatprep.subr.mxu0 0.0
  %3724 = vmatpush1.msra.mxu0 0.0
  %3725 = vmatprep.subr.mxu0 0.0
  %3726 = vmatpush1.msra.mxu0 0.0
  %3727 = vmatprep.subr.mxu0 0.0
  %3728 = vmatpush1.msra.mxu0 0.0
  %3729 = vmatprep.subr.mxu0 0.0
  %3730 = vmatpush1.msra.mxu0 0.0
  %3731 = vmatprep.subr.mxu0 0.0
  %3732 = vmatpush1.msra.mxu0 0.0
  %3733 = vmatprep.subr.mxu0 0.0
  %3734 = vmatpush1.msra.mxu0 0.0
  %3735 = vmatprep.subr.mxu0 0.0
  %3736 = vmatpush1.msra.mxu0 0.0
  %3737 = vmatprep.subr.mxu0 0.0
  %3738 = vmatpush1.msra.mxu0 0.0
  %3739 = vmatprep.mubr.f32.mxu0 0.0
  %3740 = vmatmul.mubr.f32.gmra.mrb[0].mxu0 %v3673
  %v3741 = vpop.f32.mrb[0].mxu0
  %v3742 = vadd.f32 0.0, %v3741
  %v3743 = vpop.f32.mrb[0].mxu0
  %3744 = vdwg.mxu0
  %v3746 = vsel %vm382, %v3523, 0
  %3748 = vmatprep.subr.mxu0 0.0
  %3749 = vmatpush1.msra.mxu0 %v3081
  %3750 = vmatprep.subr.mxu0 0.0
  %3751 = vmatpush1.msra.mxu0 0.0
  %3752 = vmatprep.subr.mxu0 0.0
  %3753 = vmatpush1.msra.mxu0 0.0
  %3754 = vmatprep.subr.mxu0 0.0
  %3755 = vmatpush1.msra.mxu0 0.0
  %3756 = vmatprep.subr.mxu0 0.0
  %3757 = vmatpush1.msra.mxu0 0.0
  %3758 = vmatprep.subr.mxu0 0.0
  %3759 = vmatpush1.msra.mxu0 0.0
  %3760 = vmatprep.subr.mxu0 0.0
  %3761 = vmatpush1.msra.mxu0 0.0
  %3762 = vmatprep.subr.mxu0 0.0
  %3763 = vmatpush1.msra.mxu0 0.0
  %3764 = vmatprep.subr.mxu0 0.0
  %3765 = vmatpush1.msra.mxu0 0.0
  %3766 = vmatprep.subr.mxu0 0.0
  %3767 = vmatpush1.msra.mxu0 0.0
  %3768 = vmatprep.subr.mxu0 0.0
  %3769 = vmatpush1.msra.mxu0 0.0
  %3770 = vmatprep.subr.mxu0 0.0
  %3771 = vmatpush1.msra.mxu0 0.0
  %3772 = vmatprep.subr.mxu0 0.0
  %3773 = vmatpush1.msra.mxu0 0.0
  %3774 = vmatprep.subr.mxu0 0.0
  %3775 = vmatpush1.msra.mxu0 0.0
  %3776 = vmatprep.subr.mxu0 0.0
  %3777 = vmatpush1.msra.mxu0 0.0
  %3778 = vmatprep.subr.mxu0 0.0
  %3779 = vmatpush1.msra.mxu0 0.0
  %3780 = vmatprep.subr.mxu0 0.0
  %3781 = vmatpush1.msra.mxu0 0.0
  %3782 = vmatprep.subr.mxu0 0.0
  %3783 = vmatpush1.msra.mxu0 0.0
  %3784 = vmatprep.subr.mxu0 0.0
  %3785 = vmatpush1.msra.mxu0 0.0
  %3786 = vmatprep.subr.mxu0 0.0
  %3787 = vmatpush1.msra.mxu0 0.0
  %3788 = vmatprep.subr.mxu0 0.0
  %3789 = vmatpush1.msra.mxu0 0.0
  %3790 = vmatprep.subr.mxu0 0.0
  %3791 = vmatpush1.msra.mxu0 0.0
  %3792 = vmatprep.subr.mxu0 0.0
  %3793 = vmatpush1.msra.mxu0 0.0
  %3794 = vmatprep.subr.mxu0 0.0
  %3795 = vmatpush1.msra.mxu0 0.0
  %3796 = vmatprep.subr.mxu0 0.0
  %3797 = vmatpush1.msra.mxu0 0.0
  %3798 = vmatprep.subr.mxu0 0.0
  %3799 = vmatpush1.msra.mxu0 0.0
  %3800 = vmatprep.subr.mxu0 0.0
  %3801 = vmatpush1.msra.mxu0 0.0
  %3802 = vmatprep.subr.mxu0 0.0
  %3803 = vmatpush1.msra.mxu0 0.0
  %3804 = vmatprep.subr.mxu0 0.0
  %3805 = vmatpush1.msra.mxu0 0.0
  %3806 = vmatprep.subr.mxu0 0.0
  %3807 = vmatpush1.msra.mxu0 0.0
  %3808 = vmatprep.subr.mxu0 0.0
  %3809 = vmatpush1.msra.mxu0 0.0
  %3810 = vmatprep.subr.mxu0 0.0
  %3811 = vmatpush1.msra.mxu0 0.0
  %3812 = vmatprep.mubr.f32.mxu0 0.0
  %3813 = vmatmul.mubr.f32.gmra.mrb[0].mxu0 %v3746
  %v3814 = vpop.f32.mrb[0].mxu0
  %v3815 = vadd.f32 0.0, %v3814
  %v3816 = vpop.f32.mrb[0].mxu0
  %3817 = vdwg.mxu0
  %v3819 = vsel %vm382, %v3596, 0
  %3821 = vmatprep.subr.mxu0 0.0
  %3822 = vmatpush1.msra.mxu0 %v3082
  %3823 = vmatprep.subr.mxu0 0.0
  %3824 = vmatpush1.msra.mxu0 0.0
  %3825 = vmatprep.subr.mxu0 0.0
  %3826 = vmatpush1.msra.mxu0 0.0
  %3827 = vmatprep.subr.mxu0 0.0
  %3828 = vmatpush1.msra.mxu0 0.0
  %3829 = vmatprep.subr.mxu0 0.0
  %3830 = vmatpush1.msra.mxu0 0.0
  %3831 = vmatprep.subr.mxu0 0.0
  %3832 = vmatpush1.msra.mxu0 0.0
  %3833 = vmatprep.subr.mxu0 0.0
  %3834 = vmatpush1.msra.mxu0 0.0
  %3835 = vmatprep.subr.mxu0 0.0
  %3836 = vmatpush1.msra.mxu0 0.0
  %3837 = vmatprep.subr.mxu0 0.0
  %3838 = vmatpush1.msra.mxu0 0.0
  %3839 = vmatprep.subr.mxu0 0.0
  %3840 = vmatpush1.msra.mxu0 0.0
  %3841 = vmatprep.subr.mxu0 0.0
  %3842 = vmatpush1.msra.mxu0 0.0
  %3843 = vmatprep.subr.mxu0 0.0
  %3844 = vmatpush1.msra.mxu0 0.0
  %3845 = vmatprep.subr.mxu0 0.0
  %3846 = vmatpush1.msra.mxu0 0.0
  %3847 = vmatprep.subr.mxu0 0.0
  %3848 = vmatpush1.msra.mxu0 0.0
  %3849 = vmatprep.subr.mxu0 0.0
  %3850 = vmatpush1.msra.mxu0 0.0
  %3851 = vmatprep.subr.mxu0 0.0
  %3852 = vmatpush1.msra.mxu0 0.0
  %3853 = vmatprep.subr.mxu0 0.0
  %3854 = vmatpush1.msra.mxu0 0.0
  %3855 = vmatprep.subr.mxu0 0.0
  %3856 = vmatpush1.msra.mxu0 0.0
  %3857 = vmatprep.subr.mxu0 0.0
  %3858 = vmatpush1.msra.mxu0 0.0
  %3859 = vmatprep.subr.mxu0 0.0
  %3860 = vmatpush1.msra.mxu0 0.0
  %3861 = vmatprep.subr.mxu0 0.0
  %3862 = vmatpush1.msra.mxu0 0.0
  %3863 = vmatprep.subr.mxu0 0.0
  %3864 = vmatpush1.msra.mxu0 0.0
  %3865 = vmatprep.subr.mxu0 0.0
  %3866 = vmatpush1.msra.mxu0 0.0
  %3867 = vmatprep.subr.mxu0 0.0
  %3868 = vmatpush1.msra.mxu0 0.0
  %3869 = vmatprep.subr.mxu0 0.0
  %3870 = vmatpush1.msra.mxu0 0.0
  %3871 = vmatprep.subr.mxu0 0.0
  %3872 = vmatpush1.msra.mxu0 0.0
  %3873 = vmatprep.subr.mxu0 0.0
  %3874 = vmatpush1.msra.mxu0 0.0
  %3875 = vmatprep.subr.mxu0 0.0
  %3876 = vmatpush1.msra.mxu0 0.0
  %3877 = vmatprep.subr.mxu0 0.0
  %3878 = vmatpush1.msra.mxu0 0.0
  %3879 = vmatprep.subr.mxu0 0.0
  %3880 = vmatpush1.msra.mxu0 0.0
  %3881 = vmatprep.subr.mxu0 0.0
  %3882 = vmatpush1.msra.mxu0 0.0
  %3883 = vmatprep.subr.mxu0 0.0
  %3884 = vmatpush1.msra.mxu0 0.0
  %3885 = vmatprep.mubr.f32.mxu0 0.0
  %3886 = vmatmul.mubr.f32.gmra.mrb[0].mxu0 %v3819
  %v3887 = vpop.f32.mrb[0].mxu0
  %v3888 = vadd.f32 0.0, %v3887
  %v3889 = vpop.f32.mrb[0].mxu0
  %3890 = vdwg.mxu0
  %v3892 = vsel %vm382, %v3669, 0
  %3894 = vmatprep.subr.mxu0 0.0
  %3895 = vmatpush1.msra.mxu0 %v3083
  %3896 = vmatprep.subr.mxu0 0.0
  %3897 = vmatpush1.msra.mxu0 0.0
  %3898 = vmatprep.subr.mxu0 0.0
  %3899 = vmatpush1.msra.mxu0 0.0
  %3900 = vmatprep.subr.mxu0 0.0
  %3901 = vmatpush1.msra.mxu0 0.0
  %3902 = vmatprep.subr.mxu0 0.0
  %3903 = vmatpush1.msra.mxu0 0.0
  %3904 = vmatprep.subr.mxu0 0.0
  %3905 = vmatpush1.msra.mxu0 0.0
  %3906 = vmatprep.subr.mxu0 0.0
  %3907 = vmatpush1.msra.mxu0 0.0
  %3908 = vmatprep.subr.mxu0 0.0
  %3909 = vmatpush1.msra.mxu0 0.0
  %3910 = vmatprep.subr.mxu0 0.0
  %3911 = vmatpush1.msra.mxu0 0.0
  %3912 = vmatprep.subr.mxu0 0.0
  %3913 = vmatpush1.msra.mxu0 0.0
  %3914 = vmatprep.subr.mxu0 0.0
  %3915 = vmatpush1.msra.mxu0 0.0
  %3916 = vmatprep.subr.mxu0 0.0
  %3917 = vmatpush1.msra.mxu0 0.0
  %3918 = vmatprep.subr.mxu0 0.0
  %3919 = vmatpush1.msra.mxu0 0.0
  %3920 = vmatprep.subr.mxu0 0.0
  %3921 = vmatpush1.msra.mxu0 0.0
  %3922 = vmatprep.subr.mxu0 0.0
  %3923 = vmatpush1.msra.mxu0 0.0
  %3924 = vmatprep.subr.mxu0 0.0
  %3925 = vmatpush1.msra.mxu0 0.0
  %3926 = vmatprep.subr.mxu0 0.0
  %3927 = vmatpush1.msra.mxu0 0.0
  %3928 = vmatprep.subr.mxu0 0.0
  %3929 = vmatpush1.msra.mxu0 0.0
  %3930 = vmatprep.subr.mxu0 0.0
  %3931 = vmatpush1.msra.mxu0 0.0
  %3932 = vmatprep.subr.mxu0 0.0
  %3933 = vmatpush1.msra.mxu0 0.0
  %3934 = vmatprep.subr.mxu0 0.0
  %3935 = vmatpush1.msra.mxu0 0.0
  %3936 = vmatprep.subr.mxu0 0.0
  %3937 = vmatpush1.msra.mxu0 0.0
  %3938 = vmatprep.subr.mxu0 0.0
  %3939 = vmatpush1.msra.mxu0 0.0
  %3940 = vmatprep.subr.mxu0 0.0
  %3941 = vmatpush1.msra.mxu0 0.0
  %3942 = vmatprep.subr.mxu0 0.0
  %3943 = vmatpush1.msra.mxu0 0.0
  %3944 = vmatprep.subr.mxu0 0.0
  %3945 = vmatpush1.msra.mxu0 0.0
  %3946 = vmatprep.subr.mxu0 0.0
  %3947 = vmatpush1.msra.mxu0 0.0
  %3948 = vmatprep.subr.mxu0 0.0
  %3949 = vmatpush1.msra.mxu0 0.0
  %3950 = vmatprep.subr.mxu0 0.0
  %3951 = vmatpush1.msra.mxu0 0.0
  %3952 = vmatprep.subr.mxu0 0.0
  %3953 = vmatpush1.msra.mxu0 0.0
  %3954 = vmatprep.subr.mxu0 0.0
  %3955 = vmatpush1.msra.mxu0 0.0
  %3956 = vmatprep.subr.mxu0 0.0
  %3957 = vmatpush1.msra.mxu0 0.0
  %3958 = vmatprep.mubr.f32.mxu0 0.0
  %3959 = vmatmul.mubr.f32.gmra.mrb[0].mxu0 %v3892
  %v3960 = vpop.f32.mrb[0].mxu0
  %v3961 = vadd.f32 0.0, %v3960
  %v3962 = vpop.f32.mrb[0].mxu0
  %3963 = vdwg.mxu0
  %v3965 = vsel %vm382, %v3742, 0
  %3967 = vmatprep.subr.mxu0 0.0
  %3968 = vmatpush1.msra.mxu0 %v3084
  %3969 = vmatprep.subr.mxu0 0.0
  %3970 = vmatpush1.msra.mxu0 0.0
  %3971 = vmatprep.subr.mxu0 0.0
  %3972 = vmatpush1.msra.mxu0 0.0
  %3973 = vmatprep.subr.mxu0 0.0
  %3974 = vmatpush1.msra.mxu0 0.0
  %3975 = vmatprep.subr.mxu0 0.0
  %3976 = vmatpush1.msra.mxu0 0.0
  %3977 = vmatprep.subr.mxu0 0.0
  %3978 = vmatpush1.msra.mxu0 0.0
  %3979 = vmatprep.subr.mxu0 0.0
  %3980 = vmatpush1.msra.mxu0 0.0
  %3981 = vmatprep.subr.mxu0 0.0
  %3982 = vmatpush1.msra.mxu0 0.0
  %3983 = vmatprep.subr.mxu0 0.0
  %3984 = vmatpush1.msra.mxu0 0.0
  %3985 = vmatprep.subr.mxu0 0.0
  %3986 = vmatpush1.msra.mxu0 0.0
  %3987 = vmatprep.subr.mxu0 0.0
  %3988 = vmatpush1.msra.mxu0 0.0
  %3989 = vmatprep.subr.mxu0 0.0
  %3990 = vmatpush1.msra.mxu0 0.0
  %3991 = vmatprep.subr.mxu0 0.0
  %3992 = vmatpush1.msra.mxu0 0.0
  %3993 = vmatprep.subr.mxu0 0.0
  %3994 = vmatpush1.msra.mxu0 0.0
  %3995 = vmatprep.subr.mxu0 0.0
  %3996 = vmatpush1.msra.mxu0 0.0
  %3997 = vmatprep.subr.mxu0 0.0
  %3998 = vmatpush1.msra.mxu0 0.0
  %3999 = vmatprep.subr.mxu0 0.0
  %4000 = vmatpush1.msra.mxu0 0.0
  %4001 = vmatprep.subr.mxu0 0.0
  %4002 = vmatpush1.msra.mxu0 0.0
  %4003 = vmatprep.subr.mxu0 0.0
  %4004 = vmatpush1.msra.mxu0 0.0
  %4005 = vmatprep.subr.mxu0 0.0
  %4006 = vmatpush1.msra.mxu0 0.0
  %4007 = vmatprep.subr.mxu0 0.0
  %4008 = vmatpush1.msra.mxu0 0.0
  %4009 = vmatprep.subr.mxu0 0.0
  %4010 = vmatpush1.msra.mxu0 0.0
  %4011 = vmatprep.subr.mxu0 0.0
  %4012 = vmatpush1.msra.mxu0 0.0
  %4013 = vmatprep.subr.mxu0 0.0
  %4014 = vmatpush1.msra.mxu0 0.0
  %4015 = vmatprep.subr.mxu0 0.0
  %4016 = vmatpush1.msra.mxu0 0.0
  %4017 = vmatprep.subr.mxu0 0.0
  %4018 = vmatpush1.msra.mxu0 0.0
  %4019 = vmatprep.subr.mxu0 0.0
  %4020 = vmatpush1.msra.mxu0 0.0
  %4021 = vmatprep.subr.mxu0 0.0
  %4022 = vmatpush1.msra.mxu0 0.0
  %4023 = vmatprep.subr.mxu0 0.0
  %4024 = vmatpush1.msra.mxu0 0.0
  %4025 = vmatprep.subr.mxu0 0.0
  %4026 = vmatpush1.msra.mxu0 0.0
  %4027 = vmatprep.subr.mxu0 0.0
  %4028 = vmatpush1.msra.mxu0 0.0
  %4029 = vmatprep.subr.mxu0 0.0
  %4030 = vmatpush1.msra.mxu0 0.0
  %4031 = vmatprep.mubr.f32.mxu0 0.0
  %4032 = vmatmul.mubr.f32.gmra.mrb[0].mxu0 %v3965
  %v4033 = vpop.f32.mrb[0].mxu0
  %v4034 = vadd.f32 0.0, %v4033
  %v4035 = vpop.f32.mrb[0].mxu0
  %4036 = vdwg.mxu0
  %v4037 = vadd.f32 %v3815, %v3888
  %v4038 = vadd.f32 %v4037, %v3961
  %v4039 = vadd.f32 %v4038, %v4034
  %4040 = vst.msk [vmem:[#allocation5] sm:$0xff] %vm68, %v4039
  %v4041 = vld [vmem:[%s434] sm:$0xff]
  %v4042 = vld [vmem:[%s434 + $0x8] sm:$0xff]
  %v4043 = vld [vmem:[%s434 + $0x10] sm:$0xff]
  %v4044 = vld [vmem:[%s434 + $0x18] sm:$0xff]
  %v4045 = vld [vmem:[%s436] sm:$0xff]
  %v4046 = vld [vmem:[%s436 + $0x8] sm:$0xff]
  %v4047 = vld [vmem:[%s436 + $0x10] sm:$0xff]
  %v4048 = vld [vmem:[%s436 + $0x18] sm:$0xff]
  %v4049 = vld [vmem:[%s438] sm:$0xff]
  %v4050 = vld [vmem:[%s438 + $0x8] sm:$0xff]
  %v4051 = vld [vmem:[%s438 + $0x10] sm:$0xff]
  %v4052 = vld [vmem:[%s438 + $0x18] sm:$0xff]
  %v4054 = vsel %vm382, %v4041, 0
  %v4057 = vsel %vm382, %v4045, 0
  %4059 = vmatprep.subr.mxu0 0.0
  %4060 = vmatpush1.xpose.msra.mxu0 %v4057
  %4061 = vmatprep.subr.mxu0 0.0
  %4062 = vmatpush1.xpose.msra.mxu0 0.0
  %4063 = vmatprep.subr.mxu0 0.0
  %4064 = vmatpush1.xpose.msra.mxu0 0.0
  %4065 = vmatprep.subr.mxu0 0.0
  %4066 = vmatpush1.xpose.msra.mxu0 0.0
  %4067 = vmatprep.subr.mxu0 0.0
  %4068 = vmatpush1.xpose.msra.mxu0 0.0
  %4069 = vmatprep.subr.mxu0 0.0
  %4070 = vmatpush1.xpose.msra.mxu0 0.0
  %4071 = vmatprep.subr.mxu0 0.0
  %4072 = vmatpush1.xpose.msra.mxu0 0.0
  %4073 = vmatprep.subr.mxu0 0.0
  %4074 = vmatpush1.xpose.msra.mxu0 0.0
  %4075 = vmatprep.subr.mxu0 0.0
  %4076 = vmatpush1.xpose.msra.mxu0 0.0
  %4077 = vmatprep.subr.mxu0 0.0
  %4078 = vmatpush1.xpose.msra.mxu0 0.0
  %4079 = vmatprep.subr.mxu0 0.0
  %4080 = vmatpush1.xpose.msra.mxu0 0.0
  %4081 = vmatprep.subr.mxu0 0.0
  %4082 = vmatpush1.xpose.msra.mxu0 0.0
  %4083 = vmatprep.subr.mxu0 0.0
  %4084 = vmatpush1.xpose.msra.mxu0 0.0
  %4085 = vmatprep.subr.mxu0 0.0
  %4086 = vmatpush1.xpose.msra.mxu0 0.0
  %4087 = vmatprep.subr.mxu0 0.0
  %4088 = vmatpush1.xpose.msra.mxu0 0.0
  %4089 = vmatprep.subr.mxu0 0.0
  %4090 = vmatpush1.xpose.msra.mxu0 0.0
  %4091 = vmatprep.subr.mxu0 0.0
  %4092 = vmatpush1.xpose.msra.mxu0 0.0
  %4093 = vmatprep.subr.mxu0 0.0
  %4094 = vmatpush1.xpose.msra.mxu0 0.0
  %4095 = vmatprep.subr.mxu0 0.0
  %4096 = vmatpush1.xpose.msra.mxu0 0.0
  %4097 = vmatprep.subr.mxu0 0.0
  %4098 = vmatpush1.xpose.msra.mxu0 0.0
  %4099 = vmatprep.subr.mxu0 0.0
  %4100 = vmatpush1.xpose.msra.mxu0 0.0
  %4101 = vmatprep.subr.mxu0 0.0
  %4102 = vmatpush1.xpose.msra.mxu0 0.0
  %4103 = vmatprep.subr.mxu0 0.0
  %4104 = vmatpush1.xpose.msra.mxu0 0.0
  %4105 = vmatprep.subr.mxu0 0.0
  %4106 = vmatpush1.xpose.msra.mxu0 0.0
  %4107 = vmatprep.subr.mxu0 0.0
  %4108 = vmatpush1.xpose.msra.mxu0 0.0
  %4109 = vmatprep.subr.mxu0 0.0
  %4110 = vmatpush1.xpose.msra.mxu0 0.0
  %4111 = vmatprep.subr.mxu0 0.0
  %4112 = vmatpush1.xpose.msra.mxu0 0.0
  %4113 = vmatprep.subr.mxu0 0.0
  %4114 = vmatpush1.xpose.msra.mxu0 0.0
  %4115 = vmatprep.subr.mxu0 0.0
  %4116 = vmatpush1.xpose.msra.mxu0 0.0
  %4117 = vmatprep.subr.mxu0 0.0
  %4118 = vmatpush1.xpose.msra.mxu0 0.0
  %4119 = vmatprep.subr.mxu0 0.0
  %4120 = vmatpush1.xpose.msra.mxu0 0.0
  %4121 = vmatprep.subr.mxu0 0.0
  %4122 = vmatpush1.xpose.msra.mxu0 0.0
  %4123 = vmatprep.mubr.f32.mxu0 0.0
  %4124 = vmatmul.mubr.f32.gmra.mrb[0].mxu0 %v4054
  %v4125 = vpop.f32.mrb[0].mxu0
  %v4126 = vadd.f32 0.0, %v4125
  %v4127 = vpop.f32.mrb[0].mxu0
  %4128 = vdwg.mxu0
  %v4130 = vsel %vm382, %v4042, 0
  %v4133 = vsel %vm382, %v4046, 0
  %4135 = vmatprep.subr.mxu0 0.0
  %4136 = vmatpush1.xpose.msra.mxu0 %v4133
  %4137 = vmatprep.subr.mxu0 0.0
  %4138 = vmatpush1.xpose.msra.mxu0 0.0
  %4139 = vmatprep.subr.mxu0 0.0
  %4140 = vmatpush1.xpose.msra.mxu0 0.0
  %4141 = vmatprep.subr.mxu0 0.0
  %4142 = vmatpush1.xpose.msra.mxu0 0.0
  %4143 = vmatprep.subr.mxu0 0.0
  %4144 = vmatpush1.xpose.msra.mxu0 0.0
  %4145 = vmatprep.subr.mxu0 0.0
  %4146 = vmatpush1.xpose.msra.mxu0 0.0
  %4147 = vmatprep.subr.mxu0 0.0
  %4148 = vmatpush1.xpose.msra.mxu0 0.0
  %4149 = vmatprep.subr.mxu0 0.0
  %4150 = vmatpush1.xpose.msra.mxu0 0.0
  %4151 = vmatprep.subr.mxu0 0.0
  %4152 = vmatpush1.xpose.msra.mxu0 0.0
  %4153 = vmatprep.subr.mxu0 0.0
  %4154 = vmatpush1.xpose.msra.mxu0 0.0
  %4155 = vmatprep.subr.mxu0 0.0
  %4156 = vmatpush1.xpose.msra.mxu0 0.0
  %4157 = vmatprep.subr.mxu0 0.0
  %4158 = vmatpush1.xpose.msra.mxu0 0.0
  %4159 = vmatprep.subr.mxu0 0.0
  %4160 = vmatpush1.xpose.msra.mxu0 0.0
  %4161 = vmatprep.subr.mxu0 0.0
  %4162 = vmatpush1.xpose.msra.mxu0 0.0
  %4163 = vmatprep.subr.mxu0 0.0
  %4164 = vmatpush1.xpose.msra.mxu0 0.0
  %4165 = vmatprep.subr.mxu0 0.0
  %4166 = vmatpush1.xpose.msra.mxu0 0.0
  %4167 = vmatprep.subr.mxu0 0.0
  %4168 = vmatpush1.xpose.msra.mxu0 0.0
  %4169 = vmatprep.subr.mxu0 0.0
  %4170 = vmatpush1.xpose.msra.mxu0 0.0
  %4171 = vmatprep.subr.mxu0 0.0
  %4172 = vmatpush1.xpose.msra.mxu0 0.0
  %4173 = vmatprep.subr.mxu0 0.0
  %4174 = vmatpush1.xpose.msra.mxu0 0.0
  %4175 = vmatprep.subr.mxu0 0.0
  %4176 = vmatpush1.xpose.msra.mxu0 0.0
  %4177 = vmatprep.subr.mxu0 0.0
  %4178 = vmatpush1.xpose.msra.mxu0 0.0
  %4179 = vmatprep.subr.mxu0 0.0
  %4180 = vmatpush1.xpose.msra.mxu0 0.0
  %4181 = vmatprep.subr.mxu0 0.0
  %4182 = vmatpush1.xpose.msra.mxu0 0.0
  %4183 = vmatprep.subr.mxu0 0.0
  %4184 = vmatpush1.xpose.msra.mxu0 0.0
  %4185 = vmatprep.subr.mxu0 0.0
  %4186 = vmatpush1.xpose.msra.mxu0 0.0
  %4187 = vmatprep.subr.mxu0 0.0
  %4188 = vmatpush1.xpose.msra.mxu0 0.0
  %4189 = vmatprep.subr.mxu0 0.0
  %4190 = vmatpush1.xpose.msra.mxu0 0.0
  %4191 = vmatprep.subr.mxu0 0.0
  %4192 = vmatpush1.xpose.msra.mxu0 0.0
  %4193 = vmatprep.subr.mxu0 0.0
  %4194 = vmatpush1.xpose.msra.mxu0 0.0
  %4195 = vmatprep.subr.mxu0 0.0
  %4196 = vmatpush1.xpose.msra.mxu0 0.0
  %4197 = vmatprep.subr.mxu0 0.0
  %4198 = vmatpush1.xpose.msra.mxu0 0.0
  %4199 = vmatprep.mubr.f32.mxu0 0.0
  %4200 = vmatmul.mubr.f32.gmra.mrb[0].mxu0 %v4130
  %v4201 = vpop.f32.mrb[0].mxu0
  %v4202 = vadd.f32 0.0, %v4201
  %v4203 = vpop.f32.mrb[0].mxu0
  %4204 = vdwg.mxu0
  %v4206 = vsel %vm382, %v4043, 0
  %v4209 = vsel %vm382, %v4047, 0
  %4211 = vmatprep.subr.mxu0 0.0
  %4212 = vmatpush1.xpose.msra.mxu0 %v4209
  %4213 = vmatprep.subr.mxu0 0.0
  %4214 = vmatpush1.xpose.msra.mxu0 0.0
  %4215 = vmatprep.subr.mxu0 0.0
  %4216 = vmatpush1.xpose.msra.mxu0 0.0
  %4217 = vmatprep.subr.mxu0 0.0
  %4218 = vmatpush1.xpose.msra.mxu0 0.0
  %4219 = vmatprep.subr.mxu0 0.0
  %4220 = vmatpush1.xpose.msra.mxu0 0.0
  %4221 = vmatprep.subr.mxu0 0.0
  %4222 = vmatpush1.xpose.msra.mxu0 0.0
  %4223 = vmatprep.subr.mxu0 0.0
  %4224 = vmatpush1.xpose.msra.mxu0 0.0
  %4225 = vmatprep.subr.mxu0 0.0
  %4226 = vmatpush1.xpose.msra.mxu0 0.0
  %4227 = vmatprep.subr.mxu0 0.0
  %4228 = vmatpush1.xpose.msra.mxu0 0.0
  %4229 = vmatprep.subr.mxu0 0.0
  %4230 = vmatpush1.xpose.msra.mxu0 0.0
  %4231 = vmatprep.subr.mxu0 0.0
  %4232 = vmatpush1.xpose.msra.mxu0 0.0
  %4233 = vmatprep.subr.mxu0 0.0
  %4234 = vmatpush1.xpose.msra.mxu0 0.0
  %4235 = vmatprep.subr.mxu0 0.0
  %4236 = vmatpush1.xpose.msra.mxu0 0.0
  %4237 = vmatprep.subr.mxu0 0.0
  %4238 = vmatpush1.xpose.msra.mxu0 0.0
  %4239 = vmatprep.subr.mxu0 0.0
  %4240 = vmatpush1.xpose.msra.mxu0 0.0
  %4241 = vmatprep.subr.mxu0 0.0
  %4242 = vmatpush1.xpose.msra.mxu0 0.0
  %4243 = vmatprep.subr.mxu0 0.0
  %4244 = vmatpush1.xpose.msra.mxu0 0.0
  %4245 = vmatprep.subr.mxu0 0.0
  %4246 = vmatpush1.xpose.msra.mxu0 0.0
  %4247 = vmatprep.subr.mxu0 0.0
  %4248 = vmatpush1.xpose.msra.mxu0 0.0
  %4249 = vmatprep.subr.mxu0 0.0
  %4250 = vmatpush1.xpose.msra.mxu0 0.0
  %4251 = vmatprep.subr.mxu0 0.0
  %4252 = vmatpush1.xpose.msra.mxu0 0.0
  %4253 = vmatprep.subr.mxu0 0.0
  %4254 = vmatpush1.xpose.msra.mxu0 0.0
  %4255 = vmatprep.subr.mxu0 0.0
  %4256 = vmatpush1.xpose.msra.mxu0 0.0
  %4257 = vmatprep.subr.mxu0 0.0
  %4258 = vmatpush1.xpose.msra.mxu0 0.0
  %4259 = vmatprep.subr.mxu0 0.0
  %4260 = vmatpush1.xpose.msra.mxu0 0.0
  %4261 = vmatprep.subr.mxu0 0.0
  %4262 = vmatpush1.xpose.msra.mxu0 0.0
  %4263 = vmatprep.subr.mxu0 0.0
  %4264 = vmatpush1.xpose.msra.mxu0 0.0
  %4265 = vmatprep.subr.mxu0 0.0
  %4266 = vmatpush1.xpose.msra.mxu0 0.0
  %4267 = vmatprep.subr.mxu0 0.0
  %4268 = vmatpush1.xpose.msra.mxu0 0.0
  %4269 = vmatprep.subr.mxu0 0.0
  %4270 = vmatpush1.xpose.msra.mxu0 0.0
  %4271 = vmatprep.subr.mxu0 0.0
  %4272 = vmatpush1.xpose.msra.mxu0 0.0
  %4273 = vmatprep.subr.mxu0 0.0
  %4274 = vmatpush1.xpose.msra.mxu0 0.0
  %4275 = vmatprep.mubr.f32.mxu0 0.0
  %4276 = vmatmul.mubr.f32.gmra.mrb[0].mxu0 %v4206
  %v4277 = vpop.f32.mrb[0].mxu0
  %v4278 = vadd.f32 0.0, %v4277
  %v4279 = vpop.f32.mrb[0].mxu0
  %4280 = vdwg.mxu0
  %v4282 = vsel %vm382, %v4044, 0
  %v4285 = vsel %vm382, %v4048, 0
  %4287 = vmatprep.subr.mxu0 0.0
  %4288 = vmatpush1.xpose.msra.mxu0 %v4285
  %4289 = vmatprep.subr.mxu0 0.0
  %4290 = vmatpush1.xpose.msra.mxu0 0.0
  %4291 = vmatprep.subr.mxu0 0.0
  %4292 = vmatpush1.xpose.msra.mxu0 0.0
  %4293 = vmatprep.subr.mxu0 0.0
  %4294 = vmatpush1.xpose.msra.mxu0 0.0
  %4295 = vmatprep.subr.mxu0 0.0
  %4296 = vmatpush1.xpose.msra.mxu0 0.0
  %4297 = vmatprep.subr.mxu0 0.0
  %4298 = vmatpush1.xpose.msra.mxu0 0.0
  %4299 = vmatprep.subr.mxu0 0.0
  %4300 = vmatpush1.xpose.msra.mxu0 0.0
  %4301 = vmatprep.subr.mxu0 0.0
  %4302 = vmatpush1.xpose.msra.mxu0 0.0
  %4303 = vmatprep.subr.mxu0 0.0
  %4304 = vmatpush1.xpose.msra.mxu0 0.0
  %4305 = vmatprep.subr.mxu0 0.0
  %4306 = vmatpush1.xpose.msra.mxu0 0.0
  %4307 = vmatprep.subr.mxu0 0.0
  %4308 = vmatpush1.xpose.msra.mxu0 0.0
  %4309 = vmatprep.subr.mxu0 0.0
  %4310 = vmatpush1.xpose.msra.mxu0 0.0
  %4311 = vmatprep.subr.mxu0 0.0
  %4312 = vmatpush1.xpose.msra.mxu0 0.0
  %4313 = vmatprep.subr.mxu0 0.0
  %4314 = vmatpush1.xpose.msra.mxu0 0.0
  %4315 = vmatprep.subr.mxu0 0.0
  %4316 = vmatpush1.xpose.msra.mxu0 0.0
  %4317 = vmatprep.subr.mxu0 0.0
  %4318 = vmatpush1.xpose.msra.mxu0 0.0
  %4319 = vmatprep.subr.mxu0 0.0
  %4320 = vmatpush1.xpose.msra.mxu0 0.0
  %4321 = vmatprep.subr.mxu0 0.0
  %4322 = vmatpush1.xpose.msra.mxu0 0.0
  %4323 = vmatprep.subr.mxu0 0.0
  %4324 = vmatpush1.xpose.msra.mxu0 0.0
  %4325 = vmatprep.subr.mxu0 0.0
  %4326 = vmatpush1.xpose.msra.mxu0 0.0
  %4327 = vmatprep.subr.mxu0 0.0
  %4328 = vmatpush1.xpose.msra.mxu0 0.0
  %4329 = vmatprep.subr.mxu0 0.0
  %4330 = vmatpush1.xpose.msra.mxu0 0.0
  %4331 = vmatprep.subr.mxu0 0.0
  %4332 = vmatpush1.xpose.msra.mxu0 0.0
  %4333 = vmatprep.subr.mxu0 0.0
  %4334 = vmatpush1.xpose.msra.mxu0 0.0
  %4335 = vmatprep.subr.mxu0 0.0
  %4336 = vmatpush1.xpose.msra.mxu0 0.0
  %4337 = vmatprep.subr.mxu0 0.0
  %4338 = vmatpush1.xpose.msra.mxu0 0.0
  %4339 = vmatprep.subr.mxu0 0.0
  %4340 = vmatpush1.xpose.msra.mxu0 0.0
  %4341 = vmatprep.subr.mxu0 0.0
  %4342 = vmatpush1.xpose.msra.mxu0 0.0
  %4343 = vmatprep.subr.mxu0 0.0
  %4344 = vmatpush1.xpose.msra.mxu0 0.0
  %4345 = vmatprep.subr.mxu0 0.0
  %4346 = vmatpush1.xpose.msra.mxu0 0.0
  %4347 = vmatprep.subr.mxu0 0.0
  %4348 = vmatpush1.xpose.msra.mxu0 0.0
  %4349 = vmatprep.subr.mxu0 0.0
  %4350 = vmatpush1.xpose.msra.mxu0 0.0
  %4351 = vmatprep.mubr.f32.mxu0 0.0
  %4352 = vmatmul.mubr.f32.gmra.mrb[0].mxu0 %v4282
  %v4353 = vpop.f32.mrb[0].mxu0
  %v4354 = vadd.f32 0.0, %v4353
  %v4355 = vpop.f32.mrb[0].mxu0
  %4356 = vdwg.mxu0
  %v4357 = vmul.f32 %v4126, 0.35355338
  %v4358 = vmul.f32 %v4202, 0.35355338
  %v4359 = vmul.f32 %v4278, 0.35355338
  %v4360 = vmul.f32 %v4354, 0.35355338
  %v4361 = vadd.f32 %v4357, %v1778
  %v4362 = vadd.f32 %v4358, %v1778
  %v4363 = vadd.f32 %v4359, %v1778
  %v4364 = vadd.f32 %v4360, %v1778
  %v4365 = vsel %vm382, %v4361, -inf
  %4366 = vmax.xlane.f32.xlu0 %v4365
  %v4367 = vpop.xlane.xlu0 %4366
  %v4368 = vsel %vm382, %v4362, -inf
  %4369 = vmax.xlane.f32.xlu0 %v4368
  %v4370 = vpop.xlane.xlu0 %4369
  %v4371 = vsel %vm382, %v4363, -inf
  %4372 = vmax.xlane.f32.xlu0 %v4371
  %v4373 = vpop.xlane.xlu0 %4372
  %v4374 = vsel %vm382, %v4364, -inf
  %4375 = vmax.xlane.f32.xlu0 %v4374
  %v4376 = vpop.xlane.xlu0 %4375
  %v4377 = vsub.f32 %v4361, %v4367
  %v4378 = vsub.f32 %v4362, %v4370
  %v4379 = vsub.f32 %v4363, %v4373
  %v4380 = vsub.f32 %v4364, %v4376
  %v4381 = vmul.f32 %v4377, 1.442695
  %v4382 = vpow.pop %v4381
  %v4383 = vmul.f32 %v4378, 1.442695
  %v4384 = vpow.pop %v4383
  %v4385 = vmul.f32 %v4379, 1.442695
  %v4386 = vpow.pop %v4385
  %v4387 = vmul.f32 %v4380, 1.442695
  %v4388 = vpow.pop %v4387
  %v4389 = vsel %vm382, %v4382, 0.0
  %4390 = vadd.xlane.f32.xlu0 %v4389
  %v4391 = vpop.xlane.xlu0 %4390
  %v4392 = vsel %vm382, %v4384, 0.0
  %4393 = vadd.xlane.f32.xlu0 %v4392
  %v4394 = vpop.xlane.xlu0 %4393
  %v4395 = vsel %vm382, %v4386, 0.0
  %4396 = vadd.xlane.f32.xlu0 %v4395
  %v4397 = vpop.xlane.xlu0 %4396
  %v4398 = vsel %vm382, %v4388, 0.0
  %4399 = vadd.xlane.f32.xlu0 %v4398
  %v4400 = vpop.xlane.xlu0 %4399
  %v4401 = vrcp.pop %v4391
  %v4402 = vmul.f32 %v4382, %v4401
  %v4403 = vrcp.pop %v4394
  %v4404 = vmul.f32 %v4384, %v4403
  %v4405 = vrcp.pop %v4397
  %v4406 = vmul.f32 %v4386, %v4405
  %v4407 = vrcp.pop %v4400
  %v4408 = vmul.f32 %v4388, %v4407
  %v4410 = vsel %vm382, %v4402, 0
  %4412 = vmatprep.subr.mxu0 0.0
  %4413 = vmatpush1.msra.mxu0 %v4049
  %4414 = vmatprep.subr.mxu0 0.0
  %4415 = vmatpush1.msra.mxu0 0.0
  %4416 = vmatprep.subr.mxu0 0.0
  %4417 = vmatpush1.msra.mxu0 0.0
  %4418 = vmatprep.subr.mxu0 0.0
  %4419 = vmatpush1.msra.mxu0 0.0
  %4420 = vmatprep.subr.mxu0 0.0
  %4421 = vmatpush1.msra.mxu0 0.0
  %4422 = vmatprep.subr.mxu0 0.0
  %4423 = vmatpush1.msra.mxu0 0.0
  %4424 = vmatprep.subr.mxu0 0.0
  %4425 = vmatpush1.msra.mxu0 0.0
  %4426 = vmatprep.subr.mxu0 0.0
  %4427 = vmatpush1.msra.mxu0 0.0
  %4428 = vmatprep.subr.mxu0 0.0
  %4429 = vmatpush1.msra.mxu0 0.0
  %4430 = vmatprep.subr.mxu0 0.0
  %4431 = vmatpush1.msra.mxu0 0.0
  %4432 = vmatprep.subr.mxu0 0.0
  %4433 = vmatpush1.msra.mxu0 0.0
  %4434 = vmatprep.subr.mxu0 0.0
  %4435 = vmatpush1.msra.mxu0 0.0
  %4436 = vmatprep.subr.mxu0 0.0
  %4437 = vmatpush1.msra.mxu0 0.0
  %4438 = vmatprep.subr.mxu0 0.0
  %4439 = vmatpush1.msra.mxu0 0.0
  %4440 = vmatprep.subr.mxu0 0.0
  %4441 = vmatpush1.msra.mxu0 0.0
  %4442 = vmatprep.subr.mxu0 0.0
  %4443 = vmatpush1.msra.mxu0 0.0
  %4444 = vmatprep.subr.mxu0 0.0
  %4445 = vmatpush1.msra.mxu0 0.0
  %4446 = vmatprep.subr.mxu0 0.0
  %4447 = vmatpush1.msra.mxu0 0.0
  %4448 = vmatprep.subr.mxu0 0.0
  %4449 = vmatpush1.msra.mxu0 0.0
  %4450 = vmatprep.subr.mxu0 0.0
  %4451 = vmatpush1.msra.mxu0 0.0
  %4452 = vmatprep.subr.mxu0 0.0
  %4453 = vmatpush1.msra.mxu0 0.0
  %4454 = vmatprep.subr.mxu0 0.0
  %4455 = vmatpush1.msra.mxu0 0.0
  %4456 = vmatprep.subr.mxu0 0.0
  %4457 = vmatpush1.msra.mxu0 0.0
  %4458 = vmatprep.subr.mxu0 0.0
  %4459 = vmatpush1.msra.mxu0 0.0
  %4460 = vmatprep.subr.mxu0 0.0
  %4461 = vmatpush1.msra.mxu0 0.0
  %4462 = vmatprep.subr.mxu0 0.0
  %4463 = vmatpush1.msra.mxu0 0.0
  %4464 = vmatprep.subr.mxu0 0.0
  %4465 = vmatpush1.msra.mxu0 0.0
  %4466 = vmatprep.subr.mxu0 0.0
  %4467 = vmatpush1.msra.mxu0 0.0
  %4468 = vmatprep.subr.mxu0 0.0
  %4469 = vmatpush1.msra.mxu0 0.0
  %4470 = vmatprep.subr.mxu0 0.0
  %4471 = vmatpush1.msra.mxu0 0.0
  %4472 = vmatprep.subr.mxu0 0.0
  %4473 = vmatpush1.msra.mxu0 0.0
  %4474 = vmatprep.subr.mxu0 0.0
  %4475 = vmatpush1.msra.mxu0 0.0
  %4476 = vmatprep.mubr.f32.mxu0 0.0
  %4477 = vmatmul.mubr.f32.gmra.mrb[0].mxu0 %v4410
  %v4478 = vpop.f32.mrb[0].mxu0
  %v4479 = vadd.f32 0.0, %v4478
  %v4480 = vpop.f32.mrb[0].mxu0
  %4481 = vdwg.mxu0
  %v4483 = vsel %vm382, %v4404, 0
  %4485 = vmatprep.subr.mxu0 0.0
  %4486 = vmatpush1.msra.mxu0 %v4050
  %4487 = vmatprep.subr.mxu0 0.0
  %4488 = vmatpush1.msra.mxu0 0.0
  %4489 = vmatprep.subr.mxu0 0.0
  %4490 = vmatpush1.msra.mxu0 0.0
  %4491 = vmatprep.subr.mxu0 0.0
  %4492 = vmatpush1.msra.mxu0 0.0
  %4493 = vmatprep.subr.mxu0 0.0
  %4494 = vmatpush1.msra.mxu0 0.0
  %4495 = vmatprep.subr.mxu0 0.0
  %4496 = vmatpush1.msra.mxu0 0.0
  %4497 = vmatprep.subr.mxu0 0.0
  %4498 = vmatpush1.msra.mxu0 0.0
  %4499 = vmatprep.subr.mxu0 0.0
  %4500 = vmatpush1.msra.mxu0 0.0
  %4501 = vmatprep.subr.mxu0 0.0
  %4502 = vmatpush1.msra.mxu0 0.0
  %4503 = vmatprep.subr.mxu0 0.0
  %4504 = vmatpush1.msra.mxu0 0.0
  %4505 = vmatprep.subr.mxu0 0.0
  %4506 = vmatpush1.msra.mxu0 0.0
  %4507 = vmatprep.subr.mxu0 0.0
  %4508 = vmatpush1.msra.mxu0 0.0
  %4509 = vmatprep.subr.mxu0 0.0
  %4510 = vmatpush1.msra.mxu0 0.0
  %4511 = vmatprep.subr.mxu0 0.0
  %4512 = vmatpush1.msra.mxu0 0.0
  %4513 = vmatprep.subr.mxu0 0.0
  %4514 = vmatpush1.msra.mxu0 0.0
  %4515 = vmatprep.subr.mxu0 0.0
  %4516 = vmatpush1.msra.mxu0 0.0
  %4517 = vmatprep.subr.mxu0 0.0
  %4518 = vmatpush1.msra.mxu0 0.0
  %4519 = vmatprep.subr.mxu0 0.0
  %4520 = vmatpush1.msra.mxu0 0.0
  %4521 = vmatprep.subr.mxu0 0.0
  %4522 = vmatpush1.msra.mxu0 0.0
  %4523 = vmatprep.subr.mxu0 0.0
  %4524 = vmatpush1.msra.mxu0 0.0
  %4525 = vmatprep.subr.mxu0 0.0
  %4526 = vmatpush1.msra.mxu0 0.0
  %4527 = vmatprep.subr.mxu0 0.0
  %4528 = vmatpush1.msra.mxu0 0.0
  %4529 = vmatprep.subr.mxu0 0.0
  %4530 = vmatpush1.msra.mxu0 0.0
  %4531 = vmatprep.subr.mxu0 0.0
  %4532 = vmatpush1.msra.mxu0 0.0
  %4533 = vmatprep.subr.mxu0 0.0
  %4534 = vmatpush1.msra.mxu0 0.0
  %4535 = vmatprep.subr.mxu0 0.0
  %4536 = vmatpush1.msra.mxu0 0.0
  %4537 = vmatprep.subr.mxu0 0.0
  %4538 = vmatpush1.msra.mxu0 0.0
  %4539 = vmatprep.subr.mxu0 0.0
  %4540 = vmatpush1.msra.mxu0 0.0
  %4541 = vmatprep.subr.mxu0 0.0
  %4542 = vmatpush1.msra.mxu0 0.0
  %4543 = vmatprep.subr.mxu0 0.0
  %4544 = vmatpush1.msra.mxu0 0.0
  %4545 = vmatprep.subr.mxu0 0.0
  %4546 = vmatpush1.msra.mxu0 0.0
  %4547 = vmatprep.subr.mxu0 0.0
  %4548 = vmatpush1.msra.mxu0 0.0
  %4549 = vmatprep.mubr.f32.mxu0 0.0
  %4550 = vmatmul.mubr.f32.gmra.mrb[0].mxu0 %v4483
  %v4551 = vpop.f32.mrb[0].mxu0
  %v4552 = vadd.f32 0.0, %v4551
  %v4553 = vpop.f32.mrb[0].mxu0
  %4554 = vdwg.mxu0
  %v4556 = vsel %vm382, %v4406, 0
  %4558 = vmatprep.subr.mxu0 0.0
  %4559 = vmatpush1.msra.mxu0 %v4051
  %4560 = vmatprep.subr.mxu0 0.0
  %4561 = vmatpush1.msra.mxu0 0.0
  %4562 = vmatprep.subr.mxu0 0.0
  %4563 = vmatpush1.msra.mxu0 0.0
  %4564 = vmatprep.subr.mxu0 0.0
  %4565 = vmatpush1.msra.mxu0 0.0
  %4566 = vmatprep.subr.mxu0 0.0
  %4567 = vmatpush1.msra.mxu0 0.0
  %4568 = vmatprep.subr.mxu0 0.0
  %4569 = vmatpush1.msra.mxu0 0.0
  %4570 = vmatprep.subr.mxu0 0.0
  %4571 = vmatpush1.msra.mxu0 0.0
  %4572 = vmatprep.subr.mxu0 0.0
  %4573 = vmatpush1.msra.mxu0 0.0
  %4574 = vmatprep.subr.mxu0 0.0
  %4575 = vmatpush1.msra.mxu0 0.0
  %4576 = vmatprep.subr.mxu0 0.0
  %4577 = vmatpush1.msra.mxu0 0.0
  %4578 = vmatprep.subr.mxu0 0.0
  %4579 = vmatpush1.msra.mxu0 0.0
  %4580 = vmatprep.subr.mxu0 0.0
  %4581 = vmatpush1.msra.mxu0 0.0
  %4582 = vmatprep.subr.mxu0 0.0
  %4583 = vmatpush1.msra.mxu0 0.0
  %4584 = vmatprep.subr.mxu0 0.0
  %4585 = vmatpush1.msra.mxu0 0.0
  %4586 = vmatprep.subr.mxu0 0.0
  %4587 = vmatpush1.msra.mxu0 0.0
  %4588 = vmatprep.subr.mxu0 0.0
  %4589 = vmatpush1.msra.mxu0 0.0
  %4590 = vmatprep.subr.mxu0 0.0
  %4591 = vmatpush1.msra.mxu0 0.0
  %4592 = vmatprep.subr.mxu0 0.0
  %4593 = vmatpush1.msra.mxu0 0.0
  %4594 = vmatprep.subr.mxu0 0.0
  %4595 = vmatpush1.msra.mxu0 0.0
  %4596 = vmatprep.subr.mxu0 0.0
  %4597 = vmatpush1.msra.mxu0 0.0
  %4598 = vmatprep.subr.mxu0 0.0
  %4599 = vmatpush1.msra.mxu0 0.0
  %4600 = vmatprep.subr.mxu0 0.0
  %4601 = vmatpush1.msra.mxu0 0.0
  %4602 = vmatprep.subr.mxu0 0.0
  %4603 = vmatpush1.msra.mxu0 0.0
  %4604 = vmatprep.subr.mxu0 0.0
  %4605 = vmatpush1.msra.mxu0 0.0
  %4606 = vmatprep.subr.mxu0 0.0
  %4607 = vmatpush1.msra.mxu0 0.0
  %4608 = vmatprep.subr.mxu0 0.0
  %4609 = vmatpush1.msra.mxu0 0.0
  %4610 = vmatprep.subr.mxu0 0.0
  %4611 = vmatpush1.msra.mxu0 0.0
  %4612 = vmatprep.subr.mxu0 0.0
  %4613 = vmatpush1.msra.mxu0 0.0
  %4614 = vmatprep.subr.mxu0 0.0
  %4615 = vmatpush1.msra.mxu0 0.0
  %4616 = vmatprep.subr.mxu0 0.0
  %4617 = vmatpush1.msra.mxu0 0.0
  %4618 = vmatprep.subr.mxu0 0.0
  %4619 = vmatpush1.msra.mxu0 0.0
  %4620 = vmatprep.subr.mxu0 0.0
  %4621 = vmatpush1.msra.mxu0 0.0
  %4622 = vmatprep.mubr.f32.mxu0 0.0
  %4623 = vmatmul.mubr.f32.gmra.mrb[0].mxu0 %v4556
  %v4624 = vpop.f32.mrb[0].mxu0
  %v4625 = vadd.f32 0.0, %v4624
  %v4626 = vpop.f32.mrb[0].mxu0
  %4627 = vdwg.mxu0
  %v4629 = vsel %vm382, %v4408, 0
  %4631 = vmatprep.subr.mxu0 0.0
  %4632 = vmatpush1.msra.mxu0 %v4052
  %4633 = vmatprep.subr.mxu0 0.0
  %4634 = vmatpush1.msra.mxu0 0.0
  %4635 = vmatprep.subr.mxu0 0.0
  %4636 = vmatpush1.msra.mxu0 0.0
  %4637 = vmatprep.subr.mxu0 0.0
  %4638 = vmatpush1.msra.mxu0 0.0
  %4639 = vmatprep.subr.mxu0 0.0
  %4640 = vmatpush1.msra.mxu0 0.0
  %4641 = vmatprep.subr.mxu0 0.0
  %4642 = vmatpush1.msra.mxu0 0.0
  %4643 = vmatprep.subr.mxu0 0.0
  %4644 = vmatpush1.msra.mxu0 0.0
  %4645 = vmatprep.subr.mxu0 0.0
  %4646 = vmatpush1.msra.mxu0 0.0
  %4647 = vmatprep.subr.mxu0 0.0
  %4648 = vmatpush1.msra.mxu0 0.0
  %4649 = vmatprep.subr.mxu0 0.0
  %4650 = vmatpush1.msra.mxu0 0.0
  %4651 = vmatprep.subr.mxu0 0.0
  %4652 = vmatpush1.msra.mxu0 0.0
  %4653 = vmatprep.subr.mxu0 0.0
  %4654 = vmatpush1.msra.mxu0 0.0
  %4655 = vmatprep.subr.mxu0 0.0
  %4656 = vmatpush1.msra.mxu0 0.0
  %4657 = vmatprep.subr.mxu0 0.0
  %4658 = vmatpush1.msra.mxu0 0.0
  %4659 = vmatprep.subr.mxu0 0.0
  %4660 = vmatpush1.msra.mxu0 0.0
  %4661 = vmatprep.subr.mxu0 0.0
  %4662 = vmatpush1.msra.mxu0 0.0
  %4663 = vmatprep.subr.mxu0 0.0
  %4664 = vmatpush1.msra.mxu0 0.0
  %4665 = vmatprep.subr.mxu0 0.0
  %4666 = vmatpush1.msra.mxu0 0.0
  %4667 = vmatprep.subr.mxu0 0.0
  %4668 = vmatpush1.msra.mxu0 0.0
  %4669 = vmatprep.subr.mxu0 0.0
  %4670 = vmatpush1.msra.mxu0 0.0
  %4671 = vmatprep.subr.mxu0 0.0
  %4672 = vmatpush1.msra.mxu0 0.0
  %4673 = vmatprep.subr.mxu0 0.0
  %4674 = vmatpush1.msra.mxu0 0.0
  %4675 = vmatprep.subr.mxu0 0.0
  %4676 = vmatpush1.msra.mxu0 0.0
  %4677 = vmatprep.subr.mxu0 0.0
  %4678 = vmatpush1.msra.mxu0 0.0
  %4679 = vmatprep.subr.mxu0 0.0
  %4680 = vmatpush1.msra.mxu0 0.0
  %4681 = vmatprep.subr.mxu0 0.0
  %4682 = vmatpush1.msra.mxu0 0.0
  %4683 = vmatprep.subr.mxu0 0.0
  %4684 = vmatpush1.msra.mxu0 0.0
  %4685 = vmatprep.subr.mxu0 0.0
  %4686 = vmatpush1.msra.mxu0 0.0
  %4687 = vmatprep.subr.mxu0 0.0
  %4688 = vmatpush1.msra.mxu0 0.0
  %4689 = vmatprep.subr.mxu0 0.0
  %4690 = vmatpush1.msra.mxu0 0.0
  %4691 = vmatprep.subr.mxu0 0.0
  %4692 = vmatpush1.msra.mxu0 0.0
  %4693 = vmatprep.subr.mxu0 0.0
  %4694 = vmatpush1.msra.mxu0 0.0
  %4695 = vmatprep.mubr.f32.mxu0 0.0
  %4696 = vmatmul.mubr.f32.gmra.mrb[0].mxu0 %v4629
  %v4697 = vpop.f32.mrb[0].mxu0
  %v4698 = vadd.f32 0.0, %v4697
  %v4699 = vpop.f32.mrb[0].mxu0
  %4700 = vdwg.mxu0
  %v4702 = vsel %vm382, %v4479, 0
  %4704 = vmatprep.subr.mxu0 0.0
  %4705 = vmatpush1.msra.mxu0 %v3081
  %4706 = vmatprep.subr.mxu0 0.0
  %4707 = vmatpush1.msra.mxu0 0.0
  %4708 = vmatprep.subr.mxu0 0.0
  %4709 = vmatpush1.msra.mxu0 0.0
  %4710 = vmatprep.subr.mxu0 0.0
  %4711 = vmatpush1.msra.mxu0 0.0
  %4712 = vmatprep.subr.mxu0 0.0
  %4713 = vmatpush1.msra.mxu0 0.0
  %4714 = vmatprep.subr.mxu0 0.0
  %4715 = vmatpush1.msra.mxu0 0.0
  %4716 = vmatprep.subr.mxu0 0.0
  %4717 = vmatpush1.msra.mxu0 0.0
  %4718 = vmatprep.subr.mxu0 0.0
  %4719 = vmatpush1.msra.mxu0 0.0
  %4720 = vmatprep.subr.mxu0 0.0
  %4721 = vmatpush1.msra.mxu0 0.0
  %4722 = vmatprep.subr.mxu0 0.0
  %4723 = vmatpush1.msra.mxu0 0.0
  %4724 = vmatprep.subr.mxu0 0.0
  %4725 = vmatpush1.msra.mxu0 0.0
  %4726 = vmatprep.subr.mxu0 0.0
  %4727 = vmatpush1.msra.mxu0 0.0
  %4728 = vmatprep.subr.mxu0 0.0
  %4729 = vmatpush1.msra.mxu0 0.0
  %4730 = vmatprep.subr.mxu0 0.0
  %4731 = vmatpush1.msra.mxu0 0.0
  %4732 = vmatprep.subr.mxu0 0.0
  %4733 = vmatpush1.msra.mxu0 0.0
  %4734 = vmatprep.subr.mxu0 0.0
  %4735 = vmatpush1.msra.mxu0 0.0
  %4736 = vmatprep.subr.mxu0 0.0
  %4737 = vmatpush1.msra.mxu0 0.0
  %4738 = vmatprep.subr.mxu0 0.0
  %4739 = vmatpush1.msra.mxu0 0.0
  %4740 = vmatprep.subr.mxu0 0.0
  %4741 = vmatpush1.msra.mxu0 0.0
  %4742 = vmatprep.subr.mxu0 0.0
  %4743 = vmatpush1.msra.mxu0 0.0
  %4744 = vmatprep.subr.mxu0 0.0
  %4745 = vmatpush1.msra.mxu0 0.0
  %4746 = vmatprep.subr.mxu0 0.0
  %4747 = vmatpush1.msra.mxu0 0.0
  %4748 = vmatprep.subr.mxu0 0.0
  %4749 = vmatpush1.msra.mxu0 0.0
  %4750 = vmatprep.subr.mxu0 0.0
  %4751 = vmatpush1.msra.mxu0 0.0
  %4752 = vmatprep.subr.mxu0 0.0
  %4753 = vmatpush1.msra.mxu0 0.0
  %4754 = vmatprep.subr.mxu0 0.0
  %4755 = vmatpush1.msra.mxu0 0.0
  %4756 = vmatprep.subr.mxu0 0.0
  %4757 = vmatpush1.msra.mxu0 0.0
  %4758 = vmatprep.subr.mxu0 0.0
  %4759 = vmatpush1.msra.mxu0 0.0
  %4760 = vmatprep.subr.mxu0 0.0
  %4761 = vmatpush1.msra.mxu0 0.0
  %4762 = vmatprep.subr.mxu0 0.0
  %4763 = vmatpush1.msra.mxu0 0.0
  %4764 = vmatprep.subr.mxu0 0.0
  %4765 = vmatpush1.msra.mxu0 0.0
  %4766 = vmatprep.subr.mxu0 0.0
  %4767 = vmatpush1.msra.mxu0 0.0
  %4768 = vmatprep.mubr.f32.mxu0 0.0
  %4769 = vmatmul.mubr.f32.gmra.mrb[0].mxu0 %v4702
  %v4770 = vpop.f32.mrb[0].mxu0
  %v4771 = vadd.f32 0.0, %v4770
  %v4772 = vpop.f32.mrb[0].mxu0
  %4773 = vdwg.mxu0
  %v4775 = vsel %vm382, %v4552, 0
  %4777 = vmatprep.subr.mxu0 0.0
  %4778 = vmatpush1.msra.mxu0 %v3082
  %4779 = vmatprep.subr.mxu0 0.0
  %4780 = vmatpush1.msra.mxu0 0.0
  %4781 = vmatprep.subr.mxu0 0.0
  %4782 = vmatpush1.msra.mxu0 0.0
  %4783 = vmatprep.subr.mxu0 0.0
  %4784 = vmatpush1.msra.mxu0 0.0
  %4785 = vmatprep.subr.mxu0 0.0
  %4786 = vmatpush1.msra.mxu0 0.0
  %4787 = vmatprep.subr.mxu0 0.0
  %4788 = vmatpush1.msra.mxu0 0.0
  %4789 = vmatprep.subr.mxu0 0.0
  %4790 = vmatpush1.msra.mxu0 0.0
  %4791 = vmatprep.subr.mxu0 0.0
  %4792 = vmatpush1.msra.mxu0 0.0
  %4793 = vmatprep.subr.mxu0 0.0
  %4794 = vmatpush1.msra.mxu0 0.0
  %4795 = vmatprep.subr.mxu0 0.0
  %4796 = vmatpush1.msra.mxu0 0.0
  %4797 = vmatprep.subr.mxu0 0.0
  %4798 = vmatpush1.msra.mxu0 0.0
  %4799 = vmatprep.subr.mxu0 0.0
  %4800 = vmatpush1.msra.mxu0 0.0
  %4801 = vmatprep.subr.mxu0 0.0
  %4802 = vmatpush1.msra.mxu0 0.0
  %4803 = vmatprep.subr.mxu0 0.0
  %4804 = vmatpush1.msra.mxu0 0.0
  %4805 = vmatprep.subr.mxu0 0.0
  %4806 = vmatpush1.msra.mxu0 0.0
  %4807 = vmatprep.subr.mxu0 0.0
  %4808 = vmatpush1.msra.mxu0 0.0
  %4809 = vmatprep.subr.mxu0 0.0
  %4810 = vmatpush1.msra.mxu0 0.0
  %4811 = vmatprep.subr.mxu0 0.0
  %4812 = vmatpush1.msra.mxu0 0.0
  %4813 = vmatprep.subr.mxu0 0.0
  %4814 = vmatpush1.msra.mxu0 0.0
  %4815 = vmatprep.subr.mxu0 0.0
  %4816 = vmatpush1.msra.mxu0 0.0
  %4817 = vmatprep.subr.mxu0 0.0
  %4818 = vmatpush1.msra.mxu0 0.0
  %4819 = vmatprep.subr.mxu0 0.0
  %4820 = vmatpush1.msra.mxu0 0.0
  %4821 = vmatprep.subr.mxu0 0.0
  %4822 = vmatpush1.msra.mxu0 0.0
  %4823 = vmatprep.subr.mxu0 0.0
  %4824 = vmatpush1.msra.mxu0 0.0
  %4825 = vmatprep.subr.mxu0 0.0
  %4826 = vmatpush1.msra.mxu0 0.0
  %4827 = vmatprep.subr.mxu0 0.0
  %4828 = vmatpush1.msra.mxu0 0.0
  %4829 = vmatprep.subr.mxu0 0.0
  %4830 = vmatpush1.msra.mxu0 0.0
  %4831 = vmatprep.subr.mxu0 0.0
  %4832 = vmatpush1.msra.mxu0 0.0
  %4833 = vmatprep.subr.mxu0 0.0
  %4834 = vmatpush1.msra.mxu0 0.0
  %4835 = vmatprep.subr.mxu0 0.0
  %4836 = vmatpush1.msra.mxu0 0.0
  %4837 = vmatprep.subr.mxu0 0.0
  %4838 = vmatpush1.msra.mxu0 0.0
  %4839 = vmatprep.subr.mxu0 0.0
  %4840 = vmatpush1.msra.mxu0 0.0
  %4841 = vmatprep.mubr.f32.mxu0 0.0
  %4842 = vmatmul.mubr.f32.gmra.mrb[0].mxu0 %v4775
  %v4843 = vpop.f32.mrb[0].mxu0
  %v4844 = vadd.f32 0.0, %v4843
  %v4845 = vpop.f32.mrb[0].mxu0
  %4846 = vdwg.mxu0
  %v4848 = vsel %vm382, %v4625, 0
  %4850 = vmatprep.subr.mxu0 0.0
  %4851 = vmatpush1.msra.mxu0 %v3083
  %4852 = vmatprep.subr.mxu0 0.0
  %4853 = vmatpush1.msra.mxu0 0.0
  %4854 = vmatprep.subr.mxu0 0.0
  %4855 = vmatpush1.msra.mxu0 0.0
  %4856 = vmatprep.subr.mxu0 0.0
  %4857 = vmatpush1.msra.mxu0 0.0
  %4858 = vmatprep.subr.mxu0 0.0
  %4859 = vmatpush1.msra.mxu0 0.0
  %4860 = vmatprep.subr.mxu0 0.0
  %4861 = vmatpush1.msra.mxu0 0.0
  %4862 = vmatprep.subr.mxu0 0.0
  %4863 = vmatpush1.msra.mxu0 0.0
  %4864 = vmatprep.subr.mxu0 0.0
  %4865 = vmatpush1.msra.mxu0 0.0
  %4866 = vmatprep.subr.mxu0 0.0
  %4867 = vmatpush1.msra.mxu0 0.0
  %4868 = vmatprep.subr.mxu0 0.0
  %4869 = vmatpush1.msra.mxu0 0.0
  %4870 = vmatprep.subr.mxu0 0.0
  %4871 = vmatpush1.msra.mxu0 0.0
  %4872 = vmatprep.subr.mxu0 0.0
  %4873 = vmatpush1.msra.mxu0 0.0
  %4874 = vmatprep.subr.mxu0 0.0
  %4875 = vmatpush1.msra.mxu0 0.0
  %4876 = vmatprep.subr.mxu0 0.0
  %4877 = vmatpush1.msra.mxu0 0.0
  %4878 = vmatprep.subr.mxu0 0.0
  %4879 = vmatpush1.msra.mxu0 0.0
  %4880 = vmatprep.subr.mxu0 0.0
  %4881 = vmatpush1.msra.mxu0 0.0
  %4882 = vmatprep.subr.mxu0 0.0
  %4883 = vmatpush1.msra.mxu0 0.0
  %4884 = vmatprep.subr.mxu0 0.0
  %4885 = vmatpush1.msra.mxu0 0.0
  %4886 = vmatprep.subr.mxu0 0.0
  %4887 = vmatpush1.msra.mxu0 0.0
  %4888 = vmatprep.subr.mxu0 0.0
  %4889 = vmatpush1.msra.mxu0 0.0
  %4890 = vmatprep.subr.mxu0 0.0
  %4891 = vmatpush1.msra.mxu0 0.0
  %4892 = vmatprep.subr.mxu0 0.0
  %4893 = vmatpush1.msra.mxu0 0.0
  %4894 = vmatprep.subr.mxu0 0.0
  %4895 = vmatpush1.msra.mxu0 0.0
  %4896 = vmatprep.subr.mxu0 0.0
  %4897 = vmatpush1.msra.mxu0 0.0
  %4898 = vmatprep.subr.mxu0 0.0
  %4899 = vmatpush1.msra.mxu0 0.0
  %4900 = vmatprep.subr.mxu0 0.0
  %4901 = vmatpush1.msra.mxu0 0.0
  %4902 = vmatprep.subr.mxu0 0.0
  %4903 = vmatpush1.msra.mxu0 0.0
  %4904 = vmatprep.subr.mxu0 0.0
  %4905 = vmatpush1.msra.mxu0 0.0
  %4906 = vmatprep.subr.mxu0 0.0
  %4907 = vmatpush1.msra.mxu0 0.0
  %4908 = vmatprep.subr.mxu0 0.0
  %4909 = vmatpush1.msra.mxu0 0.0
  %4910 = vmatprep.subr.mxu0 0.0
  %4911 = vmatpush1.msra.mxu0 0.0
  %4912 = vmatprep.subr.mxu0 0.0
  %4913 = vmatpush1.msra.mxu0 0.0
  %4914 = vmatprep.mubr.f32.mxu0 0.0
  %4915 = vmatmul.mubr.f32.gmra.mrb[0].mxu0 %v4848
  %v4916 = vpop.f32.mrb[0].mxu0
  %v4917 = vadd.f32 0.0, %v4916
  %v4918 = vpop.f32.mrb[0].mxu0
  %4919 = vdwg.mxu0
  %v4921 = vsel %vm382, %v4698, 0
  %4923 = vmatprep.subr.mxu0 0.0
  %4924 = vmatpush1.msra.mxu0 %v3084
  %4925 = vmatprep.subr.mxu0 0.0
  %4926 = vmatpush1.msra.mxu0 0.0
  %4927 = vmatprep.subr.mxu0 0.0
  %4928 = vmatpush1.msra.mxu0 0.0
  %4929 = vmatprep.subr.mxu0 0.0
  %4930 = vmatpush1.msra.mxu0 0.0
  %4931 = vmatprep.subr.mxu0 0.0
  %4932 = vmatpush1.msra.mxu0 0.0
  %4933 = vmatprep.subr.mxu0 0.0
  %4934 = vmatpush1.msra.mxu0 0.0
  %4935 = vmatprep.subr.mxu0 0.0
  %4936 = vmatpush1.msra.mxu0 0.0
  %4937 = vmatprep.subr.mxu0 0.0
  %4938 = vmatpush1.msra.mxu0 0.0
  %4939 = vmatprep.subr.mxu0 0.0
  %4940 = vmatpush1.msra.mxu0 0.0
  %4941 = vmatprep.subr.mxu0 0.0
  %4942 = vmatpush1.msra.mxu0 0.0
  %4943 = vmatprep.subr.mxu0 0.0
  %4944 = vmatpush1.msra.mxu0 0.0
  %4945 = vmatprep.subr.mxu0 0.0
  %4946 = vmatpush1.msra.mxu0 0.0
  %4947 = vmatprep.subr.mxu0 0.0
  %4948 = vmatpush1.msra.mxu0 0.0
  %4949 = vmatprep.subr.mxu0 0.0
  %4950 = vmatpush1.msra.mxu0 0.0
  %4951 = vmatprep.subr.mxu0 0.0
  %4952 = vmatpush1.msra.mxu0 0.0
  %4953 = vmatprep.subr.mxu0 0.0
  %4954 = vmatpush1.msra.mxu0 0.0
  %4955 = vmatprep.subr.mxu0 0.0
  %4956 = vmatpush1.msra.mxu0 0.0
  %4957 = vmatprep.subr.mxu0 0.0
  %4958 = vmatpush1.msra.mxu0 0.0
  %4959 = vmatprep.subr.mxu0 0.0
  %4960 = vmatpush1.msra.mxu0 0.0
  %4961 = vmatprep.subr.mxu0 0.0
  %4962 = vmatpush1.msra.mxu0 0.0
  %4963 = vmatprep.subr.mxu0 0.0
  %4964 = vmatpush1.msra.mxu0 0.0
  %4965 = vmatprep.subr.mxu0 0.0
  %4966 = vmatpush1.msra.mxu0 0.0
  %4967 = vmatprep.subr.mxu0 0.0
  %4968 = vmatpush1.msra.mxu0 0.0
  %4969 = vmatprep.subr.mxu0 0.0
  %4970 = vmatpush1.msra.mxu0 0.0
  %4971 = vmatprep.subr.mxu0 0.0
  %4972 = vmatpush1.msra.mxu0 0.0
  %4973 = vmatprep.subr.mxu0 0.0
  %4974 = vmatpush1.msra.mxu0 0.0
  %4975 = vmatprep.subr.mxu0 0.0
  %4976 = vmatpush1.msra.mxu0 0.0
  %4977 = vmatprep.subr.mxu0 0.0
  %4978 = vmatpush1.msra.mxu0 0.0
  %4979 = vmatprep.subr.mxu0 0.0
  %4980 = vmatpush1.msra.mxu0 0.0
  %4981 = vmatprep.subr.mxu0 0.0
  %4982 = vmatpush1.msra.mxu0 0.0
  %4983 = vmatprep.subr.mxu0 0.0
  %4984 = vmatpush1.msra.mxu0 0.0
  %4985 = vmatprep.subr.mxu0 0.0
  %4986 = vmatpush1.msra.mxu0 0.0
  %4987 = vmatprep.mubr.f32.mxu0 0.0
  %4988 = vmatmul.mubr.f32.gmra.mrb[0].mxu0 %v4921
  %v4989 = vpop.f32.mrb[0].mxu0
  %v4990 = vadd.f32 0.0, %v4989
  %v4991 = vpop.f32.mrb[0].mxu0
  %4992 = vdwg.mxu0
  %v4993 = vadd.f32 %v4771, %v4844
  %v4994 = vadd.f32 %v4993, %v4917
  %v4995 = vadd.f32 %v4994, %v4990
  %4996 = vst.msk [vmem:[#allocation5 + $0x8] sm:$0xff] %vm68, %v4995
  %v4997 = vld [vmem:[#allocation5] sm:$0xff]
  %v4998 = vld [vmem:[#allocation5 + $0x8] sm:$0xff]
  %v4999 = vadd.f32 %v2724, %v4997
  %v5000 = vadd.f32 %v2725, %v4998
  %s5001 = scalar_lea.vmem %s8, 1
  %v5002 = vld [vmem:[%s5001] sm:$0x1]
  %v5004 = vlaneseq
  %v5005 = vshrl.u32 %v5004, 7
  %v5006 = vsub.s32 0, %v5005
  %v5007 = vrot.slane %v5002, %v5006
  %v5009 = vadd.f32 %v4999, %v5007
  %v5010 = vadd.f32 %v5000, %v5007
  %s5011 = scalar_lea.vmem %s9, 1
  %v5012 = vld [vmem:[%s5011] sm:$0x1]
  %s5013 = scalar_lea.vmem %s10, 1
  %v5014 = vld [vmem:[%s5013] sm:$0x1]
  %v5015 = vsel %vm68, %v5009, 0.0
  %5016 = vadd.xlane.f32.xlu0 %v5015
  %v5017 = vpop.xlane.xlu0 %5016
  %v5018 = vsel %vm68, %v5010, 0.0
  %5019 = vadd.xlane.f32.xlu0 %v5018
  %v5020 = vpop.xlane.xlu0 %5019
  %v5021 = vmul.f32 %v5017, %v75
  %v5022 = vmul.f32 %v5020, %v75
  %v5023 = vsub.f32 %v5009, %v5021
  %v5024 = vsub.f32 %v5010, %v5022
  %v5025 = vmul.f32 %v5023, %v5023
  %v5026 = vmul.f32 %v5024, %v5024
  %v5027 = vsel %vm68, %v5025, 0.0
  %5028 = vadd.xlane.f32.xlu0 %v5027
  %v5029 = vpop.xlane.xlu0 %5028
  %v5030 = vsel %vm68, %v5026, 0.0
  %5031 = vadd.xlane.f32.xlu0 %v5030
  %v5032 = vpop.xlane.xlu0 %5031
  %v5033 = vmul.f32 %v5029, %v75
  %v5034 = vmul.f32 %v5032, %v75
  %v5035 = vadd.f32 %v5033, 1e-12
  %v5036 = vadd.f32 %v5034, 1e-12
  %v5037 = vrsqrt.pop %v5035
  %v5038 = vrsqrt.pop %v5036
  %v5039 = vmul.f32 %v5023, %v5037
  %v5040 = vmul.f32 %v5024, %v5038
  %v5042 = vlaneseq
  %v5043 = vshrl.u32 %v5042, 7
  %v5044 = vsub.s32 0, %v5043
  %v5045 = vrot.slane %v5012, %v5044
  %v5047 = vmul.f32 %v5039, %v5045
  %v5048 = vmul.f32 %v5040, %v5045
  %v5050 = vlaneseq
  %v5051 = vshrl.u32 %v5050, 7
  %v5052 = vsub.s32 0, %v5051
  %v5053 = vrot.slane %v5014, %v5052
  %v5055 = vadd.f32 %v5047, %v5053
  %v5056 = vadd.f32 %v5048, %v5053
  %s5057 = scalar_lea.vmem %s11, 32
  %v5058 = vld [vmem:[%s5057] sm:$0xff]
  %v5059 = vld [vmem:[%s5057 + $0x8] sm:$0xff]
  %v5060 = vld [vmem:[%s5057 + $0x10] sm:$0xff]
  %v5061 = vld [vmem:[%s5057 + $0x18] sm:$0xff]
  %s5062 = scalar_lea.vmem %s12, 1
  %v5063 = vld [vmem:[%s5062] sm:$0x1]
  %v5065 = vlaneseq
  %v5066 = vshrl.u32 %v5065, 7
  %v5067 = vsub.s32 0, %v5066
  %v5068 = vrot.slane %v5063, %v5067
  %v5071 = vsel %vm68, %v5055, 0
  %v5074 = vsel %vm68, %v5056, 0
  %5076 = vmatprep.subr.mxu0 0.0
  %5077 = vmatpush1.msra.mxu0 %v5058
  %5078 = vmatprep.subr.mxu0 0.0
  %5079 = vmatpush1.msra.mxu0 %v5059
  %5080 = vmatprep.subr.mxu0 0.0
  %5081 = vmatpush1.msra.mxu0 %v5060
  %5082 = vmatprep.subr.mxu0 0.0
  %5083 = vmatpush1.msra.mxu0 %v5061
  %5084 = vmatprep.subr.mxu0 0.0
  %5085 = vmatpush1.msra.mxu0 0.0
  %5086 = vmatprep.subr.mxu0 0.0
  %5087 = vmatpush1.msra.mxu0 0.0
  %5088 = vmatprep.subr.mxu0 0.0
  %5089 = vmatpush1.msra.mxu0 0.0
  %5090 = vmatprep.subr.mxu0 0.0
  %5091 = vmatpush1.msra.mxu0 0.0
  %5092 = vmatprep.subr.mxu0 0.0
  %5093 = vmatpush1.msra.mxu0 0.0
  %5094 = vmatprep.subr.mxu0 0.0
  %5095 = vmatpush1.msra.mxu0 0.0
  %5096 = vmatprep.subr.mxu0 0.0
  %5097 = vmatpush1.msra.mxu0 0.0
  %5098 = vmatprep.subr.mxu0 0.0
  %5099 = vmatpush1.msra.mxu0 0.0
  %5100 = vmatprep.subr.mxu0 0.0
  %5101 = vmatpush1.msra.mxu0 0.0
  %5102 = vmatprep.subr.mxu0 0.0
  %5103 = vmatpush1.msra.mxu0 0.0
  %5104 = vmatprep.subr.mxu0 0.0
  %5105 = vmatpush1.msra.mxu0 0.0
  %5106 = vmatprep.subr.mxu0 0.0
  %5107 = vmatpush1.msra.mxu0 0.0
  %5108 = vmatprep.subr.mxu0 0.0
  %5109 = vmatpush1.msra.mxu0 0.0
  %5110 = vmatprep.subr.mxu0 0.0
  %5111 = vmatpush1.msra.mxu0 0.0
  %5112 = vmatprep.subr.mxu0 0.0
  %5113 = vmatpush1.msra.mxu0 0.0
  %5114 = vmatprep.subr.mxu0 0.0
  %5115 = vmatpush1.msra.mxu0 0.0
  %5116 = vmatprep.subr.mxu0 0.0
  %5117 = vmatpush1.msra.mxu0 0.0
  %5118 = vmatprep.subr.mxu0 0.0
  %5119 = vmatpush1.msra.mxu0 0.0
  %5120 = vmatprep.subr.mxu0 0.0
  %5121 = vmatpush1.msra.mxu0 0.0
  %5122 = vmatprep.subr.mxu0 0.0
  %5123 = vmatpush1.msra.mxu0 0.0
  %5124 = vmatprep.subr.mxu0 0.0
  %5125 = vmatpush1.msra.mxu0 0.0
  %5126 = vmatprep.subr.mxu0 0.0
  %5127 = vmatpush1.msra.mxu0 0.0
  %5128 = vmatprep.subr.mxu0 0.0
  %5129 = vmatpush1.msra.mxu0 0.0
  %5130 = vmatprep.subr.mxu0 0.0
  %5131 = vmatpush1.msra.mxu0 0.0
  %5132 = vmatprep.subr.mxu0 0.0
  %5133 = vmatpush1.msra.mxu0 0.0
  %5134 = vmatprep.subr.mxu0 0.0
  %5135 = vmatpush1.msra.mxu0 0.0
  %5136 = vmatprep.subr.mxu0 0.0
  %5137 = vmatpush1.msra.mxu0 0.0
  %5138 = vmatprep.subr.mxu0 0.0
  %5139 = vmatpush1.msra.mxu0 0.0
  %5140 = vmatprep.mubr.f32.mxu0 0.0
  %5141 = vmatmul.mubr.f32.gmra.mrb[0].mxu0 %v5071
  %v5142 = vpop.f32.mrb[0].mxu0
  %v5143 = vadd.f32 %v5068, %v5142
  %v5144 = vpop.f32.mrb[0].mxu0
  %5145 = vmatprep.mubr.f32.mxu0 0.0
  %5146 = vmatmul.mubr.f32.gmra.mrb[0].mxu0 %v5074
  %v5147 = vpop.f32.mrb[0].mxu0
  %v5148 = vadd.f32 %v5068, %v5147
  %v5149 = vpop.f32.mrb[0].mxu0
  %5150 = vdwg.mxu0
  %v5151 = vmul.f32 %v5143, %v5143
  %v5152 = vmul.f32 %v5148, %v5148
  %v5153 = vmul.f32 %v5143, %v5151
  %v5154 = vmul.f32 %v5148, %v5152
  %v5155 = vmul.f32 %v5153, 0.044715
  %v5156 = vmul.f32 %v5154, 0.044715
  %v5157 = vadd.f32 %v5143, %v5155
  %v5158 = vadd.f32 %v5148, %v5156
  %v5159 = vmul.f32 %v5157, 0.7978846
  %v5160 = vmul.f32 %v5158, 0.7978846
  %v5161 = vtanh.pop %v5159
  %v5162 = vtanh.pop %v5160
  %v5163 = vadd.f32 %v5161, 1.0
  %v5164 = vadd.f32 %v5162, 1.0
  %v5165 = vmul.f32 %v5163, 0.5
  %v5166 = vmul.f32 %v5164, 0.5
  %v5167 = vmul.f32 %v5143, %v5165
  %v5168 = vmul.f32 %v5148, %v5166
  %s5169 = scalar_lea.vmem %s13, 64
  %v5170 = vld [vmem:[%s5169] sm:$0xff]
  %v5171 = vld [vmem:[%s5169 + $0x8] sm:$0xff]
  %v5172 = vld [vmem:[%s5169 + $0x10] sm:$0xff]
  %v5173 = vld [vmem:[%s5169 + $0x18] sm:$0xff]
  %v5174 = vld [vmem:[%s5169 + $0x20] sm:$0xff]
  %v5175 = vld [vmem:[%s5169 + $0x28] sm:$0xff]
  %v5176 = vld [vmem:[%s5169 + $0x30] sm:$0xff]
  %v5177 = vld [vmem:[%s5169 + $0x38] sm:$0xff]
  %s5178 = scalar_lea.vmem %s14, 1
  %v5179 = vld [vmem:[%s5178] sm:$0x1]
  %v5181 = vlaneseq
  %v5182 = vshrl.u32 %v5181, 7
  %v5183 = vsub.s32 0, %v5182
  %v5184 = vrot.slane %v5179, %v5183
  %v5187 = vsel %vm2598, %v5167, 0
  %v5190 = vsel %vm2598, %v5168, 0
  %5192 = vmatprep.subr.mxu0 0.0
  %5193 = vmatpush1.msra.mxu0 %v5170
  %5194 = vmatprep.subr.mxu0 0.0
  %5195 = vmatpush1.msra.mxu0 %v5171
  %5196 = vmatprep.subr.mxu0 0.0
  %5197 = vmatpush1.msra.mxu0 %v5172
  %5198 = vmatprep.subr.mxu0 0.0
  %5199 = vmatpush1.msra.mxu0 %v5173
  %5200 = vmatprep.subr.mxu0 0.0
  %5201 = vmatpush1.msra.mxu0 %v5174
  %5202 = vmatprep.subr.mxu0 0.0
  %5203 = vmatpush1.msra.mxu0 %v5175
  %5204 = vmatprep.subr.mxu0 0.0
  %5205 = vmatpush1.msra.mxu0 %v5176
  %5206 = vmatprep.subr.mxu0 0.0
  %5207 = vmatpush1.msra.mxu0 %v5177
  %5208 = vmatprep.subr.mxu0 0.0
  %5209 = vmatpush1.msra.mxu0 0.0
  %5210 = vmatprep.subr.mxu0 0.0
  %5211 = vmatpush1.msra.mxu0 0.0
  %5212 = vmatprep.subr.mxu0 0.0
  %5213 = vmatpush1.msra.mxu0 0.0
  %5214 = vmatprep.subr.mxu0 0.0
  %5215 = vmatpush1.msra.mxu0 0.0
  %5216 = vmatprep.subr.mxu0 0.0
  %5217 = vmatpush1.msra.mxu0 0.0
  %5218 = vmatprep.subr.mxu0 0.0
  %5219 = vmatpush1.msra.mxu0 0.0
  %5220 = vmatprep.subr.mxu0 0.0
  %5221 = vmatpush1.msra.mxu0 0.0
  %5222 = vmatprep.subr.mxu0 0.0
  %5223 = vmatpush1.msra.mxu0 0.0
  %5224 = vmatprep.subr.mxu0 0.0
  %5225 = vmatpush1.msra.mxu0 0.0
  %5226 = vmatprep.subr.mxu0 0.0
  %5227 = vmatpush1.msra.mxu0 0.0
  %5228 = vmatprep.subr.mxu0 0.0
  %5229 = vmatpush1.msra.mxu0 0.0
  %5230 = vmatprep.subr.mxu0 0.0
  %5231 = vmatpush1.msra.mxu0 0.0
  %5232 = vmatprep.subr.mxu0 0.0
  %5233 = vmatpush1.msra.mxu0 0.0
  %5234 = vmatprep.subr.mxu0 0.0
  %5235 = vmatpush1.msra.mxu0 0.0
  %5236 = vmatprep.subr.mxu0 0.0
  %5237 = vmatpush1.msra.mxu0 0.0
  %5238 = vmatprep.subr.mxu0 0.0
  %5239 = vmatpush1.msra.mxu0 0.0
  %5240 = vmatprep.subr.mxu0 0.0
  %5241 = vmatpush1.msra.mxu0 0.0
  %5242 = vmatprep.subr.mxu0 0.0
  %5243 = vmatpush1.msra.mxu0 0.0
  %5244 = vmatprep.subr.mxu0 0.0
  %5245 = vmatpush1.msra.mxu0 0.0
  %5246 = vmatprep.subr.mxu0 0.0
  %5247 = vmatpush1.msra.mxu0 0.0
  %5248 = vmatprep.subr.mxu0 0.0
  %5249 = vmatpush1.msra.mxu0 0.0
  %5250 = vmatprep.subr.mxu0 0.0
  %5251 = vmatpush1.msra.mxu0 0.0
  %5252 = vmatprep.subr.mxu0 0.0
  %5253 = vmatpush1.msra.mxu0 0.0
  %5254 = vmatprep.subr.mxu0 0.0
  %5255 = vmatpush1.msra.mxu0 0.0
  %5256 = vmatprep.mubr.f32.mxu0 0.0
  %5257 = vmatmul.mubr.f32.gmra.mrb[0].mxu0 %v5187
  %v5258 = vpop.f32.mrb[0].mxu0
  %v5259 = vadd.f32 %v5184, %v5258
  %v5260 = vpop.f32.mrb[0].mxu0
  %5261 = vmatprep.mubr.f32.mxu0 0.0
  %5262 = vmatmul.mubr.f32.gmra.mrb[0].mxu0 %v5190
  %v5263 = vpop.f32.mrb[0].mxu0
  %v5264 = vadd.f32 %v5184, %v5263
  %v5265 = vpop.f32.mrb[0].mxu0
  %5266 = vdwg.mxu0
  %v5267 = vadd.f32 %v5055, %v5259
  %v5268 = vadd.f32 %v5056, %v5264
  %s5269 = scalar_lea.vmem %s15, 1
  %v5270 = vld [vmem:[%s5269] sm:$0x1]
  %s5271 = scalar_lea.vmem %s16, 1
  %v5272 = vld [vmem:[%s5271] sm:$0x1]
  %v5273 = vsel %vm68, %v5267, 0.0
  %5274 = vadd.xlane.f32.xlu0 %v5273
  %v5275 = vpop.xlane.xlu0 %5274
  %v5276 = vsel %vm68, %v5268, 0.0
  %5277 = vadd.xlane.f32.xlu0 %v5276
  %v5278 = vpop.xlane.xlu0 %5277
  %v5279 = vmul.f32 %v5275, %v75
  %v5280 = vmul.f32 %v5278, %v75
  %v5281 = vsub.f32 %v5267, %v5279
  %v5282 = vsub.f32 %v5268, %v5280
  %v5283 = vmul.f32 %v5281, %v5281
  %v5284 = vmul.f32 %v5282, %v5282
  %v5285 = vsel %vm68, %v5283, 0.0
  %5286 = vadd.xlane.f32.xlu0 %v5285
  %v5287 = vpop.xlane.xlu0 %5286
  %v5288 = vsel %vm68, %v5284, 0.0
  %5289 = vadd.xlane.f32.xlu0 %v5288
  %v5290 = vpop.xlane.xlu0 %5289
  %v5291 = vmul.f32 %v5287, %v75
  %v5292 = vmul.f32 %v5290, %v75
  %v5293 = vadd.f32 %v5291, 1e-12
  %v5294 = vadd.f32 %v5292, 1e-12
  %v5295 = vrsqrt.pop %v5293
  %v5296 = vrsqrt.pop %v5294
  %v5297 = vmul.f32 %v5281, %v5295
  %v5298 = vmul.f32 %v5282, %v5296
  %v5300 = vlaneseq
  %v5301 = vshrl.u32 %v5300, 7
  %v5302 = vsub.s32 0, %v5301
  %v5303 = vrot.slane %v5270, %v5302
  %v5305 = vmul.f32 %v5297, %v5303
  %v5306 = vmul.f32 %v5298, %v5303
  %v5308 = vlaneseq
  %v5309 = vshrl.u32 %v5308, 7
  %v5310 = vsub.s32 0, %v5309
  %v5311 = vrot.slane %v5272, %v5310
  %v5313 = vadd.f32 %v5305, %v5311
  %v5314 = vadd.f32 %v5306, %v5311
  %v5315 = vld [vmem:[%s17] sm:$0xff]
  %v5316 = vld [vmem:[%s17 + $0x8] sm:$0xff]
  %v5317 = vld [vmem:[%s17 + $0x10] sm:$0xff]
  %v5318 = vld [vmem:[%s17 + $0x18] sm:$0xff]
  %v5319 = vld [vmem:[%s18] sm:$0x1]
  %v5321 = vlaneseq
  %v5322 = vshrl.u32 %v5321, 7
  %v5323 = vsub.s32 0, %v5322
  %v5324 = vrot.slane %v5319, %v5323
  %v5327 = vsel %vm68, %v5313, 0
  %v5330 = vsel %vm68, %v5314, 0
  %5332 = vmatprep.subr.mxu0 0.0
  %5333 = vmatpush1.msra.mxu0 %v5315
  %5334 = vmatprep.subr.mxu0 0.0
  %5335 = vmatpush1.msra.mxu0 %v5316
  %5336 = vmatprep.subr.mxu0 0.0
  %5337 = vmatpush1.msra.mxu0 %v5317
  %5338 = vmatprep.subr.mxu0 0.0
  %5339 = vmatpush1.msra.mxu0 %v5318
  %5340 = vmatprep.subr.mxu0 0.0
  %5341 = vmatpush1.msra.mxu0 0.0
  %5342 = vmatprep.subr.mxu0 0.0
  %5343 = vmatpush1.msra.mxu0 0.0
  %5344 = vmatprep.subr.mxu0 0.0
  %5345 = vmatpush1.msra.mxu0 0.0
  %5346 = vmatprep.subr.mxu0 0.0
  %5347 = vmatpush1.msra.mxu0 0.0
  %5348 = vmatprep.subr.mxu0 0.0
  %5349 = vmatpush1.msra.mxu0 0.0
  %5350 = vmatprep.subr.mxu0 0.0
  %5351 = vmatpush1.msra.mxu0 0.0
  %5352 = vmatprep.subr.mxu0 0.0
  %5353 = vmatpush1.msra.mxu0 0.0
  %5354 = vmatprep.subr.mxu0 0.0
  %5355 = vmatpush1.msra.mxu0 0.0
  %5356 = vmatprep.subr.mxu0 0.0
  %5357 = vmatpush1.msra.mxu0 0.0
  %5358 = vmatprep.subr.mxu0 0.0
  %5359 = vmatpush1.msra.mxu0 0.0
  %5360 = vmatprep.subr.mxu0 0.0
  %5361 = vmatpush1.msra.mxu0 0.0
  %5362 = vmatprep.subr.mxu0 0.0
  %5363 = vmatpush1.msra.mxu0 0.0
  %5364 = vmatprep.subr.mxu0 0.0
  %5365 = vmatpush1.msra.mxu0 0.0
  %5366 = vmatprep.subr.mxu0 0.0
  %5367 = vmatpush1.msra.mxu0 0.0
  %5368 = vmatprep.subr.mxu0 0.0
  %5369 = vmatpush1.msra.mxu0 0.0
  %5370 = vmatprep.subr.mxu0 0.0
  %5371 = vmatpush1.msra.mxu0 0.0
  %5372 = vmatprep.subr.mxu0 0.0
  %5373 = vmatpush1.msra.mxu0 0.0
  %5374 = vmatprep.subr.mxu0 0.0
  %5375 = vmatpush1.msra.mxu0 0.0
  %5376 = vmatprep.subr.mxu0 0.0
  %5377 = vmatpush1.msra.mxu0 0.0
  %5378 = vmatprep.subr.mxu0 0.0
  %5379 = vmatpush1.msra.mxu0 0.0
  %5380 = vmatprep.subr.mxu0 0.0
  %5381 = vmatpush1.msra.mxu0 0.0
  %5382 = vmatprep.subr.mxu0 0.0
  %5383 = vmatpush1.msra.mxu0 0.0
  %5384 = vmatprep.subr.mxu0 0.0
  %5385 = vmatpush1.msra.mxu0 0.0
  %5386 = vmatprep.subr.mxu0 0.0
  %5387 = vmatpush1.msra.mxu0 0.0
  %5388 = vmatprep.subr.mxu0 0.0
  %5389 = vmatpush1.msra.mxu0 0.0
  %5390 = vmatprep.subr.mxu0 0.0
  %5391 = vmatpush1.msra.mxu0 0.0
  %5392 = vmatprep.subr.mxu0 0.0
  %5393 = vmatpush1.msra.mxu0 0.0
  %5394 = vmatprep.subr.mxu0 0.0
  %5395 = vmatpush1.msra.mxu0 0.0
  %5396 = vmatprep.mubr.f32.mxu0 0.0
  %5397 = vmatmul.mubr.f32.gmra.mrb[0].mxu0 %v5327
  %v5398 = vpop.f32.mrb[0].mxu0
  %v5399 = vadd.f32 %v5324, %v5398
  %v5400 = vpop.f32.mrb[0].mxu0
  %5401 = vmatprep.mubr.f32.mxu0 0.0
  %5402 = vmatmul.mubr.f32.gmra.mrb[0].mxu0 %v5330
  %v5403 = vpop.f32.mrb[0].mxu0
  %v5404 = vadd.f32 %v5324, %v5403
  %v5405 = vpop.f32.mrb[0].mxu0
  %5406 = vdwg.mxu0
  %v5407 = vlaneseq
  %v5408 = vand.u32 %v5407, 127
  %v5409 = vsel %vm382, %v5399, -inf
  %5410 = vmax.xlane.f32.xlu0 %v5409
  %v5411 = vpop.xlane.xlu0 %5410
  %v5412 = vsel %vm382, %v5404, -inf
  %5413 = vmax.xlane.f32.xlu0 %v5412
  %v5414 = vpop.xlane.xlu0 %5413
  %vm5415 = vcmp.eq.f32.partialorder %v5399, %v5411
  %vm5416 = vcmp.eq.f32.partialorder %v5404, %v5414
  %v5417 = vsel %vm5415, %v5408, 8
  %v5418 = vsel %vm5416, %v5408, 8
  %v5419 = vsel %vm382, %v5417, 2147483647
  %v5420 = vand.u32 %v5419, 65535
  %v5421 = vshra.s32 %v5419, 16
  %v5422 = vcvt.s32.f32 %v5420
  %v5423 = vcvt.s32.f32 %v5421
  %5424 = vmin.xlane.f32.xlu0 %v5423
  %v5425 = vpop.xlane.xlu0 %5424
  %vm5426 = vcmp.eq.f32.partialorder %v5423, %v5425
  %v5427 = vsel %vm5426, %v5422, inf
  %5428 = vmin.xlane.f32.xlu0 %v5427
  %v5429 = vpop.xlane.xlu0 %5428
  %v5430 = vcvt.f32.s32 %v5429
  %v5431 = vcvt.f32.s32 %v5425
  %v5432 = vshll.u32 %v5431, 16
  %v5433 = vadd.s32 %v5432, %v5430
  %v5434 = vsel %vm382, %v5418, 2147483647
  %v5435 = vand.u32 %v5434, 65535
  %v5436 = vshra.s32 %v5434, 16
  %v5437 = vcvt.s32.f32 %v5435
  %v5438 = vcvt.s32.f32 %v5436
  %5439 = vmin.xlane.f32.xlu0 %v5438
  %v5440 = vpop.xlane.xlu0 %5439
  %vm5441 = vcmp.eq.f32.partialorder %v5438, %v5440
  %v5442 = vsel %vm5441, %v5437, inf
  %5443 = vmin.xlane.f32.xlu0 %v5442
  %v5444 = vpop.xlane.xlu0 %5443
  %v5445 = vcvt.f32.s32 %v5444
  %v5446 = vcvt.f32.s32 %v5440
  %v5447 = vshll.u32 %v5446, 16
  %v5448 = vadd.s32 %v5447, %v5445
  %v5449 = vsub.f32 %v5399, %v5411
  %v5450 = vsub.f32 %v5404, %v5414
  %v5451 = vmul.f32 %v5449, 1.442695
  %v5452 = vpow.pop %v5451
  %v5453 = vmul.f32 %v5450, 1.442695
  %v5454 = vpow.pop %v5453
  %v5455 = vsel %vm382, %v5452, 0.0
  %5456 = vadd.xlane.f32.xlu0 %v5455
  %v5457 = vpop.xlane.xlu0 %5456
  %v5458 = vsel %vm382, %v5454, 0.0
  %5459 = vadd.xlane.f32.xlu0 %v5458
  %v5460 = vpop.xlane.xlu0 %5459
  %v5461 = vlog2.pop %v5457
  %v5462 = vmul.f32 %v5461, 0.6931472
  %v5463 = vlog2.pop %v5460
  %v5464 = vmul.f32 %v5463, 0.6931472
  %v5465 = vadd.f32 %v5462, %v5411
  %v5466 = vadd.f32 %v5464, %v5414
  %v5467 = vld [vmem:[%s2] sm:$0xff]
  %v5468 = vld [vmem:[%s2 + $0x8] sm:$0xff]
  %5469 = vset.pattern.permute.xlu0 0
  %5470 = vperm.xlu0 %5469, %v5467
  %v5471 = vpop.permute.xlu0 %5470
  %5472 = vset.pattern.permute.xlu0 0
  %5473 = vperm.xlu0 %5472, %v5468
  %v5474 = vpop.permute.xlu0 %5473
  %vm5475 = vcmp.eq.s32.totalorder %v5408, %v5471
  %vm5476 = vcmp.eq.s32.totalorder %v5408, %v5474
  %v5477 = vsel %vm5475, %v5399, 0.0
  %v5478 = vsel %vm5476, %v5404, 0.0
  %v5479 = vsel %vm382, %v5477, 0.0
  %5480 = vadd.xlane.f32.xlu0 %v5479
  %v5481 = vpop.xlane.xlu0 %5480
  %v5482 = vsel %vm382, %v5478, 0.0
  %5483 = vadd.xlane.f32.xlu0 %v5482
  %v5484 = vpop.xlane.xlu0 %5483
  %v5485 = vsub.f32 %v5465, %v5481
  %v5486 = vsub.f32 %v5466, %v5484
  %5487 = vxpose.xlu0.b32.start [1/16] %v5433, 128
  %5488 = vxpose.xlu0.b32.cont [2/16] %v5448, 128
  %5489 = vxpose.xlu0.b32.cont [3/16] 0, 128
  %5490 = vxpose.xlu0.b32.cont [4/16] 0, 128
  %5491 = vxpose.xlu0.b32.cont [5/16] 0, 128
  %5492 = vxpose.xlu0.b32.cont [6/16] 0, 128
  %5493 = vxpose.xlu0.b32.cont [7/16] 0, 128
  %5494 = vxpose.xlu0.b32.cont [8/16] 0, 128
  %5495 = vxpose.xlu0.b32.cont [9/16] 0, 128
  %5496 = vxpose.xlu0.b32.cont [10/16] 0, 128
  %5497 = vxpose.xlu0.b32.cont [11/16] 0, 128
  %5498 = vxpose.xlu0.b32.cont [12/16] 0, 128
  %5499 = vxpose.xlu0.b32.cont [13/16] 0, 128
  %5500 = vxpose.xlu0.b32.cont [14/16] 0, 128
  %5501 = vxpose.xlu0.b32.cont [15/16] 0, 128
  %5502 = vxpose.xlu0.b32.end [16/16] 0, 128
  %v5503 = vpop.trf.xlu0
  %v5504 = vpop.trf.xlu0
  %v5505 = vpop.trf.xlu0
  %v5506 = vpop.trf.xlu0
  %v5507 = vpop.trf.xlu0
  %v5508 = vpop.trf.xlu0
  %v5509 = vpop.trf.xlu0
  %v5510 = vpop.trf.xlu0
  %v5511 = vpop.trf.xlu0
  %v5512 = vpop.trf.xlu0
  %v5513 = vpop.trf.xlu0
  %v5514 = vpop.trf.xlu0
  %v5515 = vpop.trf.xlu0
  %v5516 = vpop.trf.xlu0
  %v5517 = vpop.trf.xlu0
  %v5518 = vpop.trf.xlu0
  %vm5519 = vcmask 122880
  %5520 = vst.msk [vmem:[%s20] sm:$0x1] %vm5519, %v5503
  %5521 = vxpose.xlu0.b32.start [1/16] %v5485, 128
  %5522 = vxpose.xlu0.b32.cont [2/16] %v5486, 128
  %5523 = vxpose.xlu0.b32.cont [3/16] 0.0, 128
  %5524 = vxpose.xlu0.b32.cont [4/16] 0.0, 128
  %5525 = vxpose.xlu0.b32.cont [5/16] 0.0, 128
  %5526 = vxpose.xlu0.b32.cont [6/16] 0.0, 128
  %5527 = vxpose.xlu0.b32.cont [7/16] 0.0, 128
  %5528 = vxpose.xlu0.b32.cont [8/16] 0.0, 128
  %5529 = vxpose.xlu0.b32.cont [9/16] 0.0, 128
  %5530 = vxpose.xlu0.b32.cont [10/16] 0.0, 128
  %5531 = vxpose.xlu0.b32.cont [11/16] 0.0, 128
  %5532 = vxpose.xlu0.b32.cont [12/16] 0.0, 128
  %5533 = vxpose.xlu0.b32.cont [13/16] 0.0, 128
  %5534 = vxpose.xlu0.b32.cont [14/16] 0.0, 128
  %5535 = vxpose.xlu0.b32.cont [15/16] 0.0, 128
  %5536 = vxpose.xlu0.b32.end [16/16] 0.0, 128
  %v5537 = vpop.trf.xlu0
  %v5538 = vpop.trf.xlu0
  %v5539 = vpop.trf.xlu0
  %v5540 = vpop.trf.xlu0
  %v5541 = vpop.trf.xlu0
  %v5542 = vpop.trf.xlu0
  %v5543 = vpop.trf.xlu0
  %v5544 = vpop.trf.xlu0
  %v5545 = vpop.trf.xlu0
  %v5546 = vpop.trf.xlu0
  %v5547 = vpop.trf.xlu0
  %v5548 = vpop.trf.xlu0
  %v5549 = vpop.trf.xlu0
  %v5550 = vpop.trf.xlu0
  %v5551 = vpop.trf.xlu0
  %v5552 = vpop.trf.xlu0
  %5553 = vst.msk [vmem:[%s19] sm:$0x1] %vm5519, %v5537
  // Predicated region
  $region78: #{_lambda_.1} parent=0 // pred_check
    _
  $region79: #{_lambda_.1} parent=0 // pred_check_branch
    %5555 = sbr.rel (0) target = $region81
  $region80: #{_lambda_.1} parent=0 // pred_region
    _
  $region81: #{_lambda_.1} parent=0 // pred_fallthru
    _
  // Predicated region
  $region82: #{_lambda_.1} parent=0 // pred_check
    _
  $region83: #{_lambda_.1} parent=0 // pred_check_branch
    %5557 = sbr.rel (0) target = $region85
  $region84: #{_lambda_.1} parent=0 // pred_region
    _
  $region85: #{_lambda_.1} parent=0 // pred_fallthru
    _
  // Predicated region
  $region86: #{_lambda_.1} parent=0 // pred_check
    _
  $region87: #{_lambda_.1} parent=0 // pred_check_branch
    %5559 = sbr.rel (0) target = $region89
  $region88: #{_lambda_.1} parent=0 // pred_region
    _
  $region89: #{_lambda_.1} parent=0 // pred_fallthru
    _
  // Predicated region
  $region90: #{_lambda_.1} parent=0 // pred_check
    _
  $region91: #{_lambda_.1} parent=0 // pred_check_branch
    %5561 = sbr.rel (0) target = $region93
  $region92: #{_lambda_.1} parent=0 // pred_region
    _
  $region93: #{_lambda_.1} parent=0 // pred_fallthru
    _

</llo_original>
